<compile_context>
chip_gen: v7x
topology: tpu7x:2x2x1
jax: 0.10.0
libtpu: 0.0.40
codegen_flags: <defaults>
</compile_context>

<pallas_src>
import numpy as np
import jax
import jax.numpy as jnp
from jax import lax
from jax.experimental import pallas as pl
from jax.experimental.pallas import tpu as pltpu

# ----------------------------------------------------------------------------- small test config
GROWTH_RATE = 8
BLOCK_CONFIG = (2, 2)
NUM_INIT_FEATURES = 16
BN_SIZE = 2
DROP_RATE = 0.0          # dropout disabled (module default)
BN_EPS = 1e-5


def _compiler_params():
    # Batch elements are independent -> shard the (only) grid axis across TensorCores on
    # multi-TC chips; set the scoped-VMEM budget explicitly (v5e default is only 16 MiB).
    return pltpu.CompilerParams(dimension_semantics=("parallel",),
                                vmem_limit_bytes=32 * 1024 * 1024)


# ----------------------------------------------------------------------------- Pallas kernels
def make_stem_kernel(Dc, Ho, Wo, C0, Ws, C12):
    """conv0 (7x7x7, stride (1,2,2), pad 3) as a stride-1 7x4x4 conv over the s2d input,
    with folded BN0 + ReLU.  Banded weights make every tap a fat-K MXU dot with zero staging."""
    K = Ws * C12

    def kernel(x_ref, wb_ref, b_ref, o_ref):
        # x_ref : (Dp, Hs, Ws*12)       lane-fused, padded, space-to-depth'd input
        # wb_ref: (28, Ws*12, Wo*C0)    banded per-(kd,mh) weights (BN0 scale folded)
        # b_ref : (1, Wo*C0)            folded BN0 shift, tiled over Wo
        # o_ref : (Dc, Ho, Wo*C0)       lane-dense stem output
        acc = jnp.zeros((Dc * Ho, Wo * C0), jnp.float32)   # lane-dense -> no register spill
        for kd in range(7):
            for mh in range(4):
                slab = x_ref[kd:kd + Dc, mh:mh + Ho, :].reshape(Dc * Ho, K)
                acc = acc + jnp.dot(slab, wb_ref[kd * 4 + mh],
                                    preferred_element_type=jnp.float32)
        y = jnp.maximum(acc + b_ref[...], 0.0)
        o_ref[...] = y.reshape(Dc, Ho, Wo * C0).astype(o_ref.dtype)

    return kernel


def make_block_kernel(num_layers, Cin, Cmid, G, D, H, W, tail_mode):
    """One fused kernel for a whole dense block (+ transition or the norm5/relu/global-pool head).

    The running channel concatenation stays resident in the `feat_scr` VMEM scratch for the
    entire block; each layer appends its G new channels to a channel slice of that scratch.
    """
    Cfin = Cin + num_layers * G
    M = D * H * W
    n_tail = 4 if tail_mode == "transition" else 2

    def kernel(*refs):
        x_ref = refs[0]
        pos = 1
        layer_refs = []
        for _ in range(num_layers):
            layer_refs.append(refs[pos:pos + 5])
            pos += 5
        tail = refs[pos:pos + n_tail]
        pos += n_tail
        o_ref = refs[pos]
        feat_scr = refs[pos + 1]     # (D, H, W, Cfin)   resident concatenated feature map
        zpad_scr = refs[pos + 2]     # (D+2, H+2, W+2, Cmid) zero-halo bottleneck staging

        feat_scr[:, :, :, 0:Cin] = x_ref[...].astype(jnp.float32)
        # Zero the halo'd staging buffer (cheap at these sizes; done every grid step so it is
        # correct however the "parallel" batch axis is split across TensorCores).
        zpad_scr[...] = jnp.zeros_like(zpad_scr)

        for i in range(num_layers):
            s1, b1, w1, b2, w2 = layer_refs[i]
            Ci = Cin + i * G
            # bn1 + relu over the current concat prefix, then 1x1x1 conv (bn2 scale folded
            # into w1), bn2 shift, relu.
            t = feat_scr[:, :, :, 0:Ci].reshape(M, Ci)
            t = jnp.maximum(t * s1[...] + b1[...], 0.0)
            z = jnp.dot(t, w1[...], preferred_element_type=jnp.float32)
            z = jnp.maximum(z + b2[...], 0.0)                          # (M, Cmid)

            # 3x3x3 conv (pad 1): stage once into the zero-halo scratch, then 27 direct-slice
            # MXU contractions (no im2col staging buffer, no masked col stores).
            zpad_scr[1:D + 1, 1:H + 1, 1:W + 1, :] = z.reshape(D, H, W, Cmid)
            acc = jnp.zeros((M, G), jnp.float32)
            for tap in range(27):
                kd, kh, kw = tap // 9, (tap // 3) % 3, tap % 3
                slab = zpad_scr[kd:kd + D, kh:kh + H, kw:kw + W, :].reshape(M, Cmid)
                acc = acc + jnp.dot(slab, w2[tap], preferred_element_type=jnp.float32)
            # TODO(synk): dropout on the new features when drop_rate > 0 (drop_rate == 0 here).
            feat_scr[:, :, :, Ci:Ci + G] = acc.reshape(D, H, W, G)

        f = feat_scr[...].reshape(M, Cfin)
        if tail_mode == "transition":
            # _Transition: bn + relu + 1x1x1 conv, then fused 2x2x2 average pool (one MXU
            # contraction with a precomputed pooling matrix -> pooled output only goes to HBM).
            s_t, b_t, w_t, pool_t = tail
            Cout = w_t.shape[1]
            D2, H2, W2 = D // 2, H // 2, W // 2
            y = jnp.dot(jnp.maximum(f * s_t[...] + b_t[...], 0.0), w_t[...],
                        preferred_element_type=jnp.float32)            # (M, Cout)
            y = jnp.dot(pool_t[...], y, preferred_element_type=jnp.float32)  # (M/8, Cout)
            o_ref[...] = y.reshape(D2, H2, W2, Cout).astype(o_ref.dtype)
        else:
            # norm5 + relu + global average pool (AdaptiveAvgPool3d((1,1,1))).
            s5, b5 = tail
            t = jnp.maximum(f * s5[...] + b5[...], 0.0)
            o_ref[...] = (jnp.sum(t, axis=0, keepdims=True) * (1.0 / M)).astype(o_ref.dtype)

    return kernel


# ----------------------------------------------------------------------------- pallas_call wrappers
def _const_spec(a):
    zeros = (0,) * a.ndim
    return pl.BlockSpec(a.shape, lambda n, _z=zeros: _z)


def stem_pallas(x_s2d, wb, bias):
    N, Dp, Hs, KW = x_s2d.shape
    C12 = 12
    Ws = KW // C12
    Dc, Ho, Wo = Dp - 6, Hs - 3, Ws - 3
    C0 = wb.shape[-1] // Wo
    kernel = make_stem_kernel(Dc, Ho, Wo, C0, Ws, C12)
    return pl.pallas_call(
        kernel,
        out_shape=jax.ShapeDtypeStruct((N, Dc, Ho, Wo * C0), x_s2d.dtype),
        grid=(N,),
        in_specs=[
            pl.BlockSpec((None, Dp, Hs, KW), lambda n: (n, 0, 0, 0)),
            _const_spec(wb),
            _const_spec(bias),
        ],
        out_specs=pl.BlockSpec((None, Dc, Ho, Wo * C0), lambda n: (n, 0, 0, 0)),
        compiler_params=_compiler_params(),
    )(x_s2d, wb, bias)


def dense_block_pallas(x, layer_params, tail_params, tail_mode):
    """One pallas_call for an entire _DenseBlock plus its tail (transition or head)."""
    N, D, H, W, Cin = x.shape
    Cmid = layer_params[0]["w1"].shape[1]
    G = layer_params[0]["w2"].shape[2]
    L = len(layer_params)
    Cfin = Cin + L * G
    kernel = make_block_kernel(L, Cin, Cmid, G, D, H, W, tail_mode)

    in_specs = [pl.BlockSpec((None, D, H, W, Cin), lambda n: (n, 0, 0, 0, 0))]
    args = [x]
    for lp in layer_params:
        for name in ("s1", "b1", "w1", "b2", "w2"):
            a = lp[name]
            in_specs.append(_const_spec(a))
            args.append(a)

    if tail_mode == "transition":
        tail_names = ("s", "b", "w", "pool")
        Cout = tail_params["w"].shape[1]
        D2, H2, W2 = D // 2, H // 2, W // 2
        out_shape = jax.ShapeDtypeStruct((N, D2, H2, W2, Cout), x.dtype)
        out_spec = pl.BlockSpec((None, D2, H2, W2, Cout), lambda n: (n, 0, 0, 0, 0))
    else:
        tail_names = ("s", "b")
        out_shape = jax.ShapeDtypeStruct((N, 1, Cfin), x.dtype)
        out_spec = pl.BlockSpec((None, 1, Cfin), lambda n: (n, 0, 0))
    for name in tail_names:
        a = tail_params[name]
        in_specs.append(_const_spec(a))
        args.append(a)

    return pl.pallas_call(
        kernel,
        out_shape=out_shape,
        grid=(N,),
        in_specs=in_specs,
        out_specs=out_spec,
        scratch_shapes=[
            pltpu.VMEM((D, H, W, Cfin), jnp.float32),
            pltpu.VMEM((D + 2, H + 2, W + 2, Cmid), jnp.float32),
        ],
        compiler_params=_compiler_params(),
    )(*args)


# ----------------------------------------------------------------------------- layout / weight packing
def fold_bn(gamma, beta, mean, var, eps=BN_EPS):
    scale = gamma / jnp.sqrt(var + eps)
    shift = beta - mean * scale
    return scale, shift


def rgb_slice(x):
    """(N, 1, X, Y, Z) scan -> (N, 3, Z//3, X, Y) 'rgb movie' (matches RGBSlice.forward)."""
    N, _, X, Y, Z = x.shape
    ns = Z // 3
    x = x[:, 0]                               # (N, X, Y, Z)
    x = jnp.transpose(x, (0, 3, 1, 2))        # (N, Z, X, Y)
    x = x.reshape(N, ns, 3, X, Y)
    return jnp.transpose(x, (0, 2, 1, 3, 4))  # (N, 3, ns, X, Y)


def stem_input_layout(x):
    """(N, D, H, W, 3) -> padded, space-to-depth'd, lane-fused (N, D+6, (H+6)//2, ((W+6)//2)*12)."""
    x = jnp.pad(x, ((0, 0), (3, 3), (3, 3), (3, 3), (0, 0)))
    N, Dp, Hp, Wp, C = x.shape
    x = x.reshape(N, Dp, Hp // 2, 2, Wp // 2, 2, C)
    x = jnp.transpose(x, (0, 1, 2, 4, 3, 5, 6))       # (N, Dp, Hs, Ws, a, b, c)
    return x.reshape(N, Dp, Hp // 2, (Wp // 2) * 2 * 2 * C)


def repack_stem_weights_banded(w0, s0, Wo):
    """(C0,3,7,7,7) conv0 weights + folded BN0 scale -> (28, Ws*12, Wo*C0) banded form."""
    C0 = w0.shape[0]
    Ws = Wo + 3
    w = np.transpose(np.asarray(w0), (2, 3, 4, 1, 0)) * np.asarray(s0)   # (7,7,7,3,C0)
    w = np.pad(w, ((0, 0), (0, 1), (0, 1), (0, 0), (0, 0)))              # kh,kw -> 8 (zero tap)
    w = w.reshape(7, 4, 2, 4, 2, 3, C0)                                  # (kd, mh, a, mw, b, c, o)
    wb = np.zeros((28, Ws * 12, Wo * C0), np.float32)
    for kd in range(7):
        for mh in range(4):
            t = kd * 4 + mh
            for mw in range(4):
                for a in range(2):
                    for b in range(2):
                        cc = a * 6 + b * 3
                        for wo in range(Wo):
                            ws = wo + mw
                            wb[t, ws * 12 + cc: ws * 12 + cc + 3,
                               wo * C0:(wo + 1) * C0] = w[kd, mh, a, mw, b]
    return jnp.asarray(wb)


def make_avgpool_matrix(D, H, W):
    """(D2*H2*W2, D*H*W) matrix implementing a 2x2x2 average pool as one MXU contraction."""
    D2, H2, W2 = D // 2, H // 2, W // 2
    P = np.zeros((D2 * H2 * W2, D * H * W), np.float32)
    for d in range(D):
        for h in range(H):
            for w in range(W):
                m = (d * H + h) * W + w
                p = ((d // 2) * H2 + h // 2) * W2 + w // 2
                P[p, m] = 0.125
    return jnp.asarray(P)


def pack_dense_layer(lp):
    s1, b1 = fold_bn(*lp["bn1"])
    s2, b2 = fold_bn(*lp["bn2"])
    cin = s1.shape[0]
    cmid = lp["w1"].shape[0]
    g = lp["w2"].shape[0]
    w1 = lp["w1"].reshape(cmid, cin).T * s2[None, :]                      # (Cin, Cmid), bn2 scale folded
    w2 = jnp.transpose(lp["w2"], (2, 3, 4, 1, 0)).reshape(27, cmid, g)    # (tap, Cmid, G)
    return {"s1": s1.reshape(1, cin), "b1": b1.reshape(1, cin),
            "w1": w1, "b2": b2.reshape(1, cmid), "w2": w2}


def pack_transition(tp):
    s, b = fold_bn(*tp["bn"])
    cin = s.shape[0]
    cout = tp["w"].shape[0]
    return {"s": s.reshape(1, cin), "b": b.reshape(1, cin),
            "w": tp["w"].reshape(cout, cin).T}


def _spatial_after_stem(X, Y, Z):
    Dc = Z // 3
    Ho = (X + 6 - 7) // 2 + 1
    Wo = (Y + 6 - 7) // 2 + 1
    Dm = (Dc + 2 - 3) // 2 + 1
    Hm = (Ho + 2 - 3) // 2 + 1
    Wm = (Wo + 2 - 3) // 2 + 1
    return (Dc, Ho, Wo), (Dm, Hm, Wm)


def pack_params_for_pallas(params, x_shape):
    """One-time repacking of all weights into the kernel-ready layouts."""
    _, _, X, Y, Z = x_shape
    s0, b0 = fold_bn(*params["bn0"])
    s5, b5 = fold_bn(*params["bn5"])
    (_, _, Wo), (Dm, Hm, Wm) = _spatial_after_stem(X, Y, Z)
    C0 = params["w0"].shape[0]
    pk = {
        "stem_wb": repack_stem_weights_banded(params["w0"], s0, Wo),
        "stem_b": jnp.tile(b0, Wo).reshape(1, Wo * C0),
        "stem_geom": (Wo, C0),
        "blocks": [[pack_dense_layer(lp) for lp in layers] for layers in params["blocks"]],
        "head_s": s5.reshape(1, -1),
        "head_b": b5.reshape(1, -1),
    }
    trans = []
    D, H, W = Dm, Hm, Wm
    for bi in range(len(params["blocks"]) - 1):
        tp = pack_transition(params["trans"][bi])
        tp["pool"] = make_avgpool_matrix(D, H, W)
        trans.append(tp)
        D, H, W = D // 2, H // 2, W // 2
    pk["trans"] = trans
    return pk


# ----------------------------------------------------------------------------- pooling (XLA)
def maxpool3d_ndhwc(x):
    # MaxPool3d(kernel_size=3, stride=2, padding=1); -inf padding never wins (post-ReLU data).
    return lax.reduce_window(x, -jnp.inf, lax.max,
                             (1, 3, 3, 3, 1), (1, 2, 2, 2, 1),
                             ((0, 0), (1, 1), (1, 1), (1, 1), (0, 0)))


# ----------------------------------------------------------------------------- Pallas forward
def densenet_pallas_forward(x_in, pk):
    """DenseNet.forward (encode_only=True) -> (N, num_features, 1, 1, 1)."""
    x = rgb_slice(x_in)                        # (N, 3, D, H, W)
    x = jnp.transpose(x, (0, 2, 3, 4, 1))      # channels-last NDHWC
    x = stem_pallas(stem_input_layout(x), pk["stem_wb"], pk["stem_b"])   # (N, Dc, Ho, Wo*C0)
    N, Dc, Ho, _ = x.shape
    Wo, C0 = pk["stem_geom"]
    x = x.reshape(N, Dc, Ho, Wo, C0)
    x = maxpool3d_ndhwc(x)                     # TODO(synk): fuse into the stem / first block.
    nb = len(pk["blocks"])
    feat = None
    for bi, layers in enumerate(pk["blocks"]):
        if bi != nb - 1:
            x = dense_block_pallas(x, layers, pk["trans"][bi], "transition")
        else:
            feat = dense_block_pallas(x, layers, {"s": pk["head_s"], "b": pk["head_b"]}, "head")
    return jnp.transpose(feat, (0, 2, 1))[..., None, None]   # (N, C, 1, 1, 1)


# ----------------------------------------------------------------------------- pure-JAX reference
def conv3d_ncdhw(x, w, strides, padding):
    return lax.conv_general_dilated(
        x, w, window_strides=strides, padding=padding,
        dimension_numbers=("NCDHW", "OIDHW", "NCDHW"),
        precision=lax.Precision.HIGHEST)


def bn_eval_ncdhw(x, gamma, beta, mean, var, eps=BN_EPS):
    s = gamma / jnp.sqrt(var + eps)
    b = beta - mean * s
    return x * s[None, :, None, None, None] + b[None, :, None, None, None]


def reference_forward(x_in, params):
    x = rgb_slice(x_in)
    x = conv3d_ncdhw(x, params["w0"], (1, 2, 2), [(3, 3)] * 3)
    x = jnp.maximum(bn_eval_ncdhw(x, *params["bn0"]), 0.0)
    x = lax.reduce_window(x, -jnp.inf, lax.max, (1, 1, 3, 3, 3), (1, 1, 2, 2, 2),
                          ((0, 0), (0, 0), (1, 1), (1, 1), (1, 1)))
    for bi, layers in enumerate(params["blocks"]):
        for lp in layers:
            t = jnp.maximum(bn_eval_ncdhw(x, *lp["bn1"]), 0.0)
            t = conv3d_ncdhw(t, lp["w1"], (1, 1, 1), [(0, 0)] * 3)
            t = jnp.maximum(bn_eval_ncdhw(t, *lp["bn2"]), 0.0)
            nf = conv3d_ncdhw(t, lp["w2"], (1, 1, 1), [(1, 1)] * 3)
            x = jnp.concatenate([x, nf], axis=1)
        if bi != len(params["blocks"]) - 1:
            tp = params["trans"][bi]
            t = jnp.maximum(bn_eval_ncdhw(x, *tp["bn"]), 0.0)
            t = conv3d_ncdhw(t, tp["w"], (1, 1, 1), [(0, 0)] * 3)
            x = lax.reduce_window(t, 0.0, lax.add, (1, 1, 2, 2, 2), (1, 1, 2, 2, 2),
                                  ((0, 0),) * 5) * 0.125
    x = jnp.maximum(bn_eval_ncdhw(x, *params["bn5"]), 0.0)
    return jnp.mean(x, axis=(2, 3, 4), keepdims=True)


# ----------------------------------------------------------------------------- parameter construction
def _conv_weight(key, shape):
    fan_in = float(np.prod(shape[1:]))
    return jax.random.normal(key, shape, jnp.float32) * np.float32(np.sqrt(2.0 / fan_in))


def _bn_params(keys, c):
    kg, kb, km, kv = keys
    gamma = 0.5 + jax.random.uniform(kg, (c,), jnp.float32)
    beta = 0.1 * jax.random.normal(kb, (c,), jnp.float32)
    mean = 0.1 * jax.random.normal(km, (c,), jnp.float32)
    var = 0.5 + jax.random.uniform(kv, (c,), jnp.float32)
    return gamma, beta, mean, var


def build_params(key):
    keys = iter(jax.random.split(key, 256))
    nxt = lambda: next(keys)
    params = {"w0": _conv_weight(nxt(), (NUM_INIT_FEATURES, 3, 7, 7, 7)),
              "bn0": _bn_params([nxt() for _ in range(4)], NUM_INIT_FEATURES)}
    nf = NUM_INIT_FEATURES
    blocks, trans = [], []
    for bi, num_layers in enumerate(BLOCK_CONFIG):
        layers = []
        for _ in range(num_layers):
            layers.append({
                "bn1": _bn_params([nxt() for _ in range(4)], nf),
                "w1": _conv_weight(nxt(), (BN_SIZE * GROWTH_RATE, nf, 1, 1, 1)),
                "bn2": _bn_params([nxt() for _ in range(4)], BN_SIZE * GROWTH_RATE),
                "w2": _conv_weight(nxt(), (GROWTH_RATE, BN_SIZE * GROWTH_RATE, 3, 3, 3)),
            })
            nf += GROWTH_RATE
        blocks.append(layers)
        if bi != len(BLOCK_CONFIG) - 1:
            trans.append({
                "bn": _bn_params([nxt() for _ in range(4)], nf),
                "w": _conv_weight(nxt(), (nf // 2, nf, 1, 1, 1)),
            })
            nf = nf // 2
    params["blocks"] = blocks
    params["trans"] = trans
    params["bn5"] = _bn_params([nxt() for _ in range(4)], nf)
    return params


# ----------------------------------------------------------------------------- main
if __name__ == "__main__":
    # (N, 1, X, Y, Z) scan; Z % 3 == 0 (RGBSlice requirement), X/Y even (stem stride 2).
    N, X, Y, Z = 2, 16, 16, 24
    root = jax.random.PRNGKey(0)
    kx, kp = jax.random.split(root)
    x_in = jax.random.normal(kx, (N, 1, X, Y, Z), jnp.float32)

    params = build_params(kp)
    pk = pack_params_for_pallas(params, x_in.shape)

    out = densenet_pallas_forward(x_in, pk)
    out = jax.block_until_ready(out)

    ref = reference_forward(x_in, params)
    assert out.shape == ref.shape, (out.shape, ref.shape)
    np.testing.assert_allclose(np.asarray(out), np.asarray(ref), rtol=1e-2, atol=1e-2)

    print("KERNEL_OK")
</pallas_src>

<mosaic_0001>
module attributes {stable_mosaic.version = 11 : i64} {
  func.func @kernel(%arg0: i32, %arg1: memref<1x14x11x132xf32, #tpu.memory_space<vmem>>, %arg2: memref<28x132x128xf32, #tpu.memory_space<vmem>>, %arg3: memref<1x128xf32, #tpu.memory_space<vmem>>, %arg4: memref<1x8x8x128xf32, #tpu.memory_space<vmem>>) attributes {dimension_semantics = [#tpu.dimension_semantics<parallel>], iteration_bounds = array<i64: 2>, scalar_prefetch = 0 : i64, scratch_operands = 0 : i64, tpu.core_type = #tpu.core_type<tc>, window_params = [{transform_indices = @transform_0, window_bounds = array<i64: 1, 14, 11, 132>}, {pipeline_mode = #tpu.pipeline_mode<synchronous>, transform_indices = @transform_1, window_bounds = array<i64: 28, 132, 128>}, {pipeline_mode = #tpu.pipeline_mode<synchronous>, transform_indices = @transform_2, window_bounds = array<i64: 1, 128>}, {transform_indices = @transform_3, window_bounds = array<i64: 1, 8, 8, 128>}]} {
    %cst = arith.constant 0.000000e+00 : f32
    %0 = vector.broadcast %cst : f32 to vector<64x128xf32>
    %c0 = arith.constant 0 : index
    %c0_0 = arith.constant 0 : index
    %c0_1 = arith.constant 0 : index
    %c0_2 = arith.constant 0 : index
    %1 = vector.load %arg1[%c0, %c0_0, %c0_1, %c0_2] : memref<1x14x11x132xf32, #tpu.memory_space<vmem>>, vector<1x8x8x132xf32>
    %2 = vector.shape_cast %1 : vector<1x8x8x132xf32> to vector<8x8x132xf32>
    %3 = vector.shape_cast %2 : vector<8x8x132xf32> to vector<64x132xf32>
    %c0_3 = arith.constant 0 : index
    %c0_4 = arith.constant 0 : index
    %c0_5 = arith.constant 0 : index
    %4 = vector.load %arg2[%c0_3, %c0_4, %c0_5] : memref<28x132x128xf32, #tpu.memory_space<vmem>>, vector<1x132x128xf32>
    %5 = vector.shape_cast %4 : vector<1x132x128xf32> to vector<132x128xf32>
    %cst_6 = arith.constant dense<0.000000e+00> : vector<64x128xf32>
    %6 = tpu.matmul %3, %5, %cst_6 {dimension_numbers = #tpu.dot_dimension_numbers<[1], [0], [0], [1], [0, 0, 1, 1], [], []>} : vector<64x132xf32>, vector<132x128xf32>, vector<64x128xf32> -> vector<64x128xf32>
    %7 = arith.addf %0, %6 : vector<64x128xf32>
    %c0_7 = arith.constant 0 : index
    %c0_8 = arith.constant 0 : index
    %c1 = arith.constant 1 : index
    %c0_9 = arith.constant 0 : index
    %8 = vector.load %arg1[%c0_7, %c0_8, %c1, %c0_9] : memref<1x14x11x132xf32, #tpu.memory_space<vmem>>, vector<1x8x8x132xf32>
    %9 = vector.shape_cast %8 : vector<1x8x8x132xf32> to vector<8x8x132xf32>
    %10 = vector.shape_cast %9 : vector<8x8x132xf32> to vector<64x132xf32>
    %c1_10 = arith.constant 1 : index
    %c0_11 = arith.constant 0 : index
    %c0_12 = arith.constant 0 : index
    %11 = vector.load %arg2[%c1_10, %c0_11, %c0_12] : memref<28x132x128xf32, #tpu.memory_space<vmem>>, vector<1x132x128xf32>
    %12 = vector.shape_cast %11 : vector<1x132x128xf32> to vector<132x128xf32>
    %cst_13 = arith.constant dense<0.000000e+00> : vector<64x128xf32>
    %13 = tpu.matmul %10, %12, %cst_13 {dimension_numbers = #tpu.dot_dimension_numbers<[1], [0], [0], [1], [0, 0, 1, 1], [], []>} : vector<64x132xf32>, vector<132x128xf32>, vector<64x128xf32> -> vector<64x128xf32>
    %14 = arith.addf %7, %13 : vector<64x128xf32>
    %c0_14 = arith.constant 0 : index
    %c0_15 = arith.constant 0 : index
    %c2 = arith.constant 2 : index
    %c0_16 = arith.constant 0 : index
    %15 = vector.load %arg1[%c0_14, %c0_15, %c2, %c0_16] : memref<1x14x11x132xf32, #tpu.memory_space<vmem>>, vector<1x8x8x132xf32>
    %16 = vector.shape_cast %15 : vector<1x8x8x132xf32> to vector<8x8x132xf32>
    %17 = vector.shape_cast %16 : vector<8x8x132xf32> to vector<64x132xf32>
    %c2_17 = arith.constant 2 : index
    %c0_18 = arith.constant 0 : index
    %c0_19 = arith.constant 0 : index
    %18 = vector.load %arg2[%c2_17, %c0_18, %c0_19] : memref<28x132x128xf32, #tpu.memory_space<vmem>>, vector<1x132x128xf32>
    %19 = vector.shape_cast %18 : vector<1x132x128xf32> to vector<132x128xf32>
    %cst_20 = arith.constant dense<0.000000e+00> : vector<64x128xf32>
    %20 = tpu.matmul %17, %19, %cst_20 {dimension_numbers = #tpu.dot_dimension_numbers<[1], [0], [0], [1], [0, 0, 1, 1], [], []>} : vector<64x132xf32>, vector<132x128xf32>, vector<64x128xf32> -> vector<64x128xf32>
    %21 = arith.addf %14, %20 : vector<64x128xf32>
    %c0_21 = arith.constant 0 : index
    %c0_22 = arith.constant 0 : index
    %c3 = arith.constant 3 : index
    %c0_23 = arith.constant 0 : index
    %22 = vector.load %arg1[%c0_21, %c0_22, %c3, %c0_23] : memref<1x14x11x132xf32, #tpu.memory_space<vmem>>, vector<1x8x8x132xf32>
    %23 = vector.shape_cast %22 : vector<1x8x8x132xf32> to vector<8x8x132xf32>
    %24 = vector.shape_cast %23 : vector<8x8x132xf32> to vector<64x132xf32>
    %c3_24 = arith.constant 3 : index
    %c0_25 = arith.constant 0 : index
    %c0_26 = arith.constant 0 : index
    %25 = vector.load %arg2[%c3_24, %c0_25, %c0_26] : memref<28x132x128xf32, #tpu.memory_space<vmem>>, vector<1x132x128xf32>
    %26 = vector.shape_cast %25 : vector<1x132x128xf32> to vector<132x128xf32>
    %cst_27 = arith.constant dense<0.000000e+00> : vector<64x128xf32>
    %27 = tpu.matmul %24, %26, %cst_27 {dimension_numbers = #tpu.dot_dimension_numbers<[1], [0], [0], [1], [0, 0, 1, 1], [], []>} : vector<64x132xf32>, vector<132x128xf32>, vector<64x128xf32> -> vector<64x128xf32>
    %28 = arith.addf %21, %27 : vector<64x128xf32>
    %c0_28 = arith.constant 0 : index
    %c1_29 = arith.constant 1 : index
    %c0_30 = arith.constant 0 : index
    %c0_31 = arith.constant 0 : index
    %29 = vector.load %arg1[%c0_28, %c1_29, %c0_30, %c0_31] : memref<1x14x11x132xf32, #tpu.memory_space<vmem>>, vector<1x8x8x132xf32>
    %30 = vector.shape_cast %29 : vector<1x8x8x132xf32> to vector<8x8x132xf32>
    %31 = vector.shape_cast %30 : vector<8x8x132xf32> to vector<64x132xf32>
    %c4 = arith.constant 4 : index
    %c0_32 = arith.constant 0 : index
    %c0_33 = arith.constant 0 : index
    %32 = vector.load %arg2[%c4, %c0_32, %c0_33] : memref<28x132x128xf32, #tpu.memory_space<vmem>>, vector<1x132x128xf32>
    %33 = vector.shape_cast %32 : vector<1x132x128xf32> to vector<132x128xf32>
    %cst_34 = arith.constant dense<0.000000e+00> : vector<64x128xf32>
    %34 = tpu.matmul %31, %33, %cst_34 {dimension_numbers = #tpu.dot_dimension_numbers<[1], [0], [0], [1], [0, 0, 1, 1], [], []>} : vector<64x132xf32>, vector<132x128xf32>, vector<64x128xf32> -> vector<64x128xf32>
    %35 = arith.addf %28, %34 : vector<64x128xf32>
    %c0_35 = arith.constant 0 : index
    %c1_36 = arith.constant 1 : index
    %c1_37 = arith.constant 1 : index
    %c0_38 = arith.constant 0 : index
    %36 = vector.load %arg1[%c0_35, %c1_36, %c1_37, %c0_38] : memref<1x14x11x132xf32, #tpu.memory_space<vmem>>, vector<1x8x8x132xf32>
    %37 = vector.shape_cast %36 : vector<1x8x8x132xf32> to vector<8x8x132xf32>
    %38 = vector.shape_cast %37 : vector<8x8x132xf32> to vector<64x132xf32>
    %c5 = arith.constant 5 : index
    %c0_39 = arith.constant 0 : index
    %c0_40 = arith.constant 0 : index
    %39 = vector.load %arg2[%c5, %c0_39, %c0_40] : memref<28x132x128xf32, #tpu.memory_space<vmem>>, vector<1x132x128xf32>
    %40 = vector.shape_cast %39 : vector<1x132x128xf32> to vector<132x128xf32>
    %cst_41 = arith.constant dense<0.000000e+00> : vector<64x128xf32>
    %41 = tpu.matmul %38, %40, %cst_41 {dimension_numbers = #tpu.dot_dimension_numbers<[1], [0], [0], [1], [0, 0, 1, 1], [], []>} : vector<64x132xf32>, vector<132x128xf32>, vector<64x128xf32> -> vector<64x128xf32>
    %42 = arith.addf %35, %41 : vector<64x128xf32>
    %c0_42 = arith.constant 0 : index
    %c1_43 = arith.constant 1 : index
    %c2_44 = arith.constant 2 : index
    %c0_45 = arith.constant 0 : index
    %43 = vector.load %arg1[%c0_42, %c1_43, %c2_44, %c0_45] : memref<1x14x11x132xf32, #tpu.memory_space<vmem>>, vector<1x8x8x132xf32>
    %44 = vector.shape_cast %43 : vector<1x8x8x132xf32> to vector<8x8x132xf32>
    %45 = vector.shape_cast %44 : vector<8x8x132xf32> to vector<64x132xf32>
    %c6 = arith.constant 6 : index
    %c0_46 = arith.constant 0 : index
    %c0_47 = arith.constant 0 : index
    %46 = vector.load %arg2[%c6, %c0_46, %c0_47] : memref<28x132x128xf32, #tpu.memory_space<vmem>>, vector<1x132x128xf32>
    %47 = vector.shape_cast %46 : vector<1x132x128xf32> to vector<132x128xf32>
    %cst_48 = arith.constant dense<0.000000e+00> : vector<64x128xf32>
    %48 = tpu.matmul %45, %47, %cst_48 {dimension_numbers = #tpu.dot_dimension_numbers<[1], [0], [0], [1], [0, 0, 1, 1], [], []>} : vector<64x132xf32>, vector<132x128xf32>, vector<64x128xf32> -> vector<64x128xf32>
    %49 = arith.addf %42, %48 : vector<64x128xf32>
    %c0_49 = arith.constant 0 : index
    %c1_50 = arith.constant 1 : index
    %c3_51 = arith.constant 3 : index
    %c0_52 = arith.constant 0 : index
    %50 = vector.load %arg1[%c0_49, %c1_50, %c3_51, %c0_52] : memref<1x14x11x132xf32, #tpu.memory_space<vmem>>, vector<1x8x8x132xf32>
    %51 = vector.shape_cast %50 : vector<1x8x8x132xf32> to vector<8x8x132xf32>
    %52 = vector.shape_cast %51 : vector<8x8x132xf32> to vector<64x132xf32>
    %c7 = arith.constant 7 : index
    %c0_53 = arith.constant 0 : index
    %c0_54 = arith.constant 0 : index
    %53 = vector.load %arg2[%c7, %c0_53, %c0_54] : memref<28x132x128xf32, #tpu.memory_space<vmem>>, vector<1x132x128xf32>
    %54 = vector.shape_cast %53 : vector<1x132x128xf32> to vector<132x128xf32>
    %cst_55 = arith.constant dense<0.000000e+00> : vector<64x128xf32>
    %55 = tpu.matmul %52, %54, %cst_55 {dimension_numbers = #tpu.dot_dimension_numbers<[1], [0], [0], [1], [0, 0, 1, 1], [], []>} : vector<64x132xf32>, vector<132x128xf32>, vector<64x128xf32> -> vector<64x128xf32>
    %56 = arith.addf %49, %55 : vector<64x128xf32>
    %c0_56 = arith.constant 0 : index
    %c2_57 = arith.constant 2 : index
    %c0_58 = arith.constant 0 : index
    %c0_59 = arith.constant 0 : index
    %57 = vector.load %arg1[%c0_56, %c2_57, %c0_58, %c0_59] : memref<1x14x11x132xf32, #tpu.memory_space<vmem>>, vector<1x8x8x132xf32>
    %58 = vector.shape_cast %57 : vector<1x8x8x132xf32> to vector<8x8x132xf32>
    %59 = vector.shape_cast %58 : vector<8x8x132xf32> to vector<64x132xf32>
    %c8 = arith.constant 8 : index
    %c0_60 = arith.constant 0 : index
    %c0_61 = arith.constant 0 : index
    %60 = vector.load %arg2[%c8, %c0_60, %c0_61] : memref<28x132x128xf32, #tpu.memory_space<vmem>>, vector<1x132x128xf32>
    %61 = vector.shape_cast %60 : vector<1x132x128xf32> to vector<132x128xf32>
    %cst_62 = arith.constant dense<0.000000e+00> : vector<64x128xf32>
    %62 = tpu.matmul %59, %61, %cst_62 {dimension_numbers = #tpu.dot_dimension_numbers<[1], [0], [0], [1], [0, 0, 1, 1], [], []>} : vector<64x132xf32>, vector<132x128xf32>, vector<64x128xf32> -> vector<64x128xf32>
    %63 = arith.addf %56, %62 : vector<64x128xf32>
    %c0_63 = arith.constant 0 : index
    %c2_64 = arith.constant 2 : index
    %c1_65 = arith.constant 1 : index
    %c0_66 = arith.constant 0 : index
    %64 = vector.load %arg1[%c0_63, %c2_64, %c1_65, %c0_66] : memref<1x14x11x132xf32, #tpu.memory_space<vmem>>, vector<1x8x8x132xf32>
    %65 = vector.shape_cast %64 : vector<1x8x8x132xf32> to vector<8x8x132xf32>
    %66 = vector.shape_cast %65 : vector<8x8x132xf32> to vector<64x132xf32>
    %c9 = arith.constant 9 : index
    %c0_67 = arith.constant 0 : index
    %c0_68 = arith.constant 0 : index
    %67 = vector.load %arg2[%c9, %c0_67, %c0_68] : memref<28x132x128xf32, #tpu.memory_space<vmem>>, vector<1x132x128xf32>
    %68 = vector.shape_cast %67 : vector<1x132x128xf32> to vector<132x128xf32>
    %cst_69 = arith.constant dense<0.000000e+00> : vector<64x128xf32>
    %69 = tpu.matmul %66, %68, %cst_69 {dimension_numbers = #tpu.dot_dimension_numbers<[1], [0], [0], [1], [0, 0, 1, 1], [], []>} : vector<64x132xf32>, vector<132x128xf32>, vector<64x128xf32> -> vector<64x128xf32>
    %70 = arith.addf %63, %69 : vector<64x128xf32>
    %c0_70 = arith.constant 0 : index
    %c2_71 = arith.constant 2 : index
    %c2_72 = arith.constant 2 : index
    %c0_73 = arith.constant 0 : index
    %71 = vector.load %arg1[%c0_70, %c2_71, %c2_72, %c0_73] : memref<1x14x11x132xf32, #tpu.memory_space<vmem>>, vector<1x8x8x132xf32>
    %72 = vector.shape_cast %71 : vector<1x8x8x132xf32> to vector<8x8x132xf32>
    %73 = vector.shape_cast %72 : vector<8x8x132xf32> to vector<64x132xf32>
    %c10 = arith.constant 10 : index
    %c0_74 = arith.constant 0 : index
    %c0_75 = arith.constant 0 : index
    %74 = vector.load %arg2[%c10, %c0_74, %c0_75] : memref<28x132x128xf32, #tpu.memory_space<vmem>>, vector<1x132x128xf32>
    %75 = vector.shape_cast %74 : vector<1x132x128xf32> to vector<132x128xf32>
    %cst_76 = arith.constant dense<0.000000e+00> : vector<64x128xf32>
    %76 = tpu.matmul %73, %75, %cst_76 {dimension_numbers = #tpu.dot_dimension_numbers<[1], [0], [0], [1], [0, 0, 1, 1], [], []>} : vector<64x132xf32>, vector<132x128xf32>, vector<64x128xf32> -> vector<64x128xf32>
    %77 = arith.addf %70, %76 : vector<64x128xf32>
    %c0_77 = arith.constant 0 : index
    %c2_78 = arith.constant 2 : index
    %c3_79 = arith.constant 3 : index
    %c0_80 = arith.constant 0 : index
    %78 = vector.load %arg1[%c0_77, %c2_78, %c3_79, %c0_80] : memref<1x14x11x132xf32, #tpu.memory_space<vmem>>, vector<1x8x8x132xf32>
    %79 = vector.shape_cast %78 : vector<1x8x8x132xf32> to vector<8x8x132xf32>
    %80 = vector.shape_cast %79 : vector<8x8x132xf32> to vector<64x132xf32>
    %c11 = arith.constant 11 : index
    %c0_81 = arith.constant 0 : index
    %c0_82 = arith.constant 0 : index
    %81 = vector.load %arg2[%c11, %c0_81, %c0_82] : memref<28x132x128xf32, #tpu.memory_space<vmem>>, vector<1x132x128xf32>
    %82 = vector.shape_cast %81 : vector<1x132x128xf32> to vector<132x128xf32>
    %cst_83 = arith.constant dense<0.000000e+00> : vector<64x128xf32>
    %83 = tpu.matmul %80, %82, %cst_83 {dimension_numbers = #tpu.dot_dimension_numbers<[1], [0], [0], [1], [0, 0, 1, 1], [], []>} : vector<64x132xf32>, vector<132x128xf32>, vector<64x128xf32> -> vector<64x128xf32>
    %84 = arith.addf %77, %83 : vector<64x128xf32>
    %c0_84 = arith.constant 0 : index
    %c3_85 = arith.constant 3 : index
    %c0_86 = arith.constant 0 : index
    %c0_87 = arith.constant 0 : index
    %85 = vector.load %arg1[%c0_84, %c3_85, %c0_86, %c0_87] : memref<1x14x11x132xf32, #tpu.memory_space<vmem>>, vector<1x8x8x132xf32>
    %86 = vector.shape_cast %85 : vector<1x8x8x132xf32> to vector<8x8x132xf32>
    %87 = vector.shape_cast %86 : vector<8x8x132xf32> to vector<64x132xf32>
    %c12 = arith.constant 12 : index
    %c0_88 = arith.constant 0 : index
    %c0_89 = arith.constant 0 : index
    %88 = vector.load %arg2[%c12, %c0_88, %c0_89] : memref<28x132x128xf32, #tpu.memory_space<vmem>>, vector<1x132x128xf32>
    %89 = vector.shape_cast %88 : vector<1x132x128xf32> to vector<132x128xf32>
    %cst_90 = arith.constant dense<0.000000e+00> : vector<64x128xf32>
    %90 = tpu.matmul %87, %89, %cst_90 {dimension_numbers = #tpu.dot_dimension_numbers<[1], [0], [0], [1], [0, 0, 1, 1], [], []>} : vector<64x132xf32>, vector<132x128xf32>, vector<64x128xf32> -> vector<64x128xf32>
    %91 = arith.addf %84, %90 : vector<64x128xf32>
    %c0_91 = arith.constant 0 : index
    %c3_92 = arith.constant 3 : index
    %c1_93 = arith.constant 1 : index
    %c0_94 = arith.constant 0 : index
    %92 = vector.load %arg1[%c0_91, %c3_92, %c1_93, %c0_94] : memref<1x14x11x132xf32, #tpu.memory_space<vmem>>, vector<1x8x8x132xf32>
    %93 = vector.shape_cast %92 : vector<1x8x8x132xf32> to vector<8x8x132xf32>
    %94 = vector.shape_cast %93 : vector<8x8x132xf32> to vector<64x132xf32>
    %c13 = arith.constant 13 : index
    %c0_95 = arith.constant 0 : index
    %c0_96 = arith.constant 0 : index
    %95 = vector.load %arg2[%c13, %c0_95, %c0_96] : memref<28x132x128xf32, #tpu.memory_space<vmem>>, vector<1x132x128xf32>
    %96 = vector.shape_cast %95 : vector<1x132x128xf32> to vector<132x128xf32>
    %cst_97 = arith.constant dense<0.000000e+00> : vector<64x128xf32>
    %97 = tpu.matmul %94, %96, %cst_97 {dimension_numbers = #tpu.dot_dimension_numbers<[1], [0], [0], [1], [0, 0, 1, 1], [], []>} : vector<64x132xf32>, vector<132x128xf32>, vector<64x128xf32> -> vector<64x128xf32>
    %98 = arith.addf %91, %97 : vector<64x128xf32>
    %c0_98 = arith.constant 0 : index
    %c3_99 = arith.constant 3 : index
    %c2_100 = arith.constant 2 : index
    %c0_101 = arith.constant 0 : index
    %99 = vector.load %arg1[%c0_98, %c3_99, %c2_100, %c0_101] : memref<1x14x11x132xf32, #tpu.memory_space<vmem>>, vector<1x8x8x132xf32>
    %100 = vector.shape_cast %99 : vector<1x8x8x132xf32> to vector<8x8x132xf32>
    %101 = vector.shape_cast %100 : vector<8x8x132xf32> to vector<64x132xf32>
    %c14 = arith.constant 14 : index
    %c0_102 = arith.constant 0 : index
    %c0_103 = arith.constant 0 : index
    %102 = vector.load %arg2[%c14, %c0_102, %c0_103] : memref<28x132x128xf32, #tpu.memory_space<vmem>>, vector<1x132x128xf32>
    %103 = vector.shape_cast %102 : vector<1x132x128xf32> to vector<132x128xf32>
    %cst_104 = arith.constant dense<0.000000e+00> : vector<64x128xf32>
    %104 = tpu.matmul %101, %103, %cst_104 {dimension_numbers = #tpu.dot_dimension_numbers<[1], [0], [0], [1], [0, 0, 1, 1], [], []>} : vector<64x132xf32>, vector<132x128xf32>, vector<64x128xf32> -> vector<64x128xf32>
    %105 = arith.addf %98, %104 : vector<64x128xf32>
    %c0_105 = arith.constant 0 : index
    %c3_106 = arith.constant 3 : index
    %c3_107 = arith.constant 3 : index
    %c0_108 = arith.constant 0 : index
    %106 = vector.load %arg1[%c0_105, %c3_106, %c3_107, %c0_108] : memref<1x14x11x132xf32, #tpu.memory_space<vmem>>, vector<1x8x8x132xf32>
    %107 = vector.shape_cast %106 : vector<1x8x8x132xf32> to vector<8x8x132xf32>
    %108 = vector.shape_cast %107 : vector<8x8x132xf32> to vector<64x132xf32>
    %c15 = arith.constant 15 : index
    %c0_109 = arith.constant 0 : index
    %c0_110 = arith.constant 0 : index
    %109 = vector.load %arg2[%c15, %c0_109, %c0_110] : memref<28x132x128xf32, #tpu.memory_space<vmem>>, vector<1x132x128xf32>
    %110 = vector.shape_cast %109 : vector<1x132x128xf32> to vector<132x128xf32>
    %cst_111 = arith.constant dense<0.000000e+00> : vector<64x128xf32>
    %111 = tpu.matmul %108, %110, %cst_111 {dimension_numbers = #tpu.dot_dimension_numbers<[1], [0], [0], [1], [0, 0, 1, 1], [], []>} : vector<64x132xf32>, vector<132x128xf32>, vector<64x128xf32> -> vector<64x128xf32>
    %112 = arith.addf %105, %111 : vector<64x128xf32>
    %c0_112 = arith.constant 0 : index
    %c4_113 = arith.constant 4 : index
    %c0_114 = arith.constant 0 : index
    %c0_115 = arith.constant 0 : index
    %113 = vector.load %arg1[%c0_112, %c4_113, %c0_114, %c0_115] : memref<1x14x11x132xf32, #tpu.memory_space<vmem>>, vector<1x8x8x132xf32>
    %114 = vector.shape_cast %113 : vector<1x8x8x132xf32> to vector<8x8x132xf32>
    %115 = vector.shape_cast %114 : vector<8x8x132xf32> to vector<64x132xf32>
    %c16 = arith.constant 16 : index
    %c0_116 = arith.constant 0 : index
    %c0_117 = arith.constant 0 : index
    %116 = vector.load %arg2[%c16, %c0_116, %c0_117] : memref<28x132x128xf32, #tpu.memory_space<vmem>>, vector<1x132x128xf32>
    %117 = vector.shape_cast %116 : vector<1x132x128xf32> to vector<132x128xf32>
    %cst_118 = arith.constant dense<0.000000e+00> : vector<64x128xf32>
    %118 = tpu.matmul %115, %117, %cst_118 {dimension_numbers = #tpu.dot_dimension_numbers<[1], [0], [0], [1], [0, 0, 1, 1], [], []>} : vector<64x132xf32>, vector<132x128xf32>, vector<64x128xf32> -> vector<64x128xf32>
    %119 = arith.addf %112, %118 : vector<64x128xf32>
    %c0_119 = arith.constant 0 : index
    %c4_120 = arith.constant 4 : index
    %c1_121 = arith.constant 1 : index
    %c0_122 = arith.constant 0 : index
    %120 = vector.load %arg1[%c0_119, %c4_120, %c1_121, %c0_122] : memref<1x14x11x132xf32, #tpu.memory_space<vmem>>, vector<1x8x8x132xf32>
    %121 = vector.shape_cast %120 : vector<1x8x8x132xf32> to vector<8x8x132xf32>
    %122 = vector.shape_cast %121 : vector<8x8x132xf32> to vector<64x132xf32>
    %c17 = arith.constant 17 : index
    %c0_123 = arith.constant 0 : index
    %c0_124 = arith.constant 0 : index
    %123 = vector.load %arg2[%c17, %c0_123, %c0_124] : memref<28x132x128xf32, #tpu.memory_space<vmem>>, vector<1x132x128xf32>
    %124 = vector.shape_cast %123 : vector<1x132x128xf32> to vector<132x128xf32>
    %cst_125 = arith.constant dense<0.000000e+00> : vector<64x128xf32>
    %125 = tpu.matmul %122, %124, %cst_125 {dimension_numbers = #tpu.dot_dimension_numbers<[1], [0], [0], [1], [0, 0, 1, 1], [], []>} : vector<64x132xf32>, vector<132x128xf32>, vector<64x128xf32> -> vector<64x128xf32>
    %126 = arith.addf %119, %125 : vector<64x128xf32>
    %c0_126 = arith.constant 0 : index
    %c4_127 = arith.constant 4 : index
    %c2_128 = arith.constant 2 : index
    %c0_129 = arith.constant 0 : index
    %127 = vector.load %arg1[%c0_126, %c4_127, %c2_128, %c0_129] : memref<1x14x11x132xf32, #tpu.memory_space<vmem>>, vector<1x8x8x132xf32>
    %128 = vector.shape_cast %127 : vector<1x8x8x132xf32> to vector<8x8x132xf32>
    %129 = vector.shape_cast %128 : vector<8x8x132xf32> to vector<64x132xf32>
    %c18 = arith.constant 18 : index
    %c0_130 = arith.constant 0 : index
    %c0_131 = arith.constant 0 : index
    %130 = vector.load %arg2[%c18, %c0_130, %c0_131] : memref<28x132x128xf32, #tpu.memory_space<vmem>>, vector<1x132x128xf32>
    %131 = vector.shape_cast %130 : vector<1x132x128xf32> to vector<132x128xf32>
    %cst_132 = arith.constant dense<0.000000e+00> : vector<64x128xf32>
    %132 = tpu.matmul %129, %131, %cst_132 {dimension_numbers = #tpu.dot_dimension_numbers<[1], [0], [0], [1], [0, 0, 1, 1], [], []>} : vector<64x132xf32>, vector<132x128xf32>, vector<64x128xf32> -> vector<64x128xf32>
    %133 = arith.addf %126, %132 : vector<64x128xf32>
    %c0_133 = arith.constant 0 : index
    %c4_134 = arith.constant 4 : index
    %c3_135 = arith.constant 3 : index
    %c0_136 = arith.constant 0 : index
    %134 = vector.load %arg1[%c0_133, %c4_134, %c3_135, %c0_136] : memref<1x14x11x132xf32, #tpu.memory_space<vmem>>, vector<1x8x8x132xf32>
    %135 = vector.shape_cast %134 : vector<1x8x8x132xf32> to vector<8x8x132xf32>
    %136 = vector.shape_cast %135 : vector<8x8x132xf32> to vector<64x132xf32>
    %c19 = arith.constant 19 : index
    %c0_137 = arith.constant 0 : index
    %c0_138 = arith.constant 0 : index
    %137 = vector.load %arg2[%c19, %c0_137, %c0_138] : memref<28x132x128xf32, #tpu.memory_space<vmem>>, vector<1x132x128xf32>
    %138 = vector.shape_cast %137 : vector<1x132x128xf32> to vector<132x128xf32>
    %cst_139 = arith.constant dense<0.000000e+00> : vector<64x128xf32>
    %139 = tpu.matmul %136, %138, %cst_139 {dimension_numbers = #tpu.dot_dimension_numbers<[1], [0], [0], [1], [0, 0, 1, 1], [], []>} : vector<64x132xf32>, vector<132x128xf32>, vector<64x128xf32> -> vector<64x128xf32>
    %140 = arith.addf %133, %139 : vector<64x128xf32>
    %c0_140 = arith.constant 0 : index
    %c5_141 = arith.constant 5 : index
    %c0_142 = arith.constant 0 : index
    %c0_143 = arith.constant 0 : index
    %141 = vector.load %arg1[%c0_140, %c5_141, %c0_142, %c0_143] : memref<1x14x11x132xf32, #tpu.memory_space<vmem>>, vector<1x8x8x132xf32>
    %142 = vector.shape_cast %141 : vector<1x8x8x132xf32> to vector<8x8x132xf32>
    %143 = vector.shape_cast %142 : vector<8x8x132xf32> to vector<64x132xf32>
    %c20 = arith.constant 20 : index
    %c0_144 = arith.constant 0 : index
    %c0_145 = arith.constant 0 : index
    %144 = vector.load %arg2[%c20, %c0_144, %c0_145] : memref<28x132x128xf32, #tpu.memory_space<vmem>>, vector<1x132x128xf32>
    %145 = vector.shape_cast %144 : vector<1x132x128xf32> to vector<132x128xf32>
    %cst_146 = arith.constant dense<0.000000e+00> : vector<64x128xf32>
    %146 = tpu.matmul %143, %145, %cst_146 {dimension_numbers = #tpu.dot_dimension_numbers<[1], [0], [0], [1], [0, 0, 1, 1], [], []>} : vector<64x132xf32>, vector<132x128xf32>, vector<64x128xf32> -> vector<64x128xf32>
    %147 = arith.addf %140, %146 : vector<64x128xf32>
    %c0_147 = arith.constant 0 : index
    %c5_148 = arith.constant 5 : index
    %c1_149 = arith.constant 1 : index
    %c0_150 = arith.constant 0 : index
    %148 = vector.load %arg1[%c0_147, %c5_148, %c1_149, %c0_150] : memref<1x14x11x132xf32, #tpu.memory_space<vmem>>, vector<1x8x8x132xf32>
    %149 = vector.shape_cast %148 : vector<1x8x8x132xf32> to vector<8x8x132xf32>
    %150 = vector.shape_cast %149 : vector<8x8x132xf32> to vector<64x132xf32>
    %c21 = arith.constant 21 : index
    %c0_151 = arith.constant 0 : index
    %c0_152 = arith.constant 0 : index
    %151 = vector.load %arg2[%c21, %c0_151, %c0_152] : memref<28x132x128xf32, #tpu.memory_space<vmem>>, vector<1x132x128xf32>
    %152 = vector.shape_cast %151 : vector<1x132x128xf32> to vector<132x128xf32>
    %cst_153 = arith.constant dense<0.000000e+00> : vector<64x128xf32>
    %153 = tpu.matmul %150, %152, %cst_153 {dimension_numbers = #tpu.dot_dimension_numbers<[1], [0], [0], [1], [0, 0, 1, 1], [], []>} : vector<64x132xf32>, vector<132x128xf32>, vector<64x128xf32> -> vector<64x128xf32>
    %154 = arith.addf %147, %153 : vector<64x128xf32>
    %c0_154 = arith.constant 0 : index
    %c5_155 = arith.constant 5 : index
    %c2_156 = arith.constant 2 : index
    %c0_157 = arith.constant 0 : index
    %155 = vector.load %arg1[%c0_154, %c5_155, %c2_156, %c0_157] : memref<1x14x11x132xf32, #tpu.memory_space<vmem>>, vector<1x8x8x132xf32>
    %156 = vector.shape_cast %155 : vector<1x8x8x132xf32> to vector<8x8x132xf32>
    %157 = vector.shape_cast %156 : vector<8x8x132xf32> to vector<64x132xf32>
    %c22 = arith.constant 22 : index
    %c0_158 = arith.constant 0 : index
    %c0_159 = arith.constant 0 : index
    %158 = vector.load %arg2[%c22, %c0_158, %c0_159] : memref<28x132x128xf32, #tpu.memory_space<vmem>>, vector<1x132x128xf32>
    %159 = vector.shape_cast %158 : vector<1x132x128xf32> to vector<132x128xf32>
    %cst_160 = arith.constant dense<0.000000e+00> : vector<64x128xf32>
    %160 = tpu.matmul %157, %159, %cst_160 {dimension_numbers = #tpu.dot_dimension_numbers<[1], [0], [0], [1], [0, 0, 1, 1], [], []>} : vector<64x132xf32>, vector<132x128xf32>, vector<64x128xf32> -> vector<64x128xf32>
    %161 = arith.addf %154, %160 : vector<64x128xf32>
    %c0_161 = arith.constant 0 : index
    %c5_162 = arith.constant 5 : index
    %c3_163 = arith.constant 3 : index
    %c0_164 = arith.constant 0 : index
    %162 = vector.load %arg1[%c0_161, %c5_162, %c3_163, %c0_164] : memref<1x14x11x132xf32, #tpu.memory_space<vmem>>, vector<1x8x8x132xf32>
    %163 = vector.shape_cast %162 : vector<1x8x8x132xf32> to vector<8x8x132xf32>
    %164 = vector.shape_cast %163 : vector<8x8x132xf32> to vector<64x132xf32>
    %c23 = arith.constant 23 : index
    %c0_165 = arith.constant 0 : index
    %c0_166 = arith.constant 0 : index
    %165 = vector.load %arg2[%c23, %c0_165, %c0_166] : memref<28x132x128xf32, #tpu.memory_space<vmem>>, vector<1x132x128xf32>
    %166 = vector.shape_cast %165 : vector<1x132x128xf32> to vector<132x128xf32>
    %cst_167 = arith.constant dense<0.000000e+00> : vector<64x128xf32>
    %167 = tpu.matmul %164, %166, %cst_167 {dimension_numbers = #tpu.dot_dimension_numbers<[1], [0], [0], [1], [0, 0, 1, 1], [], []>} : vector<64x132xf32>, vector<132x128xf32>, vector<64x128xf32> -> vector<64x128xf32>
    %168 = arith.addf %161, %167 : vector<64x128xf32>
    %c0_168 = arith.constant 0 : index
    %c6_169 = arith.constant 6 : index
    %c0_170 = arith.constant 0 : index
    %c0_171 = arith.constant 0 : index
    %169 = vector.load %arg1[%c0_168, %c6_169, %c0_170, %c0_171] : memref<1x14x11x132xf32, #tpu.memory_space<vmem>>, vector<1x8x8x132xf32>
    %170 = vector.shape_cast %169 : vector<1x8x8x132xf32> to vector<8x8x132xf32>
    %171 = vector.shape_cast %170 : vector<8x8x132xf32> to vector<64x132xf32>
    %c24 = arith.constant 24 : index
    %c0_172 = arith.constant 0 : index
    %c0_173 = arith.constant 0 : index
    %172 = vector.load %arg2[%c24, %c0_172, %c0_173] : memref<28x132x128xf32, #tpu.memory_space<vmem>>, vector<1x132x128xf32>
    %173 = vector.shape_cast %172 : vector<1x132x128xf32> to vector<132x128xf32>
    %cst_174 = arith.constant dense<0.000000e+00> : vector<64x128xf32>
    %174 = tpu.matmul %171, %173, %cst_174 {dimension_numbers = #tpu.dot_dimension_numbers<[1], [0], [0], [1], [0, 0, 1, 1], [], []>} : vector<64x132xf32>, vector<132x128xf32>, vector<64x128xf32> -> vector<64x128xf32>
    %175 = arith.addf %168, %174 : vector<64x128xf32>
    %c0_175 = arith.constant 0 : index
    %c6_176 = arith.constant 6 : index
    %c1_177 = arith.constant 1 : index
    %c0_178 = arith.constant 0 : index
    %176 = vector.load %arg1[%c0_175, %c6_176, %c1_177, %c0_178] : memref<1x14x11x132xf32, #tpu.memory_space<vmem>>, vector<1x8x8x132xf32>
    %177 = vector.shape_cast %176 : vector<1x8x8x132xf32> to vector<8x8x132xf32>
    %178 = vector.shape_cast %177 : vector<8x8x132xf32> to vector<64x132xf32>
    %c25 = arith.constant 25 : index
    %c0_179 = arith.constant 0 : index
    %c0_180 = arith.constant 0 : index
    %179 = vector.load %arg2[%c25, %c0_179, %c0_180] : memref<28x132x128xf32, #tpu.memory_space<vmem>>, vector<1x132x128xf32>
    %180 = vector.shape_cast %179 : vector<1x132x128xf32> to vector<132x128xf32>
    %cst_181 = arith.constant dense<0.000000e+00> : vector<64x128xf32>
    %181 = tpu.matmul %178, %180, %cst_181 {dimension_numbers = #tpu.dot_dimension_numbers<[1], [0], [0], [1], [0, 0, 1, 1], [], []>} : vector<64x132xf32>, vector<132x128xf32>, vector<64x128xf32> -> vector<64x128xf32>
    %182 = arith.addf %175, %181 : vector<64x128xf32>
    %c0_182 = arith.constant 0 : index
    %c6_183 = arith.constant 6 : index
    %c2_184 = arith.constant 2 : index
    %c0_185 = arith.constant 0 : index
    %183 = vector.load %arg1[%c0_182, %c6_183, %c2_184, %c0_185] : memref<1x14x11x132xf32, #tpu.memory_space<vmem>>, vector<1x8x8x132xf32>
    %184 = vector.shape_cast %183 : vector<1x8x8x132xf32> to vector<8x8x132xf32>
    %185 = vector.shape_cast %184 : vector<8x8x132xf32> to vector<64x132xf32>
    %c26 = arith.constant 26 : index
    %c0_186 = arith.constant 0 : index
    %c0_187 = arith.constant 0 : index
    %186 = vector.load %arg2[%c26, %c0_186, %c0_187] : memref<28x132x128xf32, #tpu.memory_space<vmem>>, vector<1x132x128xf32>
    %187 = vector.shape_cast %186 : vector<1x132x128xf32> to vector<132x128xf32>
    %cst_188 = arith.constant dense<0.000000e+00> : vector<64x128xf32>
    %188 = tpu.matmul %185, %187, %cst_188 {dimension_numbers = #tpu.dot_dimension_numbers<[1], [0], [0], [1], [0, 0, 1, 1], [], []>} : vector<64x132xf32>, vector<132x128xf32>, vector<64x128xf32> -> vector<64x128xf32>
    %189 = arith.addf %182, %188 : vector<64x128xf32>
    %c0_189 = arith.constant 0 : index
    %c6_190 = arith.constant 6 : index
    %c3_191 = arith.constant 3 : index
    %c0_192 = arith.constant 0 : index
    %190 = vector.load %arg1[%c0_189, %c6_190, %c3_191, %c0_192] : memref<1x14x11x132xf32, #tpu.memory_space<vmem>>, vector<1x8x8x132xf32>
    %191 = vector.shape_cast %190 : vector<1x8x8x132xf32> to vector<8x8x132xf32>
    %192 = vector.shape_cast %191 : vector<8x8x132xf32> to vector<64x132xf32>
    %c27 = arith.constant 27 : index
    %c0_193 = arith.constant 0 : index
    %c0_194 = arith.constant 0 : index
    %193 = vector.load %arg2[%c27, %c0_193, %c0_194] : memref<28x132x128xf32, #tpu.memory_space<vmem>>, vector<1x132x128xf32>
    %194 = vector.shape_cast %193 : vector<1x132x128xf32> to vector<132x128xf32>
    %cst_195 = arith.constant dense<0.000000e+00> : vector<64x128xf32>
    %195 = tpu.matmul %192, %194, %cst_195 {dimension_numbers = #tpu.dot_dimension_numbers<[1], [0], [0], [1], [0, 0, 1, 1], [], []>} : vector<64x132xf32>, vector<132x128xf32>, vector<64x128xf32> -> vector<64x128xf32>
    %196 = arith.addf %189, %195 : vector<64x128xf32>
    %c0_196 = arith.constant 0 : index
    %c0_197 = arith.constant 0 : index
    %197 = vector.load %arg3[%c0_196, %c0_197] : memref<1x128xf32, #tpu.memory_space<vmem>>, vector<1x128xf32>
    %198 = vector.broadcast %197 : vector<1x128xf32> to vector<64x128xf32>
    %199 = arith.addf %196, %198 : vector<64x128xf32>
    %cst_198 = arith.constant 0.000000e+00 : f32
    %200 = vector.broadcast %cst_198 : f32 to vector<64x128xf32>
    %201 = arith.maximumf %199, %200 : vector<64x128xf32>
    %202 = vector.shape_cast %201 : vector<64x128xf32> to vector<8x8x128xf32>
    %c0_199 = arith.constant 0 : index
    %c0_200 = arith.constant 0 : index
    %c0_201 = arith.constant 0 : index
    %c0_202 = arith.constant 0 : index
    %203 = vector.load %arg4[%c0_199, %c0_200, %c0_201, %c0_202] : memref<1x8x8x128xf32, #tpu.memory_space<vmem>>, vector<1x8x8x128xf32>
    %204 = vector.shape_cast %203 : vector<1x8x8x128xf32> to vector<8x8x128xf32>
    %205 = vector.shape_cast %202 : vector<8x8x128xf32> to vector<1x8x8x128xf32>
    tpu.vector_store %arg4[%c0_199, %c0_200, %c0_201, %c0_202], %205 {strides = array<i32>} : memref<1x8x8x128xf32, #tpu.memory_space<vmem>>, vector<1x8x8x128xf32>,
    return
  }
  func.func @transform_0(%arg0: i32) -> (i32, i32, i32, i32) {
    %c0_i32 = arith.constant 0 : i32
    %c0_i32_0 = arith.constant 0 : i32
    %c0_i32_1 = arith.constant 0 : i32
    %c0_i32_2 = arith.constant 0 : i32
    return %arg0, %c0_i32, %c0_i32_0, %c0_i32_1 : i32, i32, i32, i32
  }
  func.func @transform_1(%arg0: i32) -> (i32, i32, i32) {
    %c0_i32 = arith.constant 0 : i32
    %c0_i32_0 = arith.constant 0 : i32
    %c0_i32_1 = arith.constant 0 : i32
    %c0_i32_2 = arith.constant 0 : i32
    return %c0_i32, %c0_i32_0, %c0_i32_1 : i32, i32, i32
  }
  func.func @transform_2(%arg0: i32) -> (i32, i32) {
    %c0_i32 = arith.constant 0 : i32
    %c0_i32_0 = arith.constant 0 : i32
    %c0_i32_1 = arith.constant 0 : i32
    return %c0_i32, %c0_i32_0 : i32, i32
  }
  func.func @transform_3(%arg0: i32) -> (i32, i32, i32, i32) {
    %c0_i32 = arith.constant 0 : i32
    %c0_i32_0 = arith.constant 0 : i32
    %c0_i32_1 = arith.constant 0 : i32
    %c0_i32_2 = arith.constant 0 : i32
    return %arg0, %c0_i32, %c0_i32_0, %c0_i32_1 : i32, i32, i32, i32
  }
}

</mosaic_0001>

<llo_original>
// kernel: tpu_custom_call.1
$region0: #{tpu_custom_call.1}
  #allocation0 [shape = 'u32[]', space=smem, size = 0x4, offset = 0x4, fixed_abs, tag = 'smem constant byte address 0x4 - core index']
  #allocation1 [shape = 'u32[144,128]{1,0:T(1,128)}', space=vmem, size = 0x12000, scoped, tag = 'internal scratch']
  %s0 = inlined_call_operand.vmem [shape: f32[2,14,11,132], index: 0, kind: input, shape index: {}]
  %s1 = inlined_call_operand.hbm [shape: f32[28,132,128], index: 1, kind: input, shape index: {}]
  %s2 = inlined_call_operand.hbm [shape: f32[1,128], index: 2, kind: input, shape index: {}]
  %s3 = inlined_call_operand.hbm [shape: f32[2,8,8,128], index: 3, kind: output, shape index: {}]
  %s4 = sld [smem:[#allocation0]]
  $region53: #{tpu_custom_call.1} parent=0
    _
  %s6 = ssub.s32 1, %s4
  %s7 = scalar_select 0, %s6, %s4
  $region1: #{tpu_custom_call.1} parent=0
    #allocation2 [shape = 'u8[1949696]{0}', space=vmem, size = 0x1dc000, scoped, tag = 'input window, operand 1, single buffered']
    #allocation3 [shape = 's32[2]{0}', space=sflag, size = 0x8, scoped, tag = 'scoped memory for tpu_custom_call.1']
    #allocation4 [shape = 's32[2]{0}', space=sflag, size = 0x8, scoped, tag = 'scoped memory for tpu_custom_call.1']
    #allocation5 [shape = 'u8[512]{0}', space=vmem, size = 0x400, scoped, tag = 'input window, operand 2, single buffered']
    #allocation6 [shape = 's32[1]{0}', space=sflag, size = 0x4, scoped, tag = 'scoped memory for tpu_custom_call.1']
    #allocation7 [shape = 'u8[65536]{0}', space=vmem, size = 0x10000, scoped, tag = 'output window, operand 0']
    %8 = vsyncpa [#allocation3], 0
    %9 = vsyncpa [#allocation6], 0
    %10 = vsyncpa [#allocation4], 0
    %s11 = scalar_lea.sflag [#allocation4], 1
    %12 = vsyncpa %s11, 0
    loop: start=0, step=1, limit=4
    $region2: #{tpu_custom_call.1} parent=1 // loop_pre_header
      _
    $region3: #{tpu_custom_call.1} parent=1 // loop_header
      %s14 = sphi 0, %s18
      %p15 = scmp.ge.s32.totalorder %s14, 4
      %s24 = sphi 0, %s26
      %s27 = sphi 0, %s24
      %s28 = sphi 0, %s27
      %s44 = sphi 0, %s28
      %s48 = sphi 0, %s48
      %s50 = sphi 0, %s48
      %s51 = sphi 0, %s50
      %s65 = sphi 0, %s51
      %s69 = sphi 0, %s69
      %s71 = sphi 0, %s69
      %s72 = sphi 0, %s71
      %s86 = sphi 0, %s72
      %s92 = sphi 0, %s94
      %s95 = sphi 0, %s92
      %s96 = sphi 0, %s95
      %s112 = sphi 0, %s96
    $region4: #{tpu_custom_call.1} parent=1 // loop_header_branch
      %17 = sbr.rel (%p15) target = $region8
    $region5: #{tpu_custom_call.1} parent=1 // loop_body
      %s19 = ssub.s32 %s14, 1
      %s20 = ssub.s32 %s14, 2
      %s21 = sadd.s32 %s14, 1
      %s22 = ssub.s32 %s14, %s21
      %p23 = scmp.eq.s32.totalorder %s22, 0
      %s25 = sadd.s32 %s24, 1
      %s26 = scalar_select %p23, %s24, %s25
      %p29 = pneg %p23
      %p30 = scmp.eq.s32.totalorder %s14, 1
      %p31 = por %p29, %p30
      %p32 = scmp.ne.s32.totalorder %s24, %s27
      %p33 = scmp.eq.s32.totalorder %s14, 0
      %p34 = por %p32, %p33
      %p35 = scmp.ne.s32.totalorder %s24, %s27
      %p36 = scmp.eq.s32.totalorder %s19, 1
      %p37 = por %p35, %p36
      %p38 = scmp.ne.s32.totalorder %s27, %s28
      %p39 = scmp.eq.s32.totalorder %s19, 0
      %p40 = por %p38, %p39
      %p41 = scmp.ne.s32.totalorder %s27, %s28
      %p42 = scmp.eq.s32.totalorder %s20, 1
      %p43 = por %p41, %p42
      %p45 = scmp.ne.s32.totalorder %s28, %s44
      %p46 = scmp.eq.s32.totalorder %s20, 0
      %p47 = por %p45, %p46
      %s49 = sadd.s32 %s48, 1
      %p52 = scmp.eq.s32.totalorder %s14, 1
      %p53 = scmp.ne.s32.totalorder %s48, %s50
      %p54 = scmp.eq.s32.totalorder %s14, 0
      %p55 = por %p53, %p54
      %p56 = scmp.ne.s32.totalorder %s48, %s50
      %p57 = scmp.eq.s32.totalorder %s19, 1
      %p58 = por %p56, %p57
      %p59 = scmp.ne.s32.totalorder %s50, %s51
      %p60 = scmp.eq.s32.totalorder %s19, 0
      %p61 = por %p59, %p60
      %p62 = scmp.ne.s32.totalorder %s50, %s51
      %p63 = scmp.eq.s32.totalorder %s20, 1
      %p64 = por %p62, %p63
      %p66 = scmp.ne.s32.totalorder %s51, %s65
      %p67 = scmp.eq.s32.totalorder %s20, 0
      %p68 = por %p66, %p67
      %s70 = sadd.s32 %s69, 1
      %p73 = scmp.eq.s32.totalorder %s14, 1
      %p74 = scmp.ne.s32.totalorder %s69, %s71
      %p75 = scmp.eq.s32.totalorder %s14, 0
      %p76 = por %p74, %p75
      %p77 = scmp.ne.s32.totalorder %s69, %s71
      %p78 = scmp.eq.s32.totalorder %s19, 1
      %p79 = por %p77, %p78
      %p80 = scmp.ne.s32.totalorder %s71, %s72
      %p81 = scmp.eq.s32.totalorder %s19, 0
      %p82 = por %p80, %p81
      %p83 = scmp.ne.s32.totalorder %s71, %s72
      %p84 = scmp.eq.s32.totalorder %s20, 1
      %p85 = por %p83, %p84
      %p87 = scmp.ne.s32.totalorder %s72, %s86
      %p88 = scmp.eq.s32.totalorder %s20, 0
      %p89 = por %p87, %p88
      %s90 = ssub.s32 %s14, %s21
      %p91 = scmp.eq.s32.totalorder %s90, 0
      %s93 = sadd.s32 %s92, 1
      %s94 = scalar_select %p91, %s92, %s93
      %p97 = pneg %p91
      %p98 = scmp.eq.s32.totalorder %s14, 1
      %p99 = por %p97, %p98
      %p100 = scmp.ne.s32.totalorder %s92, %s95
      %p101 = scmp.eq.s32.totalorder %s14, 0
      %p102 = por %p100, %p101
      %p103 = scmp.ne.s32.totalorder %s92, %s95
      %p104 = scmp.eq.s32.totalorder %s19, 1
      %p105 = por %p103, %p104
      %p106 = scmp.ne.s32.totalorder %s95, %s96
      %p107 = scmp.eq.s32.totalorder %s19, 0
      %p108 = por %p106, %p107
      %p109 = scmp.ne.s32.totalorder %s95, %s96
      %p110 = scmp.eq.s32.totalorder %s20, 1
      %p111 = por %p109, %p110
      %p113 = scmp.ne.s32.totalorder %s96, %s112
      %p114 = scmp.eq.s32.totalorder %s20, 0
      %p115 = por %p113, %p114
      %p116 = scmp.le.s32.totalorder 1, %s14
      %p117 = scmp.lt.s32.totalorder %s14, 3
      %p118 = pnand %p116, %p117
      %p119 = pneg %p118
      // Predicated region
      $region9: #{tpu_custom_call.1} parent=5 // pred_check
        _
      $region10: #{tpu_custom_call.1} parent=5 // pred_check_branch
        %121 = sbr.rel (%p118) target = $region12
      $region11: #{tpu_custom_call.1} parent=5 // pred_region
        %s122 = ssub.s32 %s14, 1
        // Predicated region
        $region13: #{tpu_custom_call.1} parent=11 // pred_check
          %p123 = pneg %p61
        $region14: #{tpu_custom_call.1} parent=11 // pred_check_branch
          %125 = sbr.rel (%p123) target = $region16
        $region15: #{tpu_custom_call.1} parent=11 // pred_region
          %s127 = ssub.s32 60928, 60928
          %128 = vsyncadd [#allocation3], %s127
          %s129 = sshll.u32 [#allocation2], 4
          %s130 = int_to_ptr.vmem [resolvable:$true] %s129
          %135 = dma.hbm_to_vmem [thread:$0]  %s1, 60928, %s130, [#allocation3], 128, 128, 8
        $region16: #{tpu_custom_call.1} parent=11 // pred_fallthru
          _
        // Predicated region
        $region17: #{tpu_custom_call.1} parent=11 // pred_check
          %p136 = pneg %p82
        $region18: #{tpu_custom_call.1} parent=11 // pred_check_branch
          %138 = sbr.rel (%p136) target = $region20
        $region19: #{tpu_custom_call.1} parent=11 // pred_region
          %s140 = ssub.s32 16, 16
          %141 = vsyncadd [#allocation6], %s140
          %s143 = sshll.u32 [#allocation5], 4
          %s144 = int_to_ptr.vmem [resolvable:$true] %s143
          %146 = dma.hbm_to_vmem [thread:$0]  %s2, 16, %s144, [#allocation6]
        $region20: #{tpu_custom_call.1} parent=11 // pred_fallthru
          _
      $region12: #{tpu_custom_call.1} parent=5 // pred_fallthru
        _
      %p147 = scmp.lt.s32.totalorder %s14, 2
      // Predicated region
      $region21: #{tpu_custom_call.1} parent=5 // pred_check
        %p148 = pneg %p147
      $region22: #{tpu_custom_call.1} parent=5 // pred_check_branch
        %150 = sbr.rel (%p148) target = $region24
      $region23: #{tpu_custom_call.1} parent=5 // pred_region
        // Predicated region
        $region25: #{tpu_custom_call.1} parent=23 // pred_check
          %p151 = pneg %p34
        $region26: #{tpu_custom_call.1} parent=23 // pred_check_branch
          %153 = sbr.rel (%p151) target = $region28
        $region27: #{tpu_custom_call.1} parent=23 // pred_region
          %p154 = scmp.lt.s32.totalorder %s14, 1
          %s155 = scalar_select %p154, %s14, 1
          %s156 = smul.addr %s155, 56
          %s157 = smul.addr %s156, 8
          %s158 = scalar_lea.vmem %s0, %s157
        $region28: #{tpu_custom_call.1} parent=23 // pred_fallthru
          _
      $region24: #{tpu_custom_call.1} parent=5 // pred_fallthru
        _
      %p159 = scmp.le.s32.totalorder 1, %s14
      %p160 = scmp.lt.s32.totalorder %s14, 3
      %p161 = pnand %p159, %p160
      %p162 = pneg %p161
      // Predicated region
      $region29: #{tpu_custom_call.1} parent=5 // pred_check
        _
      $region30: #{tpu_custom_call.1} parent=5 // pred_check_branch
        %164 = sbr.rel (%p161) target = $region32
      $region31: #{tpu_custom_call.1} parent=5 // pred_region
        %s165 = ssub.s32 %s14, 1
        // Predicated region
        $region33: #{tpu_custom_call.1} parent=31 // pred_check
          %p166 = pneg %p61
        $region34: #{tpu_custom_call.1} parent=31 // pred_check_branch
          %168 = sbr.rel (%p166) target = $region36
        $region35: #{tpu_custom_call.1} parent=31 // pred_region
          %169 = dma.done [#allocation3], 60928
        $region36: #{tpu_custom_call.1} parent=31 // pred_fallthru
          _
        // Predicated region
        $region37: #{tpu_custom_call.1} parent=31 // pred_check
          %p170 = pneg %p82
        $region38: #{tpu_custom_call.1} parent=31 // pred_check_branch
          %172 = sbr.rel (%p170) target = $region40
        $region39: #{tpu_custom_call.1} parent=31 // pred_region
          %173 = dma.done [#allocation6], 16
        $region40: #{tpu_custom_call.1} parent=31 // pred_fallthru
          _
        %p174 = scmp.lt.s32.totalorder %s19, 1
        %s175 = scalar_select %p174, %s19, 1
        %s176 = smul.addr %s175, 56
        %s177 = smul.addr %s176, 8
        %s178 = scalar_lea.vmem %s0, %s177
        %p179 = pneg %p40
        %p180 = pneg %p37
        %p181 = pneg %p61
        %p182 = pneg %p58
        %p183 = pneg %p82
        %p184 = pneg %p79
        %p185 = pneg %p108
        %p186 = pneg %p105
        %s187 = sand.u32 %s95, 1
        %s188 = scalar_lea.sflag [#allocation4], %s187
        %s189 = sand.u32 %s95, 1
        %s190 = smul.addr %s189, 64
        %s191 = scalar_lea.vmem [#allocation7], %s190
        %p192 = scmp.lt.s32.totalorder %s19, 1
        %s193 = scalar_select %p192, %s19, 1
        %s194 = smul.addr %s193, 56
        %s195 = smul.addr %s194, 8
        %s196 = scalar_lea.vmem %s0, %s195
        %v197 = vld [vmem:[%s196] sm:$0xff]
        %v198 = vld [vmem:[%s196 + $0x8] sm:$0xff]
        %v199 = vld [vmem:[%s196 + $0x20] sm:$0xff]
        %v200 = vld [vmem:[%s196 + $0x28] sm:$0xff]
        %v201 = vld [vmem:[%s196 + $0x40] sm:$0xff]
        %v202 = vld [vmem:[%s196 + $0x48] sm:$0xff]
        %v203 = vld [vmem:[%s196 + $0x60] sm:$0xff]
        %v204 = vld [vmem:[%s196 + $0x68] sm:$0xff]
        %v205 = vld [vmem:[%s196 + $0x80] sm:$0xff]
        %v206 = vld [vmem:[%s196 + $0x88] sm:$0xff]
        %v207 = vld [vmem:[%s196 + $0xa0] sm:$0xff]
        %v208 = vld [vmem:[%s196 + $0xa8] sm:$0xff]
        %v209 = vld [vmem:[%s196 + $0xc0] sm:$0xff]
        %v210 = vld [vmem:[%s196 + $0xc8] sm:$0xff]
        %v211 = vld [vmem:[%s196 + $0xe0] sm:$0xff]
        %v212 = vld [vmem:[%s196 + $0xe8] sm:$0xff]
        %v213 = vld [vmem:[#allocation2] sm:$0xff]
        %v214 = vld [vmem:[#allocation2 + $0x8] sm:$0xff]
        %v215 = vld [vmem:[#allocation2 + $0x10] sm:$0xff]
        %v216 = vld [vmem:[#allocation2 + $0x18] sm:$0xff]
        %v217 = vld [vmem:[#allocation2 + $0x20] sm:$0xff]
        %v218 = vld [vmem:[#allocation2 + $0x28] sm:$0xff]
        %v219 = vld [vmem:[#allocation2 + $0x30] sm:$0xff]
        %v220 = vld [vmem:[#allocation2 + $0x38] sm:$0xff]
        %v221 = vld [vmem:[#allocation2 + $0x40] sm:$0xff]
        %v222 = vld [vmem:[#allocation2 + $0x48] sm:$0xff]
        %v223 = vld [vmem:[#allocation2 + $0x50] sm:$0xff]
        %v224 = vld [vmem:[#allocation2 + $0x58] sm:$0xff]
        %v225 = vld [vmem:[#allocation2 + $0x60] sm:$0xff]
        %v226 = vld [vmem:[#allocation2 + $0x68] sm:$0xff]
        %v227 = vld [vmem:[#allocation2 + $0x70] sm:$0xff]
        %v228 = vld [vmem:[#allocation2 + $0x78] sm:$0xff]
        %v229 = vld [vmem:[#allocation2 + $0x80] sm:$0xf]
        %v230 = vld [vmem:[%s196] sm:$0xfe]
        %v231 = vld [vmem:[%s196 + $0x8] sm:$0xfe]
        %v232 = vld [vmem:[%s196 + $0x10] sm:$0x1]
        %v233 = vld [vmem:[%s196 + $0x18] sm:$0x1]
        %v234 = vld [vmem:[%s196 + $0x20] sm:$0xfe]
        %v235 = vld [vmem:[%s196 + $0x28] sm:$0xfe]
        %v236 = vld [vmem:[%s196 + $0x30] sm:$0x1]
        %v237 = vld [vmem:[%s196 + $0x38] sm:$0x1]
        %v238 = vld [vmem:[%s196 + $0x40] sm:$0xfe]
        %v239 = vld [vmem:[%s196 + $0x48] sm:$0xfe]
        %v240 = vld [vmem:[%s196 + $0x50] sm:$0x1]
        %v241 = vld [vmem:[%s196 + $0x58] sm:$0x1]
        %v242 = vld [vmem:[%s196 + $0x60] sm:$0xfe]
        %v243 = vld [vmem:[%s196 + $0x68] sm:$0xfe]
        %v244 = vld [vmem:[%s196 + $0x70] sm:$0x1]
        %v245 = vld [vmem:[%s196 + $0x78] sm:$0x1]
        %v246 = vld [vmem:[%s196 + $0x80] sm:$0xfe]
        %v247 = vld [vmem:[%s196 + $0x88] sm:$0xfe]
        %v248 = vld [vmem:[%s196 + $0x90] sm:$0x1]
        %v249 = vld [vmem:[%s196 + $0x98] sm:$0x1]
        %v250 = vld [vmem:[%s196 + $0xa0] sm:$0xfe]
        %v251 = vld [vmem:[%s196 + $0xa8] sm:$0xfe]
        %v252 = vld [vmem:[%s196 + $0xb0] sm:$0x1]
        %v253 = vld [vmem:[%s196 + $0xb8] sm:$0x1]
        %v254 = vld [vmem:[%s196 + $0xc0] sm:$0xfe]
        %v255 = vld [vmem:[%s196 + $0xc8] sm:$0xfe]
        %v256 = vld [vmem:[%s196 + $0xd0] sm:$0x1]
        %v257 = vld [vmem:[%s196 + $0xd8] sm:$0x1]
        %v258 = vld [vmem:[%s196 + $0xe0] sm:$0xfe]
        %v259 = vld [vmem:[%s196 + $0xe8] sm:$0xfe]
        %v260 = vld [vmem:[%s196 + $0xf0] sm:$0x1]
        %v261 = vld [vmem:[%s196 + $0xf8] sm:$0x1]
        %vm294 = vcmask 1046528
        %v295 = vrot.slane %v230, 1
        %v296 = vrot.slane %v232, 1
        %v297 = vsel %vm294, %v295, %v296
        %v298 = vrot.slane %v231, 1
        %v299 = vrot.slane %v233, 1
        %v300 = vsel %vm294, %v298, %v299
        %v301 = vrot.slane %v234, 1
        %v302 = vrot.slane %v236, 1
        %v303 = vsel %vm294, %v301, %v302
        %v304 = vrot.slane %v235, 1
        %v305 = vrot.slane %v237, 1
        %v306 = vsel %vm294, %v304, %v305
        %v307 = vrot.slane %v238, 1
        %v308 = vrot.slane %v240, 1
        %v309 = vsel %vm294, %v307, %v308
        %v310 = vrot.slane %v239, 1
        %v311 = vrot.slane %v241, 1
        %v312 = vsel %vm294, %v310, %v311
        %v313 = vrot.slane %v242, 1
        %v314 = vrot.slane %v244, 1
        %v315 = vsel %vm294, %v313, %v314
        %v316 = vrot.slane %v243, 1
        %v317 = vrot.slane %v245, 1
        %v318 = vsel %vm294, %v316, %v317
        %v319 = vrot.slane %v246, 1
        %v320 = vrot.slane %v248, 1
        %v321 = vsel %vm294, %v319, %v320
        %v322 = vrot.slane %v247, 1
        %v323 = vrot.slane %v249, 1
        %v324 = vsel %vm294, %v322, %v323
        %v325 = vrot.slane %v250, 1
        %v326 = vrot.slane %v252, 1
        %v327 = vsel %vm294, %v325, %v326
        %v328 = vrot.slane %v251, 1
        %v329 = vrot.slane %v253, 1
        %v330 = vsel %vm294, %v328, %v329
        %v331 = vrot.slane %v254, 1
        %v332 = vrot.slane %v256, 1
        %v333 = vsel %vm294, %v331, %v332
        %v334 = vrot.slane %v255, 1
        %v335 = vrot.slane %v257, 1
        %v336 = vsel %vm294, %v334, %v335
        %v337 = vrot.slane %v258, 1
        %v338 = vrot.slane %v260, 1
        %v339 = vsel %vm294, %v337, %v338
        %v340 = vrot.slane %v259, 1
        %v341 = vrot.slane %v261, 1
        %v342 = vsel %vm294, %v340, %v341
        %s351 = scalar_lea.vmem [#allocation2], 136
        %v352 = vld [vmem:[%s351] sm:$0xff]
        %v353 = vld [vmem:[%s351 + $0x8] sm:$0xff]
        %v354 = vld [vmem:[%s351 + $0x10] sm:$0xff]
        %v355 = vld [vmem:[%s351 + $0x18] sm:$0xff]
        %v356 = vld [vmem:[%s351 + $0x20] sm:$0xff]
        %v357 = vld [vmem:[%s351 + $0x28] sm:$0xff]
        %v358 = vld [vmem:[%s351 + $0x30] sm:$0xff]
        %v359 = vld [vmem:[%s351 + $0x38] sm:$0xff]
        %v360 = vld [vmem:[%s351 + $0x40] sm:$0xff]
        %v361 = vld [vmem:[%s351 + $0x48] sm:$0xff]
        %v362 = vld [vmem:[%s351 + $0x50] sm:$0xff]
        %v363 = vld [vmem:[%s351 + $0x58] sm:$0xff]
        %v364 = vld [vmem:[%s351 + $0x60] sm:$0xff]
        %v365 = vld [vmem:[%s351 + $0x68] sm:$0xff]
        %v366 = vld [vmem:[%s351 + $0x70] sm:$0xff]
        %v367 = vld [vmem:[%s351 + $0x78] sm:$0xff]
        %v368 = vld [vmem:[%s351 + $0x80] sm:$0xf]
        %vm369 = vcmask 31744
        %v370 = vsel %vm369, %v300, 0
        %v372 = vsel %vm369, %v306, 0
        %v374 = vsel %vm369, %v312, 0
        %v376 = vsel %vm369, %v318, 0
        %v378 = vsel %vm369, %v324, 0
        %v380 = vsel %vm369, %v330, 0
        %v382 = vsel %vm369, %v336, 0
        %v384 = vsel %vm369, %v342, 0
        %vm386 = vcmask 1043456
        %v388 = vsel %vm386, %v368, 0
        %390 = vmatprep.subr.mxu0 0.0
        %391 = vmatpush1.msra.mxu0 %v352
        %392 = vmatprep.subr.mxu0 0.0
        %393 = vmatpush1.msra.mxu0 %v353
        %394 = vmatprep.subr.mxu0 0.0
        %395 = vmatpush1.msra.mxu0 %v354
        %396 = vmatprep.subr.mxu0 0.0
        %397 = vmatpush1.msra.mxu0 %v355
        %398 = vmatprep.subr.mxu0 0.0
        %399 = vmatpush1.msra.mxu0 %v356
        %400 = vmatprep.subr.mxu0 0.0
        %401 = vmatpush1.msra.mxu0 %v357
        %402 = vmatprep.subr.mxu0 0.0
        %403 = vmatpush1.msra.mxu0 %v358
        %404 = vmatprep.subr.mxu0 0.0
        %405 = vmatpush1.msra.mxu0 %v359
        %406 = vmatprep.subr.mxu0 0.0
        %407 = vmatpush1.msra.mxu0 %v360
        %408 = vmatprep.subr.mxu0 0.0
        %409 = vmatpush1.msra.mxu0 %v361
        %410 = vmatprep.subr.mxu0 0.0
        %411 = vmatpush1.msra.mxu0 %v362
        %412 = vmatprep.subr.mxu0 0.0
        %413 = vmatpush1.msra.mxu0 %v363
        %414 = vmatprep.subr.mxu0 0.0
        %415 = vmatpush1.msra.mxu0 %v364
        %416 = vmatprep.subr.mxu0 0.0
        %417 = vmatpush1.msra.mxu0 %v365
        %418 = vmatprep.subr.mxu0 0.0
        %419 = vmatpush1.msra.mxu0 %v366
        %420 = vmatprep.subr.mxu0 0.0
        %421 = vmatpush1.msra.mxu0 %v367
        %422 = vmatprep.subr.mxu0 0.0
        %423 = vmatpush1.msra.mxu0 %v388
        %424 = vmatprep.subr.mxu0 0.0
        %425 = vmatpush1.msra.mxu0 0.0
        %426 = vmatprep.subr.mxu0 0.0
        %427 = vmatpush1.msra.mxu0 0.0
        %428 = vmatprep.subr.mxu0 0.0
        %429 = vmatpush1.msra.mxu0 0.0
        %430 = vmatprep.subr.mxu0 0.0
        %431 = vmatpush1.msra.mxu0 0.0
        %432 = vmatprep.subr.mxu0 0.0
        %433 = vmatpush1.msra.mxu0 0.0
        %434 = vmatprep.subr.mxu0 0.0
        %435 = vmatpush1.msra.mxu0 0.0
        %436 = vmatprep.subr.mxu0 0.0
        %437 = vmatpush1.msra.mxu0 0.0
        %438 = vmatprep.subr.mxu0 0.0
        %439 = vmatpush1.msra.mxu0 0.0
        %440 = vmatprep.subr.mxu0 0.0
        %441 = vmatpush1.msra.mxu0 0.0
        %442 = vmatprep.subr.mxu0 0.0
        %443 = vmatpush1.msra.mxu0 0.0
        %444 = vmatprep.subr.mxu0 0.0
        %445 = vmatpush1.msra.mxu0 0.0
        %446 = vmatprep.subr.mxu0 0.0
        %447 = vmatpush1.msra.mxu0 0.0
        %448 = vmatprep.subr.mxu0 0.0
        %449 = vmatpush1.msra.mxu0 0.0
        %450 = vmatprep.subr.mxu0 0.0
        %451 = vmatpush1.msra.mxu0 0.0
        %452 = vmatprep.subr.mxu0 0.0
        %453 = vmatpush1.msra.mxu0 0.0
        %454 = vmatprep.mubr.f32.mxu0 %v370
        %455 = vmatmul.mubr.f32.gmra.mrb[0].mxu0 %v297
        %v456 = vpop.f32.mrb[0].mxu0
        %v457 = vadd.f32 0.0, %v456
        %v458 = vpop.f32.mrb[0].mxu0
        %459 = vmatprep.mubr.f32.mxu0 %v372
        %460 = vmatmul.mubr.f32.gmra.mrb[0].mxu0 %v303
        %v461 = vpop.f32.mrb[0].mxu0
        %v462 = vadd.f32 0.0, %v461
        %v463 = vpop.f32.mrb[0].mxu0
        %464 = vmatprep.mubr.f32.mxu0 %v374
        %465 = vmatmul.mubr.f32.gmra.mrb[0].mxu0 %v309
        %v466 = vpop.f32.mrb[0].mxu0
        %v467 = vadd.f32 0.0, %v466
        %v468 = vpop.f32.mrb[0].mxu0
        %469 = vmatprep.mubr.f32.mxu0 %v376
        %470 = vmatmul.mubr.f32.gmra.mrb[0].mxu0 %v315
        %v471 = vpop.f32.mrb[0].mxu0
        %v472 = vadd.f32 0.0, %v471
        %v473 = vpop.f32.mrb[0].mxu0
        %474 = vmatprep.mubr.f32.mxu0 %v378
        %475 = vmatmul.mubr.f32.gmra.mrb[0].mxu0 %v321
        %v476 = vpop.f32.mrb[0].mxu0
        %v477 = vadd.f32 0.0, %v476
        %v478 = vpop.f32.mrb[0].mxu0
        %479 = vmatprep.mubr.f32.mxu0 %v380
        %480 = vmatmul.mubr.f32.gmra.mrb[0].mxu0 %v327
        %v481 = vpop.f32.mrb[0].mxu0
        %v482 = vadd.f32 0.0, %v481
        %v483 = vpop.f32.mrb[0].mxu0
        %484 = vmatprep.mubr.f32.mxu0 %v382
        %485 = vmatmul.mubr.f32.gmra.mrb[0].mxu0 %v333
        %v486 = vpop.f32.mrb[0].mxu0
        %v487 = vadd.f32 0.0, %v486
        %v488 = vpop.f32.mrb[0].mxu0
        %489 = vmatprep.mubr.f32.mxu0 %v384
        %490 = vmatmul.mubr.f32.gmra.mrb[0].mxu0 %v339
        %v491 = vpop.f32.mrb[0].mxu0
        %v492 = vadd.f32 0.0, %v491
        %v493 = vpop.f32.mrb[0].mxu0
        %494 = vdwg.mxu0
        %v496 = vsel %vm369, %v198, 0
        %v499 = vsel %vm369, %v200, 0
        %v502 = vsel %vm369, %v202, 0
        %v505 = vsel %vm369, %v204, 0
        %v508 = vsel %vm369, %v206, 0
        %v511 = vsel %vm369, %v208, 0
        %v514 = vsel %vm369, %v210, 0
        %v517 = vsel %vm369, %v212, 0
        %v520 = vsel %vm386, %v229, 0
        %522 = vmatprep.subr.mxu0 0.0
        %523 = vmatpush1.msra.mxu0 %v213
        %524 = vmatprep.subr.mxu0 0.0
        %525 = vmatpush1.msra.mxu0 %v214
        %526 = vmatprep.subr.mxu0 0.0
        %527 = vmatpush1.msra.mxu0 %v215
        %528 = vmatprep.subr.mxu0 0.0
        %529 = vmatpush1.msra.mxu0 %v216
        %530 = vmatprep.subr.mxu0 0.0
        %531 = vmatpush1.msra.mxu0 %v217
        %532 = vmatprep.subr.mxu0 0.0
        %533 = vmatpush1.msra.mxu0 %v218
        %534 = vmatprep.subr.mxu0 0.0
        %535 = vmatpush1.msra.mxu0 %v219
        %536 = vmatprep.subr.mxu0 0.0
        %537 = vmatpush1.msra.mxu0 %v220
        %538 = vmatprep.subr.mxu0 0.0
        %539 = vmatpush1.msra.mxu0 %v221
        %540 = vmatprep.subr.mxu0 0.0
        %541 = vmatpush1.msra.mxu0 %v222
        %542 = vmatprep.subr.mxu0 0.0
        %543 = vmatpush1.msra.mxu0 %v223
        %544 = vmatprep.subr.mxu0 0.0
        %545 = vmatpush1.msra.mxu0 %v224
        %546 = vmatprep.subr.mxu0 0.0
        %547 = vmatpush1.msra.mxu0 %v225
        %548 = vmatprep.subr.mxu0 0.0
        %549 = vmatpush1.msra.mxu0 %v226
        %550 = vmatprep.subr.mxu0 0.0
        %551 = vmatpush1.msra.mxu0 %v227
        %552 = vmatprep.subr.mxu0 0.0
        %553 = vmatpush1.msra.mxu0 %v228
        %554 = vmatprep.subr.mxu0 0.0
        %555 = vmatpush1.msra.mxu0 %v520
        %556 = vmatprep.subr.mxu0 0.0
        %557 = vmatpush1.msra.mxu0 0.0
        %558 = vmatprep.subr.mxu0 0.0
        %559 = vmatpush1.msra.mxu0 0.0
        %560 = vmatprep.subr.mxu0 0.0
        %561 = vmatpush1.msra.mxu0 0.0
        %562 = vmatprep.subr.mxu0 0.0
        %563 = vmatpush1.msra.mxu0 0.0
        %564 = vmatprep.subr.mxu0 0.0
        %565 = vmatpush1.msra.mxu0 0.0
        %566 = vmatprep.subr.mxu0 0.0
        %567 = vmatpush1.msra.mxu0 0.0
        %568 = vmatprep.subr.mxu0 0.0
        %569 = vmatpush1.msra.mxu0 0.0
        %570 = vmatprep.subr.mxu0 0.0
        %571 = vmatpush1.msra.mxu0 0.0
        %572 = vmatprep.subr.mxu0 0.0
        %573 = vmatpush1.msra.mxu0 0.0
        %574 = vmatprep.subr.mxu0 0.0
        %575 = vmatpush1.msra.mxu0 0.0
        %576 = vmatprep.subr.mxu0 0.0
        %577 = vmatpush1.msra.mxu0 0.0
        %578 = vmatprep.subr.mxu0 0.0
        %579 = vmatpush1.msra.mxu0 0.0
        %580 = vmatprep.subr.mxu0 0.0
        %581 = vmatpush1.msra.mxu0 0.0
        %582 = vmatprep.subr.mxu0 0.0
        %583 = vmatpush1.msra.mxu0 0.0
        %584 = vmatprep.subr.mxu0 0.0
        %585 = vmatpush1.msra.mxu0 0.0
        %586 = vmatprep.mubr.f32.mxu0 %v496
        %587 = vmatmul.mubr.f32.gmra.mrb[0].mxu0 %v197
        %v588 = vpop.f32.mrb[0].mxu0
        %v589 = vadd.f32 %v457, %v588
        %v590 = vpop.f32.mrb[0].mxu0
        %591 = vmatprep.mubr.f32.mxu0 %v499
        %592 = vmatmul.mubr.f32.gmra.mrb[0].mxu0 %v199
        %v593 = vpop.f32.mrb[0].mxu0
        %v594 = vadd.f32 %v462, %v593
        %v595 = vpop.f32.mrb[0].mxu0
        %596 = vmatprep.mubr.f32.mxu0 %v502
        %597 = vmatmul.mubr.f32.gmra.mrb[0].mxu0 %v201
        %v598 = vpop.f32.mrb[0].mxu0
        %v599 = vadd.f32 %v467, %v598
        %v600 = vpop.f32.mrb[0].mxu0
        %601 = vmatprep.mubr.f32.mxu0 %v505
        %602 = vmatmul.mubr.f32.gmra.mrb[0].mxu0 %v203
        %v603 = vpop.f32.mrb[0].mxu0
        %v604 = vadd.f32 %v472, %v603
        %v605 = vpop.f32.mrb[0].mxu0
        %606 = vmatprep.mubr.f32.mxu0 %v508
        %607 = vmatmul.mubr.f32.gmra.mrb[0].mxu0 %v205
        %v608 = vpop.f32.mrb[0].mxu0
        %v609 = vadd.f32 %v477, %v608
        %v610 = vpop.f32.mrb[0].mxu0
        %611 = vmatprep.mubr.f32.mxu0 %v511
        %612 = vmatmul.mubr.f32.gmra.mrb[0].mxu0 %v207
        %v613 = vpop.f32.mrb[0].mxu0
        %v614 = vadd.f32 %v482, %v613
        %v615 = vpop.f32.mrb[0].mxu0
        %616 = vmatprep.mubr.f32.mxu0 %v514
        %617 = vmatmul.mubr.f32.gmra.mrb[0].mxu0 %v209
        %v618 = vpop.f32.mrb[0].mxu0
        %v619 = vadd.f32 %v487, %v618
        %v620 = vpop.f32.mrb[0].mxu0
        %621 = vmatprep.mubr.f32.mxu0 %v517
        %622 = vmatmul.mubr.f32.gmra.mrb[0].mxu0 %v211
        %v623 = vpop.f32.mrb[0].mxu0
        %v624 = vadd.f32 %v492, %v623
        %v625 = vpop.f32.mrb[0].mxu0
        %626 = vdwg.mxu0
        %v627 = vld [vmem:[%s196] sm:$0xfc]
        %v628 = vld [vmem:[%s196 + $0x8] sm:$0xfc]
        %v629 = vld [vmem:[%s196 + $0x10] sm:$0x3]
        %v630 = vld [vmem:[%s196 + $0x18] sm:$0x3]
        %v631 = vld [vmem:[%s196 + $0x20] sm:$0xfc]
        %v632 = vld [vmem:[%s196 + $0x28] sm:$0xfc]
        %v633 = vld [vmem:[%s196 + $0x30] sm:$0x3]
        %v634 = vld [vmem:[%s196 + $0x38] sm:$0x3]
        %v635 = vld [vmem:[%s196 + $0x40] sm:$0xfc]
        %v636 = vld [vmem:[%s196 + $0x48] sm:$0xfc]
        %v637 = vld [vmem:[%s196 + $0x50] sm:$0x3]
        %v638 = vld [vmem:[%s196 + $0x58] sm:$0x3]
        %v639 = vld [vmem:[%s196 + $0x60] sm:$0xfc]
        %v640 = vld [vmem:[%s196 + $0x68] sm:$0xfc]
        %v641 = vld [vmem:[%s196 + $0x70] sm:$0x3]
        %v642 = vld [vmem:[%s196 + $0x78] sm:$0x3]
        %v643 = vld [vmem:[%s196 + $0x80] sm:$0xfc]
        %v644 = vld [vmem:[%s196 + $0x88] sm:$0xfc]
        %v645 = vld [vmem:[%s196 + $0x90] sm:$0x3]
        %v646 = vld [vmem:[%s196 + $0x98] sm:$0x3]
        %v647 = vld [vmem:[%s196 + $0xa0] sm:$0xfc]
        %v648 = vld [vmem:[%s196 + $0xa8] sm:$0xfc]
        %v649 = vld [vmem:[%s196 + $0xb0] sm:$0x3]
        %v650 = vld [vmem:[%s196 + $0xb8] sm:$0x3]
        %v651 = vld [vmem:[%s196 + $0xc0] sm:$0xfc]
        %v652 = vld [vmem:[%s196 + $0xc8] sm:$0xfc]
        %v653 = vld [vmem:[%s196 + $0xd0] sm:$0x3]
        %v654 = vld [vmem:[%s196 + $0xd8] sm:$0x3]
        %v655 = vld [vmem:[%s196 + $0xe0] sm:$0xfc]
        %v656 = vld [vmem:[%s196 + $0xe8] sm:$0xfc]
        %v657 = vld [vmem:[%s196 + $0xf0] sm:$0x3]
        %v658 = vld [vmem:[%s196 + $0xf8] sm:$0x3]
        %vm691 = vcmask 1045504
        %v692 = vrot.slane %v627, 2
        %v693 = vrot.slane %v629, 2
        %v694 = vsel %vm691, %v692, %v693
        %v695 = vrot.slane %v628, 2
        %v696 = vrot.slane %v630, 2
        %v697 = vsel %vm691, %v695, %v696
        %v698 = vrot.slane %v631, 2
        %v699 = vrot.slane %v633, 2
        %v700 = vsel %vm691, %v698, %v699
        %v701 = vrot.slane %v632, 2
        %v702 = vrot.slane %v634, 2
        %v703 = vsel %vm691, %v701, %v702
        %v704 = vrot.slane %v635, 2
        %v705 = vrot.slane %v637, 2
        %v706 = vsel %vm691, %v704, %v705
        %v707 = vrot.slane %v636, 2
        %v708 = vrot.slane %v638, 2
        %v709 = vsel %vm691, %v707, %v708
        %v710 = vrot.slane %v639, 2
        %v711 = vrot.slane %v641, 2
        %v712 = vsel %vm691, %v710, %v711
        %v713 = vrot.slane %v640, 2
        %v714 = vrot.slane %v642, 2
        %v715 = vsel %vm691, %v713, %v714
        %v716 = vrot.slane %v643, 2
        %v717 = vrot.slane %v645, 2
        %v718 = vsel %vm691, %v716, %v717
        %v719 = vrot.slane %v644, 2
        %v720 = vrot.slane %v646, 2
        %v721 = vsel %vm691, %v719, %v720
        %v722 = vrot.slane %v647, 2
        %v723 = vrot.slane %v649, 2
        %v724 = vsel %vm691, %v722, %v723
        %v725 = vrot.slane %v648, 2
        %v726 = vrot.slane %v650, 2
        %v727 = vsel %vm691, %v725, %v726
        %v728 = vrot.slane %v651, 2
        %v729 = vrot.slane %v653, 2
        %v730 = vsel %vm691, %v728, %v729
        %v731 = vrot.slane %v652, 2
        %v732 = vrot.slane %v654, 2
        %v733 = vsel %vm691, %v731, %v732
        %v734 = vrot.slane %v655, 2
        %v735 = vrot.slane %v657, 2
        %v736 = vsel %vm691, %v734, %v735
        %v737 = vrot.slane %v656, 2
        %v738 = vrot.slane %v658, 2
        %v739 = vsel %vm691, %v737, %v738
        %s748 = scalar_lea.vmem [#allocation2], 272
        %v749 = vld [vmem:[%s748] sm:$0xff]
        %v750 = vld [vmem:[%s748 + $0x8] sm:$0xff]
        %v751 = vld [vmem:[%s748 + $0x10] sm:$0xff]
        %v752 = vld [vmem:[%s748 + $0x18] sm:$0xff]
        %v753 = vld [vmem:[%s748 + $0x20] sm:$0xff]
        %v754 = vld [vmem:[%s748 + $0x28] sm:$0xff]
        %v755 = vld [vmem:[%s748 + $0x30] sm:$0xff]
        %v756 = vld [vmem:[%s748 + $0x38] sm:$0xff]
        %v757 = vld [vmem:[%s748 + $0x40] sm:$0xff]
        %v758 = vld [vmem:[%s748 + $0x48] sm:$0xff]
        %v759 = vld [vmem:[%s748 + $0x50] sm:$0xff]
        %v760 = vld [vmem:[%s748 + $0x58] sm:$0xff]
        %v761 = vld [vmem:[%s748 + $0x60] sm:$0xff]
        %v762 = vld [vmem:[%s748 + $0x68] sm:$0xff]
        %v763 = vld [vmem:[%s748 + $0x70] sm:$0xff]
        %v764 = vld [vmem:[%s748 + $0x78] sm:$0xff]
        %v765 = vld [vmem:[%s748 + $0x80] sm:$0xf]
        %v766 = vsel %vm369, %v697, 0
        %v768 = vsel %vm369, %v703, 0
        %v770 = vsel %vm369, %v709, 0
        %v772 = vsel %vm369, %v715, 0
        %v774 = vsel %vm369, %v721, 0
        %v776 = vsel %vm369, %v727, 0
        %v778 = vsel %vm369, %v733, 0
        %v780 = vsel %vm369, %v739, 0
        %v783 = vsel %vm386, %v765, 0
        %785 = vmatprep.subr.mxu0 0.0
        %786 = vmatpush1.msra.mxu0 %v749
        %787 = vmatprep.subr.mxu0 0.0
        %788 = vmatpush1.msra.mxu0 %v750
        %789 = vmatprep.subr.mxu0 0.0
        %790 = vmatpush1.msra.mxu0 %v751
        %791 = vmatprep.subr.mxu0 0.0
        %792 = vmatpush1.msra.mxu0 %v752
        %793 = vmatprep.subr.mxu0 0.0
        %794 = vmatpush1.msra.mxu0 %v753
        %795 = vmatprep.subr.mxu0 0.0
        %796 = vmatpush1.msra.mxu0 %v754
        %797 = vmatprep.subr.mxu0 0.0
        %798 = vmatpush1.msra.mxu0 %v755
        %799 = vmatprep.subr.mxu0 0.0
        %800 = vmatpush1.msra.mxu0 %v756
        %801 = vmatprep.subr.mxu0 0.0
        %802 = vmatpush1.msra.mxu0 %v757
        %803 = vmatprep.subr.mxu0 0.0
        %804 = vmatpush1.msra.mxu0 %v758
        %805 = vmatprep.subr.mxu0 0.0
        %806 = vmatpush1.msra.mxu0 %v759
        %807 = vmatprep.subr.mxu0 0.0
        %808 = vmatpush1.msra.mxu0 %v760
        %809 = vmatprep.subr.mxu0 0.0
        %810 = vmatpush1.msra.mxu0 %v761
        %811 = vmatprep.subr.mxu0 0.0
        %812 = vmatpush1.msra.mxu0 %v762
        %813 = vmatprep.subr.mxu0 0.0
        %814 = vmatpush1.msra.mxu0 %v763
        %815 = vmatprep.subr.mxu0 0.0
        %816 = vmatpush1.msra.mxu0 %v764
        %817 = vmatprep.subr.mxu0 0.0
        %818 = vmatpush1.msra.mxu0 %v783
        %819 = vmatprep.subr.mxu0 0.0
        %820 = vmatpush1.msra.mxu0 0.0
        %821 = vmatprep.subr.mxu0 0.0
        %822 = vmatpush1.msra.mxu0 0.0
        %823 = vmatprep.subr.mxu0 0.0
        %824 = vmatpush1.msra.mxu0 0.0
        %825 = vmatprep.subr.mxu0 0.0
        %826 = vmatpush1.msra.mxu0 0.0
        %827 = vmatprep.subr.mxu0 0.0
        %828 = vmatpush1.msra.mxu0 0.0
        %829 = vmatprep.subr.mxu0 0.0
        %830 = vmatpush1.msra.mxu0 0.0
        %831 = vmatprep.subr.mxu0 0.0
        %832 = vmatpush1.msra.mxu0 0.0
        %833 = vmatprep.subr.mxu0 0.0
        %834 = vmatpush1.msra.mxu0 0.0
        %835 = vmatprep.subr.mxu0 0.0
        %836 = vmatpush1.msra.mxu0 0.0
        %837 = vmatprep.subr.mxu0 0.0
        %838 = vmatpush1.msra.mxu0 0.0
        %839 = vmatprep.subr.mxu0 0.0
        %840 = vmatpush1.msra.mxu0 0.0
        %841 = vmatprep.subr.mxu0 0.0
        %842 = vmatpush1.msra.mxu0 0.0
        %843 = vmatprep.subr.mxu0 0.0
        %844 = vmatpush1.msra.mxu0 0.0
        %845 = vmatprep.subr.mxu0 0.0
        %846 = vmatpush1.msra.mxu0 0.0
        %847 = vmatprep.subr.mxu0 0.0
        %848 = vmatpush1.msra.mxu0 0.0
        %849 = vmatprep.mubr.f32.mxu0 %v766
        %850 = vmatmul.mubr.f32.gmra.mrb[0].mxu0 %v694
        %v851 = vpop.f32.mrb[0].mxu0
        %v852 = vadd.f32 0.0, %v851
        %v853 = vpop.f32.mrb[0].mxu0
        %854 = vmatprep.mubr.f32.mxu0 %v768
        %855 = vmatmul.mubr.f32.gmra.mrb[0].mxu0 %v700
        %v856 = vpop.f32.mrb[0].mxu0
        %v857 = vadd.f32 0.0, %v856
        %v858 = vpop.f32.mrb[0].mxu0
        %859 = vmatprep.mubr.f32.mxu0 %v770
        %860 = vmatmul.mubr.f32.gmra.mrb[0].mxu0 %v706
        %v861 = vpop.f32.mrb[0].mxu0
        %v862 = vadd.f32 0.0, %v861
        %v863 = vpop.f32.mrb[0].mxu0
        %864 = vmatprep.mubr.f32.mxu0 %v772
        %865 = vmatmul.mubr.f32.gmra.mrb[0].mxu0 %v712
        %v866 = vpop.f32.mrb[0].mxu0
        %v867 = vadd.f32 0.0, %v866
        %v868 = vpop.f32.mrb[0].mxu0
        %869 = vmatprep.mubr.f32.mxu0 %v774
        %870 = vmatmul.mubr.f32.gmra.mrb[0].mxu0 %v718
        %v871 = vpop.f32.mrb[0].mxu0
        %v872 = vadd.f32 0.0, %v871
        %v873 = vpop.f32.mrb[0].mxu0
        %874 = vmatprep.mubr.f32.mxu0 %v776
        %875 = vmatmul.mubr.f32.gmra.mrb[0].mxu0 %v724
        %v876 = vpop.f32.mrb[0].mxu0
        %v877 = vadd.f32 0.0, %v876
        %v878 = vpop.f32.mrb[0].mxu0
        %879 = vmatprep.mubr.f32.mxu0 %v778
        %880 = vmatmul.mubr.f32.gmra.mrb[0].mxu0 %v730
        %v881 = vpop.f32.mrb[0].mxu0
        %v882 = vadd.f32 0.0, %v881
        %v883 = vpop.f32.mrb[0].mxu0
        %884 = vmatprep.mubr.f32.mxu0 %v780
        %885 = vmatmul.mubr.f32.gmra.mrb[0].mxu0 %v736
        %v886 = vpop.f32.mrb[0].mxu0
        %v887 = vadd.f32 0.0, %v886
        %v888 = vpop.f32.mrb[0].mxu0
        %889 = vdwg.mxu0
        %v890 = vadd.f32 %v589, %v852
        %v891 = vadd.f32 %v594, %v857
        %v892 = vadd.f32 %v599, %v862
        %v893 = vadd.f32 %v604, %v867
        %v894 = vadd.f32 %v609, %v872
        %v895 = vadd.f32 %v614, %v877
        %v896 = vadd.f32 %v619, %v882
        %v897 = vadd.f32 %v624, %v887
        %v898 = vld [vmem:[%s196] sm:$0xf8]
        %v899 = vld [vmem:[%s196 + $0x8] sm:$0xf8]
        %v900 = vld [vmem:[%s196 + $0x10] sm:$0x7]
        %v901 = vld [vmem:[%s196 + $0x18] sm:$0x7]
        %v902 = vld [vmem:[%s196 + $0x20] sm:$0xf8]
        %v903 = vld [vmem:[%s196 + $0x28] sm:$0xf8]
        %v904 = vld [vmem:[%s196 + $0x30] sm:$0x7]
        %v905 = vld [vmem:[%s196 + $0x38] sm:$0x7]
        %v906 = vld [vmem:[%s196 + $0x40] sm:$0xf8]
        %v907 = vld [vmem:[%s196 + $0x48] sm:$0xf8]
        %v908 = vld [vmem:[%s196 + $0x50] sm:$0x7]
        %v909 = vld [vmem:[%s196 + $0x58] sm:$0x7]
        %v910 = vld [vmem:[%s196 + $0x60] sm:$0xf8]
        %v911 = vld [vmem:[%s196 + $0x68] sm:$0xf8]
        %v912 = vld [vmem:[%s196 + $0x70] sm:$0x7]
        %v913 = vld [vmem:[%s196 + $0x78] sm:$0x7]
        %v914 = vld [vmem:[%s196 + $0x80] sm:$0xf8]
        %v915 = vld [vmem:[%s196 + $0x88] sm:$0xf8]
        %v916 = vld [vmem:[%s196 + $0x90] sm:$0x7]
        %v917 = vld [vmem:[%s196 + $0x98] sm:$0x7]
        %v918 = vld [vmem:[%s196 + $0xa0] sm:$0xf8]
        %v919 = vld [vmem:[%s196 + $0xa8] sm:$0xf8]
        %v920 = vld [vmem:[%s196 + $0xb0] sm:$0x7]
        %v921 = vld [vmem:[%s196 + $0xb8] sm:$0x7]
        %v922 = vld [vmem:[%s196 + $0xc0] sm:$0xf8]
        %v923 = vld [vmem:[%s196 + $0xc8] sm:$0xf8]
        %v924 = vld [vmem:[%s196 + $0xd0] sm:$0x7]
        %v925 = vld [vmem:[%s196 + $0xd8] sm:$0x7]
        %v926 = vld [vmem:[%s196 + $0xe0] sm:$0xf8]
        %v927 = vld [vmem:[%s196 + $0xe8] sm:$0xf8]
        %v928 = vld [vmem:[%s196 + $0xf0] sm:$0x7]
        %v929 = vld [vmem:[%s196 + $0xf8] sm:$0x7]
        %vm962 = vcmask 1044480
        %v963 = vrot.slane %v898, 3
        %v964 = vrot.slane %v900, 3
        %v965 = vsel %vm962, %v963, %v964
        %v966 = vrot.slane %v899, 3
        %v967 = vrot.slane %v901, 3
        %v968 = vsel %vm962, %v966, %v967
        %v969 = vrot.slane %v902, 3
        %v970 = vrot.slane %v904, 3
        %v971 = vsel %vm962, %v969, %v970
        %v972 = vrot.slane %v903, 3
        %v973 = vrot.slane %v905, 3
        %v974 = vsel %vm962, %v972, %v973
        %v975 = vrot.slane %v906, 3
        %v976 = vrot.slane %v908, 3
        %v977 = vsel %vm962, %v975, %v976
        %v978 = vrot.slane %v907, 3
        %v979 = vrot.slane %v909, 3
        %v980 = vsel %vm962, %v978, %v979
        %v981 = vrot.slane %v910, 3
        %v982 = vrot.slane %v912, 3
        %v983 = vsel %vm962, %v981, %v982
        %v984 = vrot.slane %v911, 3
        %v985 = vrot.slane %v913, 3
        %v986 = vsel %vm962, %v984, %v985
        %v987 = vrot.slane %v914, 3
        %v988 = vrot.slane %v916, 3
        %v989 = vsel %vm962, %v987, %v988
        %v990 = vrot.slane %v915, 3
        %v991 = vrot.slane %v917, 3
        %v992 = vsel %vm962, %v990, %v991
        %v993 = vrot.slane %v918, 3
        %v994 = vrot.slane %v920, 3
        %v995 = vsel %vm962, %v993, %v994
        %v996 = vrot.slane %v919, 3
        %v997 = vrot.slane %v921, 3
        %v998 = vsel %vm962, %v996, %v997
        %v999 = vrot.slane %v922, 3
        %v1000 = vrot.slane %v924, 3
        %v1001 = vsel %vm962, %v999, %v1000
        %v1002 = vrot.slane %v923, 3
        %v1003 = vrot.slane %v925, 3
        %v1004 = vsel %vm962, %v1002, %v1003
        %v1005 = vrot.slane %v926, 3
        %v1006 = vrot.slane %v928, 3
        %v1007 = vsel %vm962, %v1005, %v1006
        %v1008 = vrot.slane %v927, 3
        %v1009 = vrot.slane %v929, 3
        %v1010 = vsel %vm962, %v1008, %v1009
        %s1019 = scalar_lea.vmem [#allocation2], 408
        %v1020 = vld [vmem:[%s1019] sm:$0xff]
        %v1021 = vld [vmem:[%s1019 + $0x8] sm:$0xff]
        %v1022 = vld [vmem:[%s1019 + $0x10] sm:$0xff]
        %v1023 = vld [vmem:[%s1019 + $0x18] sm:$0xff]
        %v1024 = vld [vmem:[%s1019 + $0x20] sm:$0xff]
        %v1025 = vld [vmem:[%s1019 + $0x28] sm:$0xff]
        %v1026 = vld [vmem:[%s1019 + $0x30] sm:$0xff]
        %v1027 = vld [vmem:[%s1019 + $0x38] sm:$0xff]
        %v1028 = vld [vmem:[%s1019 + $0x40] sm:$0xff]
        %v1029 = vld [vmem:[%s1019 + $0x48] sm:$0xff]
        %v1030 = vld [vmem:[%s1019 + $0x50] sm:$0xff]
        %v1031 = vld [vmem:[%s1019 + $0x58] sm:$0xff]
        %v1032 = vld [vmem:[%s1019 + $0x60] sm:$0xff]
        %v1033 = vld [vmem:[%s1019 + $0x68] sm:$0xff]
        %v1034 = vld [vmem:[%s1019 + $0x70] sm:$0xff]
        %v1035 = vld [vmem:[%s1019 + $0x78] sm:$0xff]
        %v1036 = vld [vmem:[%s1019 + $0x80] sm:$0xf]
        %v1037 = vsel %vm369, %v968, 0
        %v1039 = vsel %vm369, %v974, 0
        %v1041 = vsel %vm369, %v980, 0
        %v1043 = vsel %vm369, %v986, 0
        %v1045 = vsel %vm369, %v992, 0
        %v1047 = vsel %vm369, %v998, 0
        %v1049 = vsel %vm369, %v1004, 0
        %v1051 = vsel %vm369, %v1010, 0
        %v1054 = vsel %vm386, %v1036, 0
        %1056 = vmatprep.subr.mxu0 0.0
        %1057 = vmatpush1.msra.mxu0 %v1020
        %1058 = vmatprep.subr.mxu0 0.0
        %1059 = vmatpush1.msra.mxu0 %v1021
        %1060 = vmatprep.subr.mxu0 0.0
        %1061 = vmatpush1.msra.mxu0 %v1022
        %1062 = vmatprep.subr.mxu0 0.0
        %1063 = vmatpush1.msra.mxu0 %v1023
        %1064 = vmatprep.subr.mxu0 0.0
        %1065 = vmatpush1.msra.mxu0 %v1024
        %1066 = vmatprep.subr.mxu0 0.0
        %1067 = vmatpush1.msra.mxu0 %v1025
        %1068 = vmatprep.subr.mxu0 0.0
        %1069 = vmatpush1.msra.mxu0 %v1026
        %1070 = vmatprep.subr.mxu0 0.0
        %1071 = vmatpush1.msra.mxu0 %v1027
        %1072 = vmatprep.subr.mxu0 0.0
        %1073 = vmatpush1.msra.mxu0 %v1028
        %1074 = vmatprep.subr.mxu0 0.0
        %1075 = vmatpush1.msra.mxu0 %v1029
        %1076 = vmatprep.subr.mxu0 0.0
        %1077 = vmatpush1.msra.mxu0 %v1030
        %1078 = vmatprep.subr.mxu0 0.0
        %1079 = vmatpush1.msra.mxu0 %v1031
        %1080 = vmatprep.subr.mxu0 0.0
        %1081 = vmatpush1.msra.mxu0 %v1032
        %1082 = vmatprep.subr.mxu0 0.0
        %1083 = vmatpush1.msra.mxu0 %v1033
        %1084 = vmatprep.subr.mxu0 0.0
        %1085 = vmatpush1.msra.mxu0 %v1034
        %1086 = vmatprep.subr.mxu0 0.0
        %1087 = vmatpush1.msra.mxu0 %v1035
        %1088 = vmatprep.subr.mxu0 0.0
        %1089 = vmatpush1.msra.mxu0 %v1054
        %1090 = vmatprep.subr.mxu0 0.0
        %1091 = vmatpush1.msra.mxu0 0.0
        %1092 = vmatprep.subr.mxu0 0.0
        %1093 = vmatpush1.msra.mxu0 0.0
        %1094 = vmatprep.subr.mxu0 0.0
        %1095 = vmatpush1.msra.mxu0 0.0
        %1096 = vmatprep.subr.mxu0 0.0
        %1097 = vmatpush1.msra.mxu0 0.0
        %1098 = vmatprep.subr.mxu0 0.0
        %1099 = vmatpush1.msra.mxu0 0.0
        %1100 = vmatprep.subr.mxu0 0.0
        %1101 = vmatpush1.msra.mxu0 0.0
        %1102 = vmatprep.subr.mxu0 0.0
        %1103 = vmatpush1.msra.mxu0 0.0
        %1104 = vmatprep.subr.mxu0 0.0
        %1105 = vmatpush1.msra.mxu0 0.0
        %1106 = vmatprep.subr.mxu0 0.0
        %1107 = vmatpush1.msra.mxu0 0.0
        %1108 = vmatprep.subr.mxu0 0.0
        %1109 = vmatpush1.msra.mxu0 0.0
        %1110 = vmatprep.subr.mxu0 0.0
        %1111 = vmatpush1.msra.mxu0 0.0
        %1112 = vmatprep.subr.mxu0 0.0
        %1113 = vmatpush1.msra.mxu0 0.0
        %1114 = vmatprep.subr.mxu0 0.0
        %1115 = vmatpush1.msra.mxu0 0.0
        %1116 = vmatprep.subr.mxu0 0.0
        %1117 = vmatpush1.msra.mxu0 0.0
        %1118 = vmatprep.subr.mxu0 0.0
        %1119 = vmatpush1.msra.mxu0 0.0
        %1120 = vmatprep.mubr.f32.mxu0 %v1037
        %1121 = vmatmul.mubr.f32.gmra.mrb[0].mxu0 %v965
        %v1122 = vpop.f32.mrb[0].mxu0
        %v1123 = vadd.f32 0.0, %v1122
        %v1124 = vpop.f32.mrb[0].mxu0
        %1125 = vmatprep.mubr.f32.mxu0 %v1039
        %1126 = vmatmul.mubr.f32.gmra.mrb[0].mxu0 %v971
        %v1127 = vpop.f32.mrb[0].mxu0
        %v1128 = vadd.f32 0.0, %v1127
        %v1129 = vpop.f32.mrb[0].mxu0
        %1130 = vmatprep.mubr.f32.mxu0 %v1041
        %1131 = vmatmul.mubr.f32.gmra.mrb[0].mxu0 %v977
        %v1132 = vpop.f32.mrb[0].mxu0
        %v1133 = vadd.f32 0.0, %v1132
        %v1134 = vpop.f32.mrb[0].mxu0
        %1135 = vmatprep.mubr.f32.mxu0 %v1043
        %1136 = vmatmul.mubr.f32.gmra.mrb[0].mxu0 %v983
        %v1137 = vpop.f32.mrb[0].mxu0
        %v1138 = vadd.f32 0.0, %v1137
        %v1139 = vpop.f32.mrb[0].mxu0
        %1140 = vmatprep.mubr.f32.mxu0 %v1045
        %1141 = vmatmul.mubr.f32.gmra.mrb[0].mxu0 %v989
        %v1142 = vpop.f32.mrb[0].mxu0
        %v1143 = vadd.f32 0.0, %v1142
        %v1144 = vpop.f32.mrb[0].mxu0
        %1145 = vmatprep.mubr.f32.mxu0 %v1047
        %1146 = vmatmul.mubr.f32.gmra.mrb[0].mxu0 %v995
        %v1147 = vpop.f32.mrb[0].mxu0
        %v1148 = vadd.f32 0.0, %v1147
        %v1149 = vpop.f32.mrb[0].mxu0
        %1150 = vmatprep.mubr.f32.mxu0 %v1049
        %1151 = vmatmul.mubr.f32.gmra.mrb[0].mxu0 %v1001
        %v1152 = vpop.f32.mrb[0].mxu0
        %v1153 = vadd.f32 0.0, %v1152
        %v1154 = vpop.f32.mrb[0].mxu0
        %1155 = vmatprep.mubr.f32.mxu0 %v1051
        %1156 = vmatmul.mubr.f32.gmra.mrb[0].mxu0 %v1007
        %v1157 = vpop.f32.mrb[0].mxu0
        %v1158 = vadd.f32 0.0, %v1157
        %v1159 = vpop.f32.mrb[0].mxu0
        %1160 = vdwg.mxu0
        %v1161 = vadd.f32 %v890, %v1123
        %v1162 = vadd.f32 %v891, %v1128
        %v1163 = vadd.f32 %v892, %v1133
        %v1164 = vadd.f32 %v893, %v1138
        %v1165 = vadd.f32 %v894, %v1143
        %v1166 = vadd.f32 %v895, %v1148
        %v1167 = vadd.f32 %v896, %v1153
        %v1168 = vadd.f32 %v897, %v1158
        %s1169 = scalar_lea.vmem %s196, 32
        %v1170 = vld [vmem:[%s1169] sm:$0xff]
        %v1171 = vld [vmem:[%s1169 + $0x8] sm:$0xff]
        %v1172 = vld [vmem:[%s1169 + $0x20] sm:$0xff]
        %v1173 = vld [vmem:[%s1169 + $0x28] sm:$0xff]
        %v1174 = vld [vmem:[%s1169 + $0x40] sm:$0xff]
        %v1175 = vld [vmem:[%s1169 + $0x48] sm:$0xff]
        %v1176 = vld [vmem:[%s1169 + $0x60] sm:$0xff]
        %v1177 = vld [vmem:[%s1169 + $0x68] sm:$0xff]
        %v1178 = vld [vmem:[%s1169 + $0x80] sm:$0xff]
        %v1179 = vld [vmem:[%s1169 + $0x88] sm:$0xff]
        %v1180 = vld [vmem:[%s1169 + $0xa0] sm:$0xff]
        %v1181 = vld [vmem:[%s1169 + $0xa8] sm:$0xff]
        %v1182 = vld [vmem:[%s1169 + $0xc0] sm:$0xff]
        %v1183 = vld [vmem:[%s1169 + $0xc8] sm:$0xff]
        %v1184 = vld [vmem:[%s1169 + $0xe0] sm:$0xff]
        %v1185 = vld [vmem:[%s1169 + $0xe8] sm:$0xff]
        %s1186 = scalar_lea.vmem [#allocation2], 544
        %v1187 = vld [vmem:[%s1186] sm:$0xff]
        %v1188 = vld [vmem:[%s1186 + $0x8] sm:$0xff]
        %v1189 = vld [vmem:[%s1186 + $0x10] sm:$0xff]
        %v1190 = vld [vmem:[%s1186 + $0x18] sm:$0xff]
        %v1191 = vld [vmem:[%s1186 + $0x20] sm:$0xff]
        %v1192 = vld [vmem:[%s1186 + $0x28] sm:$0xff]
        %v1193 = vld [vmem:[%s1186 + $0x30] sm:$0xff]
        %v1194 = vld [vmem:[%s1186 + $0x38] sm:$0xff]
        %v1195 = vld [vmem:[%s1186 + $0x40] sm:$0xff]
        %v1196 = vld [vmem:[%s1186 + $0x48] sm:$0xff]
        %v1197 = vld [vmem:[%s1186 + $0x50] sm:$0xff]
        %v1198 = vld [vmem:[%s1186 + $0x58] sm:$0xff]
        %v1199 = vld [vmem:[%s1186 + $0x60] sm:$0xff]
        %v1200 = vld [vmem:[%s1186 + $0x68] sm:$0xff]
        %v1201 = vld [vmem:[%s1186 + $0x70] sm:$0xff]
        %v1202 = vld [vmem:[%s1186 + $0x78] sm:$0xff]
        %v1203 = vld [vmem:[%s1186 + $0x80] sm:$0xf]
        %v1205 = vsel %vm369, %v1171, 0
        %v1208 = vsel %vm369, %v1173, 0
        %v1211 = vsel %vm369, %v1175, 0
        %v1214 = vsel %vm369, %v1177, 0
        %v1217 = vsel %vm369, %v1179, 0
        %v1220 = vsel %vm369, %v1181, 0
        %v1223 = vsel %vm369, %v1183, 0
        %v1226 = vsel %vm369, %v1185, 0
        %v1229 = vsel %vm386, %v1203, 0
        %1231 = vmatprep.subr.mxu0 0.0
        %1232 = vmatpush1.msra.mxu0 %v1187
        %1233 = vmatprep.subr.mxu0 0.0
        %1234 = vmatpush1.msra.mxu0 %v1188
        %1235 = vmatprep.subr.mxu0 0.0
        %1236 = vmatpush1.msra.mxu0 %v1189
        %1237 = vmatprep.subr.mxu0 0.0
        %1238 = vmatpush1.msra.mxu0 %v1190
        %1239 = vmatprep.subr.mxu0 0.0
        %1240 = vmatpush1.msra.mxu0 %v1191
        %1241 = vmatprep.subr.mxu0 0.0
        %1242 = vmatpush1.msra.mxu0 %v1192
        %1243 = vmatprep.subr.mxu0 0.0
        %1244 = vmatpush1.msra.mxu0 %v1193
        %1245 = vmatprep.subr.mxu0 0.0
        %1246 = vmatpush1.msra.mxu0 %v1194
        %1247 = vmatprep.subr.mxu0 0.0
        %1248 = vmatpush1.msra.mxu0 %v1195
        %1249 = vmatprep.subr.mxu0 0.0
        %1250 = vmatpush1.msra.mxu0 %v1196
        %1251 = vmatprep.subr.mxu0 0.0
        %1252 = vmatpush1.msra.mxu0 %v1197
        %1253 = vmatprep.subr.mxu0 0.0
        %1254 = vmatpush1.msra.mxu0 %v1198
        %1255 = vmatprep.subr.mxu0 0.0
        %1256 = vmatpush1.msra.mxu0 %v1199
        %1257 = vmatprep.subr.mxu0 0.0
        %1258 = vmatpush1.msra.mxu0 %v1200
        %1259 = vmatprep.subr.mxu0 0.0
        %1260 = vmatpush1.msra.mxu0 %v1201
        %1261 = vmatprep.subr.mxu0 0.0
        %1262 = vmatpush1.msra.mxu0 %v1202
        %1263 = vmatprep.subr.mxu0 0.0
        %1264 = vmatpush1.msra.mxu0 %v1229
        %1265 = vmatprep.subr.mxu0 0.0
        %1266 = vmatpush1.msra.mxu0 0.0
        %1267 = vmatprep.subr.mxu0 0.0
        %1268 = vmatpush1.msra.mxu0 0.0
        %1269 = vmatprep.subr.mxu0 0.0
        %1270 = vmatpush1.msra.mxu0 0.0
        %1271 = vmatprep.subr.mxu0 0.0
        %1272 = vmatpush1.msra.mxu0 0.0
        %1273 = vmatprep.subr.mxu0 0.0
        %1274 = vmatpush1.msra.mxu0 0.0
        %1275 = vmatprep.subr.mxu0 0.0
        %1276 = vmatpush1.msra.mxu0 0.0
        %1277 = vmatprep.subr.mxu0 0.0
        %1278 = vmatpush1.msra.mxu0 0.0
        %1279 = vmatprep.subr.mxu0 0.0
        %1280 = vmatpush1.msra.mxu0 0.0
        %1281 = vmatprep.subr.mxu0 0.0
        %1282 = vmatpush1.msra.mxu0 0.0
        %1283 = vmatprep.subr.mxu0 0.0
        %1284 = vmatpush1.msra.mxu0 0.0
        %1285 = vmatprep.subr.mxu0 0.0
        %1286 = vmatpush1.msra.mxu0 0.0
        %1287 = vmatprep.subr.mxu0 0.0
        %1288 = vmatpush1.msra.mxu0 0.0
        %1289 = vmatprep.subr.mxu0 0.0
        %1290 = vmatpush1.msra.mxu0 0.0
        %1291 = vmatprep.subr.mxu0 0.0
        %1292 = vmatpush1.msra.mxu0 0.0
        %1293 = vmatprep.subr.mxu0 0.0
        %1294 = vmatpush1.msra.mxu0 0.0
        %1295 = vmatprep.mubr.f32.mxu0 %v1205
        %1296 = vmatmul.mubr.f32.gmra.mrb[0].mxu0 %v1170
        %v1297 = vpop.f32.mrb[0].mxu0
        %v1298 = vadd.f32 0.0, %v1297
        %v1299 = vpop.f32.mrb[0].mxu0
        %1300 = vmatprep.mubr.f32.mxu0 %v1208
        %1301 = vmatmul.mubr.f32.gmra.mrb[0].mxu0 %v1172
        %v1302 = vpop.f32.mrb[0].mxu0
        %v1303 = vadd.f32 0.0, %v1302
        %v1304 = vpop.f32.mrb[0].mxu0
        %1305 = vmatprep.mubr.f32.mxu0 %v1211
        %1306 = vmatmul.mubr.f32.gmra.mrb[0].mxu0 %v1174
        %v1307 = vpop.f32.mrb[0].mxu0
        %v1308 = vadd.f32 0.0, %v1307
        %v1309 = vpop.f32.mrb[0].mxu0
        %1310 = vmatprep.mubr.f32.mxu0 %v1214
        %1311 = vmatmul.mubr.f32.gmra.mrb[0].mxu0 %v1176
        %v1312 = vpop.f32.mrb[0].mxu0
        %v1313 = vadd.f32 0.0, %v1312
        %v1314 = vpop.f32.mrb[0].mxu0
        %1315 = vmatprep.mubr.f32.mxu0 %v1217
        %1316 = vmatmul.mubr.f32.gmra.mrb[0].mxu0 %v1178
        %v1317 = vpop.f32.mrb[0].mxu0
        %v1318 = vadd.f32 0.0, %v1317
        %v1319 = vpop.f32.mrb[0].mxu0
        %1320 = vmatprep.mubr.f32.mxu0 %v1220
        %1321 = vmatmul.mubr.f32.gmra.mrb[0].mxu0 %v1180
        %v1322 = vpop.f32.mrb[0].mxu0
        %v1323 = vadd.f32 0.0, %v1322
        %v1324 = vpop.f32.mrb[0].mxu0
        %1325 = vmatprep.mubr.f32.mxu0 %v1223
        %1326 = vmatmul.mubr.f32.gmra.mrb[0].mxu0 %v1182
        %v1327 = vpop.f32.mrb[0].mxu0
        %v1328 = vadd.f32 0.0, %v1327
        %v1329 = vpop.f32.mrb[0].mxu0
        %1330 = vmatprep.mubr.f32.mxu0 %v1226
        %1331 = vmatmul.mubr.f32.gmra.mrb[0].mxu0 %v1184
        %v1332 = vpop.f32.mrb[0].mxu0
        %v1333 = vadd.f32 0.0, %v1332
        %v1334 = vpop.f32.mrb[0].mxu0
        %1335 = vdwg.mxu0
        %v1336 = vadd.f32 %v1161, %v1298
        %v1337 = vadd.f32 %v1162, %v1303
        %v1338 = vadd.f32 %v1163, %v1308
        %v1339 = vadd.f32 %v1164, %v1313
        %v1340 = vadd.f32 %v1165, %v1318
        %v1341 = vadd.f32 %v1166, %v1323
        %v1342 = vadd.f32 %v1167, %v1328
        %v1343 = vadd.f32 %v1168, %v1333
        %v1344 = vld [vmem:[%s1169] sm:$0xfe]
        %v1345 = vld [vmem:[%s1169 + $0x8] sm:$0xfe]
        %v1346 = vld [vmem:[%s1169 + $0x10] sm:$0x1]
        %v1347 = vld [vmem:[%s1169 + $0x18] sm:$0x1]
        %v1348 = vld [vmem:[%s1169 + $0x20] sm:$0xfe]
        %v1349 = vld [vmem:[%s1169 + $0x28] sm:$0xfe]
        %v1350 = vld [vmem:[%s1169 + $0x30] sm:$0x1]
        %v1351 = vld [vmem:[%s1169 + $0x38] sm:$0x1]
        %v1352 = vld [vmem:[%s1169 + $0x40] sm:$0xfe]
        %v1353 = vld [vmem:[%s1169 + $0x48] sm:$0xfe]
        %v1354 = vld [vmem:[%s1169 + $0x50] sm:$0x1]
        %v1355 = vld [vmem:[%s1169 + $0x58] sm:$0x1]
        %v1356 = vld [vmem:[%s1169 + $0x60] sm:$0xfe]
        %v1357 = vld [vmem:[%s1169 + $0x68] sm:$0xfe]
        %v1358 = vld [vmem:[%s1169 + $0x70] sm:$0x1]
        %v1359 = vld [vmem:[%s1169 + $0x78] sm:$0x1]
        %v1360 = vld [vmem:[%s1169 + $0x80] sm:$0xfe]
        %v1361 = vld [vmem:[%s1169 + $0x88] sm:$0xfe]
        %v1362 = vld [vmem:[%s1169 + $0x90] sm:$0x1]
        %v1363 = vld [vmem:[%s1169 + $0x98] sm:$0x1]
        %v1364 = vld [vmem:[%s1169 + $0xa0] sm:$0xfe]
        %v1365 = vld [vmem:[%s1169 + $0xa8] sm:$0xfe]
        %v1366 = vld [vmem:[%s1169 + $0xb0] sm:$0x1]
        %v1367 = vld [vmem:[%s1169 + $0xb8] sm:$0x1]
        %v1368 = vld [vmem:[%s1169 + $0xc0] sm:$0xfe]
        %v1369 = vld [vmem:[%s1169 + $0xc8] sm:$0xfe]
        %v1370 = vld [vmem:[%s1169 + $0xd0] sm:$0x1]
        %v1371 = vld [vmem:[%s1169 + $0xd8] sm:$0x1]
        %v1372 = vld [vmem:[%s1169 + $0xe0] sm:$0xfe]
        %v1373 = vld [vmem:[%s1169 + $0xe8] sm:$0xfe]
        %v1374 = vld [vmem:[%s1169 + $0xf0] sm:$0x1]
        %v1375 = vld [vmem:[%s1169 + $0xf8] sm:$0x1]
        %v1408 = vrot.slane %v1344, 1
        %v1409 = vrot.slane %v1346, 1
        %v1410 = vsel %vm294, %v1408, %v1409
        %v1411 = vrot.slane %v1345, 1
        %v1412 = vrot.slane %v1347, 1
        %v1413 = vsel %vm294, %v1411, %v1412
        %v1414 = vrot.slane %v1348, 1
        %v1415 = vrot.slane %v1350, 1
        %v1416 = vsel %vm294, %v1414, %v1415
        %v1417 = vrot.slane %v1349, 1
        %v1418 = vrot.slane %v1351, 1
        %v1419 = vsel %vm294, %v1417, %v1418
        %v1420 = vrot.slane %v1352, 1
        %v1421 = vrot.slane %v1354, 1
        %v1422 = vsel %vm294, %v1420, %v1421
        %v1423 = vrot.slane %v1353, 1
        %v1424 = vrot.slane %v1355, 1
        %v1425 = vsel %vm294, %v1423, %v1424
        %v1426 = vrot.slane %v1356, 1
        %v1427 = vrot.slane %v1358, 1
        %v1428 = vsel %vm294, %v1426, %v1427
        %v1429 = vrot.slane %v1357, 1
        %v1430 = vrot.slane %v1359, 1
        %v1431 = vsel %vm294, %v1429, %v1430
        %v1432 = vrot.slane %v1360, 1
        %v1433 = vrot.slane %v1362, 1
        %v1434 = vsel %vm294, %v1432, %v1433
        %v1435 = vrot.slane %v1361, 1
        %v1436 = vrot.slane %v1363, 1
        %v1437 = vsel %vm294, %v1435, %v1436
        %v1438 = vrot.slane %v1364, 1
        %v1439 = vrot.slane %v1366, 1
        %v1440 = vsel %vm294, %v1438, %v1439
        %v1441 = vrot.slane %v1365, 1
        %v1442 = vrot.slane %v1367, 1
        %v1443 = vsel %vm294, %v1441, %v1442
        %v1444 = vrot.slane %v1368, 1
        %v1445 = vrot.slane %v1370, 1
        %v1446 = vsel %vm294, %v1444, %v1445
        %v1447 = vrot.slane %v1369, 1
        %v1448 = vrot.slane %v1371, 1
        %v1449 = vsel %vm294, %v1447, %v1448
        %v1450 = vrot.slane %v1372, 1
        %v1451 = vrot.slane %v1374, 1
        %v1452 = vsel %vm294, %v1450, %v1451
        %v1453 = vrot.slane %v1373, 1
        %v1454 = vrot.slane %v1375, 1
        %v1455 = vsel %vm294, %v1453, %v1454
        %s1464 = scalar_lea.vmem [#allocation2], 680
        %v1465 = vld [vmem:[%s1464] sm:$0xff]
        %v1466 = vld [vmem:[%s1464 + $0x8] sm:$0xff]
        %v1467 = vld [vmem:[%s1464 + $0x10] sm:$0xff]
        %v1468 = vld [vmem:[%s1464 + $0x18] sm:$0xff]
        %v1469 = vld [vmem:[%s1464 + $0x20] sm:$0xff]
        %v1470 = vld [vmem:[%s1464 + $0x28] sm:$0xff]
        %v1471 = vld [vmem:[%s1464 + $0x30] sm:$0xff]
        %v1472 = vld [vmem:[%s1464 + $0x38] sm:$0xff]
        %v1473 = vld [vmem:[%s1464 + $0x40] sm:$0xff]
        %v1474 = vld [vmem:[%s1464 + $0x48] sm:$0xff]
        %v1475 = vld [vmem:[%s1464 + $0x50] sm:$0xff]
        %v1476 = vld [vmem:[%s1464 + $0x58] sm:$0xff]
        %v1477 = vld [vmem:[%s1464 + $0x60] sm:$0xff]
        %v1478 = vld [vmem:[%s1464 + $0x68] sm:$0xff]
        %v1479 = vld [vmem:[%s1464 + $0x70] sm:$0xff]
        %v1480 = vld [vmem:[%s1464 + $0x78] sm:$0xff]
        %v1481 = vld [vmem:[%s1464 + $0x80] sm:$0xf]
        %v1482 = vsel %vm369, %v1413, 0
        %v1484 = vsel %vm369, %v1419, 0
        %v1486 = vsel %vm369, %v1425, 0
        %v1488 = vsel %vm369, %v1431, 0
        %v1490 = vsel %vm369, %v1437, 0
        %v1492 = vsel %vm369, %v1443, 0
        %v1494 = vsel %vm369, %v1449, 0
        %v1496 = vsel %vm369, %v1455, 0
        %v1499 = vsel %vm386, %v1481, 0
        %1501 = vmatprep.subr.mxu0 0.0
        %1502 = vmatpush1.msra.mxu0 %v1465
        %1503 = vmatprep.subr.mxu0 0.0
        %1504 = vmatpush1.msra.mxu0 %v1466
        %1505 = vmatprep.subr.mxu0 0.0
        %1506 = vmatpush1.msra.mxu0 %v1467
        %1507 = vmatprep.subr.mxu0 0.0
        %1508 = vmatpush1.msra.mxu0 %v1468
        %1509 = vmatprep.subr.mxu0 0.0
        %1510 = vmatpush1.msra.mxu0 %v1469
        %1511 = vmatprep.subr.mxu0 0.0
        %1512 = vmatpush1.msra.mxu0 %v1470
        %1513 = vmatprep.subr.mxu0 0.0
        %1514 = vmatpush1.msra.mxu0 %v1471
        %1515 = vmatprep.subr.mxu0 0.0
        %1516 = vmatpush1.msra.mxu0 %v1472
        %1517 = vmatprep.subr.mxu0 0.0
        %1518 = vmatpush1.msra.mxu0 %v1473
        %1519 = vmatprep.subr.mxu0 0.0
        %1520 = vmatpush1.msra.mxu0 %v1474
        %1521 = vmatprep.subr.mxu0 0.0
        %1522 = vmatpush1.msra.mxu0 %v1475
        %1523 = vmatprep.subr.mxu0 0.0
        %1524 = vmatpush1.msra.mxu0 %v1476
        %1525 = vmatprep.subr.mxu0 0.0
        %1526 = vmatpush1.msra.mxu0 %v1477
        %1527 = vmatprep.subr.mxu0 0.0
        %1528 = vmatpush1.msra.mxu0 %v1478
        %1529 = vmatprep.subr.mxu0 0.0
        %1530 = vmatpush1.msra.mxu0 %v1479
        %1531 = vmatprep.subr.mxu0 0.0
        %1532 = vmatpush1.msra.mxu0 %v1480
        %1533 = vmatprep.subr.mxu0 0.0
        %1534 = vmatpush1.msra.mxu0 %v1499
        %1535 = vmatprep.subr.mxu0 0.0
        %1536 = vmatpush1.msra.mxu0 0.0
        %1537 = vmatprep.subr.mxu0 0.0
        %1538 = vmatpush1.msra.mxu0 0.0
        %1539 = vmatprep.subr.mxu0 0.0
        %1540 = vmatpush1.msra.mxu0 0.0
        %1541 = vmatprep.subr.mxu0 0.0
        %1542 = vmatpush1.msra.mxu0 0.0
        %1543 = vmatprep.subr.mxu0 0.0
        %1544 = vmatpush1.msra.mxu0 0.0
        %1545 = vmatprep.subr.mxu0 0.0
        %1546 = vmatpush1.msra.mxu0 0.0
        %1547 = vmatprep.subr.mxu0 0.0
        %1548 = vmatpush1.msra.mxu0 0.0
        %1549 = vmatprep.subr.mxu0 0.0
        %1550 = vmatpush1.msra.mxu0 0.0
        %1551 = vmatprep.subr.mxu0 0.0
        %1552 = vmatpush1.msra.mxu0 0.0
        %1553 = vmatprep.subr.mxu0 0.0
        %1554 = vmatpush1.msra.mxu0 0.0
        %1555 = vmatprep.subr.mxu0 0.0
        %1556 = vmatpush1.msra.mxu0 0.0
        %1557 = vmatprep.subr.mxu0 0.0
        %1558 = vmatpush1.msra.mxu0 0.0
        %1559 = vmatprep.subr.mxu0 0.0
        %1560 = vmatpush1.msra.mxu0 0.0
        %1561 = vmatprep.subr.mxu0 0.0
        %1562 = vmatpush1.msra.mxu0 0.0
        %1563 = vmatprep.subr.mxu0 0.0
        %1564 = vmatpush1.msra.mxu0 0.0
        %1565 = vmatprep.mubr.f32.mxu0 %v1482
        %1566 = vmatmul.mubr.f32.gmra.mrb[0].mxu0 %v1410
        %v1567 = vpop.f32.mrb[0].mxu0
        %v1568 = vadd.f32 0.0, %v1567
        %v1569 = vpop.f32.mrb[0].mxu0
        %1570 = vmatprep.mubr.f32.mxu0 %v1484
        %1571 = vmatmul.mubr.f32.gmra.mrb[0].mxu0 %v1416
        %v1572 = vpop.f32.mrb[0].mxu0
        %v1573 = vadd.f32 0.0, %v1572
        %v1574 = vpop.f32.mrb[0].mxu0
        %1575 = vmatprep.mubr.f32.mxu0 %v1486
        %1576 = vmatmul.mubr.f32.gmra.mrb[0].mxu0 %v1422
        %v1577 = vpop.f32.mrb[0].mxu0
        %v1578 = vadd.f32 0.0, %v1577
        %v1579 = vpop.f32.mrb[0].mxu0
        %1580 = vmatprep.mubr.f32.mxu0 %v1488
        %1581 = vmatmul.mubr.f32.gmra.mrb[0].mxu0 %v1428
        %v1582 = vpop.f32.mrb[0].mxu0
        %v1583 = vadd.f32 0.0, %v1582
        %v1584 = vpop.f32.mrb[0].mxu0
        %1585 = vmatprep.mubr.f32.mxu0 %v1490
        %1586 = vmatmul.mubr.f32.gmra.mrb[0].mxu0 %v1434
        %v1587 = vpop.f32.mrb[0].mxu0
        %v1588 = vadd.f32 0.0, %v1587
        %v1589 = vpop.f32.mrb[0].mxu0
        %1590 = vmatprep.mubr.f32.mxu0 %v1492
        %1591 = vmatmul.mubr.f32.gmra.mrb[0].mxu0 %v1440
        %v1592 = vpop.f32.mrb[0].mxu0
        %v1593 = vadd.f32 0.0, %v1592
        %v1594 = vpop.f32.mrb[0].mxu0
        %1595 = vmatprep.mubr.f32.mxu0 %v1494
        %1596 = vmatmul.mubr.f32.gmra.mrb[0].mxu0 %v1446
        %v1597 = vpop.f32.mrb[0].mxu0
        %v1598 = vadd.f32 0.0, %v1597
        %v1599 = vpop.f32.mrb[0].mxu0
        %1600 = vmatprep.mubr.f32.mxu0 %v1496
        %1601 = vmatmul.mubr.f32.gmra.mrb[0].mxu0 %v1452
        %v1602 = vpop.f32.mrb[0].mxu0
        %v1603 = vadd.f32 0.0, %v1602
        %v1604 = vpop.f32.mrb[0].mxu0
        %1605 = vdwg.mxu0
        %v1606 = vadd.f32 %v1336, %v1568
        %v1607 = vadd.f32 %v1337, %v1573
        %v1608 = vadd.f32 %v1338, %v1578
        %v1609 = vadd.f32 %v1339, %v1583
        %v1610 = vadd.f32 %v1340, %v1588
        %v1611 = vadd.f32 %v1341, %v1593
        %v1612 = vadd.f32 %v1342, %v1598
        %v1613 = vadd.f32 %v1343, %v1603
        %v1614 = vld [vmem:[%s1169] sm:$0xfc]
        %v1615 = vld [vmem:[%s1169 + $0x8] sm:$0xfc]
        %v1616 = vld [vmem:[%s1169 + $0x10] sm:$0x3]
        %v1617 = vld [vmem:[%s1169 + $0x18] sm:$0x3]
        %v1618 = vld [vmem:[%s1169 + $0x20] sm:$0xfc]
        %v1619 = vld [vmem:[%s1169 + $0x28] sm:$0xfc]
        %v1620 = vld [vmem:[%s1169 + $0x30] sm:$0x3]
        %v1621 = vld [vmem:[%s1169 + $0x38] sm:$0x3]
        %v1622 = vld [vmem:[%s1169 + $0x40] sm:$0xfc]
        %v1623 = vld [vmem:[%s1169 + $0x48] sm:$0xfc]
        %v1624 = vld [vmem:[%s1169 + $0x50] sm:$0x3]
        %v1625 = vld [vmem:[%s1169 + $0x58] sm:$0x3]
        %v1626 = vld [vmem:[%s1169 + $0x60] sm:$0xfc]
        %v1627 = vld [vmem:[%s1169 + $0x68] sm:$0xfc]
        %v1628 = vld [vmem:[%s1169 + $0x70] sm:$0x3]
        %v1629 = vld [vmem:[%s1169 + $0x78] sm:$0x3]
        %v1630 = vld [vmem:[%s1169 + $0x80] sm:$0xfc]
        %v1631 = vld [vmem:[%s1169 + $0x88] sm:$0xfc]
        %v1632 = vld [vmem:[%s1169 + $0x90] sm:$0x3]
        %v1633 = vld [vmem:[%s1169 + $0x98] sm:$0x3]
        %v1634 = vld [vmem:[%s1169 + $0xa0] sm:$0xfc]
        %v1635 = vld [vmem:[%s1169 + $0xa8] sm:$0xfc]
        %v1636 = vld [vmem:[%s1169 + $0xb0] sm:$0x3]
        %v1637 = vld [vmem:[%s1169 + $0xb8] sm:$0x3]
        %v1638 = vld [vmem:[%s1169 + $0xc0] sm:$0xfc]
        %v1639 = vld [vmem:[%s1169 + $0xc8] sm:$0xfc]
        %v1640 = vld [vmem:[%s1169 + $0xd0] sm:$0x3]
        %v1641 = vld [vmem:[%s1169 + $0xd8] sm:$0x3]
        %v1642 = vld [vmem:[%s1169 + $0xe0] sm:$0xfc]
        %v1643 = vld [vmem:[%s1169 + $0xe8] sm:$0xfc]
        %v1644 = vld [vmem:[%s1169 + $0xf0] sm:$0x3]
        %v1645 = vld [vmem:[%s1169 + $0xf8] sm:$0x3]
        %v1678 = vrot.slane %v1614, 2
        %v1679 = vrot.slane %v1616, 2
        %v1680 = vsel %vm691, %v1678, %v1679
        %v1681 = vrot.slane %v1615, 2
        %v1682 = vrot.slane %v1617, 2
        %v1683 = vsel %vm691, %v1681, %v1682
        %v1684 = vrot.slane %v1618, 2
        %v1685 = vrot.slane %v1620, 2
        %v1686 = vsel %vm691, %v1684, %v1685
        %v1687 = vrot.slane %v1619, 2
        %v1688 = vrot.slane %v1621, 2
        %v1689 = vsel %vm691, %v1687, %v1688
        %v1690 = vrot.slane %v1622, 2
        %v1691 = vrot.slane %v1624, 2
        %v1692 = vsel %vm691, %v1690, %v1691
        %v1693 = vrot.slane %v1623, 2
        %v1694 = vrot.slane %v1625, 2
        %v1695 = vsel %vm691, %v1693, %v1694
        %v1696 = vrot.slane %v1626, 2
        %v1697 = vrot.slane %v1628, 2
        %v1698 = vsel %vm691, %v1696, %v1697
        %v1699 = vrot.slane %v1627, 2
        %v1700 = vrot.slane %v1629, 2
        %v1701 = vsel %vm691, %v1699, %v1700
        %v1702 = vrot.slane %v1630, 2
        %v1703 = vrot.slane %v1632, 2
        %v1704 = vsel %vm691, %v1702, %v1703
        %v1705 = vrot.slane %v1631, 2
        %v1706 = vrot.slane %v1633, 2
        %v1707 = vsel %vm691, %v1705, %v1706
        %v1708 = vrot.slane %v1634, 2
        %v1709 = vrot.slane %v1636, 2
        %v1710 = vsel %vm691, %v1708, %v1709
        %v1711 = vrot.slane %v1635, 2
        %v1712 = vrot.slane %v1637, 2
        %v1713 = vsel %vm691, %v1711, %v1712
        %v1714 = vrot.slane %v1638, 2
        %v1715 = vrot.slane %v1640, 2
        %v1716 = vsel %vm691, %v1714, %v1715
        %v1717 = vrot.slane %v1639, 2
        %v1718 = vrot.slane %v1641, 2
        %v1719 = vsel %vm691, %v1717, %v1718
        %v1720 = vrot.slane %v1642, 2
        %v1721 = vrot.slane %v1644, 2
        %v1722 = vsel %vm691, %v1720, %v1721
        %v1723 = vrot.slane %v1643, 2
        %v1724 = vrot.slane %v1645, 2
        %v1725 = vsel %vm691, %v1723, %v1724
        %s1734 = scalar_lea.vmem [#allocation2], 816
        %v1735 = vld [vmem:[%s1734] sm:$0xff]
        %v1736 = vld [vmem:[%s1734 + $0x8] sm:$0xff]
        %v1737 = vld [vmem:[%s1734 + $0x10] sm:$0xff]
        %v1738 = vld [vmem:[%s1734 + $0x18] sm:$0xff]
        %v1739 = vld [vmem:[%s1734 + $0x20] sm:$0xff]
        %v1740 = vld [vmem:[%s1734 + $0x28] sm:$0xff]
        %v1741 = vld [vmem:[%s1734 + $0x30] sm:$0xff]
        %v1742 = vld [vmem:[%s1734 + $0x38] sm:$0xff]
        %v1743 = vld [vmem:[%s1734 + $0x40] sm:$0xff]
        %v1744 = vld [vmem:[%s1734 + $0x48] sm:$0xff]
        %v1745 = vld [vmem:[%s1734 + $0x50] sm:$0xff]
        %v1746 = vld [vmem:[%s1734 + $0x58] sm:$0xff]
        %v1747 = vld [vmem:[%s1734 + $0x60] sm:$0xff]
        %v1748 = vld [vmem:[%s1734 + $0x68] sm:$0xff]
        %v1749 = vld [vmem:[%s1734 + $0x70] sm:$0xff]
        %v1750 = vld [vmem:[%s1734 + $0x78] sm:$0xff]
        %v1751 = vld [vmem:[%s1734 + $0x80] sm:$0xf]
        %v1752 = vsel %vm369, %v1683, 0
        %v1754 = vsel %vm369, %v1689, 0
        %v1756 = vsel %vm369, %v1695, 0
        %v1758 = vsel %vm369, %v1701, 0
        %v1760 = vsel %vm369, %v1707, 0
        %v1762 = vsel %vm369, %v1713, 0
        %v1764 = vsel %vm369, %v1719, 0
        %v1766 = vsel %vm369, %v1725, 0
        %v1769 = vsel %vm386, %v1751, 0
        %1771 = vmatprep.subr.mxu0 0.0
        %1772 = vmatpush1.msra.mxu0 %v1735
        %1773 = vmatprep.subr.mxu0 0.0
        %1774 = vmatpush1.msra.mxu0 %v1736
        %1775 = vmatprep.subr.mxu0 0.0
        %1776 = vmatpush1.msra.mxu0 %v1737
        %1777 = vmatprep.subr.mxu0 0.0
        %1778 = vmatpush1.msra.mxu0 %v1738
        %1779 = vmatprep.subr.mxu0 0.0
        %1780 = vmatpush1.msra.mxu0 %v1739
        %1781 = vmatprep.subr.mxu0 0.0
        %1782 = vmatpush1.msra.mxu0 %v1740
        %1783 = vmatprep.subr.mxu0 0.0
        %1784 = vmatpush1.msra.mxu0 %v1741
        %1785 = vmatprep.subr.mxu0 0.0
        %1786 = vmatpush1.msra.mxu0 %v1742
        %1787 = vmatprep.subr.mxu0 0.0
        %1788 = vmatpush1.msra.mxu0 %v1743
        %1789 = vmatprep.subr.mxu0 0.0
        %1790 = vmatpush1.msra.mxu0 %v1744
        %1791 = vmatprep.subr.mxu0 0.0
        %1792 = vmatpush1.msra.mxu0 %v1745
        %1793 = vmatprep.subr.mxu0 0.0
        %1794 = vmatpush1.msra.mxu0 %v1746
        %1795 = vmatprep.subr.mxu0 0.0
        %1796 = vmatpush1.msra.mxu0 %v1747
        %1797 = vmatprep.subr.mxu0 0.0
        %1798 = vmatpush1.msra.mxu0 %v1748
        %1799 = vmatprep.subr.mxu0 0.0
        %1800 = vmatpush1.msra.mxu0 %v1749
        %1801 = vmatprep.subr.mxu0 0.0
        %1802 = vmatpush1.msra.mxu0 %v1750
        %1803 = vmatprep.subr.mxu0 0.0
        %1804 = vmatpush1.msra.mxu0 %v1769
        %1805 = vmatprep.subr.mxu0 0.0
        %1806 = vmatpush1.msra.mxu0 0.0
        %1807 = vmatprep.subr.mxu0 0.0
        %1808 = vmatpush1.msra.mxu0 0.0
        %1809 = vmatprep.subr.mxu0 0.0
        %1810 = vmatpush1.msra.mxu0 0.0
        %1811 = vmatprep.subr.mxu0 0.0
        %1812 = vmatpush1.msra.mxu0 0.0
        %1813 = vmatprep.subr.mxu0 0.0
        %1814 = vmatpush1.msra.mxu0 0.0
        %1815 = vmatprep.subr.mxu0 0.0
        %1816 = vmatpush1.msra.mxu0 0.0
        %1817 = vmatprep.subr.mxu0 0.0
        %1818 = vmatpush1.msra.mxu0 0.0
        %1819 = vmatprep.subr.mxu0 0.0
        %1820 = vmatpush1.msra.mxu0 0.0
        %1821 = vmatprep.subr.mxu0 0.0
        %1822 = vmatpush1.msra.mxu0 0.0
        %1823 = vmatprep.subr.mxu0 0.0
        %1824 = vmatpush1.msra.mxu0 0.0
        %1825 = vmatprep.subr.mxu0 0.0
        %1826 = vmatpush1.msra.mxu0 0.0
        %1827 = vmatprep.subr.mxu0 0.0
        %1828 = vmatpush1.msra.mxu0 0.0
        %1829 = vmatprep.subr.mxu0 0.0
        %1830 = vmatpush1.msra.mxu0 0.0
        %1831 = vmatprep.subr.mxu0 0.0
        %1832 = vmatpush1.msra.mxu0 0.0
        %1833 = vmatprep.subr.mxu0 0.0
        %1834 = vmatpush1.msra.mxu0 0.0
        %1835 = vmatprep.mubr.f32.mxu0 %v1752
        %1836 = vmatmul.mubr.f32.gmra.mrb[0].mxu0 %v1680
        %v1837 = vpop.f32.mrb[0].mxu0
        %v1838 = vadd.f32 0.0, %v1837
        %v1839 = vpop.f32.mrb[0].mxu0
        %1840 = vmatprep.mubr.f32.mxu0 %v1754
        %1841 = vmatmul.mubr.f32.gmra.mrb[0].mxu0 %v1686
        %v1842 = vpop.f32.mrb[0].mxu0
        %v1843 = vadd.f32 0.0, %v1842
        %v1844 = vpop.f32.mrb[0].mxu0
        %1845 = vmatprep.mubr.f32.mxu0 %v1756
        %1846 = vmatmul.mubr.f32.gmra.mrb[0].mxu0 %v1692
        %v1847 = vpop.f32.mrb[0].mxu0
        %v1848 = vadd.f32 0.0, %v1847
        %v1849 = vpop.f32.mrb[0].mxu0
        %1850 = vmatprep.mubr.f32.mxu0 %v1758
        %1851 = vmatmul.mubr.f32.gmra.mrb[0].mxu0 %v1698
        %v1852 = vpop.f32.mrb[0].mxu0
        %v1853 = vadd.f32 0.0, %v1852
        %v1854 = vpop.f32.mrb[0].mxu0
        %1855 = vmatprep.mubr.f32.mxu0 %v1760
        %1856 = vmatmul.mubr.f32.gmra.mrb[0].mxu0 %v1704
        %v1857 = vpop.f32.mrb[0].mxu0
        %v1858 = vadd.f32 0.0, %v1857
        %v1859 = vpop.f32.mrb[0].mxu0
        %1860 = vmatprep.mubr.f32.mxu0 %v1762
        %1861 = vmatmul.mubr.f32.gmra.mrb[0].mxu0 %v1710
        %v1862 = vpop.f32.mrb[0].mxu0
        %v1863 = vadd.f32 0.0, %v1862
        %v1864 = vpop.f32.mrb[0].mxu0
        %1865 = vmatprep.mubr.f32.mxu0 %v1764
        %1866 = vmatmul.mubr.f32.gmra.mrb[0].mxu0 %v1716
        %v1867 = vpop.f32.mrb[0].mxu0
        %v1868 = vadd.f32 0.0, %v1867
        %v1869 = vpop.f32.mrb[0].mxu0
        %1870 = vmatprep.mubr.f32.mxu0 %v1766
        %1871 = vmatmul.mubr.f32.gmra.mrb[0].mxu0 %v1722
        %v1872 = vpop.f32.mrb[0].mxu0
        %v1873 = vadd.f32 0.0, %v1872
        %v1874 = vpop.f32.mrb[0].mxu0
        %1875 = vdwg.mxu0
        %v1876 = vadd.f32 %v1606, %v1838
        %v1877 = vadd.f32 %v1607, %v1843
        %v1878 = vadd.f32 %v1608, %v1848
        %v1879 = vadd.f32 %v1609, %v1853
        %v1880 = vadd.f32 %v1610, %v1858
        %v1881 = vadd.f32 %v1611, %v1863
        %v1882 = vadd.f32 %v1612, %v1868
        %v1883 = vadd.f32 %v1613, %v1873
        %v1884 = vld [vmem:[%s1169] sm:$0xf8]
        %v1885 = vld [vmem:[%s1169 + $0x8] sm:$0xf8]
        %v1886 = vld [vmem:[%s1169 + $0x10] sm:$0x7]
        %v1887 = vld [vmem:[%s1169 + $0x18] sm:$0x7]
        %v1888 = vld [vmem:[%s1169 + $0x20] sm:$0xf8]
        %v1889 = vld [vmem:[%s1169 + $0x28] sm:$0xf8]
        %v1890 = vld [vmem:[%s1169 + $0x30] sm:$0x7]
        %v1891 = vld [vmem:[%s1169 + $0x38] sm:$0x7]
        %v1892 = vld [vmem:[%s1169 + $0x40] sm:$0xf8]
        %v1893 = vld [vmem:[%s1169 + $0x48] sm:$0xf8]
        %v1894 = vld [vmem:[%s1169 + $0x50] sm:$0x7]
        %v1895 = vld [vmem:[%s1169 + $0x58] sm:$0x7]
        %v1896 = vld [vmem:[%s1169 + $0x60] sm:$0xf8]
        %v1897 = vld [vmem:[%s1169 + $0x68] sm:$0xf8]
        %v1898 = vld [vmem:[%s1169 + $0x70] sm:$0x7]
        %v1899 = vld [vmem:[%s1169 + $0x78] sm:$0x7]
        %v1900 = vld [vmem:[%s1169 + $0x80] sm:$0xf8]
        %v1901 = vld [vmem:[%s1169 + $0x88] sm:$0xf8]
        %v1902 = vld [vmem:[%s1169 + $0x90] sm:$0x7]
        %v1903 = vld [vmem:[%s1169 + $0x98] sm:$0x7]
        %v1904 = vld [vmem:[%s1169 + $0xa0] sm:$0xf8]
        %v1905 = vld [vmem:[%s1169 + $0xa8] sm:$0xf8]
        %v1906 = vld [vmem:[%s1169 + $0xb0] sm:$0x7]
        %v1907 = vld [vmem:[%s1169 + $0xb8] sm:$0x7]
        %v1908 = vld [vmem:[%s1169 + $0xc0] sm:$0xf8]
        %v1909 = vld [vmem:[%s1169 + $0xc8] sm:$0xf8]
        %v1910 = vld [vmem:[%s1169 + $0xd0] sm:$0x7]
        %v1911 = vld [vmem:[%s1169 + $0xd8] sm:$0x7]
        %v1912 = vld [vmem:[%s1169 + $0xe0] sm:$0xf8]
        %v1913 = vld [vmem:[%s1169 + $0xe8] sm:$0xf8]
        %v1914 = vld [vmem:[%s1169 + $0xf0] sm:$0x7]
        %v1915 = vld [vmem:[%s1169 + $0xf8] sm:$0x7]
        %v1948 = vrot.slane %v1884, 3
        %v1949 = vrot.slane %v1886, 3
        %v1950 = vsel %vm962, %v1948, %v1949
        %v1951 = vrot.slane %v1885, 3
        %v1952 = vrot.slane %v1887, 3
        %v1953 = vsel %vm962, %v1951, %v1952
        %v1954 = vrot.slane %v1888, 3
        %v1955 = vrot.slane %v1890, 3
        %v1956 = vsel %vm962, %v1954, %v1955
        %v1957 = vrot.slane %v1889, 3
        %v1958 = vrot.slane %v1891, 3
        %v1959 = vsel %vm962, %v1957, %v1958
        %v1960 = vrot.slane %v1892, 3
        %v1961 = vrot.slane %v1894, 3
        %v1962 = vsel %vm962, %v1960, %v1961
        %v1963 = vrot.slane %v1893, 3
        %v1964 = vrot.slane %v1895, 3
        %v1965 = vsel %vm962, %v1963, %v1964
        %v1966 = vrot.slane %v1896, 3
        %v1967 = vrot.slane %v1898, 3
        %v1968 = vsel %vm962, %v1966, %v1967
        %v1969 = vrot.slane %v1897, 3
        %v1970 = vrot.slane %v1899, 3
        %v1971 = vsel %vm962, %v1969, %v1970
        %v1972 = vrot.slane %v1900, 3
        %v1973 = vrot.slane %v1902, 3
        %v1974 = vsel %vm962, %v1972, %v1973
        %v1975 = vrot.slane %v1901, 3
        %v1976 = vrot.slane %v1903, 3
        %v1977 = vsel %vm962, %v1975, %v1976
        %v1978 = vrot.slane %v1904, 3
        %v1979 = vrot.slane %v1906, 3
        %v1980 = vsel %vm962, %v1978, %v1979
        %v1981 = vrot.slane %v1905, 3
        %v1982 = vrot.slane %v1907, 3
        %v1983 = vsel %vm962, %v1981, %v1982
        %v1984 = vrot.slane %v1908, 3
        %v1985 = vrot.slane %v1910, 3
        %v1986 = vsel %vm962, %v1984, %v1985
        %v1987 = vrot.slane %v1909, 3
        %v1988 = vrot.slane %v1911, 3
        %v1989 = vsel %vm962, %v1987, %v1988
        %v1990 = vrot.slane %v1912, 3
        %v1991 = vrot.slane %v1914, 3
        %v1992 = vsel %vm962, %v1990, %v1991
        %v1993 = vrot.slane %v1913, 3
        %v1994 = vrot.slane %v1915, 3
        %v1995 = vsel %vm962, %v1993, %v1994
        %s2004 = scalar_lea.vmem [#allocation2], 952
        %v2005 = vld [vmem:[%s2004] sm:$0xff]
        %v2006 = vld [vmem:[%s2004 + $0x8] sm:$0xff]
        %v2007 = vld [vmem:[%s2004 + $0x10] sm:$0xff]
        %v2008 = vld [vmem:[%s2004 + $0x18] sm:$0xff]
        %v2009 = vld [vmem:[%s2004 + $0x20] sm:$0xff]
        %v2010 = vld [vmem:[%s2004 + $0x28] sm:$0xff]
        %v2011 = vld [vmem:[%s2004 + $0x30] sm:$0xff]
        %v2012 = vld [vmem:[%s2004 + $0x38] sm:$0xff]
        %v2013 = vld [vmem:[%s2004 + $0x40] sm:$0xff]
        %v2014 = vld [vmem:[%s2004 + $0x48] sm:$0xff]
        %v2015 = vld [vmem:[%s2004 + $0x50] sm:$0xff]
        %v2016 = vld [vmem:[%s2004 + $0x58] sm:$0xff]
        %v2017 = vld [vmem:[%s2004 + $0x60] sm:$0xff]
        %v2018 = vld [vmem:[%s2004 + $0x68] sm:$0xff]
        %v2019 = vld [vmem:[%s2004 + $0x70] sm:$0xff]
        %v2020 = vld [vmem:[%s2004 + $0x78] sm:$0xff]
        %v2021 = vld [vmem:[%s2004 + $0x80] sm:$0xf]
        %v2022 = vsel %vm369, %v1953, 0
        %v2024 = vsel %vm369, %v1959, 0
        %v2026 = vsel %vm369, %v1965, 0
        %v2028 = vsel %vm369, %v1971, 0
        %v2030 = vsel %vm369, %v1977, 0
        %v2032 = vsel %vm369, %v1983, 0
        %v2034 = vsel %vm369, %v1989, 0
        %v2036 = vsel %vm369, %v1995, 0
        %v2039 = vsel %vm386, %v2021, 0
        %2041 = vmatprep.subr.mxu0 0.0
        %2042 = vmatpush1.msra.mxu0 %v2005
        %2043 = vmatprep.subr.mxu0 0.0
        %2044 = vmatpush1.msra.mxu0 %v2006
        %2045 = vmatprep.subr.mxu0 0.0
        %2046 = vmatpush1.msra.mxu0 %v2007
        %2047 = vmatprep.subr.mxu0 0.0
        %2048 = vmatpush1.msra.mxu0 %v2008
        %2049 = vmatprep.subr.mxu0 0.0
        %2050 = vmatpush1.msra.mxu0 %v2009
        %2051 = vmatprep.subr.mxu0 0.0
        %2052 = vmatpush1.msra.mxu0 %v2010
        %2053 = vmatprep.subr.mxu0 0.0
        %2054 = vmatpush1.msra.mxu0 %v2011
        %2055 = vmatprep.subr.mxu0 0.0
        %2056 = vmatpush1.msra.mxu0 %v2012
        %2057 = vmatprep.subr.mxu0 0.0
        %2058 = vmatpush1.msra.mxu0 %v2013
        %2059 = vmatprep.subr.mxu0 0.0
        %2060 = vmatpush1.msra.mxu0 %v2014
        %2061 = vmatprep.subr.mxu0 0.0
        %2062 = vmatpush1.msra.mxu0 %v2015
        %2063 = vmatprep.subr.mxu0 0.0
        %2064 = vmatpush1.msra.mxu0 %v2016
        %2065 = vmatprep.subr.mxu0 0.0
        %2066 = vmatpush1.msra.mxu0 %v2017
        %2067 = vmatprep.subr.mxu0 0.0
        %2068 = vmatpush1.msra.mxu0 %v2018
        %2069 = vmatprep.subr.mxu0 0.0
        %2070 = vmatpush1.msra.mxu0 %v2019
        %2071 = vmatprep.subr.mxu0 0.0
        %2072 = vmatpush1.msra.mxu0 %v2020
        %2073 = vmatprep.subr.mxu0 0.0
        %2074 = vmatpush1.msra.mxu0 %v2039
        %2075 = vmatprep.subr.mxu0 0.0
        %2076 = vmatpush1.msra.mxu0 0.0
        %2077 = vmatprep.subr.mxu0 0.0
        %2078 = vmatpush1.msra.mxu0 0.0
        %2079 = vmatprep.subr.mxu0 0.0
        %2080 = vmatpush1.msra.mxu0 0.0
        %2081 = vmatprep.subr.mxu0 0.0
        %2082 = vmatpush1.msra.mxu0 0.0
        %2083 = vmatprep.subr.mxu0 0.0
        %2084 = vmatpush1.msra.mxu0 0.0
        %2085 = vmatprep.subr.mxu0 0.0
        %2086 = vmatpush1.msra.mxu0 0.0
        %2087 = vmatprep.subr.mxu0 0.0
        %2088 = vmatpush1.msra.mxu0 0.0
        %2089 = vmatprep.subr.mxu0 0.0
        %2090 = vmatpush1.msra.mxu0 0.0
        %2091 = vmatprep.subr.mxu0 0.0
        %2092 = vmatpush1.msra.mxu0 0.0
        %2093 = vmatprep.subr.mxu0 0.0
        %2094 = vmatpush1.msra.mxu0 0.0
        %2095 = vmatprep.subr.mxu0 0.0
        %2096 = vmatpush1.msra.mxu0 0.0
        %2097 = vmatprep.subr.mxu0 0.0
        %2098 = vmatpush1.msra.mxu0 0.0
        %2099 = vmatprep.subr.mxu0 0.0
        %2100 = vmatpush1.msra.mxu0 0.0
        %2101 = vmatprep.subr.mxu0 0.0
        %2102 = vmatpush1.msra.mxu0 0.0
        %2103 = vmatprep.subr.mxu0 0.0
        %2104 = vmatpush1.msra.mxu0 0.0
        %2105 = vmatprep.mubr.f32.mxu0 %v2022
        %2106 = vmatmul.mubr.f32.gmra.mrb[0].mxu0 %v1950
        %v2107 = vpop.f32.mrb[0].mxu0
        %v2108 = vadd.f32 0.0, %v2107
        %v2109 = vpop.f32.mrb[0].mxu0
        %2110 = vmatprep.mubr.f32.mxu0 %v2024
        %2111 = vmatmul.mubr.f32.gmra.mrb[0].mxu0 %v1956
        %v2112 = vpop.f32.mrb[0].mxu0
        %v2113 = vadd.f32 0.0, %v2112
        %v2114 = vpop.f32.mrb[0].mxu0
        %2115 = vmatprep.mubr.f32.mxu0 %v2026
        %2116 = vmatmul.mubr.f32.gmra.mrb[0].mxu0 %v1962
        %v2117 = vpop.f32.mrb[0].mxu0
        %v2118 = vadd.f32 0.0, %v2117
        %v2119 = vpop.f32.mrb[0].mxu0
        %2120 = vmatprep.mubr.f32.mxu0 %v2028
        %2121 = vmatmul.mubr.f32.gmra.mrb[0].mxu0 %v1968
        %v2122 = vpop.f32.mrb[0].mxu0
        %v2123 = vadd.f32 0.0, %v2122
        %v2124 = vpop.f32.mrb[0].mxu0
        %2125 = vmatprep.mubr.f32.mxu0 %v2030
        %2126 = vmatmul.mubr.f32.gmra.mrb[0].mxu0 %v1974
        %v2127 = vpop.f32.mrb[0].mxu0
        %v2128 = vadd.f32 0.0, %v2127
        %v2129 = vpop.f32.mrb[0].mxu0
        %2130 = vmatprep.mubr.f32.mxu0 %v2032
        %2131 = vmatmul.mubr.f32.gmra.mrb[0].mxu0 %v1980
        %v2132 = vpop.f32.mrb[0].mxu0
        %v2133 = vadd.f32 0.0, %v2132
        %v2134 = vpop.f32.mrb[0].mxu0
        %2135 = vmatprep.mubr.f32.mxu0 %v2034
        %2136 = vmatmul.mubr.f32.gmra.mrb[0].mxu0 %v1986
        %v2137 = vpop.f32.mrb[0].mxu0
        %v2138 = vadd.f32 0.0, %v2137
        %v2139 = vpop.f32.mrb[0].mxu0
        %2140 = vmatprep.mubr.f32.mxu0 %v2036
        %2141 = vmatmul.mubr.f32.gmra.mrb[0].mxu0 %v1992
        %v2142 = vpop.f32.mrb[0].mxu0
        %v2143 = vadd.f32 0.0, %v2142
        %v2144 = vpop.f32.mrb[0].mxu0
        %2145 = vdwg.mxu0
        %v2146 = vadd.f32 %v1876, %v2108
        %v2147 = vadd.f32 %v1877, %v2113
        %v2148 = vadd.f32 %v1878, %v2118
        %v2149 = vadd.f32 %v1879, %v2123
        %v2150 = vadd.f32 %v1880, %v2128
        %v2151 = vadd.f32 %v1881, %v2133
        %v2152 = vadd.f32 %v1882, %v2138
        %v2153 = vadd.f32 %v1883, %v2143
        %s2154 = scalar_lea.vmem %s196, 64
        %v2155 = vld [vmem:[%s2154] sm:$0xff]
        %v2156 = vld [vmem:[%s2154 + $0x8] sm:$0xff]
        %v2157 = vld [vmem:[%s2154 + $0x20] sm:$0xff]
        %v2158 = vld [vmem:[%s2154 + $0x28] sm:$0xff]
        %v2159 = vld [vmem:[%s2154 + $0x40] sm:$0xff]
        %v2160 = vld [vmem:[%s2154 + $0x48] sm:$0xff]
        %v2161 = vld [vmem:[%s2154 + $0x60] sm:$0xff]
        %v2162 = vld [vmem:[%s2154 + $0x68] sm:$0xff]
        %v2163 = vld [vmem:[%s2154 + $0x80] sm:$0xff]
        %v2164 = vld [vmem:[%s2154 + $0x88] sm:$0xff]
        %v2165 = vld [vmem:[%s2154 + $0xa0] sm:$0xff]
        %v2166 = vld [vmem:[%s2154 + $0xa8] sm:$0xff]
        %v2167 = vld [vmem:[%s2154 + $0xc0] sm:$0xff]
        %v2168 = vld [vmem:[%s2154 + $0xc8] sm:$0xff]
        %v2169 = vld [vmem:[%s2154 + $0xe0] sm:$0xff]
        %v2170 = vld [vmem:[%s2154 + $0xe8] sm:$0xff]
        %s2171 = scalar_lea.vmem [#allocation2], 1088
        %v2172 = vld [vmem:[%s2171] sm:$0xff]
        %v2173 = vld [vmem:[%s2171 + $0x8] sm:$0xff]
        %v2174 = vld [vmem:[%s2171 + $0x10] sm:$0xff]
        %v2175 = vld [vmem:[%s2171 + $0x18] sm:$0xff]
        %v2176 = vld [vmem:[%s2171 + $0x20] sm:$0xff]
        %v2177 = vld [vmem:[%s2171 + $0x28] sm:$0xff]
        %v2178 = vld [vmem:[%s2171 + $0x30] sm:$0xff]
        %v2179 = vld [vmem:[%s2171 + $0x38] sm:$0xff]
        %v2180 = vld [vmem:[%s2171 + $0x40] sm:$0xff]
        %v2181 = vld [vmem:[%s2171 + $0x48] sm:$0xff]
        %v2182 = vld [vmem:[%s2171 + $0x50] sm:$0xff]
        %v2183 = vld [vmem:[%s2171 + $0x58] sm:$0xff]
        %v2184 = vld [vmem:[%s2171 + $0x60] sm:$0xff]
        %v2185 = vld [vmem:[%s2171 + $0x68] sm:$0xff]
        %v2186 = vld [vmem:[%s2171 + $0x70] sm:$0xff]
        %v2187 = vld [vmem:[%s2171 + $0x78] sm:$0xff]
        %v2188 = vld [vmem:[%s2171 + $0x80] sm:$0xf]
        %v2190 = vsel %vm369, %v2156, 0
        %v2193 = vsel %vm369, %v2158, 0
        %v2196 = vsel %vm369, %v2160, 0
        %v2199 = vsel %vm369, %v2162, 0
        %v2202 = vsel %vm369, %v2164, 0
        %v2205 = vsel %vm369, %v2166, 0
        %v2208 = vsel %vm369, %v2168, 0
        %v2211 = vsel %vm369, %v2170, 0
        %v2214 = vsel %vm386, %v2188, 0
        %2216 = vmatprep.subr.mxu0 0.0
        %2217 = vmatpush1.msra.mxu0 %v2172
        %2218 = vmatprep.subr.mxu0 0.0
        %2219 = vmatpush1.msra.mxu0 %v2173
        %2220 = vmatprep.subr.mxu0 0.0
        %2221 = vmatpush1.msra.mxu0 %v2174
        %2222 = vmatprep.subr.mxu0 0.0
        %2223 = vmatpush1.msra.mxu0 %v2175
        %2224 = vmatprep.subr.mxu0 0.0
        %2225 = vmatpush1.msra.mxu0 %v2176
        %2226 = vmatprep.subr.mxu0 0.0
        %2227 = vmatpush1.msra.mxu0 %v2177
        %2228 = vmatprep.subr.mxu0 0.0
        %2229 = vmatpush1.msra.mxu0 %v2178
        %2230 = vmatprep.subr.mxu0 0.0
        %2231 = vmatpush1.msra.mxu0 %v2179
        %2232 = vmatprep.subr.mxu0 0.0
        %2233 = vmatpush1.msra.mxu0 %v2180
        %2234 = vmatprep.subr.mxu0 0.0
        %2235 = vmatpush1.msra.mxu0 %v2181
        %2236 = vmatprep.subr.mxu0 0.0
        %2237 = vmatpush1.msra.mxu0 %v2182
        %2238 = vmatprep.subr.mxu0 0.0
        %2239 = vmatpush1.msra.mxu0 %v2183
        %2240 = vmatprep.subr.mxu0 0.0
        %2241 = vmatpush1.msra.mxu0 %v2184
        %2242 = vmatprep.subr.mxu0 0.0
        %2243 = vmatpush1.msra.mxu0 %v2185
        %2244 = vmatprep.subr.mxu0 0.0
        %2245 = vmatpush1.msra.mxu0 %v2186
        %2246 = vmatprep.subr.mxu0 0.0
        %2247 = vmatpush1.msra.mxu0 %v2187
        %2248 = vmatprep.subr.mxu0 0.0
        %2249 = vmatpush1.msra.mxu0 %v2214
        %2250 = vmatprep.subr.mxu0 0.0
        %2251 = vmatpush1.msra.mxu0 0.0
        %2252 = vmatprep.subr.mxu0 0.0
        %2253 = vmatpush1.msra.mxu0 0.0
        %2254 = vmatprep.subr.mxu0 0.0
        %2255 = vmatpush1.msra.mxu0 0.0
        %2256 = vmatprep.subr.mxu0 0.0
        %2257 = vmatpush1.msra.mxu0 0.0
        %2258 = vmatprep.subr.mxu0 0.0
        %2259 = vmatpush1.msra.mxu0 0.0
        %2260 = vmatprep.subr.mxu0 0.0
        %2261 = vmatpush1.msra.mxu0 0.0
        %2262 = vmatprep.subr.mxu0 0.0
        %2263 = vmatpush1.msra.mxu0 0.0
        %2264 = vmatprep.subr.mxu0 0.0
        %2265 = vmatpush1.msra.mxu0 0.0
        %2266 = vmatprep.subr.mxu0 0.0
        %2267 = vmatpush1.msra.mxu0 0.0
        %2268 = vmatprep.subr.mxu0 0.0
        %2269 = vmatpush1.msra.mxu0 0.0
        %2270 = vmatprep.subr.mxu0 0.0
        %2271 = vmatpush1.msra.mxu0 0.0
        %2272 = vmatprep.subr.mxu0 0.0
        %2273 = vmatpush1.msra.mxu0 0.0
        %2274 = vmatprep.subr.mxu0 0.0
        %2275 = vmatpush1.msra.mxu0 0.0
        %2276 = vmatprep.subr.mxu0 0.0
        %2277 = vmatpush1.msra.mxu0 0.0
        %2278 = vmatprep.subr.mxu0 0.0
        %2279 = vmatpush1.msra.mxu0 0.0
        %2280 = vmatprep.mubr.f32.mxu0 %v2190
        %2281 = vmatmul.mubr.f32.gmra.mrb[0].mxu0 %v2155
        %v2282 = vpop.f32.mrb[0].mxu0
        %v2283 = vadd.f32 0.0, %v2282
        %v2284 = vpop.f32.mrb[0].mxu0
        %2285 = vmatprep.mubr.f32.mxu0 %v2193
        %2286 = vmatmul.mubr.f32.gmra.mrb[0].mxu0 %v2157
        %v2287 = vpop.f32.mrb[0].mxu0
        %v2288 = vadd.f32 0.0, %v2287
        %v2289 = vpop.f32.mrb[0].mxu0
        %2290 = vmatprep.mubr.f32.mxu0 %v2196
        %2291 = vmatmul.mubr.f32.gmra.mrb[0].mxu0 %v2159
        %v2292 = vpop.f32.mrb[0].mxu0
        %v2293 = vadd.f32 0.0, %v2292
        %v2294 = vpop.f32.mrb[0].mxu0
        %2295 = vmatprep.mubr.f32.mxu0 %v2199
        %2296 = vmatmul.mubr.f32.gmra.mrb[0].mxu0 %v2161
        %v2297 = vpop.f32.mrb[0].mxu0
        %v2298 = vadd.f32 0.0, %v2297
        %v2299 = vpop.f32.mrb[0].mxu0
        %2300 = vmatprep.mubr.f32.mxu0 %v2202
        %2301 = vmatmul.mubr.f32.gmra.mrb[0].mxu0 %v2163
        %v2302 = vpop.f32.mrb[0].mxu0
        %v2303 = vadd.f32 0.0, %v2302
        %v2304 = vpop.f32.mrb[0].mxu0
        %2305 = vmatprep.mubr.f32.mxu0 %v2205
        %2306 = vmatmul.mubr.f32.gmra.mrb[0].mxu0 %v2165
        %v2307 = vpop.f32.mrb[0].mxu0
        %v2308 = vadd.f32 0.0, %v2307
        %v2309 = vpop.f32.mrb[0].mxu0
        %2310 = vmatprep.mubr.f32.mxu0 %v2208
        %2311 = vmatmul.mubr.f32.gmra.mrb[0].mxu0 %v2167
        %v2312 = vpop.f32.mrb[0].mxu0
        %v2313 = vadd.f32 0.0, %v2312
        %v2314 = vpop.f32.mrb[0].mxu0
        %2315 = vmatprep.mubr.f32.mxu0 %v2211
        %2316 = vmatmul.mubr.f32.gmra.mrb[0].mxu0 %v2169
        %v2317 = vpop.f32.mrb[0].mxu0
        %v2318 = vadd.f32 0.0, %v2317
        %v2319 = vpop.f32.mrb[0].mxu0
        %2320 = vdwg.mxu0
        %v2321 = vadd.f32 %v2146, %v2283
        %v2322 = vadd.f32 %v2147, %v2288
        %v2323 = vadd.f32 %v2148, %v2293
        %v2324 = vadd.f32 %v2149, %v2298
        %v2325 = vadd.f32 %v2150, %v2303
        %v2326 = vadd.f32 %v2151, %v2308
        %v2327 = vadd.f32 %v2152, %v2313
        %v2328 = vadd.f32 %v2153, %v2318
        %v2329 = vld [vmem:[%s2154] sm:$0xfe]
        %v2330 = vld [vmem:[%s2154 + $0x8] sm:$0xfe]
        %v2331 = vld [vmem:[%s2154 + $0x10] sm:$0x1]
        %v2332 = vld [vmem:[%s2154 + $0x18] sm:$0x1]
        %v2333 = vld [vmem:[%s2154 + $0x20] sm:$0xfe]
        %v2334 = vld [vmem:[%s2154 + $0x28] sm:$0xfe]
        %v2335 = vld [vmem:[%s2154 + $0x30] sm:$0x1]
        %v2336 = vld [vmem:[%s2154 + $0x38] sm:$0x1]
        %v2337 = vld [vmem:[%s2154 + $0x40] sm:$0xfe]
        %v2338 = vld [vmem:[%s2154 + $0x48] sm:$0xfe]
        %v2339 = vld [vmem:[%s2154 + $0x50] sm:$0x1]
        %v2340 = vld [vmem:[%s2154 + $0x58] sm:$0x1]
        %v2341 = vld [vmem:[%s2154 + $0x60] sm:$0xfe]
        %v2342 = vld [vmem:[%s2154 + $0x68] sm:$0xfe]
        %v2343 = vld [vmem:[%s2154 + $0x70] sm:$0x1]
        %v2344 = vld [vmem:[%s2154 + $0x78] sm:$0x1]
        %v2345 = vld [vmem:[%s2154 + $0x80] sm:$0xfe]
        %v2346 = vld [vmem:[%s2154 + $0x88] sm:$0xfe]
        %v2347 = vld [vmem:[%s2154 + $0x90] sm:$0x1]
        %v2348 = vld [vmem:[%s2154 + $0x98] sm:$0x1]
        %v2349 = vld [vmem:[%s2154 + $0xa0] sm:$0xfe]
        %v2350 = vld [vmem:[%s2154 + $0xa8] sm:$0xfe]
        %v2351 = vld [vmem:[%s2154 + $0xb0] sm:$0x1]
        %v2352 = vld [vmem:[%s2154 + $0xb8] sm:$0x1]
        %v2353 = vld [vmem:[%s2154 + $0xc0] sm:$0xfe]
        %v2354 = vld [vmem:[%s2154 + $0xc8] sm:$0xfe]
        %v2355 = vld [vmem:[%s2154 + $0xd0] sm:$0x1]
        %v2356 = vld [vmem:[%s2154 + $0xd8] sm:$0x1]
        %v2357 = vld [vmem:[%s2154 + $0xe0] sm:$0xfe]
        %v2358 = vld [vmem:[%s2154 + $0xe8] sm:$0xfe]
        %v2359 = vld [vmem:[%s2154 + $0xf0] sm:$0x1]
        %v2360 = vld [vmem:[%s2154 + $0xf8] sm:$0x1]
        %v2393 = vrot.slane %v2329, 1
        %v2394 = vrot.slane %v2331, 1
        %v2395 = vsel %vm294, %v2393, %v2394
        %v2396 = vrot.slane %v2330, 1
        %v2397 = vrot.slane %v2332, 1
        %v2398 = vsel %vm294, %v2396, %v2397
        %v2399 = vrot.slane %v2333, 1
        %v2400 = vrot.slane %v2335, 1
        %v2401 = vsel %vm294, %v2399, %v2400
        %v2402 = vrot.slane %v2334, 1
        %v2403 = vrot.slane %v2336, 1
        %v2404 = vsel %vm294, %v2402, %v2403
        %v2405 = vrot.slane %v2337, 1
        %v2406 = vrot.slane %v2339, 1
        %v2407 = vsel %vm294, %v2405, %v2406
        %v2408 = vrot.slane %v2338, 1
        %v2409 = vrot.slane %v2340, 1
        %v2410 = vsel %vm294, %v2408, %v2409
        %v2411 = vrot.slane %v2341, 1
        %v2412 = vrot.slane %v2343, 1
        %v2413 = vsel %vm294, %v2411, %v2412
        %v2414 = vrot.slane %v2342, 1
        %v2415 = vrot.slane %v2344, 1
        %v2416 = vsel %vm294, %v2414, %v2415
        %v2417 = vrot.slane %v2345, 1
        %v2418 = vrot.slane %v2347, 1
        %v2419 = vsel %vm294, %v2417, %v2418
        %v2420 = vrot.slane %v2346, 1
        %v2421 = vrot.slane %v2348, 1
        %v2422 = vsel %vm294, %v2420, %v2421
        %v2423 = vrot.slane %v2349, 1
        %v2424 = vrot.slane %v2351, 1
        %v2425 = vsel %vm294, %v2423, %v2424
        %v2426 = vrot.slane %v2350, 1
        %v2427 = vrot.slane %v2352, 1
        %v2428 = vsel %vm294, %v2426, %v2427
        %v2429 = vrot.slane %v2353, 1
        %v2430 = vrot.slane %v2355, 1
        %v2431 = vsel %vm294, %v2429, %v2430
        %v2432 = vrot.slane %v2354, 1
        %v2433 = vrot.slane %v2356, 1
        %v2434 = vsel %vm294, %v2432, %v2433
        %v2435 = vrot.slane %v2357, 1
        %v2436 = vrot.slane %v2359, 1
        %v2437 = vsel %vm294, %v2435, %v2436
        %v2438 = vrot.slane %v2358, 1
        %v2439 = vrot.slane %v2360, 1
        %v2440 = vsel %vm294, %v2438, %v2439
        %s2449 = scalar_lea.vmem [#allocation2], 1224
        %v2450 = vld [vmem:[%s2449] sm:$0xff]
        %v2451 = vld [vmem:[%s2449 + $0x8] sm:$0xff]
        %v2452 = vld [vmem:[%s2449 + $0x10] sm:$0xff]
        %v2453 = vld [vmem:[%s2449 + $0x18] sm:$0xff]
        %v2454 = vld [vmem:[%s2449 + $0x20] sm:$0xff]
        %v2455 = vld [vmem:[%s2449 + $0x28] sm:$0xff]
        %v2456 = vld [vmem:[%s2449 + $0x30] sm:$0xff]
        %v2457 = vld [vmem:[%s2449 + $0x38] sm:$0xff]
        %v2458 = vld [vmem:[%s2449 + $0x40] sm:$0xff]
        %v2459 = vld [vmem:[%s2449 + $0x48] sm:$0xff]
        %v2460 = vld [vmem:[%s2449 + $0x50] sm:$0xff]
        %v2461 = vld [vmem:[%s2449 + $0x58] sm:$0xff]
        %v2462 = vld [vmem:[%s2449 + $0x60] sm:$0xff]
        %v2463 = vld [vmem:[%s2449 + $0x68] sm:$0xff]
        %v2464 = vld [vmem:[%s2449 + $0x70] sm:$0xff]
        %v2465 = vld [vmem:[%s2449 + $0x78] sm:$0xff]
        %v2466 = vld [vmem:[%s2449 + $0x80] sm:$0xf]
        %v2467 = vsel %vm369, %v2398, 0
        %v2469 = vsel %vm369, %v2404, 0
        %v2471 = vsel %vm369, %v2410, 0
        %v2473 = vsel %vm369, %v2416, 0
        %v2475 = vsel %vm369, %v2422, 0
        %v2477 = vsel %vm369, %v2428, 0
        %v2479 = vsel %vm369, %v2434, 0
        %v2481 = vsel %vm369, %v2440, 0
        %v2484 = vsel %vm386, %v2466, 0
        %2486 = vmatprep.subr.mxu0 0.0
        %2487 = vmatpush1.msra.mxu0 %v2450
        %2488 = vmatprep.subr.mxu0 0.0
        %2489 = vmatpush1.msra.mxu0 %v2451
        %2490 = vmatprep.subr.mxu0 0.0
        %2491 = vmatpush1.msra.mxu0 %v2452
        %2492 = vmatprep.subr.mxu0 0.0
        %2493 = vmatpush1.msra.mxu0 %v2453
        %2494 = vmatprep.subr.mxu0 0.0
        %2495 = vmatpush1.msra.mxu0 %v2454
        %2496 = vmatprep.subr.mxu0 0.0
        %2497 = vmatpush1.msra.mxu0 %v2455
        %2498 = vmatprep.subr.mxu0 0.0
        %2499 = vmatpush1.msra.mxu0 %v2456
        %2500 = vmatprep.subr.mxu0 0.0
        %2501 = vmatpush1.msra.mxu0 %v2457
        %2502 = vmatprep.subr.mxu0 0.0
        %2503 = vmatpush1.msra.mxu0 %v2458
        %2504 = vmatprep.subr.mxu0 0.0
        %2505 = vmatpush1.msra.mxu0 %v2459
        %2506 = vmatprep.subr.mxu0 0.0
        %2507 = vmatpush1.msra.mxu0 %v2460
        %2508 = vmatprep.subr.mxu0 0.0
        %2509 = vmatpush1.msra.mxu0 %v2461
        %2510 = vmatprep.subr.mxu0 0.0
        %2511 = vmatpush1.msra.mxu0 %v2462
        %2512 = vmatprep.subr.mxu0 0.0
        %2513 = vmatpush1.msra.mxu0 %v2463
        %2514 = vmatprep.subr.mxu0 0.0
        %2515 = vmatpush1.msra.mxu0 %v2464
        %2516 = vmatprep.subr.mxu0 0.0
        %2517 = vmatpush1.msra.mxu0 %v2465
        %2518 = vmatprep.subr.mxu0 0.0
        %2519 = vmatpush1.msra.mxu0 %v2484
        %2520 = vmatprep.subr.mxu0 0.0
        %2521 = vmatpush1.msra.mxu0 0.0
        %2522 = vmatprep.subr.mxu0 0.0
        %2523 = vmatpush1.msra.mxu0 0.0
        %2524 = vmatprep.subr.mxu0 0.0
        %2525 = vmatpush1.msra.mxu0 0.0
        %2526 = vmatprep.subr.mxu0 0.0
        %2527 = vmatpush1.msra.mxu0 0.0
        %2528 = vmatprep.subr.mxu0 0.0
        %2529 = vmatpush1.msra.mxu0 0.0
        %2530 = vmatprep.subr.mxu0 0.0
        %2531 = vmatpush1.msra.mxu0 0.0
        %2532 = vmatprep.subr.mxu0 0.0
        %2533 = vmatpush1.msra.mxu0 0.0
        %2534 = vmatprep.subr.mxu0 0.0
        %2535 = vmatpush1.msra.mxu0 0.0
        %2536 = vmatprep.subr.mxu0 0.0
        %2537 = vmatpush1.msra.mxu0 0.0
        %2538 = vmatprep.subr.mxu0 0.0
        %2539 = vmatpush1.msra.mxu0 0.0
        %2540 = vmatprep.subr.mxu0 0.0
        %2541 = vmatpush1.msra.mxu0 0.0
        %2542 = vmatprep.subr.mxu0 0.0
        %2543 = vmatpush1.msra.mxu0 0.0
        %2544 = vmatprep.subr.mxu0 0.0
        %2545 = vmatpush1.msra.mxu0 0.0
        %2546 = vmatprep.subr.mxu0 0.0
        %2547 = vmatpush1.msra.mxu0 0.0
        %2548 = vmatprep.subr.mxu0 0.0
        %2549 = vmatpush1.msra.mxu0 0.0
        %2550 = vmatprep.mubr.f32.mxu0 %v2467
        %2551 = vmatmul.mubr.f32.gmra.mrb[0].mxu0 %v2395
        %v2552 = vpop.f32.mrb[0].mxu0
        %v2553 = vadd.f32 0.0, %v2552
        %v2554 = vpop.f32.mrb[0].mxu0
        %2555 = vmatprep.mubr.f32.mxu0 %v2469
        %2556 = vmatmul.mubr.f32.gmra.mrb[0].mxu0 %v2401
        %v2557 = vpop.f32.mrb[0].mxu0
        %v2558 = vadd.f32 0.0, %v2557
        %v2559 = vpop.f32.mrb[0].mxu0
        %2560 = vmatprep.mubr.f32.mxu0 %v2471
        %2561 = vmatmul.mubr.f32.gmra.mrb[0].mxu0 %v2407
        %v2562 = vpop.f32.mrb[0].mxu0
        %v2563 = vadd.f32 0.0, %v2562
        %v2564 = vpop.f32.mrb[0].mxu0
        %2565 = vmatprep.mubr.f32.mxu0 %v2473
        %2566 = vmatmul.mubr.f32.gmra.mrb[0].mxu0 %v2413
        %v2567 = vpop.f32.mrb[0].mxu0
        %v2568 = vadd.f32 0.0, %v2567
        %v2569 = vpop.f32.mrb[0].mxu0
        %2570 = vmatprep.mubr.f32.mxu0 %v2475
        %2571 = vmatmul.mubr.f32.gmra.mrb[0].mxu0 %v2419
        %v2572 = vpop.f32.mrb[0].mxu0
        %v2573 = vadd.f32 0.0, %v2572
        %v2574 = vpop.f32.mrb[0].mxu0
        %2575 = vmatprep.mubr.f32.mxu0 %v2477
        %2576 = vmatmul.mubr.f32.gmra.mrb[0].mxu0 %v2425
        %v2577 = vpop.f32.mrb[0].mxu0
        %v2578 = vadd.f32 0.0, %v2577
        %v2579 = vpop.f32.mrb[0].mxu0
        %2580 = vmatprep.mubr.f32.mxu0 %v2479
        %2581 = vmatmul.mubr.f32.gmra.mrb[0].mxu0 %v2431
        %v2582 = vpop.f32.mrb[0].mxu0
        %v2583 = vadd.f32 0.0, %v2582
        %v2584 = vpop.f32.mrb[0].mxu0
        %2585 = vmatprep.mubr.f32.mxu0 %v2481
        %2586 = vmatmul.mubr.f32.gmra.mrb[0].mxu0 %v2437
        %v2587 = vpop.f32.mrb[0].mxu0
        %v2588 = vadd.f32 0.0, %v2587
        %v2589 = vpop.f32.mrb[0].mxu0
        %2590 = vdwg.mxu0
        %v2591 = vadd.f32 %v2321, %v2553
        %v2592 = vadd.f32 %v2322, %v2558
        %v2593 = vadd.f32 %v2323, %v2563
        %v2594 = vadd.f32 %v2324, %v2568
        %v2595 = vadd.f32 %v2325, %v2573
        %v2596 = vadd.f32 %v2326, %v2578
        %v2597 = vadd.f32 %v2327, %v2583
        %v2598 = vadd.f32 %v2328, %v2588
        %v2599 = vld [vmem:[%s2154] sm:$0xfc]
        %v2600 = vld [vmem:[%s2154 + $0x8] sm:$0xfc]
        %v2601 = vld [vmem:[%s2154 + $0x10] sm:$0x3]
        %v2602 = vld [vmem:[%s2154 + $0x18] sm:$0x3]
        %v2603 = vld [vmem:[%s2154 + $0x20] sm:$0xfc]
        %v2604 = vld [vmem:[%s2154 + $0x28] sm:$0xfc]
        %v2605 = vld [vmem:[%s2154 + $0x30] sm:$0x3]
        %v2606 = vld [vmem:[%s2154 + $0x38] sm:$0x3]
        %v2607 = vld [vmem:[%s2154 + $0x40] sm:$0xfc]
        %v2608 = vld [vmem:[%s2154 + $0x48] sm:$0xfc]
        %v2609 = vld [vmem:[%s2154 + $0x50] sm:$0x3]
        %v2610 = vld [vmem:[%s2154 + $0x58] sm:$0x3]
        %v2611 = vld [vmem:[%s2154 + $0x60] sm:$0xfc]
        %v2612 = vld [vmem:[%s2154 + $0x68] sm:$0xfc]
        %v2613 = vld [vmem:[%s2154 + $0x70] sm:$0x3]
        %v2614 = vld [vmem:[%s2154 + $0x78] sm:$0x3]
        %v2615 = vld [vmem:[%s2154 + $0x80] sm:$0xfc]
        %v2616 = vld [vmem:[%s2154 + $0x88] sm:$0xfc]
        %v2617 = vld [vmem:[%s2154 + $0x90] sm:$0x3]
        %v2618 = vld [vmem:[%s2154 + $0x98] sm:$0x3]
        %v2619 = vld [vmem:[%s2154 + $0xa0] sm:$0xfc]
        %v2620 = vld [vmem:[%s2154 + $0xa8] sm:$0xfc]
        %v2621 = vld [vmem:[%s2154 + $0xb0] sm:$0x3]
        %v2622 = vld [vmem:[%s2154 + $0xb8] sm:$0x3]
        %v2623 = vld [vmem:[%s2154 + $0xc0] sm:$0xfc]
        %v2624 = vld [vmem:[%s2154 + $0xc8] sm:$0xfc]
        %v2625 = vld [vmem:[%s2154 + $0xd0] sm:$0x3]
        %v2626 = vld [vmem:[%s2154 + $0xd8] sm:$0x3]
        %v2627 = vld [vmem:[%s2154 + $0xe0] sm:$0xfc]
        %v2628 = vld [vmem:[%s2154 + $0xe8] sm:$0xfc]
        %v2629 = vld [vmem:[%s2154 + $0xf0] sm:$0x3]
        %v2630 = vld [vmem:[%s2154 + $0xf8] sm:$0x3]
        %v2663 = vrot.slane %v2599, 2
        %v2664 = vrot.slane %v2601, 2
        %v2665 = vsel %vm691, %v2663, %v2664
        %v2666 = vrot.slane %v2600, 2
        %v2667 = vrot.slane %v2602, 2
        %v2668 = vsel %vm691, %v2666, %v2667
        %v2669 = vrot.slane %v2603, 2
        %v2670 = vrot.slane %v2605, 2
        %v2671 = vsel %vm691, %v2669, %v2670
        %v2672 = vrot.slane %v2604, 2
        %v2673 = vrot.slane %v2606, 2
        %v2674 = vsel %vm691, %v2672, %v2673
        %v2675 = vrot.slane %v2607, 2
        %v2676 = vrot.slane %v2609, 2
        %v2677 = vsel %vm691, %v2675, %v2676
        %v2678 = vrot.slane %v2608, 2
        %v2679 = vrot.slane %v2610, 2
        %v2680 = vsel %vm691, %v2678, %v2679
        %v2681 = vrot.slane %v2611, 2
        %v2682 = vrot.slane %v2613, 2
        %v2683 = vsel %vm691, %v2681, %v2682
        %v2684 = vrot.slane %v2612, 2
        %v2685 = vrot.slane %v2614, 2
        %v2686 = vsel %vm691, %v2684, %v2685
        %v2687 = vrot.slane %v2615, 2
        %v2688 = vrot.slane %v2617, 2
        %v2689 = vsel %vm691, %v2687, %v2688
        %v2690 = vrot.slane %v2616, 2
        %v2691 = vrot.slane %v2618, 2
        %v2692 = vsel %vm691, %v2690, %v2691
        %v2693 = vrot.slane %v2619, 2
        %v2694 = vrot.slane %v2621, 2
        %v2695 = vsel %vm691, %v2693, %v2694
        %v2696 = vrot.slane %v2620, 2
        %v2697 = vrot.slane %v2622, 2
        %v2698 = vsel %vm691, %v2696, %v2697
        %v2699 = vrot.slane %v2623, 2
        %v2700 = vrot.slane %v2625, 2
        %v2701 = vsel %vm691, %v2699, %v2700
        %v2702 = vrot.slane %v2624, 2
        %v2703 = vrot.slane %v2626, 2
        %v2704 = vsel %vm691, %v2702, %v2703
        %v2705 = vrot.slane %v2627, 2
        %v2706 = vrot.slane %v2629, 2
        %v2707 = vsel %vm691, %v2705, %v2706
        %v2708 = vrot.slane %v2628, 2
        %v2709 = vrot.slane %v2630, 2
        %v2710 = vsel %vm691, %v2708, %v2709
        %s2719 = scalar_lea.vmem [#allocation2], 1360
        %v2720 = vld [vmem:[%s2719] sm:$0xff]
        %v2721 = vld [vmem:[%s2719 + $0x8] sm:$0xff]
        %v2722 = vld [vmem:[%s2719 + $0x10] sm:$0xff]
        %v2723 = vld [vmem:[%s2719 + $0x18] sm:$0xff]
        %v2724 = vld [vmem:[%s2719 + $0x20] sm:$0xff]
        %v2725 = vld [vmem:[%s2719 + $0x28] sm:$0xff]
        %v2726 = vld [vmem:[%s2719 + $0x30] sm:$0xff]
        %v2727 = vld [vmem:[%s2719 + $0x38] sm:$0xff]
        %v2728 = vld [vmem:[%s2719 + $0x40] sm:$0xff]
        %v2729 = vld [vmem:[%s2719 + $0x48] sm:$0xff]
        %v2730 = vld [vmem:[%s2719 + $0x50] sm:$0xff]
        %v2731 = vld [vmem:[%s2719 + $0x58] sm:$0xff]
        %v2732 = vld [vmem:[%s2719 + $0x60] sm:$0xff]
        %v2733 = vld [vmem:[%s2719 + $0x68] sm:$0xff]
        %v2734 = vld [vmem:[%s2719 + $0x70] sm:$0xff]
        %v2735 = vld [vmem:[%s2719 + $0x78] sm:$0xff]
        %v2736 = vld [vmem:[%s2719 + $0x80] sm:$0xf]
        %v2737 = vsel %vm369, %v2668, 0
        %v2739 = vsel %vm369, %v2674, 0
        %v2741 = vsel %vm369, %v2680, 0
        %v2743 = vsel %vm369, %v2686, 0
        %v2745 = vsel %vm369, %v2692, 0
        %v2747 = vsel %vm369, %v2698, 0
        %v2749 = vsel %vm369, %v2704, 0
        %v2751 = vsel %vm369, %v2710, 0
        %v2754 = vsel %vm386, %v2736, 0
        %2756 = vmatprep.subr.mxu0 0.0
        %2757 = vmatpush1.msra.mxu0 %v2720
        %2758 = vmatprep.subr.mxu0 0.0
        %2759 = vmatpush1.msra.mxu0 %v2721
        %2760 = vmatprep.subr.mxu0 0.0
        %2761 = vmatpush1.msra.mxu0 %v2722
        %2762 = vmatprep.subr.mxu0 0.0
        %2763 = vmatpush1.msra.mxu0 %v2723
        %2764 = vmatprep.subr.mxu0 0.0
        %2765 = vmatpush1.msra.mxu0 %v2724
        %2766 = vmatprep.subr.mxu0 0.0
        %2767 = vmatpush1.msra.mxu0 %v2725
        %2768 = vmatprep.subr.mxu0 0.0
        %2769 = vmatpush1.msra.mxu0 %v2726
        %2770 = vmatprep.subr.mxu0 0.0
        %2771 = vmatpush1.msra.mxu0 %v2727
        %2772 = vmatprep.subr.mxu0 0.0
        %2773 = vmatpush1.msra.mxu0 %v2728
        %2774 = vmatprep.subr.mxu0 0.0
        %2775 = vmatpush1.msra.mxu0 %v2729
        %2776 = vmatprep.subr.mxu0 0.0
        %2777 = vmatpush1.msra.mxu0 %v2730
        %2778 = vmatprep.subr.mxu0 0.0
        %2779 = vmatpush1.msra.mxu0 %v2731
        %2780 = vmatprep.subr.mxu0 0.0
        %2781 = vmatpush1.msra.mxu0 %v2732
        %2782 = vmatprep.subr.mxu0 0.0
        %2783 = vmatpush1.msra.mxu0 %v2733
        %2784 = vmatprep.subr.mxu0 0.0
        %2785 = vmatpush1.msra.mxu0 %v2734
        %2786 = vmatprep.subr.mxu0 0.0
        %2787 = vmatpush1.msra.mxu0 %v2735
        %2788 = vmatprep.subr.mxu0 0.0
        %2789 = vmatpush1.msra.mxu0 %v2754
        %2790 = vmatprep.subr.mxu0 0.0
        %2791 = vmatpush1.msra.mxu0 0.0
        %2792 = vmatprep.subr.mxu0 0.0
        %2793 = vmatpush1.msra.mxu0 0.0
        %2794 = vmatprep.subr.mxu0 0.0
        %2795 = vmatpush1.msra.mxu0 0.0
        %2796 = vmatprep.subr.mxu0 0.0
        %2797 = vmatpush1.msra.mxu0 0.0
        %2798 = vmatprep.subr.mxu0 0.0
        %2799 = vmatpush1.msra.mxu0 0.0
        %2800 = vmatprep.subr.mxu0 0.0
        %2801 = vmatpush1.msra.mxu0 0.0
        %2802 = vmatprep.subr.mxu0 0.0
        %2803 = vmatpush1.msra.mxu0 0.0
        %2804 = vmatprep.subr.mxu0 0.0
        %2805 = vmatpush1.msra.mxu0 0.0
        %2806 = vmatprep.subr.mxu0 0.0
        %2807 = vmatpush1.msra.mxu0 0.0
        %2808 = vmatprep.subr.mxu0 0.0
        %2809 = vmatpush1.msra.mxu0 0.0
        %2810 = vmatprep.subr.mxu0 0.0
        %2811 = vmatpush1.msra.mxu0 0.0
        %2812 = vmatprep.subr.mxu0 0.0
        %2813 = vmatpush1.msra.mxu0 0.0
        %2814 = vmatprep.subr.mxu0 0.0
        %2815 = vmatpush1.msra.mxu0 0.0
        %2816 = vmatprep.subr.mxu0 0.0
        %2817 = vmatpush1.msra.mxu0 0.0
        %2818 = vmatprep.subr.mxu0 0.0
        %2819 = vmatpush1.msra.mxu0 0.0
        %2820 = vmatprep.mubr.f32.mxu0 %v2737
        %2821 = vmatmul.mubr.f32.gmra.mrb[0].mxu0 %v2665
        %v2822 = vpop.f32.mrb[0].mxu0
        %v2823 = vadd.f32 0.0, %v2822
        %v2824 = vpop.f32.mrb[0].mxu0
        %2825 = vmatprep.mubr.f32.mxu0 %v2739
        %2826 = vmatmul.mubr.f32.gmra.mrb[0].mxu0 %v2671
        %v2827 = vpop.f32.mrb[0].mxu0
        %v2828 = vadd.f32 0.0, %v2827
        %v2829 = vpop.f32.mrb[0].mxu0
        %2830 = vmatprep.mubr.f32.mxu0 %v2741
        %2831 = vmatmul.mubr.f32.gmra.mrb[0].mxu0 %v2677
        %v2832 = vpop.f32.mrb[0].mxu0
        %v2833 = vadd.f32 0.0, %v2832
        %v2834 = vpop.f32.mrb[0].mxu0
        %2835 = vmatprep.mubr.f32.mxu0 %v2743
        %2836 = vmatmul.mubr.f32.gmra.mrb[0].mxu0 %v2683
        %v2837 = vpop.f32.mrb[0].mxu0
        %v2838 = vadd.f32 0.0, %v2837
        %v2839 = vpop.f32.mrb[0].mxu0
        %2840 = vmatprep.mubr.f32.mxu0 %v2745
        %2841 = vmatmul.mubr.f32.gmra.mrb[0].mxu0 %v2689
        %v2842 = vpop.f32.mrb[0].mxu0
        %v2843 = vadd.f32 0.0, %v2842
        %v2844 = vpop.f32.mrb[0].mxu0
        %2845 = vmatprep.mubr.f32.mxu0 %v2747
        %2846 = vmatmul.mubr.f32.gmra.mrb[0].mxu0 %v2695
        %v2847 = vpop.f32.mrb[0].mxu0
        %v2848 = vadd.f32 0.0, %v2847
        %v2849 = vpop.f32.mrb[0].mxu0
        %2850 = vmatprep.mubr.f32.mxu0 %v2749
        %2851 = vmatmul.mubr.f32.gmra.mrb[0].mxu0 %v2701
        %v2852 = vpop.f32.mrb[0].mxu0
        %v2853 = vadd.f32 0.0, %v2852
        %v2854 = vpop.f32.mrb[0].mxu0
        %2855 = vmatprep.mubr.f32.mxu0 %v2751
        %2856 = vmatmul.mubr.f32.gmra.mrb[0].mxu0 %v2707
        %v2857 = vpop.f32.mrb[0].mxu0
        %v2858 = vadd.f32 0.0, %v2857
        %v2859 = vpop.f32.mrb[0].mxu0
        %2860 = vdwg.mxu0
        %v2861 = vadd.f32 %v2591, %v2823
        %v2862 = vadd.f32 %v2592, %v2828
        %v2863 = vadd.f32 %v2593, %v2833
        %v2864 = vadd.f32 %v2594, %v2838
        %v2865 = vadd.f32 %v2595, %v2843
        %v2866 = vadd.f32 %v2596, %v2848
        %v2867 = vadd.f32 %v2597, %v2853
        %v2868 = vadd.f32 %v2598, %v2858
        %v2869 = vld [vmem:[%s2154] sm:$0xf8]
        %v2870 = vld [vmem:[%s2154 + $0x8] sm:$0xf8]
        %v2871 = vld [vmem:[%s2154 + $0x10] sm:$0x7]
        %v2872 = vld [vmem:[%s2154 + $0x18] sm:$0x7]
        %v2873 = vld [vmem:[%s2154 + $0x20] sm:$0xf8]
        %v2874 = vld [vmem:[%s2154 + $0x28] sm:$0xf8]
        %v2875 = vld [vmem:[%s2154 + $0x30] sm:$0x7]
        %v2876 = vld [vmem:[%s2154 + $0x38] sm:$0x7]
        %v2877 = vld [vmem:[%s2154 + $0x40] sm:$0xf8]
        %v2878 = vld [vmem:[%s2154 + $0x48] sm:$0xf8]
        %v2879 = vld [vmem:[%s2154 + $0x50] sm:$0x7]
        %v2880 = vld [vmem:[%s2154 + $0x58] sm:$0x7]
        %v2881 = vld [vmem:[%s2154 + $0x60] sm:$0xf8]
        %v2882 = vld [vmem:[%s2154 + $0x68] sm:$0xf8]
        %v2883 = vld [vmem:[%s2154 + $0x70] sm:$0x7]
        %v2884 = vld [vmem:[%s2154 + $0x78] sm:$0x7]
        %v2885 = vld [vmem:[%s2154 + $0x80] sm:$0xf8]
        %v2886 = vld [vmem:[%s2154 + $0x88] sm:$0xf8]
        %v2887 = vld [vmem:[%s2154 + $0x90] sm:$0x7]
        %v2888 = vld [vmem:[%s2154 + $0x98] sm:$0x7]
        %v2889 = vld [vmem:[%s2154 + $0xa0] sm:$0xf8]
        %v2890 = vld [vmem:[%s2154 + $0xa8] sm:$0xf8]
        %v2891 = vld [vmem:[%s2154 + $0xb0] sm:$0x7]
        %v2892 = vld [vmem:[%s2154 + $0xb8] sm:$0x7]
        %v2893 = vld [vmem:[%s2154 + $0xc0] sm:$0xf8]
        %v2894 = vld [vmem:[%s2154 + $0xc8] sm:$0xf8]
        %v2895 = vld [vmem:[%s2154 + $0xd0] sm:$0x7]
        %v2896 = vld [vmem:[%s2154 + $0xd8] sm:$0x7]
        %v2897 = vld [vmem:[%s2154 + $0xe0] sm:$0xf8]
        %v2898 = vld [vmem:[%s2154 + $0xe8] sm:$0xf8]
        %v2899 = vld [vmem:[%s2154 + $0xf0] sm:$0x7]
        %v2900 = vld [vmem:[%s2154 + $0xf8] sm:$0x7]
        %v2933 = vrot.slane %v2869, 3
        %v2934 = vrot.slane %v2871, 3
        %v2935 = vsel %vm962, %v2933, %v2934
        %v2936 = vrot.slane %v2870, 3
        %v2937 = vrot.slane %v2872, 3
        %v2938 = vsel %vm962, %v2936, %v2937
        %v2939 = vrot.slane %v2873, 3
        %v2940 = vrot.slane %v2875, 3
        %v2941 = vsel %vm962, %v2939, %v2940
        %v2942 = vrot.slane %v2874, 3
        %v2943 = vrot.slane %v2876, 3
        %v2944 = vsel %vm962, %v2942, %v2943
        %v2945 = vrot.slane %v2877, 3
        %v2946 = vrot.slane %v2879, 3
        %v2947 = vsel %vm962, %v2945, %v2946
        %v2948 = vrot.slane %v2878, 3
        %v2949 = vrot.slane %v2880, 3
        %v2950 = vsel %vm962, %v2948, %v2949
        %v2951 = vrot.slane %v2881, 3
        %v2952 = vrot.slane %v2883, 3
        %v2953 = vsel %vm962, %v2951, %v2952
        %v2954 = vrot.slane %v2882, 3
        %v2955 = vrot.slane %v2884, 3
        %v2956 = vsel %vm962, %v2954, %v2955
        %v2957 = vrot.slane %v2885, 3
        %v2958 = vrot.slane %v2887, 3
        %v2959 = vsel %vm962, %v2957, %v2958
        %v2960 = vrot.slane %v2886, 3
        %v2961 = vrot.slane %v2888, 3
        %v2962 = vsel %vm962, %v2960, %v2961
        %v2963 = vrot.slane %v2889, 3
        %v2964 = vrot.slane %v2891, 3
        %v2965 = vsel %vm962, %v2963, %v2964
        %v2966 = vrot.slane %v2890, 3
        %v2967 = vrot.slane %v2892, 3
        %v2968 = vsel %vm962, %v2966, %v2967
        %v2969 = vrot.slane %v2893, 3
        %v2970 = vrot.slane %v2895, 3
        %v2971 = vsel %vm962, %v2969, %v2970
        %v2972 = vrot.slane %v2894, 3
        %v2973 = vrot.slane %v2896, 3
        %v2974 = vsel %vm962, %v2972, %v2973
        %v2975 = vrot.slane %v2897, 3
        %v2976 = vrot.slane %v2899, 3
        %v2977 = vsel %vm962, %v2975, %v2976
        %v2978 = vrot.slane %v2898, 3
        %v2979 = vrot.slane %v2900, 3
        %v2980 = vsel %vm962, %v2978, %v2979
        %s2989 = scalar_lea.vmem [#allocation2], 1496
        %v2990 = vld [vmem:[%s2989] sm:$0xff]
        %v2991 = vld [vmem:[%s2989 + $0x8] sm:$0xff]
        %v2992 = vld [vmem:[%s2989 + $0x10] sm:$0xff]
        %v2993 = vld [vmem:[%s2989 + $0x18] sm:$0xff]
        %v2994 = vld [vmem:[%s2989 + $0x20] sm:$0xff]
        %v2995 = vld [vmem:[%s2989 + $0x28] sm:$0xff]
        %v2996 = vld [vmem:[%s2989 + $0x30] sm:$0xff]
        %v2997 = vld [vmem:[%s2989 + $0x38] sm:$0xff]
        %v2998 = vld [vmem:[%s2989 + $0x40] sm:$0xff]
        %v2999 = vld [vmem:[%s2989 + $0x48] sm:$0xff]
        %v3000 = vld [vmem:[%s2989 + $0x50] sm:$0xff]
        %v3001 = vld [vmem:[%s2989 + $0x58] sm:$0xff]
        %v3002 = vld [vmem:[%s2989 + $0x60] sm:$0xff]
        %v3003 = vld [vmem:[%s2989 + $0x68] sm:$0xff]
        %v3004 = vld [vmem:[%s2989 + $0x70] sm:$0xff]
        %v3005 = vld [vmem:[%s2989 + $0x78] sm:$0xff]
        %v3006 = vld [vmem:[%s2989 + $0x80] sm:$0xf]
        %v3007 = vsel %vm369, %v2938, 0
        %v3009 = vsel %vm369, %v2944, 0
        %v3011 = vsel %vm369, %v2950, 0
        %v3013 = vsel %vm369, %v2956, 0
        %v3015 = vsel %vm369, %v2962, 0
        %v3017 = vsel %vm369, %v2968, 0
        %v3019 = vsel %vm369, %v2974, 0
        %v3021 = vsel %vm369, %v2980, 0
        %v3024 = vsel %vm386, %v3006, 0
        %3026 = vmatprep.subr.mxu0 0.0
        %3027 = vmatpush1.msra.mxu0 %v2990
        %3028 = vmatprep.subr.mxu0 0.0
        %3029 = vmatpush1.msra.mxu0 %v2991
        %3030 = vmatprep.subr.mxu0 0.0
        %3031 = vmatpush1.msra.mxu0 %v2992
        %3032 = vmatprep.subr.mxu0 0.0
        %3033 = vmatpush1.msra.mxu0 %v2993
        %3034 = vmatprep.subr.mxu0 0.0
        %3035 = vmatpush1.msra.mxu0 %v2994
        %3036 = vmatprep.subr.mxu0 0.0
        %3037 = vmatpush1.msra.mxu0 %v2995
        %3038 = vmatprep.subr.mxu0 0.0
        %3039 = vmatpush1.msra.mxu0 %v2996
        %3040 = vmatprep.subr.mxu0 0.0
        %3041 = vmatpush1.msra.mxu0 %v2997
        %3042 = vmatprep.subr.mxu0 0.0
        %3043 = vmatpush1.msra.mxu0 %v2998
        %3044 = vmatprep.subr.mxu0 0.0
        %3045 = vmatpush1.msra.mxu0 %v2999
        %3046 = vmatprep.subr.mxu0 0.0
        %3047 = vmatpush1.msra.mxu0 %v3000
        %3048 = vmatprep.subr.mxu0 0.0
        %3049 = vmatpush1.msra.mxu0 %v3001
        %3050 = vmatprep.subr.mxu0 0.0
        %3051 = vmatpush1.msra.mxu0 %v3002
        %3052 = vmatprep.subr.mxu0 0.0
        %3053 = vmatpush1.msra.mxu0 %v3003
        %3054 = vmatprep.subr.mxu0 0.0
        %3055 = vmatpush1.msra.mxu0 %v3004
        %3056 = vmatprep.subr.mxu0 0.0
        %3057 = vmatpush1.msra.mxu0 %v3005
        %3058 = vmatprep.subr.mxu0 0.0
        %3059 = vmatpush1.msra.mxu0 %v3024
        %3060 = vmatprep.subr.mxu0 0.0
        %3061 = vmatpush1.msra.mxu0 0.0
        %3062 = vmatprep.subr.mxu0 0.0
        %3063 = vmatpush1.msra.mxu0 0.0
        %3064 = vmatprep.subr.mxu0 0.0
        %3065 = vmatpush1.msra.mxu0 0.0
        %3066 = vmatprep.subr.mxu0 0.0
        %3067 = vmatpush1.msra.mxu0 0.0
        %3068 = vmatprep.subr.mxu0 0.0
        %3069 = vmatpush1.msra.mxu0 0.0
        %3070 = vmatprep.subr.mxu0 0.0
        %3071 = vmatpush1.msra.mxu0 0.0
        %3072 = vmatprep.subr.mxu0 0.0
        %3073 = vmatpush1.msra.mxu0 0.0
        %3074 = vmatprep.subr.mxu0 0.0
        %3075 = vmatpush1.msra.mxu0 0.0
        %3076 = vmatprep.subr.mxu0 0.0
        %3077 = vmatpush1.msra.mxu0 0.0
        %3078 = vmatprep.subr.mxu0 0.0
        %3079 = vmatpush1.msra.mxu0 0.0
        %3080 = vmatprep.subr.mxu0 0.0
        %3081 = vmatpush1.msra.mxu0 0.0
        %3082 = vmatprep.subr.mxu0 0.0
        %3083 = vmatpush1.msra.mxu0 0.0
        %3084 = vmatprep.subr.mxu0 0.0
        %3085 = vmatpush1.msra.mxu0 0.0
        %3086 = vmatprep.subr.mxu0 0.0
        %3087 = vmatpush1.msra.mxu0 0.0
        %3088 = vmatprep.subr.mxu0 0.0
        %3089 = vmatpush1.msra.mxu0 0.0
        %3090 = vmatprep.mubr.f32.mxu0 %v3007
        %3091 = vmatmul.mubr.f32.gmra.mrb[0].mxu0 %v2935
        %v3092 = vpop.f32.mrb[0].mxu0
        %v3093 = vadd.f32 0.0, %v3092
        %v3094 = vpop.f32.mrb[0].mxu0
        %3095 = vmatprep.mubr.f32.mxu0 %v3009
        %3096 = vmatmul.mubr.f32.gmra.mrb[0].mxu0 %v2941
        %v3097 = vpop.f32.mrb[0].mxu0
        %v3098 = vadd.f32 0.0, %v3097
        %v3099 = vpop.f32.mrb[0].mxu0
        %3100 = vmatprep.mubr.f32.mxu0 %v3011
        %3101 = vmatmul.mubr.f32.gmra.mrb[0].mxu0 %v2947
        %v3102 = vpop.f32.mrb[0].mxu0
        %v3103 = vadd.f32 0.0, %v3102
        %v3104 = vpop.f32.mrb[0].mxu0
        %3105 = vmatprep.mubr.f32.mxu0 %v3013
        %3106 = vmatmul.mubr.f32.gmra.mrb[0].mxu0 %v2953
        %v3107 = vpop.f32.mrb[0].mxu0
        %v3108 = vadd.f32 0.0, %v3107
        %v3109 = vpop.f32.mrb[0].mxu0
        %3110 = vmatprep.mubr.f32.mxu0 %v3015
        %3111 = vmatmul.mubr.f32.gmra.mrb[0].mxu0 %v2959
        %v3112 = vpop.f32.mrb[0].mxu0
        %v3113 = vadd.f32 0.0, %v3112
        %v3114 = vpop.f32.mrb[0].mxu0
        %3115 = vmatprep.mubr.f32.mxu0 %v3017
        %3116 = vmatmul.mubr.f32.gmra.mrb[0].mxu0 %v2965
        %v3117 = vpop.f32.mrb[0].mxu0
        %v3118 = vadd.f32 0.0, %v3117
        %v3119 = vpop.f32.mrb[0].mxu0
        %3120 = vmatprep.mubr.f32.mxu0 %v3019
        %3121 = vmatmul.mubr.f32.gmra.mrb[0].mxu0 %v2971
        %v3122 = vpop.f32.mrb[0].mxu0
        %v3123 = vadd.f32 0.0, %v3122
        %v3124 = vpop.f32.mrb[0].mxu0
        %3125 = vmatprep.mubr.f32.mxu0 %v3021
        %3126 = vmatmul.mubr.f32.gmra.mrb[0].mxu0 %v2977
        %v3127 = vpop.f32.mrb[0].mxu0
        %v3128 = vadd.f32 0.0, %v3127
        %v3129 = vpop.f32.mrb[0].mxu0
        %3130 = vdwg.mxu0
        %v3131 = vadd.f32 %v2861, %v3093
        %v3132 = vadd.f32 %v2862, %v3098
        %v3133 = vadd.f32 %v2863, %v3103
        %v3134 = vadd.f32 %v2864, %v3108
        %v3135 = vadd.f32 %v2865, %v3113
        %v3136 = vadd.f32 %v2866, %v3118
        %v3137 = vadd.f32 %v2867, %v3123
        %v3138 = vadd.f32 %v2868, %v3128
        %s3139 = scalar_lea.vmem %s196, 96
        %v3140 = vld [vmem:[%s3139] sm:$0xff]
        %v3141 = vld [vmem:[%s3139 + $0x8] sm:$0xff]
        %v3142 = vld [vmem:[%s3139 + $0x20] sm:$0xff]
        %v3143 = vld [vmem:[%s3139 + $0x28] sm:$0xff]
        %v3144 = vld [vmem:[%s3139 + $0x40] sm:$0xff]
        %v3145 = vld [vmem:[%s3139 + $0x48] sm:$0xff]
        %v3146 = vld [vmem:[%s3139 + $0x60] sm:$0xff]
        %v3147 = vld [vmem:[%s3139 + $0x68] sm:$0xff]
        %v3148 = vld [vmem:[%s3139 + $0x80] sm:$0xff]
        %v3149 = vld [vmem:[%s3139 + $0x88] sm:$0xff]
        %v3150 = vld [vmem:[%s3139 + $0xa0] sm:$0xff]
        %v3151 = vld [vmem:[%s3139 + $0xa8] sm:$0xff]
        %v3152 = vld [vmem:[%s3139 + $0xc0] sm:$0xff]
        %v3153 = vld [vmem:[%s3139 + $0xc8] sm:$0xff]
        %v3154 = vld [vmem:[%s3139 + $0xe0] sm:$0xff]
        %v3155 = vld [vmem:[%s3139 + $0xe8] sm:$0xff]
        %s3156 = scalar_lea.vmem [#allocation2], 1632
        %v3157 = vld [vmem:[%s3156] sm:$0xff]
        %v3158 = vld [vmem:[%s3156 + $0x8] sm:$0xff]
        %v3159 = vld [vmem:[%s3156 + $0x10] sm:$0xff]
        %v3160 = vld [vmem:[%s3156 + $0x18] sm:$0xff]
        %v3161 = vld [vmem:[%s3156 + $0x20] sm:$0xff]
        %v3162 = vld [vmem:[%s3156 + $0x28] sm:$0xff]
        %v3163 = vld [vmem:[%s3156 + $0x30] sm:$0xff]
        %v3164 = vld [vmem:[%s3156 + $0x38] sm:$0xff]
        %v3165 = vld [vmem:[%s3156 + $0x40] sm:$0xff]
        %v3166 = vld [vmem:[%s3156 + $0x48] sm:$0xff]
        %v3167 = vld [vmem:[%s3156 + $0x50] sm:$0xff]
        %v3168 = vld [vmem:[%s3156 + $0x58] sm:$0xff]
        %v3169 = vld [vmem:[%s3156 + $0x60] sm:$0xff]
        %v3170 = vld [vmem:[%s3156 + $0x68] sm:$0xff]
        %v3171 = vld [vmem:[%s3156 + $0x70] sm:$0xff]
        %v3172 = vld [vmem:[%s3156 + $0x78] sm:$0xff]
        %v3173 = vld [vmem:[%s3156 + $0x80] sm:$0xf]
        %v3175 = vsel %vm369, %v3141, 0
        %v3178 = vsel %vm369, %v3143, 0
        %v3181 = vsel %vm369, %v3145, 0
        %v3184 = vsel %vm369, %v3147, 0
        %v3187 = vsel %vm369, %v3149, 0
        %v3190 = vsel %vm369, %v3151, 0
        %v3193 = vsel %vm369, %v3153, 0
        %v3196 = vsel %vm369, %v3155, 0
        %v3199 = vsel %vm386, %v3173, 0
        %3201 = vmatprep.subr.mxu0 0.0
        %3202 = vmatpush1.msra.mxu0 %v3157
        %3203 = vmatprep.subr.mxu0 0.0
        %3204 = vmatpush1.msra.mxu0 %v3158
        %3205 = vmatprep.subr.mxu0 0.0
        %3206 = vmatpush1.msra.mxu0 %v3159
        %3207 = vmatprep.subr.mxu0 0.0
        %3208 = vmatpush1.msra.mxu0 %v3160
        %3209 = vmatprep.subr.mxu0 0.0
        %3210 = vmatpush1.msra.mxu0 %v3161
        %3211 = vmatprep.subr.mxu0 0.0
        %3212 = vmatpush1.msra.mxu0 %v3162
        %3213 = vmatprep.subr.mxu0 0.0
        %3214 = vmatpush1.msra.mxu0 %v3163
        %3215 = vmatprep.subr.mxu0 0.0
        %3216 = vmatpush1.msra.mxu0 %v3164
        %3217 = vmatprep.subr.mxu0 0.0
        %3218 = vmatpush1.msra.mxu0 %v3165
        %3219 = vmatprep.subr.mxu0 0.0
        %3220 = vmatpush1.msra.mxu0 %v3166
        %3221 = vmatprep.subr.mxu0 0.0
        %3222 = vmatpush1.msra.mxu0 %v3167
        %3223 = vmatprep.subr.mxu0 0.0
        %3224 = vmatpush1.msra.mxu0 %v3168
        %3225 = vmatprep.subr.mxu0 0.0
        %3226 = vmatpush1.msra.mxu0 %v3169
        %3227 = vmatprep.subr.mxu0 0.0
        %3228 = vmatpush1.msra.mxu0 %v3170
        %3229 = vmatprep.subr.mxu0 0.0
        %3230 = vmatpush1.msra.mxu0 %v3171
        %3231 = vmatprep.subr.mxu0 0.0
        %3232 = vmatpush1.msra.mxu0 %v3172
        %3233 = vmatprep.subr.mxu0 0.0
        %3234 = vmatpush1.msra.mxu0 %v3199
        %3235 = vmatprep.subr.mxu0 0.0
        %3236 = vmatpush1.msra.mxu0 0.0
        %3237 = vmatprep.subr.mxu0 0.0
        %3238 = vmatpush1.msra.mxu0 0.0
        %3239 = vmatprep.subr.mxu0 0.0
        %3240 = vmatpush1.msra.mxu0 0.0
        %3241 = vmatprep.subr.mxu0 0.0
        %3242 = vmatpush1.msra.mxu0 0.0
        %3243 = vmatprep.subr.mxu0 0.0
        %3244 = vmatpush1.msra.mxu0 0.0
        %3245 = vmatprep.subr.mxu0 0.0
        %3246 = vmatpush1.msra.mxu0 0.0
        %3247 = vmatprep.subr.mxu0 0.0
        %3248 = vmatpush1.msra.mxu0 0.0
        %3249 = vmatprep.subr.mxu0 0.0
        %3250 = vmatpush1.msra.mxu0 0.0
        %3251 = vmatprep.subr.mxu0 0.0
        %3252 = vmatpush1.msra.mxu0 0.0
        %3253 = vmatprep.subr.mxu0 0.0
        %3254 = vmatpush1.msra.mxu0 0.0
        %3255 = vmatprep.subr.mxu0 0.0
        %3256 = vmatpush1.msra.mxu0 0.0
        %3257 = vmatprep.subr.mxu0 0.0
        %3258 = vmatpush1.msra.mxu0 0.0
        %3259 = vmatprep.subr.mxu0 0.0
        %3260 = vmatpush1.msra.mxu0 0.0
        %3261 = vmatprep.subr.mxu0 0.0
        %3262 = vmatpush1.msra.mxu0 0.0
        %3263 = vmatprep.subr.mxu0 0.0
        %3264 = vmatpush1.msra.mxu0 0.0
        %3265 = vmatprep.mubr.f32.mxu0 %v3175
        %3266 = vmatmul.mubr.f32.gmra.mrb[0].mxu0 %v3140
        %v3267 = vpop.f32.mrb[0].mxu0
        %v3268 = vadd.f32 0.0, %v3267
        %v3269 = vpop.f32.mrb[0].mxu0
        %3270 = vmatprep.mubr.f32.mxu0 %v3178
        %3271 = vmatmul.mubr.f32.gmra.mrb[0].mxu0 %v3142
        %v3272 = vpop.f32.mrb[0].mxu0
        %v3273 = vadd.f32 0.0, %v3272
        %v3274 = vpop.f32.mrb[0].mxu0
        %3275 = vmatprep.mubr.f32.mxu0 %v3181
        %3276 = vmatmul.mubr.f32.gmra.mrb[0].mxu0 %v3144
        %v3277 = vpop.f32.mrb[0].mxu0
        %v3278 = vadd.f32 0.0, %v3277
        %v3279 = vpop.f32.mrb[0].mxu0
        %3280 = vmatprep.mubr.f32.mxu0 %v3184
        %3281 = vmatmul.mubr.f32.gmra.mrb[0].mxu0 %v3146
        %v3282 = vpop.f32.mrb[0].mxu0
        %v3283 = vadd.f32 0.0, %v3282
        %v3284 = vpop.f32.mrb[0].mxu0
        %3285 = vmatprep.mubr.f32.mxu0 %v3187
        %3286 = vmatmul.mubr.f32.gmra.mrb[0].mxu0 %v3148
        %v3287 = vpop.f32.mrb[0].mxu0
        %v3288 = vadd.f32 0.0, %v3287
        %v3289 = vpop.f32.mrb[0].mxu0
        %3290 = vmatprep.mubr.f32.mxu0 %v3190
        %3291 = vmatmul.mubr.f32.gmra.mrb[0].mxu0 %v3150
        %v3292 = vpop.f32.mrb[0].mxu0
        %v3293 = vadd.f32 0.0, %v3292
        %v3294 = vpop.f32.mrb[0].mxu0
        %3295 = vmatprep.mubr.f32.mxu0 %v3193
        %3296 = vmatmul.mubr.f32.gmra.mrb[0].mxu0 %v3152
        %v3297 = vpop.f32.mrb[0].mxu0
        %v3298 = vadd.f32 0.0, %v3297
        %v3299 = vpop.f32.mrb[0].mxu0
        %3300 = vmatprep.mubr.f32.mxu0 %v3196
        %3301 = vmatmul.mubr.f32.gmra.mrb[0].mxu0 %v3154
        %v3302 = vpop.f32.mrb[0].mxu0
        %v3303 = vadd.f32 0.0, %v3302
        %v3304 = vpop.f32.mrb[0].mxu0
        %3305 = vdwg.mxu0
        %v3306 = vadd.f32 %v3131, %v3268
        %v3307 = vadd.f32 %v3132, %v3273
        %v3308 = vadd.f32 %v3133, %v3278
        %v3309 = vadd.f32 %v3134, %v3283
        %v3310 = vadd.f32 %v3135, %v3288
        %v3311 = vadd.f32 %v3136, %v3293
        %v3312 = vadd.f32 %v3137, %v3298
        %v3313 = vadd.f32 %v3138, %v3303
        %v3314 = vld [vmem:[%s3139] sm:$0xfe]
        %v3315 = vld [vmem:[%s3139 + $0x8] sm:$0xfe]
        %v3316 = vld [vmem:[%s3139 + $0x10] sm:$0x1]
        %v3317 = vld [vmem:[%s3139 + $0x18] sm:$0x1]
        %v3318 = vld [vmem:[%s3139 + $0x20] sm:$0xfe]
        %v3319 = vld [vmem:[%s3139 + $0x28] sm:$0xfe]
        %v3320 = vld [vmem:[%s3139 + $0x30] sm:$0x1]
        %v3321 = vld [vmem:[%s3139 + $0x38] sm:$0x1]
        %v3322 = vld [vmem:[%s3139 + $0x40] sm:$0xfe]
        %v3323 = vld [vmem:[%s3139 + $0x48] sm:$0xfe]
        %v3324 = vld [vmem:[%s3139 + $0x50] sm:$0x1]
        %v3325 = vld [vmem:[%s3139 + $0x58] sm:$0x1]
        %v3326 = vld [vmem:[%s3139 + $0x60] sm:$0xfe]
        %v3327 = vld [vmem:[%s3139 + $0x68] sm:$0xfe]
        %v3328 = vld [vmem:[%s3139 + $0x70] sm:$0x1]
        %v3329 = vld [vmem:[%s3139 + $0x78] sm:$0x1]
        %v3330 = vld [vmem:[%s3139 + $0x80] sm:$0xfe]
        %v3331 = vld [vmem:[%s3139 + $0x88] sm:$0xfe]
        %v3332 = vld [vmem:[%s3139 + $0x90] sm:$0x1]
        %v3333 = vld [vmem:[%s3139 + $0x98] sm:$0x1]
        %v3334 = vld [vmem:[%s3139 + $0xa0] sm:$0xfe]
        %v3335 = vld [vmem:[%s3139 + $0xa8] sm:$0xfe]
        %v3336 = vld [vmem:[%s3139 + $0xb0] sm:$0x1]
        %v3337 = vld [vmem:[%s3139 + $0xb8] sm:$0x1]
        %v3338 = vld [vmem:[%s3139 + $0xc0] sm:$0xfe]
        %v3339 = vld [vmem:[%s3139 + $0xc8] sm:$0xfe]
        %v3340 = vld [vmem:[%s3139 + $0xd0] sm:$0x1]
        %v3341 = vld [vmem:[%s3139 + $0xd8] sm:$0x1]
        %v3342 = vld [vmem:[%s3139 + $0xe0] sm:$0xfe]
        %v3343 = vld [vmem:[%s3139 + $0xe8] sm:$0xfe]
        %v3344 = vld [vmem:[%s3139 + $0xf0] sm:$0x1]
        %v3345 = vld [vmem:[%s3139 + $0xf8] sm:$0x1]
        %v3378 = vrot.slane %v3314, 1
        %v3379 = vrot.slane %v3316, 1
        %v3380 = vsel %vm294, %v3378, %v3379
        %v3381 = vrot.slane %v3315, 1
        %v3382 = vrot.slane %v3317, 1
        %v3383 = vsel %vm294, %v3381, %v3382
        %v3384 = vrot.slane %v3318, 1
        %v3385 = vrot.slane %v3320, 1
        %v3386 = vsel %vm294, %v3384, %v3385
        %v3387 = vrot.slane %v3319, 1
        %v3388 = vrot.slane %v3321, 1
        %v3389 = vsel %vm294, %v3387, %v3388
        %v3390 = vrot.slane %v3322, 1
        %v3391 = vrot.slane %v3324, 1
        %v3392 = vsel %vm294, %v3390, %v3391
        %v3393 = vrot.slane %v3323, 1
        %v3394 = vrot.slane %v3325, 1
        %v3395 = vsel %vm294, %v3393, %v3394
        %v3396 = vrot.slane %v3326, 1
        %v3397 = vrot.slane %v3328, 1
        %v3398 = vsel %vm294, %v3396, %v3397
        %v3399 = vrot.slane %v3327, 1
        %v3400 = vrot.slane %v3329, 1
        %v3401 = vsel %vm294, %v3399, %v3400
        %v3402 = vrot.slane %v3330, 1
        %v3403 = vrot.slane %v3332, 1
        %v3404 = vsel %vm294, %v3402, %v3403
        %v3405 = vrot.slane %v3331, 1
        %v3406 = vrot.slane %v3333, 1
        %v3407 = vsel %vm294, %v3405, %v3406
        %v3408 = vrot.slane %v3334, 1
        %v3409 = vrot.slane %v3336, 1
        %v3410 = vsel %vm294, %v3408, %v3409
        %v3411 = vrot.slane %v3335, 1
        %v3412 = vrot.slane %v3337, 1
        %v3413 = vsel %vm294, %v3411, %v3412
        %v3414 = vrot.slane %v3338, 1
        %v3415 = vrot.slane %v3340, 1
        %v3416 = vsel %vm294, %v3414, %v3415
        %v3417 = vrot.slane %v3339, 1
        %v3418 = vrot.slane %v3341, 1
        %v3419 = vsel %vm294, %v3417, %v3418
        %v3420 = vrot.slane %v3342, 1
        %v3421 = vrot.slane %v3344, 1
        %v3422 = vsel %vm294, %v3420, %v3421
        %v3423 = vrot.slane %v3343, 1
        %v3424 = vrot.slane %v3345, 1
        %v3425 = vsel %vm294, %v3423, %v3424
        %s3434 = scalar_lea.vmem [#allocation2], 1768
        %v3435 = vld [vmem:[%s3434] sm:$0xff]
        %v3436 = vld [vmem:[%s3434 + $0x8] sm:$0xff]
        %v3437 = vld [vmem:[%s3434 + $0x10] sm:$0xff]
        %v3438 = vld [vmem:[%s3434 + $0x18] sm:$0xff]
        %v3439 = vld [vmem:[%s3434 + $0x20] sm:$0xff]
        %v3440 = vld [vmem:[%s3434 + $0x28] sm:$0xff]
        %v3441 = vld [vmem:[%s3434 + $0x30] sm:$0xff]
        %v3442 = vld [vmem:[%s3434 + $0x38] sm:$0xff]
        %v3443 = vld [vmem:[%s3434 + $0x40] sm:$0xff]
        %v3444 = vld [vmem:[%s3434 + $0x48] sm:$0xff]
        %v3445 = vld [vmem:[%s3434 + $0x50] sm:$0xff]
        %v3446 = vld [vmem:[%s3434 + $0x58] sm:$0xff]
        %v3447 = vld [vmem:[%s3434 + $0x60] sm:$0xff]
        %v3448 = vld [vmem:[%s3434 + $0x68] sm:$0xff]
        %v3449 = vld [vmem:[%s3434 + $0x70] sm:$0xff]
        %v3450 = vld [vmem:[%s3434 + $0x78] sm:$0xff]
        %v3451 = vld [vmem:[%s3434 + $0x80] sm:$0xf]
        %v3452 = vsel %vm369, %v3383, 0
        %v3454 = vsel %vm369, %v3389, 0
        %v3456 = vsel %vm369, %v3395, 0
        %v3458 = vsel %vm369, %v3401, 0
        %v3460 = vsel %vm369, %v3407, 0
        %v3462 = vsel %vm369, %v3413, 0
        %v3464 = vsel %vm369, %v3419, 0
        %v3466 = vsel %vm369, %v3425, 0
        %v3469 = vsel %vm386, %v3451, 0
        %3471 = vmatprep.subr.mxu0 0.0
        %3472 = vmatpush1.msra.mxu0 %v3435
        %3473 = vmatprep.subr.mxu0 0.0
        %3474 = vmatpush1.msra.mxu0 %v3436
        %3475 = vmatprep.subr.mxu0 0.0
        %3476 = vmatpush1.msra.mxu0 %v3437
        %3477 = vmatprep.subr.mxu0 0.0
        %3478 = vmatpush1.msra.mxu0 %v3438
        %3479 = vmatprep.subr.mxu0 0.0
        %3480 = vmatpush1.msra.mxu0 %v3439
        %3481 = vmatprep.subr.mxu0 0.0
        %3482 = vmatpush1.msra.mxu0 %v3440
        %3483 = vmatprep.subr.mxu0 0.0
        %3484 = vmatpush1.msra.mxu0 %v3441
        %3485 = vmatprep.subr.mxu0 0.0
        %3486 = vmatpush1.msra.mxu0 %v3442
        %3487 = vmatprep.subr.mxu0 0.0
        %3488 = vmatpush1.msra.mxu0 %v3443
        %3489 = vmatprep.subr.mxu0 0.0
        %3490 = vmatpush1.msra.mxu0 %v3444
        %3491 = vmatprep.subr.mxu0 0.0
        %3492 = vmatpush1.msra.mxu0 %v3445
        %3493 = vmatprep.subr.mxu0 0.0
        %3494 = vmatpush1.msra.mxu0 %v3446
        %3495 = vmatprep.subr.mxu0 0.0
        %3496 = vmatpush1.msra.mxu0 %v3447
        %3497 = vmatprep.subr.mxu0 0.0
        %3498 = vmatpush1.msra.mxu0 %v3448
        %3499 = vmatprep.subr.mxu0 0.0
        %3500 = vmatpush1.msra.mxu0 %v3449
        %3501 = vmatprep.subr.mxu0 0.0
        %3502 = vmatpush1.msra.mxu0 %v3450
        %3503 = vmatprep.subr.mxu0 0.0
        %3504 = vmatpush1.msra.mxu0 %v3469
        %3505 = vmatprep.subr.mxu0 0.0
        %3506 = vmatpush1.msra.mxu0 0.0
        %3507 = vmatprep.subr.mxu0 0.0
        %3508 = vmatpush1.msra.mxu0 0.0
        %3509 = vmatprep.subr.mxu0 0.0
        %3510 = vmatpush1.msra.mxu0 0.0
        %3511 = vmatprep.subr.mxu0 0.0
        %3512 = vmatpush1.msra.mxu0 0.0
        %3513 = vmatprep.subr.mxu0 0.0
        %3514 = vmatpush1.msra.mxu0 0.0
        %3515 = vmatprep.subr.mxu0 0.0
        %3516 = vmatpush1.msra.mxu0 0.0
        %3517 = vmatprep.subr.mxu0 0.0
        %3518 = vmatpush1.msra.mxu0 0.0
        %3519 = vmatprep.subr.mxu0 0.0
        %3520 = vmatpush1.msra.mxu0 0.0
        %3521 = vmatprep.subr.mxu0 0.0
        %3522 = vmatpush1.msra.mxu0 0.0
        %3523 = vmatprep.subr.mxu0 0.0
        %3524 = vmatpush1.msra.mxu0 0.0
        %3525 = vmatprep.subr.mxu0 0.0
        %3526 = vmatpush1.msra.mxu0 0.0
        %3527 = vmatprep.subr.mxu0 0.0
        %3528 = vmatpush1.msra.mxu0 0.0
        %3529 = vmatprep.subr.mxu0 0.0
        %3530 = vmatpush1.msra.mxu0 0.0
        %3531 = vmatprep.subr.mxu0 0.0
        %3532 = vmatpush1.msra.mxu0 0.0
        %3533 = vmatprep.subr.mxu0 0.0
        %3534 = vmatpush1.msra.mxu0 0.0
        %3535 = vmatprep.mubr.f32.mxu0 %v3452
        %3536 = vmatmul.mubr.f32.gmra.mrb[0].mxu0 %v3380
        %v3537 = vpop.f32.mrb[0].mxu0
        %v3538 = vadd.f32 0.0, %v3537
        %v3539 = vpop.f32.mrb[0].mxu0
        %3540 = vmatprep.mubr.f32.mxu0 %v3454
        %3541 = vmatmul.mubr.f32.gmra.mrb[0].mxu0 %v3386
        %v3542 = vpop.f32.mrb[0].mxu0
        %v3543 = vadd.f32 0.0, %v3542
        %v3544 = vpop.f32.mrb[0].mxu0
        %3545 = vmatprep.mubr.f32.mxu0 %v3456
        %3546 = vmatmul.mubr.f32.gmra.mrb[0].mxu0 %v3392
        %v3547 = vpop.f32.mrb[0].mxu0
        %v3548 = vadd.f32 0.0, %v3547
        %v3549 = vpop.f32.mrb[0].mxu0
        %3550 = vmatprep.mubr.f32.mxu0 %v3458
        %3551 = vmatmul.mubr.f32.gmra.mrb[0].mxu0 %v3398
        %v3552 = vpop.f32.mrb[0].mxu0
        %v3553 = vadd.f32 0.0, %v3552
        %v3554 = vpop.f32.mrb[0].mxu0
        %3555 = vmatprep.mubr.f32.mxu0 %v3460
        %3556 = vmatmul.mubr.f32.gmra.mrb[0].mxu0 %v3404
        %v3557 = vpop.f32.mrb[0].mxu0
        %v3558 = vadd.f32 0.0, %v3557
        %v3559 = vpop.f32.mrb[0].mxu0
        %3560 = vmatprep.mubr.f32.mxu0 %v3462
        %3561 = vmatmul.mubr.f32.gmra.mrb[0].mxu0 %v3410
        %v3562 = vpop.f32.mrb[0].mxu0
        %v3563 = vadd.f32 0.0, %v3562
        %v3564 = vpop.f32.mrb[0].mxu0
        %3565 = vmatprep.mubr.f32.mxu0 %v3464
        %3566 = vmatmul.mubr.f32.gmra.mrb[0].mxu0 %v3416
        %v3567 = vpop.f32.mrb[0].mxu0
        %v3568 = vadd.f32 0.0, %v3567
        %v3569 = vpop.f32.mrb[0].mxu0
        %3570 = vmatprep.mubr.f32.mxu0 %v3466
        %3571 = vmatmul.mubr.f32.gmra.mrb[0].mxu0 %v3422
        %v3572 = vpop.f32.mrb[0].mxu0
        %v3573 = vadd.f32 0.0, %v3572
        %v3574 = vpop.f32.mrb[0].mxu0
        %3575 = vdwg.mxu0
        %v3576 = vadd.f32 %v3306, %v3538
        %v3577 = vadd.f32 %v3307, %v3543
        %v3578 = vadd.f32 %v3308, %v3548
        %v3579 = vadd.f32 %v3309, %v3553
        %v3580 = vadd.f32 %v3310, %v3558
        %v3581 = vadd.f32 %v3311, %v3563
        %v3582 = vadd.f32 %v3312, %v3568
        %v3583 = vadd.f32 %v3313, %v3573
        %v3584 = vld [vmem:[%s3139] sm:$0xfc]
        %v3585 = vld [vmem:[%s3139 + $0x8] sm:$0xfc]
        %v3586 = vld [vmem:[%s3139 + $0x10] sm:$0x3]
        %v3587 = vld [vmem:[%s3139 + $0x18] sm:$0x3]
        %v3588 = vld [vmem:[%s3139 + $0x20] sm:$0xfc]
        %v3589 = vld [vmem:[%s3139 + $0x28] sm:$0xfc]
        %v3590 = vld [vmem:[%s3139 + $0x30] sm:$0x3]
        %v3591 = vld [vmem:[%s3139 + $0x38] sm:$0x3]
        %v3592 = vld [vmem:[%s3139 + $0x40] sm:$0xfc]
        %v3593 = vld [vmem:[%s3139 + $0x48] sm:$0xfc]
        %v3594 = vld [vmem:[%s3139 + $0x50] sm:$0x3]
        %v3595 = vld [vmem:[%s3139 + $0x58] sm:$0x3]
        %v3596 = vld [vmem:[%s3139 + $0x60] sm:$0xfc]
        %v3597 = vld [vmem:[%s3139 + $0x68] sm:$0xfc]
        %v3598 = vld [vmem:[%s3139 + $0x70] sm:$0x3]
        %v3599 = vld [vmem:[%s3139 + $0x78] sm:$0x3]
        %v3600 = vld [vmem:[%s3139 + $0x80] sm:$0xfc]
        %v3601 = vld [vmem:[%s3139 + $0x88] sm:$0xfc]
        %v3602 = vld [vmem:[%s3139 + $0x90] sm:$0x3]
        %v3603 = vld [vmem:[%s3139 + $0x98] sm:$0x3]
        %v3604 = vld [vmem:[%s3139 + $0xa0] sm:$0xfc]
        %v3605 = vld [vmem:[%s3139 + $0xa8] sm:$0xfc]
        %v3606 = vld [vmem:[%s3139 + $0xb0] sm:$0x3]
        %v3607 = vld [vmem:[%s3139 + $0xb8] sm:$0x3]
        %v3608 = vld [vmem:[%s3139 + $0xc0] sm:$0xfc]
        %v3609 = vld [vmem:[%s3139 + $0xc8] sm:$0xfc]
        %v3610 = vld [vmem:[%s3139 + $0xd0] sm:$0x3]
        %v3611 = vld [vmem:[%s3139 + $0xd8] sm:$0x3]
        %v3612 = vld [vmem:[%s3139 + $0xe0] sm:$0xfc]
        %v3613 = vld [vmem:[%s3139 + $0xe8] sm:$0xfc]
        %v3614 = vld [vmem:[%s3139 + $0xf0] sm:$0x3]
        %v3615 = vld [vmem:[%s3139 + $0xf8] sm:$0x3]
        %v3648 = vrot.slane %v3584, 2
        %v3649 = vrot.slane %v3586, 2
        %v3650 = vsel %vm691, %v3648, %v3649
        %v3651 = vrot.slane %v3585, 2
        %v3652 = vrot.slane %v3587, 2
        %v3653 = vsel %vm691, %v3651, %v3652
        %v3654 = vrot.slane %v3588, 2
        %v3655 = vrot.slane %v3590, 2
        %v3656 = vsel %vm691, %v3654, %v3655
        %v3657 = vrot.slane %v3589, 2
        %v3658 = vrot.slane %v3591, 2
        %v3659 = vsel %vm691, %v3657, %v3658
        %v3660 = vrot.slane %v3592, 2
        %v3661 = vrot.slane %v3594, 2
        %v3662 = vsel %vm691, %v3660, %v3661
        %v3663 = vrot.slane %v3593, 2
        %v3664 = vrot.slane %v3595, 2
        %v3665 = vsel %vm691, %v3663, %v3664
        %v3666 = vrot.slane %v3596, 2
        %v3667 = vrot.slane %v3598, 2
        %v3668 = vsel %vm691, %v3666, %v3667
        %v3669 = vrot.slane %v3597, 2
        %v3670 = vrot.slane %v3599, 2
        %v3671 = vsel %vm691, %v3669, %v3670
        %v3672 = vrot.slane %v3600, 2
        %v3673 = vrot.slane %v3602, 2
        %v3674 = vsel %vm691, %v3672, %v3673
        %v3675 = vrot.slane %v3601, 2
        %v3676 = vrot.slane %v3603, 2
        %v3677 = vsel %vm691, %v3675, %v3676
        %v3678 = vrot.slane %v3604, 2
        %v3679 = vrot.slane %v3606, 2
        %v3680 = vsel %vm691, %v3678, %v3679
        %v3681 = vrot.slane %v3605, 2
        %v3682 = vrot.slane %v3607, 2
        %v3683 = vsel %vm691, %v3681, %v3682
        %v3684 = vrot.slane %v3608, 2
        %v3685 = vrot.slane %v3610, 2
        %v3686 = vsel %vm691, %v3684, %v3685
        %v3687 = vrot.slane %v3609, 2
        %v3688 = vrot.slane %v3611, 2
        %v3689 = vsel %vm691, %v3687, %v3688
        %v3690 = vrot.slane %v3612, 2
        %v3691 = vrot.slane %v3614, 2
        %v3692 = vsel %vm691, %v3690, %v3691
        %v3693 = vrot.slane %v3613, 2
        %v3694 = vrot.slane %v3615, 2
        %v3695 = vsel %vm691, %v3693, %v3694
        %s3704 = scalar_lea.vmem [#allocation2], 1904
        %v3705 = vld [vmem:[%s3704] sm:$0xff]
        %v3706 = vld [vmem:[%s3704 + $0x8] sm:$0xff]
        %v3707 = vld [vmem:[%s3704 + $0x10] sm:$0xff]
        %v3708 = vld [vmem:[%s3704 + $0x18] sm:$0xff]
        %v3709 = vld [vmem:[%s3704 + $0x20] sm:$0xff]
        %v3710 = vld [vmem:[%s3704 + $0x28] sm:$0xff]
        %v3711 = vld [vmem:[%s3704 + $0x30] sm:$0xff]
        %v3712 = vld [vmem:[%s3704 + $0x38] sm:$0xff]
        %v3713 = vld [vmem:[%s3704 + $0x40] sm:$0xff]
        %v3714 = vld [vmem:[%s3704 + $0x48] sm:$0xff]
        %v3715 = vld [vmem:[%s3704 + $0x50] sm:$0xff]
        %v3716 = vld [vmem:[%s3704 + $0x58] sm:$0xff]
        %v3717 = vld [vmem:[%s3704 + $0x60] sm:$0xff]
        %v3718 = vld [vmem:[%s3704 + $0x68] sm:$0xff]
        %v3719 = vld [vmem:[%s3704 + $0x70] sm:$0xff]
        %v3720 = vld [vmem:[%s3704 + $0x78] sm:$0xff]
        %v3721 = vld [vmem:[%s3704 + $0x80] sm:$0xf]
        %v3722 = vsel %vm369, %v3653, 0
        %v3724 = vsel %vm369, %v3659, 0
        %v3726 = vsel %vm369, %v3665, 0
        %v3728 = vsel %vm369, %v3671, 0
        %v3730 = vsel %vm369, %v3677, 0
        %v3732 = vsel %vm369, %v3683, 0
        %v3734 = vsel %vm369, %v3689, 0
        %v3736 = vsel %vm369, %v3695, 0
        %v3739 = vsel %vm386, %v3721, 0
        %3741 = vmatprep.subr.mxu0 0.0
        %3742 = vmatpush1.msra.mxu0 %v3705
        %3743 = vmatprep.subr.mxu0 0.0
        %3744 = vmatpush1.msra.mxu0 %v3706
        %3745 = vmatprep.subr.mxu0 0.0
        %3746 = vmatpush1.msra.mxu0 %v3707
        %3747 = vmatprep.subr.mxu0 0.0
        %3748 = vmatpush1.msra.mxu0 %v3708
        %3749 = vmatprep.subr.mxu0 0.0
        %3750 = vmatpush1.msra.mxu0 %v3709
        %3751 = vmatprep.subr.mxu0 0.0
        %3752 = vmatpush1.msra.mxu0 %v3710
        %3753 = vmatprep.subr.mxu0 0.0
        %3754 = vmatpush1.msra.mxu0 %v3711
        %3755 = vmatprep.subr.mxu0 0.0
        %3756 = vmatpush1.msra.mxu0 %v3712
        %3757 = vmatprep.subr.mxu0 0.0
        %3758 = vmatpush1.msra.mxu0 %v3713
        %3759 = vmatprep.subr.mxu0 0.0
        %3760 = vmatpush1.msra.mxu0 %v3714
        %3761 = vmatprep.subr.mxu0 0.0
        %3762 = vmatpush1.msra.mxu0 %v3715
        %3763 = vmatprep.subr.mxu0 0.0
        %3764 = vmatpush1.msra.mxu0 %v3716
        %3765 = vmatprep.subr.mxu0 0.0
        %3766 = vmatpush1.msra.mxu0 %v3717
        %3767 = vmatprep.subr.mxu0 0.0
        %3768 = vmatpush1.msra.mxu0 %v3718
        %3769 = vmatprep.subr.mxu0 0.0
        %3770 = vmatpush1.msra.mxu0 %v3719
        %3771 = vmatprep.subr.mxu0 0.0
        %3772 = vmatpush1.msra.mxu0 %v3720
        %3773 = vmatprep.subr.mxu0 0.0
        %3774 = vmatpush1.msra.mxu0 %v3739
        %3775 = vmatprep.subr.mxu0 0.0
        %3776 = vmatpush1.msra.mxu0 0.0
        %3777 = vmatprep.subr.mxu0 0.0
        %3778 = vmatpush1.msra.mxu0 0.0
        %3779 = vmatprep.subr.mxu0 0.0
        %3780 = vmatpush1.msra.mxu0 0.0
        %3781 = vmatprep.subr.mxu0 0.0
        %3782 = vmatpush1.msra.mxu0 0.0
        %3783 = vmatprep.subr.mxu0 0.0
        %3784 = vmatpush1.msra.mxu0 0.0
        %3785 = vmatprep.subr.mxu0 0.0
        %3786 = vmatpush1.msra.mxu0 0.0
        %3787 = vmatprep.subr.mxu0 0.0
        %3788 = vmatpush1.msra.mxu0 0.0
        %3789 = vmatprep.subr.mxu0 0.0
        %3790 = vmatpush1.msra.mxu0 0.0
        %3791 = vmatprep.subr.mxu0 0.0
        %3792 = vmatpush1.msra.mxu0 0.0
        %3793 = vmatprep.subr.mxu0 0.0
        %3794 = vmatpush1.msra.mxu0 0.0
        %3795 = vmatprep.subr.mxu0 0.0
        %3796 = vmatpush1.msra.mxu0 0.0
        %3797 = vmatprep.subr.mxu0 0.0
        %3798 = vmatpush1.msra.mxu0 0.0
        %3799 = vmatprep.subr.mxu0 0.0
        %3800 = vmatpush1.msra.mxu0 0.0
        %3801 = vmatprep.subr.mxu0 0.0
        %3802 = vmatpush1.msra.mxu0 0.0
        %3803 = vmatprep.subr.mxu0 0.0
        %3804 = vmatpush1.msra.mxu0 0.0
        %3805 = vmatprep.mubr.f32.mxu0 %v3722
        %3806 = vmatmul.mubr.f32.gmra.mrb[0].mxu0 %v3650
        %v3807 = vpop.f32.mrb[0].mxu0
        %v3808 = vadd.f32 0.0, %v3807
        %v3809 = vpop.f32.mrb[0].mxu0
        %3810 = vmatprep.mubr.f32.mxu0 %v3724
        %3811 = vmatmul.mubr.f32.gmra.mrb[0].mxu0 %v3656
        %v3812 = vpop.f32.mrb[0].mxu0
        %v3813 = vadd.f32 0.0, %v3812
        %v3814 = vpop.f32.mrb[0].mxu0
        %3815 = vmatprep.mubr.f32.mxu0 %v3726
        %3816 = vmatmul.mubr.f32.gmra.mrb[0].mxu0 %v3662
        %v3817 = vpop.f32.mrb[0].mxu0
        %v3818 = vadd.f32 0.0, %v3817
        %v3819 = vpop.f32.mrb[0].mxu0
        %3820 = vmatprep.mubr.f32.mxu0 %v3728
        %3821 = vmatmul.mubr.f32.gmra.mrb[0].mxu0 %v3668
        %v3822 = vpop.f32.mrb[0].mxu0
        %v3823 = vadd.f32 0.0, %v3822
        %v3824 = vpop.f32.mrb[0].mxu0
        %3825 = vmatprep.mubr.f32.mxu0 %v3730
        %3826 = vmatmul.mubr.f32.gmra.mrb[0].mxu0 %v3674
        %v3827 = vpop.f32.mrb[0].mxu0
        %v3828 = vadd.f32 0.0, %v3827
        %v3829 = vpop.f32.mrb[0].mxu0
        %3830 = vmatprep.mubr.f32.mxu0 %v3732
        %3831 = vmatmul.mubr.f32.gmra.mrb[0].mxu0 %v3680
        %v3832 = vpop.f32.mrb[0].mxu0
        %v3833 = vadd.f32 0.0, %v3832
        %v3834 = vpop.f32.mrb[0].mxu0
        %3835 = vmatprep.mubr.f32.mxu0 %v3734
        %3836 = vmatmul.mubr.f32.gmra.mrb[0].mxu0 %v3686
        %v3837 = vpop.f32.mrb[0].mxu0
        %v3838 = vadd.f32 0.0, %v3837
        %v3839 = vpop.f32.mrb[0].mxu0
        %3840 = vmatprep.mubr.f32.mxu0 %v3736
        %3841 = vmatmul.mubr.f32.gmra.mrb[0].mxu0 %v3692
        %v3842 = vpop.f32.mrb[0].mxu0
        %v3843 = vadd.f32 0.0, %v3842
        %v3844 = vpop.f32.mrb[0].mxu0
        %3845 = vdwg.mxu0
        %v3846 = vadd.f32 %v3576, %v3808
        %v3847 = vadd.f32 %v3577, %v3813
        %v3848 = vadd.f32 %v3578, %v3818
        %v3849 = vadd.f32 %v3579, %v3823
        %v3850 = vadd.f32 %v3580, %v3828
        %v3851 = vadd.f32 %v3581, %v3833
        %v3852 = vadd.f32 %v3582, %v3838
        %v3853 = vadd.f32 %v3583, %v3843
        %v3854 = vld [vmem:[%s3139] sm:$0xf8]
        %v3855 = vld [vmem:[%s3139 + $0x8] sm:$0xf8]
        %v3856 = vld [vmem:[%s3139 + $0x10] sm:$0x7]
        %v3857 = vld [vmem:[%s3139 + $0x18] sm:$0x7]
        %v3858 = vld [vmem:[%s3139 + $0x20] sm:$0xf8]
        %v3859 = vld [vmem:[%s3139 + $0x28] sm:$0xf8]
        %v3860 = vld [vmem:[%s3139 + $0x30] sm:$0x7]
        %v3861 = vld [vmem:[%s3139 + $0x38] sm:$0x7]
        %v3862 = vld [vmem:[%s3139 + $0x40] sm:$0xf8]
        %v3863 = vld [vmem:[%s3139 + $0x48] sm:$0xf8]
        %v3864 = vld [vmem:[%s3139 + $0x50] sm:$0x7]
        %v3865 = vld [vmem:[%s3139 + $0x58] sm:$0x7]
        %v3866 = vld [vmem:[%s3139 + $0x60] sm:$0xf8]
        %v3867 = vld [vmem:[%s3139 + $0x68] sm:$0xf8]
        %v3868 = vld [vmem:[%s3139 + $0x70] sm:$0x7]
        %v3869 = vld [vmem:[%s3139 + $0x78] sm:$0x7]
        %v3870 = vld [vmem:[%s3139 + $0x80] sm:$0xf8]
        %v3871 = vld [vmem:[%s3139 + $0x88] sm:$0xf8]
        %v3872 = vld [vmem:[%s3139 + $0x90] sm:$0x7]
        %v3873 = vld [vmem:[%s3139 + $0x98] sm:$0x7]
        %v3874 = vld [vmem:[%s3139 + $0xa0] sm:$0xf8]
        %v3875 = vld [vmem:[%s3139 + $0xa8] sm:$0xf8]
        %v3876 = vld [vmem:[%s3139 + $0xb0] sm:$0x7]
        %v3877 = vld [vmem:[%s3139 + $0xb8] sm:$0x7]
        %v3878 = vld [vmem:[%s3139 + $0xc0] sm:$0xf8]
        %v3879 = vld [vmem:[%s3139 + $0xc8] sm:$0xf8]
        %v3880 = vld [vmem:[%s3139 + $0xd0] sm:$0x7]
        %v3881 = vld [vmem:[%s3139 + $0xd8] sm:$0x7]
        %v3882 = vld [vmem:[%s3139 + $0xe0] sm:$0xf8]
        %v3883 = vld [vmem:[%s3139 + $0xe8] sm:$0xf8]
        %v3884 = vld [vmem:[%s3139 + $0xf0] sm:$0x7]
        %v3885 = vld [vmem:[%s3139 + $0xf8] sm:$0x7]
        %v3918 = vrot.slane %v3854, 3
        %v3919 = vrot.slane %v3856, 3
        %v3920 = vsel %vm962, %v3918, %v3919
        %v3921 = vrot.slane %v3855, 3
        %v3922 = vrot.slane %v3857, 3
        %v3923 = vsel %vm962, %v3921, %v3922
        %v3924 = vrot.slane %v3858, 3
        %v3925 = vrot.slane %v3860, 3
        %v3926 = vsel %vm962, %v3924, %v3925
        %v3927 = vrot.slane %v3859, 3
        %v3928 = vrot.slane %v3861, 3
        %v3929 = vsel %vm962, %v3927, %v3928
        %v3930 = vrot.slane %v3862, 3
        %v3931 = vrot.slane %v3864, 3
        %v3932 = vsel %vm962, %v3930, %v3931
        %v3933 = vrot.slane %v3863, 3
        %v3934 = vrot.slane %v3865, 3
        %v3935 = vsel %vm962, %v3933, %v3934
        %v3936 = vrot.slane %v3866, 3
        %v3937 = vrot.slane %v3868, 3
        %v3938 = vsel %vm962, %v3936, %v3937
        %v3939 = vrot.slane %v3867, 3
        %v3940 = vrot.slane %v3869, 3
        %v3941 = vsel %vm962, %v3939, %v3940
        %v3942 = vrot.slane %v3870, 3
        %v3943 = vrot.slane %v3872, 3
        %v3944 = vsel %vm962, %v3942, %v3943
        %v3945 = vrot.slane %v3871, 3
        %v3946 = vrot.slane %v3873, 3
        %v3947 = vsel %vm962, %v3945, %v3946
        %v3948 = vrot.slane %v3874, 3
        %v3949 = vrot.slane %v3876, 3
        %v3950 = vsel %vm962, %v3948, %v3949
        %v3951 = vrot.slane %v3875, 3
        %v3952 = vrot.slane %v3877, 3
        %v3953 = vsel %vm962, %v3951, %v3952
        %v3954 = vrot.slane %v3878, 3
        %v3955 = vrot.slane %v3880, 3
        %v3956 = vsel %vm962, %v3954, %v3955
        %v3957 = vrot.slane %v3879, 3
        %v3958 = vrot.slane %v3881, 3
        %v3959 = vsel %vm962, %v3957, %v3958
        %v3960 = vrot.slane %v3882, 3
        %v3961 = vrot.slane %v3884, 3
        %v3962 = vsel %vm962, %v3960, %v3961
        %v3963 = vrot.slane %v3883, 3
        %v3964 = vrot.slane %v3885, 3
        %v3965 = vsel %vm962, %v3963, %v3964
        %s3974 = scalar_lea.vmem [#allocation2], 2040
        %v3975 = vld [vmem:[%s3974] sm:$0xff]
        %v3976 = vld [vmem:[%s3974 + $0x8] sm:$0xff]
        %v3977 = vld [vmem:[%s3974 + $0x10] sm:$0xff]
        %v3978 = vld [vmem:[%s3974 + $0x18] sm:$0xff]
        %v3979 = vld [vmem:[%s3974 + $0x20] sm:$0xff]
        %v3980 = vld [vmem:[%s3974 + $0x28] sm:$0xff]
        %v3981 = vld [vmem:[%s3974 + $0x30] sm:$0xff]
        %v3982 = vld [vmem:[%s3974 + $0x38] sm:$0xff]
        %v3983 = vld [vmem:[%s3974 + $0x40] sm:$0xff]
        %v3984 = vld [vmem:[%s3974 + $0x48] sm:$0xff]
        %v3985 = vld [vmem:[%s3974 + $0x50] sm:$0xff]
        %v3986 = vld [vmem:[%s3974 + $0x58] sm:$0xff]
        %v3987 = vld [vmem:[%s3974 + $0x60] sm:$0xff]
        %v3988 = vld [vmem:[%s3974 + $0x68] sm:$0xff]
        %v3989 = vld [vmem:[%s3974 + $0x70] sm:$0xff]
        %v3990 = vld [vmem:[%s3974 + $0x78] sm:$0xff]
        %v3991 = vld [vmem:[%s3974 + $0x80] sm:$0xf]
        %v3992 = vsel %vm369, %v3923, 0
        %v3994 = vsel %vm369, %v3929, 0
        %v3996 = vsel %vm369, %v3935, 0
        %v3998 = vsel %vm369, %v3941, 0
        %v4000 = vsel %vm369, %v3947, 0
        %v4002 = vsel %vm369, %v3953, 0
        %v4004 = vsel %vm369, %v3959, 0
        %v4006 = vsel %vm369, %v3965, 0
        %v4009 = vsel %vm386, %v3991, 0
        %4011 = vmatprep.subr.mxu0 0.0
        %4012 = vmatpush1.msra.mxu0 %v3975
        %4013 = vmatprep.subr.mxu0 0.0
        %4014 = vmatpush1.msra.mxu0 %v3976
        %4015 = vmatprep.subr.mxu0 0.0
        %4016 = vmatpush1.msra.mxu0 %v3977
        %4017 = vmatprep.subr.mxu0 0.0
        %4018 = vmatpush1.msra.mxu0 %v3978
        %4019 = vmatprep.subr.mxu0 0.0
        %4020 = vmatpush1.msra.mxu0 %v3979
        %4021 = vmatprep.subr.mxu0 0.0
        %4022 = vmatpush1.msra.mxu0 %v3980
        %4023 = vmatprep.subr.mxu0 0.0
        %4024 = vmatpush1.msra.mxu0 %v3981
        %4025 = vmatprep.subr.mxu0 0.0
        %4026 = vmatpush1.msra.mxu0 %v3982
        %4027 = vmatprep.subr.mxu0 0.0
        %4028 = vmatpush1.msra.mxu0 %v3983
        %4029 = vmatprep.subr.mxu0 0.0
        %4030 = vmatpush1.msra.mxu0 %v3984
        %4031 = vmatprep.subr.mxu0 0.0
        %4032 = vmatpush1.msra.mxu0 %v3985
        %4033 = vmatprep.subr.mxu0 0.0
        %4034 = vmatpush1.msra.mxu0 %v3986
        %4035 = vmatprep.subr.mxu0 0.0
        %4036 = vmatpush1.msra.mxu0 %v3987
        %4037 = vmatprep.subr.mxu0 0.0
        %4038 = vmatpush1.msra.mxu0 %v3988
        %4039 = vmatprep.subr.mxu0 0.0
        %4040 = vmatpush1.msra.mxu0 %v3989
        %4041 = vmatprep.subr.mxu0 0.0
        %4042 = vmatpush1.msra.mxu0 %v3990
        %4043 = vmatprep.subr.mxu0 0.0
        %4044 = vmatpush1.msra.mxu0 %v4009
        %4045 = vmatprep.subr.mxu0 0.0
        %4046 = vmatpush1.msra.mxu0 0.0
        %4047 = vmatprep.subr.mxu0 0.0
        %4048 = vmatpush1.msra.mxu0 0.0
        %4049 = vmatprep.subr.mxu0 0.0
        %4050 = vmatpush1.msra.mxu0 0.0
        %4051 = vmatprep.subr.mxu0 0.0
        %4052 = vmatpush1.msra.mxu0 0.0
        %4053 = vmatprep.subr.mxu0 0.0
        %4054 = vmatpush1.msra.mxu0 0.0
        %4055 = vmatprep.subr.mxu0 0.0
        %4056 = vmatpush1.msra.mxu0 0.0
        %4057 = vmatprep.subr.mxu0 0.0
        %4058 = vmatpush1.msra.mxu0 0.0
        %4059 = vmatprep.subr.mxu0 0.0
        %4060 = vmatpush1.msra.mxu0 0.0
        %4061 = vmatprep.subr.mxu0 0.0
        %4062 = vmatpush1.msra.mxu0 0.0
        %4063 = vmatprep.subr.mxu0 0.0
        %4064 = vmatpush1.msra.mxu0 0.0
        %4065 = vmatprep.subr.mxu0 0.0
        %4066 = vmatpush1.msra.mxu0 0.0
        %4067 = vmatprep.subr.mxu0 0.0
        %4068 = vmatpush1.msra.mxu0 0.0
        %4069 = vmatprep.subr.mxu0 0.0
        %4070 = vmatpush1.msra.mxu0 0.0
        %4071 = vmatprep.subr.mxu0 0.0
        %4072 = vmatpush1.msra.mxu0 0.0
        %4073 = vmatprep.subr.mxu0 0.0
        %4074 = vmatpush1.msra.mxu0 0.0
        %4075 = vmatprep.mubr.f32.mxu0 %v3992
        %4076 = vmatmul.mubr.f32.gmra.mrb[0].mxu0 %v3920
        %v4077 = vpop.f32.mrb[0].mxu0
        %v4078 = vadd.f32 0.0, %v4077
        %v4079 = vpop.f32.mrb[0].mxu0
        %4080 = vmatprep.mubr.f32.mxu0 %v3994
        %4081 = vmatmul.mubr.f32.gmra.mrb[0].mxu0 %v3926
        %v4082 = vpop.f32.mrb[0].mxu0
        %v4083 = vadd.f32 0.0, %v4082
        %v4084 = vpop.f32.mrb[0].mxu0
        %4085 = vmatprep.mubr.f32.mxu0 %v3996
        %4086 = vmatmul.mubr.f32.gmra.mrb[0].mxu0 %v3932
        %v4087 = vpop.f32.mrb[0].mxu0
        %v4088 = vadd.f32 0.0, %v4087
        %v4089 = vpop.f32.mrb[0].mxu0
        %4090 = vmatprep.mubr.f32.mxu0 %v3998
        %4091 = vmatmul.mubr.f32.gmra.mrb[0].mxu0 %v3938
        %v4092 = vpop.f32.mrb[0].mxu0
        %v4093 = vadd.f32 0.0, %v4092
        %v4094 = vpop.f32.mrb[0].mxu0
        %4095 = vmatprep.mubr.f32.mxu0 %v4000
        %4096 = vmatmul.mubr.f32.gmra.mrb[0].mxu0 %v3944
        %v4097 = vpop.f32.mrb[0].mxu0
        %v4098 = vadd.f32 0.0, %v4097
        %v4099 = vpop.f32.mrb[0].mxu0
        %4100 = vmatprep.mubr.f32.mxu0 %v4002
        %4101 = vmatmul.mubr.f32.gmra.mrb[0].mxu0 %v3950
        %v4102 = vpop.f32.mrb[0].mxu0
        %v4103 = vadd.f32 0.0, %v4102
        %v4104 = vpop.f32.mrb[0].mxu0
        %4105 = vmatprep.mubr.f32.mxu0 %v4004
        %4106 = vmatmul.mubr.f32.gmra.mrb[0].mxu0 %v3956
        %v4107 = vpop.f32.mrb[0].mxu0
        %v4108 = vadd.f32 0.0, %v4107
        %v4109 = vpop.f32.mrb[0].mxu0
        %4110 = vmatprep.mubr.f32.mxu0 %v4006
        %4111 = vmatmul.mubr.f32.gmra.mrb[0].mxu0 %v3962
        %v4112 = vpop.f32.mrb[0].mxu0
        %v4113 = vadd.f32 0.0, %v4112
        %v4114 = vpop.f32.mrb[0].mxu0
        %4115 = vdwg.mxu0
        %v4116 = vadd.f32 %v3846, %v4078
        %v4117 = vadd.f32 %v3847, %v4083
        %v4118 = vadd.f32 %v3848, %v4088
        %v4119 = vadd.f32 %v3849, %v4093
        %v4120 = vadd.f32 %v3850, %v4098
        %v4121 = vadd.f32 %v3851, %v4103
        %v4122 = vadd.f32 %v3852, %v4108
        %v4123 = vadd.f32 %v3853, %v4113
        %s4124 = scalar_lea.vmem %s196, 128
        %v4125 = vld [vmem:[%s4124] sm:$0xff]
        %v4126 = vld [vmem:[%s4124 + $0x8] sm:$0xff]
        %v4127 = vld [vmem:[%s4124 + $0x20] sm:$0xff]
        %v4128 = vld [vmem:[%s4124 + $0x28] sm:$0xff]
        %v4129 = vld [vmem:[%s4124 + $0x40] sm:$0xff]
        %v4130 = vld [vmem:[%s4124 + $0x48] sm:$0xff]
        %v4131 = vld [vmem:[%s4124 + $0x60] sm:$0xff]
        %v4132 = vld [vmem:[%s4124 + $0x68] sm:$0xff]
        %v4133 = vld [vmem:[%s4124 + $0x80] sm:$0xff]
        %v4134 = vld [vmem:[%s4124 + $0x88] sm:$0xff]
        %v4135 = vld [vmem:[%s4124 + $0xa0] sm:$0xff]
        %v4136 = vld [vmem:[%s4124 + $0xa8] sm:$0xff]
        %v4137 = vld [vmem:[%s4124 + $0xc0] sm:$0xff]
        %v4138 = vld [vmem:[%s4124 + $0xc8] sm:$0xff]
        %v4139 = vld [vmem:[%s4124 + $0xe0] sm:$0xff]
        %v4140 = vld [vmem:[%s4124 + $0xe8] sm:$0xff]
        %s4141 = scalar_lea.vmem [#allocation2], 2176
        %v4142 = vld [vmem:[%s4141] sm:$0xff]
        %v4143 = vld [vmem:[%s4141 + $0x8] sm:$0xff]
        %v4144 = vld [vmem:[%s4141 + $0x10] sm:$0xff]
        %v4145 = vld [vmem:[%s4141 + $0x18] sm:$0xff]
        %v4146 = vld [vmem:[%s4141 + $0x20] sm:$0xff]
        %v4147 = vld [vmem:[%s4141 + $0x28] sm:$0xff]
        %v4148 = vld [vmem:[%s4141 + $0x30] sm:$0xff]
        %v4149 = vld [vmem:[%s4141 + $0x38] sm:$0xff]
        %v4150 = vld [vmem:[%s4141 + $0x40] sm:$0xff]
        %v4151 = vld [vmem:[%s4141 + $0x48] sm:$0xff]
        %v4152 = vld [vmem:[%s4141 + $0x50] sm:$0xff]
        %v4153 = vld [vmem:[%s4141 + $0x58] sm:$0xff]
        %v4154 = vld [vmem:[%s4141 + $0x60] sm:$0xff]
        %v4155 = vld [vmem:[%s4141 + $0x68] sm:$0xff]
        %v4156 = vld [vmem:[%s4141 + $0x70] sm:$0xff]
        %v4157 = vld [vmem:[%s4141 + $0x78] sm:$0xff]
        %v4158 = vld [vmem:[%s4141 + $0x80] sm:$0xf]
        %v4160 = vsel %vm369, %v4126, 0
        %v4163 = vsel %vm369, %v4128, 0
        %v4166 = vsel %vm369, %v4130, 0
        %v4169 = vsel %vm369, %v4132, 0
        %v4172 = vsel %vm369, %v4134, 0
        %v4175 = vsel %vm369, %v4136, 0
        %v4178 = vsel %vm369, %v4138, 0
        %v4181 = vsel %vm369, %v4140, 0
        %v4184 = vsel %vm386, %v4158, 0
        %4186 = vmatprep.subr.mxu0 0.0
        %4187 = vmatpush1.msra.mxu0 %v4142
        %4188 = vmatprep.subr.mxu0 0.0
        %4189 = vmatpush1.msra.mxu0 %v4143
        %4190 = vmatprep.subr.mxu0 0.0
        %4191 = vmatpush1.msra.mxu0 %v4144
        %4192 = vmatprep.subr.mxu0 0.0
        %4193 = vmatpush1.msra.mxu0 %v4145
        %4194 = vmatprep.subr.mxu0 0.0
        %4195 = vmatpush1.msra.mxu0 %v4146
        %4196 = vmatprep.subr.mxu0 0.0
        %4197 = vmatpush1.msra.mxu0 %v4147
        %4198 = vmatprep.subr.mxu0 0.0
        %4199 = vmatpush1.msra.mxu0 %v4148
        %4200 = vmatprep.subr.mxu0 0.0
        %4201 = vmatpush1.msra.mxu0 %v4149
        %4202 = vmatprep.subr.mxu0 0.0
        %4203 = vmatpush1.msra.mxu0 %v4150
        %4204 = vmatprep.subr.mxu0 0.0
        %4205 = vmatpush1.msra.mxu0 %v4151
        %4206 = vmatprep.subr.mxu0 0.0
        %4207 = vmatpush1.msra.mxu0 %v4152
        %4208 = vmatprep.subr.mxu0 0.0
        %4209 = vmatpush1.msra.mxu0 %v4153
        %4210 = vmatprep.subr.mxu0 0.0
        %4211 = vmatpush1.msra.mxu0 %v4154
        %4212 = vmatprep.subr.mxu0 0.0
        %4213 = vmatpush1.msra.mxu0 %v4155
        %4214 = vmatprep.subr.mxu0 0.0
        %4215 = vmatpush1.msra.mxu0 %v4156
        %4216 = vmatprep.subr.mxu0 0.0
        %4217 = vmatpush1.msra.mxu0 %v4157
        %4218 = vmatprep.subr.mxu0 0.0
        %4219 = vmatpush1.msra.mxu0 %v4184
        %4220 = vmatprep.subr.mxu0 0.0
        %4221 = vmatpush1.msra.mxu0 0.0
        %4222 = vmatprep.subr.mxu0 0.0
        %4223 = vmatpush1.msra.mxu0 0.0
        %4224 = vmatprep.subr.mxu0 0.0
        %4225 = vmatpush1.msra.mxu0 0.0
        %4226 = vmatprep.subr.mxu0 0.0
        %4227 = vmatpush1.msra.mxu0 0.0
        %4228 = vmatprep.subr.mxu0 0.0
        %4229 = vmatpush1.msra.mxu0 0.0
        %4230 = vmatprep.subr.mxu0 0.0
        %4231 = vmatpush1.msra.mxu0 0.0
        %4232 = vmatprep.subr.mxu0 0.0
        %4233 = vmatpush1.msra.mxu0 0.0
        %4234 = vmatprep.subr.mxu0 0.0
        %4235 = vmatpush1.msra.mxu0 0.0
        %4236 = vmatprep.subr.mxu0 0.0
        %4237 = vmatpush1.msra.mxu0 0.0
        %4238 = vmatprep.subr.mxu0 0.0
        %4239 = vmatpush1.msra.mxu0 0.0
        %4240 = vmatprep.subr.mxu0 0.0
        %4241 = vmatpush1.msra.mxu0 0.0
        %4242 = vmatprep.subr.mxu0 0.0
        %4243 = vmatpush1.msra.mxu0 0.0
        %4244 = vmatprep.subr.mxu0 0.0
        %4245 = vmatpush1.msra.mxu0 0.0
        %4246 = vmatprep.subr.mxu0 0.0
        %4247 = vmatpush1.msra.mxu0 0.0
        %4248 = vmatprep.subr.mxu0 0.0
        %4249 = vmatpush1.msra.mxu0 0.0
        %4250 = vmatprep.mubr.f32.mxu0 %v4160
        %4251 = vmatmul.mubr.f32.gmra.mrb[0].mxu0 %v4125
        %v4252 = vpop.f32.mrb[0].mxu0
        %v4253 = vadd.f32 0.0, %v4252
        %v4254 = vpop.f32.mrb[0].mxu0
        %4255 = vmatprep.mubr.f32.mxu0 %v4163
        %4256 = vmatmul.mubr.f32.gmra.mrb[0].mxu0 %v4127
        %v4257 = vpop.f32.mrb[0].mxu0
        %v4258 = vadd.f32 0.0, %v4257
        %v4259 = vpop.f32.mrb[0].mxu0
        %4260 = vmatprep.mubr.f32.mxu0 %v4166
        %4261 = vmatmul.mubr.f32.gmra.mrb[0].mxu0 %v4129
        %v4262 = vpop.f32.mrb[0].mxu0
        %v4263 = vadd.f32 0.0, %v4262
        %v4264 = vpop.f32.mrb[0].mxu0
        %4265 = vmatprep.mubr.f32.mxu0 %v4169
        %4266 = vmatmul.mubr.f32.gmra.mrb[0].mxu0 %v4131
        %v4267 = vpop.f32.mrb[0].mxu0
        %v4268 = vadd.f32 0.0, %v4267
        %v4269 = vpop.f32.mrb[0].mxu0
        %4270 = vmatprep.mubr.f32.mxu0 %v4172
        %4271 = vmatmul.mubr.f32.gmra.mrb[0].mxu0 %v4133
        %v4272 = vpop.f32.mrb[0].mxu0
        %v4273 = vadd.f32 0.0, %v4272
        %v4274 = vpop.f32.mrb[0].mxu0
        %4275 = vmatprep.mubr.f32.mxu0 %v4175
        %4276 = vmatmul.mubr.f32.gmra.mrb[0].mxu0 %v4135
        %v4277 = vpop.f32.mrb[0].mxu0
        %v4278 = vadd.f32 0.0, %v4277
        %v4279 = vpop.f32.mrb[0].mxu0
        %4280 = vmatprep.mubr.f32.mxu0 %v4178
        %4281 = vmatmul.mubr.f32.gmra.mrb[0].mxu0 %v4137
        %v4282 = vpop.f32.mrb[0].mxu0
        %v4283 = vadd.f32 0.0, %v4282
        %v4284 = vpop.f32.mrb[0].mxu0
        %4285 = vmatprep.mubr.f32.mxu0 %v4181
        %4286 = vmatmul.mubr.f32.gmra.mrb[0].mxu0 %v4139
        %v4287 = vpop.f32.mrb[0].mxu0
        %v4288 = vadd.f32 0.0, %v4287
        %v4289 = vpop.f32.mrb[0].mxu0
        %4290 = vdwg.mxu0
        %v4291 = vadd.f32 %v4116, %v4253
        %v4292 = vadd.f32 %v4117, %v4258
        %v4293 = vadd.f32 %v4118, %v4263
        %v4294 = vadd.f32 %v4119, %v4268
        %v4295 = vadd.f32 %v4120, %v4273
        %v4296 = vadd.f32 %v4121, %v4278
        %v4297 = vadd.f32 %v4122, %v4283
        %v4298 = vadd.f32 %v4123, %v4288
        %v4299 = vld [vmem:[%s4124] sm:$0xfe]
        %v4300 = vld [vmem:[%s4124 + $0x8] sm:$0xfe]
        %v4301 = vld [vmem:[%s4124 + $0x10] sm:$0x1]
        %v4302 = vld [vmem:[%s4124 + $0x18] sm:$0x1]
        %v4303 = vld [vmem:[%s4124 + $0x20] sm:$0xfe]
        %v4304 = vld [vmem:[%s4124 + $0x28] sm:$0xfe]
        %v4305 = vld [vmem:[%s4124 + $0x30] sm:$0x1]
        %v4306 = vld [vmem:[%s4124 + $0x38] sm:$0x1]
        %v4307 = vld [vmem:[%s4124 + $0x40] sm:$0xfe]
        %v4308 = vld [vmem:[%s4124 + $0x48] sm:$0xfe]
        %v4309 = vld [vmem:[%s4124 + $0x50] sm:$0x1]
        %v4310 = vld [vmem:[%s4124 + $0x58] sm:$0x1]
        %v4311 = vld [vmem:[%s4124 + $0x60] sm:$0xfe]
        %v4312 = vld [vmem:[%s4124 + $0x68] sm:$0xfe]
        %v4313 = vld [vmem:[%s4124 + $0x70] sm:$0x1]
        %v4314 = vld [vmem:[%s4124 + $0x78] sm:$0x1]
        %v4315 = vld [vmem:[%s4124 + $0x80] sm:$0xfe]
        %v4316 = vld [vmem:[%s4124 + $0x88] sm:$0xfe]
        %v4317 = vld [vmem:[%s4124 + $0x90] sm:$0x1]
        %v4318 = vld [vmem:[%s4124 + $0x98] sm:$0x1]
        %v4319 = vld [vmem:[%s4124 + $0xa0] sm:$0xfe]
        %v4320 = vld [vmem:[%s4124 + $0xa8] sm:$0xfe]
        %v4321 = vld [vmem:[%s4124 + $0xb0] sm:$0x1]
        %v4322 = vld [vmem:[%s4124 + $0xb8] sm:$0x1]
        %v4323 = vld [vmem:[%s4124 + $0xc0] sm:$0xfe]
        %v4324 = vld [vmem:[%s4124 + $0xc8] sm:$0xfe]
        %v4325 = vld [vmem:[%s4124 + $0xd0] sm:$0x1]
        %v4326 = vld [vmem:[%s4124 + $0xd8] sm:$0x1]
        %v4327 = vld [vmem:[%s4124 + $0xe0] sm:$0xfe]
        %v4328 = vld [vmem:[%s4124 + $0xe8] sm:$0xfe]
        %v4329 = vld [vmem:[%s4124 + $0xf0] sm:$0x1]
        %v4330 = vld [vmem:[%s4124 + $0xf8] sm:$0x1]
        %v4363 = vrot.slane %v4299, 1
        %v4364 = vrot.slane %v4301, 1
        %v4365 = vsel %vm294, %v4363, %v4364
        %v4366 = vrot.slane %v4300, 1
        %v4367 = vrot.slane %v4302, 1
        %v4368 = vsel %vm294, %v4366, %v4367
        %v4369 = vrot.slane %v4303, 1
        %v4370 = vrot.slane %v4305, 1
        %v4371 = vsel %vm294, %v4369, %v4370
        %v4372 = vrot.slane %v4304, 1
        %v4373 = vrot.slane %v4306, 1
        %v4374 = vsel %vm294, %v4372, %v4373
        %v4375 = vrot.slane %v4307, 1
        %v4376 = vrot.slane %v4309, 1
        %v4377 = vsel %vm294, %v4375, %v4376
        %v4378 = vrot.slane %v4308, 1
        %v4379 = vrot.slane %v4310, 1
        %v4380 = vsel %vm294, %v4378, %v4379
        %v4381 = vrot.slane %v4311, 1
        %v4382 = vrot.slane %v4313, 1
        %v4383 = vsel %vm294, %v4381, %v4382
        %v4384 = vrot.slane %v4312, 1
        %v4385 = vrot.slane %v4314, 1
        %v4386 = vsel %vm294, %v4384, %v4385
        %v4387 = vrot.slane %v4315, 1
        %v4388 = vrot.slane %v4317, 1
        %v4389 = vsel %vm294, %v4387, %v4388
        %v4390 = vrot.slane %v4316, 1
        %v4391 = vrot.slane %v4318, 1
        %v4392 = vsel %vm294, %v4390, %v4391
        %v4393 = vrot.slane %v4319, 1
        %v4394 = vrot.slane %v4321, 1
        %v4395 = vsel %vm294, %v4393, %v4394
        %v4396 = vrot.slane %v4320, 1
        %v4397 = vrot.slane %v4322, 1
        %v4398 = vsel %vm294, %v4396, %v4397
        %v4399 = vrot.slane %v4323, 1
        %v4400 = vrot.slane %v4325, 1
        %v4401 = vsel %vm294, %v4399, %v4400
        %v4402 = vrot.slane %v4324, 1
        %v4403 = vrot.slane %v4326, 1
        %v4404 = vsel %vm294, %v4402, %v4403
        %v4405 = vrot.slane %v4327, 1
        %v4406 = vrot.slane %v4329, 1
        %v4407 = vsel %vm294, %v4405, %v4406
        %v4408 = vrot.slane %v4328, 1
        %v4409 = vrot.slane %v4330, 1
        %v4410 = vsel %vm294, %v4408, %v4409
        %s4419 = scalar_lea.vmem [#allocation2], 2312
        %v4420 = vld [vmem:[%s4419] sm:$0xff]
        %v4421 = vld [vmem:[%s4419 + $0x8] sm:$0xff]
        %v4422 = vld [vmem:[%s4419 + $0x10] sm:$0xff]
        %v4423 = vld [vmem:[%s4419 + $0x18] sm:$0xff]
        %v4424 = vld [vmem:[%s4419 + $0x20] sm:$0xff]
        %v4425 = vld [vmem:[%s4419 + $0x28] sm:$0xff]
        %v4426 = vld [vmem:[%s4419 + $0x30] sm:$0xff]
        %v4427 = vld [vmem:[%s4419 + $0x38] sm:$0xff]
        %v4428 = vld [vmem:[%s4419 + $0x40] sm:$0xff]
        %v4429 = vld [vmem:[%s4419 + $0x48] sm:$0xff]
        %v4430 = vld [vmem:[%s4419 + $0x50] sm:$0xff]
        %v4431 = vld [vmem:[%s4419 + $0x58] sm:$0xff]
        %v4432 = vld [vmem:[%s4419 + $0x60] sm:$0xff]
        %v4433 = vld [vmem:[%s4419 + $0x68] sm:$0xff]
        %v4434 = vld [vmem:[%s4419 + $0x70] sm:$0xff]
        %v4435 = vld [vmem:[%s4419 + $0x78] sm:$0xff]
        %v4436 = vld [vmem:[%s4419 + $0x80] sm:$0xf]
        %v4437 = vsel %vm369, %v4368, 0
        %v4439 = vsel %vm369, %v4374, 0
        %v4441 = vsel %vm369, %v4380, 0
        %v4443 = vsel %vm369, %v4386, 0
        %v4445 = vsel %vm369, %v4392, 0
        %v4447 = vsel %vm369, %v4398, 0
        %v4449 = vsel %vm369, %v4404, 0
        %v4451 = vsel %vm369, %v4410, 0
        %v4454 = vsel %vm386, %v4436, 0
        %4456 = vmatprep.subr.mxu0 0.0
        %4457 = vmatpush1.msra.mxu0 %v4420
        %4458 = vmatprep.subr.mxu0 0.0
        %4459 = vmatpush1.msra.mxu0 %v4421
        %4460 = vmatprep.subr.mxu0 0.0
        %4461 = vmatpush1.msra.mxu0 %v4422
        %4462 = vmatprep.subr.mxu0 0.0
        %4463 = vmatpush1.msra.mxu0 %v4423
        %4464 = vmatprep.subr.mxu0 0.0
        %4465 = vmatpush1.msra.mxu0 %v4424
        %4466 = vmatprep.subr.mxu0 0.0
        %4467 = vmatpush1.msra.mxu0 %v4425
        %4468 = vmatprep.subr.mxu0 0.0
        %4469 = vmatpush1.msra.mxu0 %v4426
        %4470 = vmatprep.subr.mxu0 0.0
        %4471 = vmatpush1.msra.mxu0 %v4427
        %4472 = vmatprep.subr.mxu0 0.0
        %4473 = vmatpush1.msra.mxu0 %v4428
        %4474 = vmatprep.subr.mxu0 0.0
        %4475 = vmatpush1.msra.mxu0 %v4429
        %4476 = vmatprep.subr.mxu0 0.0
        %4477 = vmatpush1.msra.mxu0 %v4430
        %4478 = vmatprep.subr.mxu0 0.0
        %4479 = vmatpush1.msra.mxu0 %v4431
        %4480 = vmatprep.subr.mxu0 0.0
        %4481 = vmatpush1.msra.mxu0 %v4432
        %4482 = vmatprep.subr.mxu0 0.0
        %4483 = vmatpush1.msra.mxu0 %v4433
        %4484 = vmatprep.subr.mxu0 0.0
        %4485 = vmatpush1.msra.mxu0 %v4434
        %4486 = vmatprep.subr.mxu0 0.0
        %4487 = vmatpush1.msra.mxu0 %v4435
        %4488 = vmatprep.subr.mxu0 0.0
        %4489 = vmatpush1.msra.mxu0 %v4454
        %4490 = vmatprep.subr.mxu0 0.0
        %4491 = vmatpush1.msra.mxu0 0.0
        %4492 = vmatprep.subr.mxu0 0.0
        %4493 = vmatpush1.msra.mxu0 0.0
        %4494 = vmatprep.subr.mxu0 0.0
        %4495 = vmatpush1.msra.mxu0 0.0
        %4496 = vmatprep.subr.mxu0 0.0
        %4497 = vmatpush1.msra.mxu0 0.0
        %4498 = vmatprep.subr.mxu0 0.0
        %4499 = vmatpush1.msra.mxu0 0.0
        %4500 = vmatprep.subr.mxu0 0.0
        %4501 = vmatpush1.msra.mxu0 0.0
        %4502 = vmatprep.subr.mxu0 0.0
        %4503 = vmatpush1.msra.mxu0 0.0
        %4504 = vmatprep.subr.mxu0 0.0
        %4505 = vmatpush1.msra.mxu0 0.0
        %4506 = vmatprep.subr.mxu0 0.0
        %4507 = vmatpush1.msra.mxu0 0.0
        %4508 = vmatprep.subr.mxu0 0.0
        %4509 = vmatpush1.msra.mxu0 0.0
        %4510 = vmatprep.subr.mxu0 0.0
        %4511 = vmatpush1.msra.mxu0 0.0
        %4512 = vmatprep.subr.mxu0 0.0
        %4513 = vmatpush1.msra.mxu0 0.0
        %4514 = vmatprep.subr.mxu0 0.0
        %4515 = vmatpush1.msra.mxu0 0.0
        %4516 = vmatprep.subr.mxu0 0.0
        %4517 = vmatpush1.msra.mxu0 0.0
        %4518 = vmatprep.subr.mxu0 0.0
        %4519 = vmatpush1.msra.mxu0 0.0
        %4520 = vmatprep.mubr.f32.mxu0 %v4437
        %4521 = vmatmul.mubr.f32.gmra.mrb[0].mxu0 %v4365
        %v4522 = vpop.f32.mrb[0].mxu0
        %v4523 = vadd.f32 0.0, %v4522
        %v4524 = vpop.f32.mrb[0].mxu0
        %4525 = vmatprep.mubr.f32.mxu0 %v4439
        %4526 = vmatmul.mubr.f32.gmra.mrb[0].mxu0 %v4371
        %v4527 = vpop.f32.mrb[0].mxu0
        %v4528 = vadd.f32 0.0, %v4527
        %v4529 = vpop.f32.mrb[0].mxu0
        %4530 = vmatprep.mubr.f32.mxu0 %v4441
        %4531 = vmatmul.mubr.f32.gmra.mrb[0].mxu0 %v4377
        %v4532 = vpop.f32.mrb[0].mxu0
        %v4533 = vadd.f32 0.0, %v4532
        %v4534 = vpop.f32.mrb[0].mxu0
        %4535 = vmatprep.mubr.f32.mxu0 %v4443
        %4536 = vmatmul.mubr.f32.gmra.mrb[0].mxu0 %v4383
        %v4537 = vpop.f32.mrb[0].mxu0
        %v4538 = vadd.f32 0.0, %v4537
        %v4539 = vpop.f32.mrb[0].mxu0
        %4540 = vmatprep.mubr.f32.mxu0 %v4445
        %4541 = vmatmul.mubr.f32.gmra.mrb[0].mxu0 %v4389
        %v4542 = vpop.f32.mrb[0].mxu0
        %v4543 = vadd.f32 0.0, %v4542
        %v4544 = vpop.f32.mrb[0].mxu0
        %4545 = vmatprep.mubr.f32.mxu0 %v4447
        %4546 = vmatmul.mubr.f32.gmra.mrb[0].mxu0 %v4395
        %v4547 = vpop.f32.mrb[0].mxu0
        %v4548 = vadd.f32 0.0, %v4547
        %v4549 = vpop.f32.mrb[0].mxu0
        %4550 = vmatprep.mubr.f32.mxu0 %v4449
        %4551 = vmatmul.mubr.f32.gmra.mrb[0].mxu0 %v4401
        %v4552 = vpop.f32.mrb[0].mxu0
        %v4553 = vadd.f32 0.0, %v4552
        %v4554 = vpop.f32.mrb[0].mxu0
        %4555 = vmatprep.mubr.f32.mxu0 %v4451
        %4556 = vmatmul.mubr.f32.gmra.mrb[0].mxu0 %v4407
        %v4557 = vpop.f32.mrb[0].mxu0
        %v4558 = vadd.f32 0.0, %v4557
        %v4559 = vpop.f32.mrb[0].mxu0
        %4560 = vdwg.mxu0
        %v4561 = vadd.f32 %v4291, %v4523
        %v4562 = vadd.f32 %v4292, %v4528
        %v4563 = vadd.f32 %v4293, %v4533
        %v4564 = vadd.f32 %v4294, %v4538
        %v4565 = vadd.f32 %v4295, %v4543
        %v4566 = vadd.f32 %v4296, %v4548
        %v4567 = vadd.f32 %v4297, %v4553
        %v4568 = vadd.f32 %v4298, %v4558
        %v4569 = vld [vmem:[%s4124] sm:$0xfc]
        %v4570 = vld [vmem:[%s4124 + $0x8] sm:$0xfc]
        %v4571 = vld [vmem:[%s4124 + $0x10] sm:$0x3]
        %v4572 = vld [vmem:[%s4124 + $0x18] sm:$0x3]
        %v4573 = vld [vmem:[%s4124 + $0x20] sm:$0xfc]
        %v4574 = vld [vmem:[%s4124 + $0x28] sm:$0xfc]
        %v4575 = vld [vmem:[%s4124 + $0x30] sm:$0x3]
        %v4576 = vld [vmem:[%s4124 + $0x38] sm:$0x3]
        %v4577 = vld [vmem:[%s4124 + $0x40] sm:$0xfc]
        %v4578 = vld [vmem:[%s4124 + $0x48] sm:$0xfc]
        %v4579 = vld [vmem:[%s4124 + $0x50] sm:$0x3]
        %v4580 = vld [vmem:[%s4124 + $0x58] sm:$0x3]
        %v4581 = vld [vmem:[%s4124 + $0x60] sm:$0xfc]
        %v4582 = vld [vmem:[%s4124 + $0x68] sm:$0xfc]
        %v4583 = vld [vmem:[%s4124 + $0x70] sm:$0x3]
        %v4584 = vld [vmem:[%s4124 + $0x78] sm:$0x3]
        %v4585 = vld [vmem:[%s4124 + $0x80] sm:$0xfc]
        %v4586 = vld [vmem:[%s4124 + $0x88] sm:$0xfc]
        %v4587 = vld [vmem:[%s4124 + $0x90] sm:$0x3]
        %v4588 = vld [vmem:[%s4124 + $0x98] sm:$0x3]
        %v4589 = vld [vmem:[%s4124 + $0xa0] sm:$0xfc]
        %v4590 = vld [vmem:[%s4124 + $0xa8] sm:$0xfc]
        %v4591 = vld [vmem:[%s4124 + $0xb0] sm:$0x3]
        %v4592 = vld [vmem:[%s4124 + $0xb8] sm:$0x3]
        %v4593 = vld [vmem:[%s4124 + $0xc0] sm:$0xfc]
        %v4594 = vld [vmem:[%s4124 + $0xc8] sm:$0xfc]
        %v4595 = vld [vmem:[%s4124 + $0xd0] sm:$0x3]
        %v4596 = vld [vmem:[%s4124 + $0xd8] sm:$0x3]
        %v4597 = vld [vmem:[%s4124 + $0xe0] sm:$0xfc]
        %v4598 = vld [vmem:[%s4124 + $0xe8] sm:$0xfc]
        %v4599 = vld [vmem:[%s4124 + $0xf0] sm:$0x3]
        %v4600 = vld [vmem:[%s4124 + $0xf8] sm:$0x3]
        %v4633 = vrot.slane %v4569, 2
        %v4634 = vrot.slane %v4571, 2
        %v4635 = vsel %vm691, %v4633, %v4634
        %v4636 = vrot.slane %v4570, 2
        %v4637 = vrot.slane %v4572, 2
        %v4638 = vsel %vm691, %v4636, %v4637
        %v4639 = vrot.slane %v4573, 2
        %v4640 = vrot.slane %v4575, 2
        %v4641 = vsel %vm691, %v4639, %v4640
        %v4642 = vrot.slane %v4574, 2
        %v4643 = vrot.slane %v4576, 2
        %v4644 = vsel %vm691, %v4642, %v4643
        %v4645 = vrot.slane %v4577, 2
        %v4646 = vrot.slane %v4579, 2
        %v4647 = vsel %vm691, %v4645, %v4646
        %v4648 = vrot.slane %v4578, 2
        %v4649 = vrot.slane %v4580, 2
        %v4650 = vsel %vm691, %v4648, %v4649
        %v4651 = vrot.slane %v4581, 2
        %v4652 = vrot.slane %v4583, 2
        %v4653 = vsel %vm691, %v4651, %v4652
        %v4654 = vrot.slane %v4582, 2
        %v4655 = vrot.slane %v4584, 2
        %v4656 = vsel %vm691, %v4654, %v4655
        %v4657 = vrot.slane %v4585, 2
        %v4658 = vrot.slane %v4587, 2
        %v4659 = vsel %vm691, %v4657, %v4658
        %v4660 = vrot.slane %v4586, 2
        %v4661 = vrot.slane %v4588, 2
        %v4662 = vsel %vm691, %v4660, %v4661
        %v4663 = vrot.slane %v4589, 2
        %v4664 = vrot.slane %v4591, 2
        %v4665 = vsel %vm691, %v4663, %v4664
        %v4666 = vrot.slane %v4590, 2
        %v4667 = vrot.slane %v4592, 2
        %v4668 = vsel %vm691, %v4666, %v4667
        %v4669 = vrot.slane %v4593, 2
        %v4670 = vrot.slane %v4595, 2
        %v4671 = vsel %vm691, %v4669, %v4670
        %v4672 = vrot.slane %v4594, 2
        %v4673 = vrot.slane %v4596, 2
        %v4674 = vsel %vm691, %v4672, %v4673
        %v4675 = vrot.slane %v4597, 2
        %v4676 = vrot.slane %v4599, 2
        %v4677 = vsel %vm691, %v4675, %v4676
        %v4678 = vrot.slane %v4598, 2
        %v4679 = vrot.slane %v4600, 2
        %v4680 = vsel %vm691, %v4678, %v4679
        %s4689 = scalar_lea.vmem [#allocation2], 2448
        %v4690 = vld [vmem:[%s4689] sm:$0xff]
        %v4691 = vld [vmem:[%s4689 + $0x8] sm:$0xff]
        %v4692 = vld [vmem:[%s4689 + $0x10] sm:$0xff]
        %v4693 = vld [vmem:[%s4689 + $0x18] sm:$0xff]
        %v4694 = vld [vmem:[%s4689 + $0x20] sm:$0xff]
        %v4695 = vld [vmem:[%s4689 + $0x28] sm:$0xff]
        %v4696 = vld [vmem:[%s4689 + $0x30] sm:$0xff]
        %v4697 = vld [vmem:[%s4689 + $0x38] sm:$0xff]
        %v4698 = vld [vmem:[%s4689 + $0x40] sm:$0xff]
        %v4699 = vld [vmem:[%s4689 + $0x48] sm:$0xff]
        %v4700 = vld [vmem:[%s4689 + $0x50] sm:$0xff]
        %v4701 = vld [vmem:[%s4689 + $0x58] sm:$0xff]
        %v4702 = vld [vmem:[%s4689 + $0x60] sm:$0xff]
        %v4703 = vld [vmem:[%s4689 + $0x68] sm:$0xff]
        %v4704 = vld [vmem:[%s4689 + $0x70] sm:$0xff]
        %v4705 = vld [vmem:[%s4689 + $0x78] sm:$0xff]
        %v4706 = vld [vmem:[%s4689 + $0x80] sm:$0xf]
        %v4707 = vsel %vm369, %v4638, 0
        %v4709 = vsel %vm369, %v4644, 0
        %v4711 = vsel %vm369, %v4650, 0
        %v4713 = vsel %vm369, %v4656, 0
        %v4715 = vsel %vm369, %v4662, 0
        %v4717 = vsel %vm369, %v4668, 0
        %v4719 = vsel %vm369, %v4674, 0
        %v4721 = vsel %vm369, %v4680, 0
        %v4724 = vsel %vm386, %v4706, 0
        %4726 = vmatprep.subr.mxu0 0.0
        %4727 = vmatpush1.msra.mxu0 %v4690
        %4728 = vmatprep.subr.mxu0 0.0
        %4729 = vmatpush1.msra.mxu0 %v4691
        %4730 = vmatprep.subr.mxu0 0.0
        %4731 = vmatpush1.msra.mxu0 %v4692
        %4732 = vmatprep.subr.mxu0 0.0
        %4733 = vmatpush1.msra.mxu0 %v4693
        %4734 = vmatprep.subr.mxu0 0.0
        %4735 = vmatpush1.msra.mxu0 %v4694
        %4736 = vmatprep.subr.mxu0 0.0
        %4737 = vmatpush1.msra.mxu0 %v4695
        %4738 = vmatprep.subr.mxu0 0.0
        %4739 = vmatpush1.msra.mxu0 %v4696
        %4740 = vmatprep.subr.mxu0 0.0
        %4741 = vmatpush1.msra.mxu0 %v4697
        %4742 = vmatprep.subr.mxu0 0.0
        %4743 = vmatpush1.msra.mxu0 %v4698
        %4744 = vmatprep.subr.mxu0 0.0
        %4745 = vmatpush1.msra.mxu0 %v4699
        %4746 = vmatprep.subr.mxu0 0.0
        %4747 = vmatpush1.msra.mxu0 %v4700
        %4748 = vmatprep.subr.mxu0 0.0
        %4749 = vmatpush1.msra.mxu0 %v4701
        %4750 = vmatprep.subr.mxu0 0.0
        %4751 = vmatpush1.msra.mxu0 %v4702
        %4752 = vmatprep.subr.mxu0 0.0
        %4753 = vmatpush1.msra.mxu0 %v4703
        %4754 = vmatprep.subr.mxu0 0.0
        %4755 = vmatpush1.msra.mxu0 %v4704
        %4756 = vmatprep.subr.mxu0 0.0
        %4757 = vmatpush1.msra.mxu0 %v4705
        %4758 = vmatprep.subr.mxu0 0.0
        %4759 = vmatpush1.msra.mxu0 %v4724
        %4760 = vmatprep.subr.mxu0 0.0
        %4761 = vmatpush1.msra.mxu0 0.0
        %4762 = vmatprep.subr.mxu0 0.0
        %4763 = vmatpush1.msra.mxu0 0.0
        %4764 = vmatprep.subr.mxu0 0.0
        %4765 = vmatpush1.msra.mxu0 0.0
        %4766 = vmatprep.subr.mxu0 0.0
        %4767 = vmatpush1.msra.mxu0 0.0
        %4768 = vmatprep.subr.mxu0 0.0
        %4769 = vmatpush1.msra.mxu0 0.0
        %4770 = vmatprep.subr.mxu0 0.0
        %4771 = vmatpush1.msra.mxu0 0.0
        %4772 = vmatprep.subr.mxu0 0.0
        %4773 = vmatpush1.msra.mxu0 0.0
        %4774 = vmatprep.subr.mxu0 0.0
        %4775 = vmatpush1.msra.mxu0 0.0
        %4776 = vmatprep.subr.mxu0 0.0
        %4777 = vmatpush1.msra.mxu0 0.0
        %4778 = vmatprep.subr.mxu0 0.0
        %4779 = vmatpush1.msra.mxu0 0.0
        %4780 = vmatprep.subr.mxu0 0.0
        %4781 = vmatpush1.msra.mxu0 0.0
        %4782 = vmatprep.subr.mxu0 0.0
        %4783 = vmatpush1.msra.mxu0 0.0
        %4784 = vmatprep.subr.mxu0 0.0
        %4785 = vmatpush1.msra.mxu0 0.0
        %4786 = vmatprep.subr.mxu0 0.0
        %4787 = vmatpush1.msra.mxu0 0.0
        %4788 = vmatprep.subr.mxu0 0.0
        %4789 = vmatpush1.msra.mxu0 0.0
        %4790 = vmatprep.mubr.f32.mxu0 %v4707
        %4791 = vmatmul.mubr.f32.gmra.mrb[0].mxu0 %v4635
        %v4792 = vpop.f32.mrb[0].mxu0
        %v4793 = vadd.f32 0.0, %v4792
        %v4794 = vpop.f32.mrb[0].mxu0
        %4795 = vmatprep.mubr.f32.mxu0 %v4709
        %4796 = vmatmul.mubr.f32.gmra.mrb[0].mxu0 %v4641
        %v4797 = vpop.f32.mrb[0].mxu0
        %v4798 = vadd.f32 0.0, %v4797
        %v4799 = vpop.f32.mrb[0].mxu0
        %4800 = vmatprep.mubr.f32.mxu0 %v4711
        %4801 = vmatmul.mubr.f32.gmra.mrb[0].mxu0 %v4647
        %v4802 = vpop.f32.mrb[0].mxu0
        %v4803 = vadd.f32 0.0, %v4802
        %v4804 = vpop.f32.mrb[0].mxu0
        %4805 = vmatprep.mubr.f32.mxu0 %v4713
        %4806 = vmatmul.mubr.f32.gmra.mrb[0].mxu0 %v4653
        %v4807 = vpop.f32.mrb[0].mxu0
        %v4808 = vadd.f32 0.0, %v4807
        %v4809 = vpop.f32.mrb[0].mxu0
        %4810 = vmatprep.mubr.f32.mxu0 %v4715
        %4811 = vmatmul.mubr.f32.gmra.mrb[0].mxu0 %v4659
        %v4812 = vpop.f32.mrb[0].mxu0
        %v4813 = vadd.f32 0.0, %v4812
        %v4814 = vpop.f32.mrb[0].mxu0
        %4815 = vmatprep.mubr.f32.mxu0 %v4717
        %4816 = vmatmul.mubr.f32.gmra.mrb[0].mxu0 %v4665
        %v4817 = vpop.f32.mrb[0].mxu0
        %v4818 = vadd.f32 0.0, %v4817
        %v4819 = vpop.f32.mrb[0].mxu0
        %4820 = vmatprep.mubr.f32.mxu0 %v4719
        %4821 = vmatmul.mubr.f32.gmra.mrb[0].mxu0 %v4671
        %v4822 = vpop.f32.mrb[0].mxu0
        %v4823 = vadd.f32 0.0, %v4822
        %v4824 = vpop.f32.mrb[0].mxu0
        %4825 = vmatprep.mubr.f32.mxu0 %v4721
        %4826 = vmatmul.mubr.f32.gmra.mrb[0].mxu0 %v4677
        %v4827 = vpop.f32.mrb[0].mxu0
        %v4828 = vadd.f32 0.0, %v4827
        %v4829 = vpop.f32.mrb[0].mxu0
        %4830 = vdwg.mxu0
        %v4831 = vadd.f32 %v4561, %v4793
        %v4832 = vadd.f32 %v4562, %v4798
        %v4833 = vadd.f32 %v4563, %v4803
        %v4834 = vadd.f32 %v4564, %v4808
        %v4835 = vadd.f32 %v4565, %v4813
        %v4836 = vadd.f32 %v4566, %v4818
        %v4837 = vadd.f32 %v4567, %v4823
        %v4838 = vadd.f32 %v4568, %v4828
        %v4839 = vld [vmem:[%s4124] sm:$0xf8]
        %v4840 = vld [vmem:[%s4124 + $0x8] sm:$0xf8]
        %v4841 = vld [vmem:[%s4124 + $0x10] sm:$0x7]
        %v4842 = vld [vmem:[%s4124 + $0x18] sm:$0x7]
        %v4843 = vld [vmem:[%s4124 + $0x20] sm:$0xf8]
        %v4844 = vld [vmem:[%s4124 + $0x28] sm:$0xf8]
        %v4845 = vld [vmem:[%s4124 + $0x30] sm:$0x7]
        %v4846 = vld [vmem:[%s4124 + $0x38] sm:$0x7]
        %v4847 = vld [vmem:[%s4124 + $0x40] sm:$0xf8]
        %v4848 = vld [vmem:[%s4124 + $0x48] sm:$0xf8]
        %v4849 = vld [vmem:[%s4124 + $0x50] sm:$0x7]
        %v4850 = vld [vmem:[%s4124 + $0x58] sm:$0x7]
        %v4851 = vld [vmem:[%s4124 + $0x60] sm:$0xf8]
        %v4852 = vld [vmem:[%s4124 + $0x68] sm:$0xf8]
        %v4853 = vld [vmem:[%s4124 + $0x70] sm:$0x7]
        %v4854 = vld [vmem:[%s4124 + $0x78] sm:$0x7]
        %v4855 = vld [vmem:[%s4124 + $0x80] sm:$0xf8]
        %v4856 = vld [vmem:[%s4124 + $0x88] sm:$0xf8]
        %v4857 = vld [vmem:[%s4124 + $0x90] sm:$0x7]
        %v4858 = vld [vmem:[%s4124 + $0x98] sm:$0x7]
        %v4859 = vld [vmem:[%s4124 + $0xa0] sm:$0xf8]
        %v4860 = vld [vmem:[%s4124 + $0xa8] sm:$0xf8]
        %v4861 = vld [vmem:[%s4124 + $0xb0] sm:$0x7]
        %v4862 = vld [vmem:[%s4124 + $0xb8] sm:$0x7]
        %v4863 = vld [vmem:[%s4124 + $0xc0] sm:$0xf8]
        %v4864 = vld [vmem:[%s4124 + $0xc8] sm:$0xf8]
        %v4865 = vld [vmem:[%s4124 + $0xd0] sm:$0x7]
        %v4866 = vld [vmem:[%s4124 + $0xd8] sm:$0x7]
        %v4867 = vld [vmem:[%s4124 + $0xe0] sm:$0xf8]
        %v4868 = vld [vmem:[%s4124 + $0xe8] sm:$0xf8]
        %v4869 = vld [vmem:[%s4124 + $0xf0] sm:$0x7]
        %v4870 = vld [vmem:[%s4124 + $0xf8] sm:$0x7]
        %v4903 = vrot.slane %v4839, 3
        %v4904 = vrot.slane %v4841, 3
        %v4905 = vsel %vm962, %v4903, %v4904
        %v4906 = vrot.slane %v4840, 3
        %v4907 = vrot.slane %v4842, 3
        %v4908 = vsel %vm962, %v4906, %v4907
        %v4909 = vrot.slane %v4843, 3
        %v4910 = vrot.slane %v4845, 3
        %v4911 = vsel %vm962, %v4909, %v4910
        %v4912 = vrot.slane %v4844, 3
        %v4913 = vrot.slane %v4846, 3
        %v4914 = vsel %vm962, %v4912, %v4913
        %v4915 = vrot.slane %v4847, 3
        %v4916 = vrot.slane %v4849, 3
        %v4917 = vsel %vm962, %v4915, %v4916
        %v4918 = vrot.slane %v4848, 3
        %v4919 = vrot.slane %v4850, 3
        %v4920 = vsel %vm962, %v4918, %v4919
        %v4921 = vrot.slane %v4851, 3
        %v4922 = vrot.slane %v4853, 3
        %v4923 = vsel %vm962, %v4921, %v4922
        %v4924 = vrot.slane %v4852, 3
        %v4925 = vrot.slane %v4854, 3
        %v4926 = vsel %vm962, %v4924, %v4925
        %v4927 = vrot.slane %v4855, 3
        %v4928 = vrot.slane %v4857, 3
        %v4929 = vsel %vm962, %v4927, %v4928
        %v4930 = vrot.slane %v4856, 3
        %v4931 = vrot.slane %v4858, 3
        %v4932 = vsel %vm962, %v4930, %v4931
        %v4933 = vrot.slane %v4859, 3
        %v4934 = vrot.slane %v4861, 3
        %v4935 = vsel %vm962, %v4933, %v4934
        %v4936 = vrot.slane %v4860, 3
        %v4937 = vrot.slane %v4862, 3
        %v4938 = vsel %vm962, %v4936, %v4937
        %v4939 = vrot.slane %v4863, 3
        %v4940 = vrot.slane %v4865, 3
        %v4941 = vsel %vm962, %v4939, %v4940
        %v4942 = vrot.slane %v4864, 3
        %v4943 = vrot.slane %v4866, 3
        %v4944 = vsel %vm962, %v4942, %v4943
        %v4945 = vrot.slane %v4867, 3
        %v4946 = vrot.slane %v4869, 3
        %v4947 = vsel %vm962, %v4945, %v4946
        %v4948 = vrot.slane %v4868, 3
        %v4949 = vrot.slane %v4870, 3
        %v4950 = vsel %vm962, %v4948, %v4949
        %s4959 = scalar_lea.vmem [#allocation2], 2584
        %v4960 = vld [vmem:[%s4959] sm:$0xff]
        %v4961 = vld [vmem:[%s4959 + $0x8] sm:$0xff]
        %v4962 = vld [vmem:[%s4959 + $0x10] sm:$0xff]
        %v4963 = vld [vmem:[%s4959 + $0x18] sm:$0xff]
        %v4964 = vld [vmem:[%s4959 + $0x20] sm:$0xff]
        %v4965 = vld [vmem:[%s4959 + $0x28] sm:$0xff]
        %v4966 = vld [vmem:[%s4959 + $0x30] sm:$0xff]
        %v4967 = vld [vmem:[%s4959 + $0x38] sm:$0xff]
        %v4968 = vld [vmem:[%s4959 + $0x40] sm:$0xff]
        %v4969 = vld [vmem:[%s4959 + $0x48] sm:$0xff]
        %v4970 = vld [vmem:[%s4959 + $0x50] sm:$0xff]
        %v4971 = vld [vmem:[%s4959 + $0x58] sm:$0xff]
        %v4972 = vld [vmem:[%s4959 + $0x60] sm:$0xff]
        %v4973 = vld [vmem:[%s4959 + $0x68] sm:$0xff]
        %v4974 = vld [vmem:[%s4959 + $0x70] sm:$0xff]
        %v4975 = vld [vmem:[%s4959 + $0x78] sm:$0xff]
        %v4976 = vld [vmem:[%s4959 + $0x80] sm:$0xf]
        %v4977 = vsel %vm369, %v4908, 0
        %v4979 = vsel %vm369, %v4914, 0
        %v4981 = vsel %vm369, %v4920, 0
        %v4983 = vsel %vm369, %v4926, 0
        %v4985 = vsel %vm369, %v4932, 0
        %v4987 = vsel %vm369, %v4938, 0
        %v4989 = vsel %vm369, %v4944, 0
        %v4991 = vsel %vm369, %v4950, 0
        %v4994 = vsel %vm386, %v4976, 0
        %4996 = vmatprep.subr.mxu0 0.0
        %4997 = vmatpush1.msra.mxu0 %v4960
        %4998 = vmatprep.subr.mxu0 0.0
        %4999 = vmatpush1.msra.mxu0 %v4961
        %5000 = vmatprep.subr.mxu0 0.0
        %5001 = vmatpush1.msra.mxu0 %v4962
        %5002 = vmatprep.subr.mxu0 0.0
        %5003 = vmatpush1.msra.mxu0 %v4963
        %5004 = vmatprep.subr.mxu0 0.0
        %5005 = vmatpush1.msra.mxu0 %v4964
        %5006 = vmatprep.subr.mxu0 0.0
        %5007 = vmatpush1.msra.mxu0 %v4965
        %5008 = vmatprep.subr.mxu0 0.0
        %5009 = vmatpush1.msra.mxu0 %v4966
        %5010 = vmatprep.subr.mxu0 0.0
        %5011 = vmatpush1.msra.mxu0 %v4967
        %5012 = vmatprep.subr.mxu0 0.0
        %5013 = vmatpush1.msra.mxu0 %v4968
        %5014 = vmatprep.subr.mxu0 0.0
        %5015 = vmatpush1.msra.mxu0 %v4969
        %5016 = vmatprep.subr.mxu0 0.0
        %5017 = vmatpush1.msra.mxu0 %v4970
        %5018 = vmatprep.subr.mxu0 0.0
        %5019 = vmatpush1.msra.mxu0 %v4971
        %5020 = vmatprep.subr.mxu0 0.0
        %5021 = vmatpush1.msra.mxu0 %v4972
        %5022 = vmatprep.subr.mxu0 0.0
        %5023 = vmatpush1.msra.mxu0 %v4973
        %5024 = vmatprep.subr.mxu0 0.0
        %5025 = vmatpush1.msra.mxu0 %v4974
        %5026 = vmatprep.subr.mxu0 0.0
        %5027 = vmatpush1.msra.mxu0 %v4975
        %5028 = vmatprep.subr.mxu0 0.0
        %5029 = vmatpush1.msra.mxu0 %v4994
        %5030 = vmatprep.subr.mxu0 0.0
        %5031 = vmatpush1.msra.mxu0 0.0
        %5032 = vmatprep.subr.mxu0 0.0
        %5033 = vmatpush1.msra.mxu0 0.0
        %5034 = vmatprep.subr.mxu0 0.0
        %5035 = vmatpush1.msra.mxu0 0.0
        %5036 = vmatprep.subr.mxu0 0.0
        %5037 = vmatpush1.msra.mxu0 0.0
        %5038 = vmatprep.subr.mxu0 0.0
        %5039 = vmatpush1.msra.mxu0 0.0
        %5040 = vmatprep.subr.mxu0 0.0
        %5041 = vmatpush1.msra.mxu0 0.0
        %5042 = vmatprep.subr.mxu0 0.0
        %5043 = vmatpush1.msra.mxu0 0.0
        %5044 = vmatprep.subr.mxu0 0.0
        %5045 = vmatpush1.msra.mxu0 0.0
        %5046 = vmatprep.subr.mxu0 0.0
        %5047 = vmatpush1.msra.mxu0 0.0
        %5048 = vmatprep.subr.mxu0 0.0
        %5049 = vmatpush1.msra.mxu0 0.0
        %5050 = vmatprep.subr.mxu0 0.0
        %5051 = vmatpush1.msra.mxu0 0.0
        %5052 = vmatprep.subr.mxu0 0.0
        %5053 = vmatpush1.msra.mxu0 0.0
        %5054 = vmatprep.subr.mxu0 0.0
        %5055 = vmatpush1.msra.mxu0 0.0
        %5056 = vmatprep.subr.mxu0 0.0
        %5057 = vmatpush1.msra.mxu0 0.0
        %5058 = vmatprep.subr.mxu0 0.0
        %5059 = vmatpush1.msra.mxu0 0.0
        %5060 = vmatprep.mubr.f32.mxu0 %v4977
        %5061 = vmatmul.mubr.f32.gmra.mrb[0].mxu0 %v4905
        %v5062 = vpop.f32.mrb[0].mxu0
        %v5063 = vadd.f32 0.0, %v5062
        %v5064 = vpop.f32.mrb[0].mxu0
        %5065 = vmatprep.mubr.f32.mxu0 %v4979
        %5066 = vmatmul.mubr.f32.gmra.mrb[0].mxu0 %v4911
        %v5067 = vpop.f32.mrb[0].mxu0
        %v5068 = vadd.f32 0.0, %v5067
        %v5069 = vpop.f32.mrb[0].mxu0
        %5070 = vmatprep.mubr.f32.mxu0 %v4981
        %5071 = vmatmul.mubr.f32.gmra.mrb[0].mxu0 %v4917
        %v5072 = vpop.f32.mrb[0].mxu0
        %v5073 = vadd.f32 0.0, %v5072
        %v5074 = vpop.f32.mrb[0].mxu0
        %5075 = vmatprep.mubr.f32.mxu0 %v4983
        %5076 = vmatmul.mubr.f32.gmra.mrb[0].mxu0 %v4923
        %v5077 = vpop.f32.mrb[0].mxu0
        %v5078 = vadd.f32 0.0, %v5077
        %v5079 = vpop.f32.mrb[0].mxu0
        %5080 = vmatprep.mubr.f32.mxu0 %v4985
        %5081 = vmatmul.mubr.f32.gmra.mrb[0].mxu0 %v4929
        %v5082 = vpop.f32.mrb[0].mxu0
        %v5083 = vadd.f32 0.0, %v5082
        %v5084 = vpop.f32.mrb[0].mxu0
        %5085 = vmatprep.mubr.f32.mxu0 %v4987
        %5086 = vmatmul.mubr.f32.gmra.mrb[0].mxu0 %v4935
        %v5087 = vpop.f32.mrb[0].mxu0
        %v5088 = vadd.f32 0.0, %v5087
        %v5089 = vpop.f32.mrb[0].mxu0
        %5090 = vmatprep.mubr.f32.mxu0 %v4989
        %5091 = vmatmul.mubr.f32.gmra.mrb[0].mxu0 %v4941
        %v5092 = vpop.f32.mrb[0].mxu0
        %v5093 = vadd.f32 0.0, %v5092
        %v5094 = vpop.f32.mrb[0].mxu0
        %5095 = vmatprep.mubr.f32.mxu0 %v4991
        %5096 = vmatmul.mubr.f32.gmra.mrb[0].mxu0 %v4947
        %v5097 = vpop.f32.mrb[0].mxu0
        %v5098 = vadd.f32 0.0, %v5097
        %v5099 = vpop.f32.mrb[0].mxu0
        %5100 = vdwg.mxu0
        %v5101 = vadd.f32 %v4831, %v5063
        %v5102 = vadd.f32 %v4832, %v5068
        %v5103 = vadd.f32 %v4833, %v5073
        %v5104 = vadd.f32 %v4834, %v5078
        %v5105 = vadd.f32 %v4835, %v5083
        %v5106 = vadd.f32 %v4836, %v5088
        %v5107 = vadd.f32 %v4837, %v5093
        %v5108 = vadd.f32 %v4838, %v5098
        %s5109 = scalar_lea.vmem %s196, 160
        %v5110 = vld [vmem:[%s5109] sm:$0xff]
        %v5111 = vld [vmem:[%s5109 + $0x8] sm:$0xff]
        %v5112 = vld [vmem:[%s5109 + $0x20] sm:$0xff]
        %v5113 = vld [vmem:[%s5109 + $0x28] sm:$0xff]
        %v5114 = vld [vmem:[%s5109 + $0x40] sm:$0xff]
        %v5115 = vld [vmem:[%s5109 + $0x48] sm:$0xff]
        %v5116 = vld [vmem:[%s5109 + $0x60] sm:$0xff]
        %v5117 = vld [vmem:[%s5109 + $0x68] sm:$0xff]
        %v5118 = vld [vmem:[%s5109 + $0x80] sm:$0xff]
        %v5119 = vld [vmem:[%s5109 + $0x88] sm:$0xff]
        %v5120 = vld [vmem:[%s5109 + $0xa0] sm:$0xff]
        %v5121 = vld [vmem:[%s5109 + $0xa8] sm:$0xff]
        %v5122 = vld [vmem:[%s5109 + $0xc0] sm:$0xff]
        %v5123 = vld [vmem:[%s5109 + $0xc8] sm:$0xff]
        %v5124 = vld [vmem:[%s5109 + $0xe0] sm:$0xff]
        %v5125 = vld [vmem:[%s5109 + $0xe8] sm:$0xff]
        %s5126 = scalar_lea.vmem [#allocation2], 2720
        %v5127 = vld [vmem:[%s5126] sm:$0xff]
        %v5128 = vld [vmem:[%s5126 + $0x8] sm:$0xff]
        %v5129 = vld [vmem:[%s5126 + $0x10] sm:$0xff]
        %v5130 = vld [vmem:[%s5126 + $0x18] sm:$0xff]
        %v5131 = vld [vmem:[%s5126 + $0x20] sm:$0xff]
        %v5132 = vld [vmem:[%s5126 + $0x28] sm:$0xff]
        %v5133 = vld [vmem:[%s5126 + $0x30] sm:$0xff]
        %v5134 = vld [vmem:[%s5126 + $0x38] sm:$0xff]
        %v5135 = vld [vmem:[%s5126 + $0x40] sm:$0xff]
        %v5136 = vld [vmem:[%s5126 + $0x48] sm:$0xff]
        %v5137 = vld [vmem:[%s5126 + $0x50] sm:$0xff]
        %v5138 = vld [vmem:[%s5126 + $0x58] sm:$0xff]
        %v5139 = vld [vmem:[%s5126 + $0x60] sm:$0xff]
        %v5140 = vld [vmem:[%s5126 + $0x68] sm:$0xff]
        %v5141 = vld [vmem:[%s5126 + $0x70] sm:$0xff]
        %v5142 = vld [vmem:[%s5126 + $0x78] sm:$0xff]
        %v5143 = vld [vmem:[%s5126 + $0x80] sm:$0xf]
        %v5145 = vsel %vm369, %v5111, 0
        %v5148 = vsel %vm369, %v5113, 0
        %v5151 = vsel %vm369, %v5115, 0
        %v5154 = vsel %vm369, %v5117, 0
        %v5157 = vsel %vm369, %v5119, 0
        %v5160 = vsel %vm369, %v5121, 0
        %v5163 = vsel %vm369, %v5123, 0
        %v5166 = vsel %vm369, %v5125, 0
        %v5169 = vsel %vm386, %v5143, 0
        %5171 = vmatprep.subr.mxu0 0.0
        %5172 = vmatpush1.msra.mxu0 %v5127
        %5173 = vmatprep.subr.mxu0 0.0
        %5174 = vmatpush1.msra.mxu0 %v5128
        %5175 = vmatprep.subr.mxu0 0.0
        %5176 = vmatpush1.msra.mxu0 %v5129
        %5177 = vmatprep.subr.mxu0 0.0
        %5178 = vmatpush1.msra.mxu0 %v5130
        %5179 = vmatprep.subr.mxu0 0.0
        %5180 = vmatpush1.msra.mxu0 %v5131
        %5181 = vmatprep.subr.mxu0 0.0
        %5182 = vmatpush1.msra.mxu0 %v5132
        %5183 = vmatprep.subr.mxu0 0.0
        %5184 = vmatpush1.msra.mxu0 %v5133
        %5185 = vmatprep.subr.mxu0 0.0
        %5186 = vmatpush1.msra.mxu0 %v5134
        %5187 = vmatprep.subr.mxu0 0.0
        %5188 = vmatpush1.msra.mxu0 %v5135
        %5189 = vmatprep.subr.mxu0 0.0
        %5190 = vmatpush1.msra.mxu0 %v5136
        %5191 = vmatprep.subr.mxu0 0.0
        %5192 = vmatpush1.msra.mxu0 %v5137
        %5193 = vmatprep.subr.mxu0 0.0
        %5194 = vmatpush1.msra.mxu0 %v5138
        %5195 = vmatprep.subr.mxu0 0.0
        %5196 = vmatpush1.msra.mxu0 %v5139
        %5197 = vmatprep.subr.mxu0 0.0
        %5198 = vmatpush1.msra.mxu0 %v5140
        %5199 = vmatprep.subr.mxu0 0.0
        %5200 = vmatpush1.msra.mxu0 %v5141
        %5201 = vmatprep.subr.mxu0 0.0
        %5202 = vmatpush1.msra.mxu0 %v5142
        %5203 = vmatprep.subr.mxu0 0.0
        %5204 = vmatpush1.msra.mxu0 %v5169
        %5205 = vmatprep.subr.mxu0 0.0
        %5206 = vmatpush1.msra.mxu0 0.0
        %5207 = vmatprep.subr.mxu0 0.0
        %5208 = vmatpush1.msra.mxu0 0.0
        %5209 = vmatprep.subr.mxu0 0.0
        %5210 = vmatpush1.msra.mxu0 0.0
        %5211 = vmatprep.subr.mxu0 0.0
        %5212 = vmatpush1.msra.mxu0 0.0
        %5213 = vmatprep.subr.mxu0 0.0
        %5214 = vmatpush1.msra.mxu0 0.0
        %5215 = vmatprep.subr.mxu0 0.0
        %5216 = vmatpush1.msra.mxu0 0.0
        %5217 = vmatprep.subr.mxu0 0.0
        %5218 = vmatpush1.msra.mxu0 0.0
        %5219 = vmatprep.subr.mxu0 0.0
        %5220 = vmatpush1.msra.mxu0 0.0
        %5221 = vmatprep.subr.mxu0 0.0
        %5222 = vmatpush1.msra.mxu0 0.0
        %5223 = vmatprep.subr.mxu0 0.0
        %5224 = vmatpush1.msra.mxu0 0.0
        %5225 = vmatprep.subr.mxu0 0.0
        %5226 = vmatpush1.msra.mxu0 0.0
        %5227 = vmatprep.subr.mxu0 0.0
        %5228 = vmatpush1.msra.mxu0 0.0
        %5229 = vmatprep.subr.mxu0 0.0
        %5230 = vmatpush1.msra.mxu0 0.0
        %5231 = vmatprep.subr.mxu0 0.0
        %5232 = vmatpush1.msra.mxu0 0.0
        %5233 = vmatprep.subr.mxu0 0.0
        %5234 = vmatpush1.msra.mxu0 0.0
        %5235 = vmatprep.mubr.f32.mxu0 %v5145
        %5236 = vmatmul.mubr.f32.gmra.mrb[0].mxu0 %v5110
        %v5237 = vpop.f32.mrb[0].mxu0
        %v5238 = vadd.f32 0.0, %v5237
        %v5239 = vpop.f32.mrb[0].mxu0
        %5240 = vmatprep.mubr.f32.mxu0 %v5148
        %5241 = vmatmul.mubr.f32.gmra.mrb[0].mxu0 %v5112
        %v5242 = vpop.f32.mrb[0].mxu0
        %v5243 = vadd.f32 0.0, %v5242
        %v5244 = vpop.f32.mrb[0].mxu0
        %5245 = vmatprep.mubr.f32.mxu0 %v5151
        %5246 = vmatmul.mubr.f32.gmra.mrb[0].mxu0 %v5114
        %v5247 = vpop.f32.mrb[0].mxu0
        %v5248 = vadd.f32 0.0, %v5247
        %v5249 = vpop.f32.mrb[0].mxu0
        %5250 = vmatprep.mubr.f32.mxu0 %v5154
        %5251 = vmatmul.mubr.f32.gmra.mrb[0].mxu0 %v5116
        %v5252 = vpop.f32.mrb[0].mxu0
        %v5253 = vadd.f32 0.0, %v5252
        %v5254 = vpop.f32.mrb[0].mxu0
        %5255 = vmatprep.mubr.f32.mxu0 %v5157
        %5256 = vmatmul.mubr.f32.gmra.mrb[0].mxu0 %v5118
        %v5257 = vpop.f32.mrb[0].mxu0
        %v5258 = vadd.f32 0.0, %v5257
        %v5259 = vpop.f32.mrb[0].mxu0
        %5260 = vmatprep.mubr.f32.mxu0 %v5160
        %5261 = vmatmul.mubr.f32.gmra.mrb[0].mxu0 %v5120
        %v5262 = vpop.f32.mrb[0].mxu0
        %v5263 = vadd.f32 0.0, %v5262
        %v5264 = vpop.f32.mrb[0].mxu0
        %5265 = vmatprep.mubr.f32.mxu0 %v5163
        %5266 = vmatmul.mubr.f32.gmra.mrb[0].mxu0 %v5122
        %v5267 = vpop.f32.mrb[0].mxu0
        %v5268 = vadd.f32 0.0, %v5267
        %v5269 = vpop.f32.mrb[0].mxu0
        %5270 = vmatprep.mubr.f32.mxu0 %v5166
        %5271 = vmatmul.mubr.f32.gmra.mrb[0].mxu0 %v5124
        %v5272 = vpop.f32.mrb[0].mxu0
        %v5273 = vadd.f32 0.0, %v5272
        %v5274 = vpop.f32.mrb[0].mxu0
        %5275 = vdwg.mxu0
        %v5276 = vadd.f32 %v5101, %v5238
        %v5277 = vadd.f32 %v5102, %v5243
        %v5278 = vadd.f32 %v5103, %v5248
        %v5279 = vadd.f32 %v5104, %v5253
        %v5280 = vadd.f32 %v5105, %v5258
        %v5281 = vadd.f32 %v5106, %v5263
        %v5282 = vadd.f32 %v5107, %v5268
        %v5283 = vadd.f32 %v5108, %v5273
        %v5284 = vld [vmem:[%s5109] sm:$0xfe]
        %v5285 = vld [vmem:[%s5109 + $0x8] sm:$0xfe]
        %v5286 = vld [vmem:[%s5109 + $0x10] sm:$0x1]
        %v5287 = vld [vmem:[%s5109 + $0x18] sm:$0x1]
        %v5288 = vld [vmem:[%s5109 + $0x20] sm:$0xfe]
        %v5289 = vld [vmem:[%s5109 + $0x28] sm:$0xfe]
        %v5290 = vld [vmem:[%s5109 + $0x30] sm:$0x1]
        %v5291 = vld [vmem:[%s5109 + $0x38] sm:$0x1]
        %v5292 = vld [vmem:[%s5109 + $0x40] sm:$0xfe]
        %v5293 = vld [vmem:[%s5109 + $0x48] sm:$0xfe]
        %v5294 = vld [vmem:[%s5109 + $0x50] sm:$0x1]
        %v5295 = vld [vmem:[%s5109 + $0x58] sm:$0x1]
        %v5296 = vld [vmem:[%s5109 + $0x60] sm:$0xfe]
        %v5297 = vld [vmem:[%s5109 + $0x68] sm:$0xfe]
        %v5298 = vld [vmem:[%s5109 + $0x70] sm:$0x1]
        %v5299 = vld [vmem:[%s5109 + $0x78] sm:$0x1]
        %v5300 = vld [vmem:[%s5109 + $0x80] sm:$0xfe]
        %v5301 = vld [vmem:[%s5109 + $0x88] sm:$0xfe]
        %v5302 = vld [vmem:[%s5109 + $0x90] sm:$0x1]
        %v5303 = vld [vmem:[%s5109 + $0x98] sm:$0x1]
        %v5304 = vld [vmem:[%s5109 + $0xa0] sm:$0xfe]
        %v5305 = vld [vmem:[%s5109 + $0xa8] sm:$0xfe]
        %v5306 = vld [vmem:[%s5109 + $0xb0] sm:$0x1]
        %v5307 = vld [vmem:[%s5109 + $0xb8] sm:$0x1]
        %v5308 = vld [vmem:[%s5109 + $0xc0] sm:$0xfe]
        %v5309 = vld [vmem:[%s5109 + $0xc8] sm:$0xfe]
        %v5310 = vld [vmem:[%s5109 + $0xd0] sm:$0x1]
        %v5311 = vld [vmem:[%s5109 + $0xd8] sm:$0x1]
        %v5312 = vld [vmem:[%s5109 + $0xe0] sm:$0xfe]
        %v5313 = vld [vmem:[%s5109 + $0xe8] sm:$0xfe]
        %v5314 = vld [vmem:[%s5109 + $0xf0] sm:$0x1]
        %v5315 = vld [vmem:[%s5109 + $0xf8] sm:$0x1]
        %v5348 = vrot.slane %v5284, 1
        %v5349 = vrot.slane %v5286, 1
        %v5350 = vsel %vm294, %v5348, %v5349
        %v5351 = vrot.slane %v5285, 1
        %v5352 = vrot.slane %v5287, 1
        %v5353 = vsel %vm294, %v5351, %v5352
        %v5354 = vrot.slane %v5288, 1
        %v5355 = vrot.slane %v5290, 1
        %v5356 = vsel %vm294, %v5354, %v5355
        %v5357 = vrot.slane %v5289, 1
        %v5358 = vrot.slane %v5291, 1
        %v5359 = vsel %vm294, %v5357, %v5358
        %v5360 = vrot.slane %v5292, 1
        %v5361 = vrot.slane %v5294, 1
        %v5362 = vsel %vm294, %v5360, %v5361
        %v5363 = vrot.slane %v5293, 1
        %v5364 = vrot.slane %v5295, 1
        %v5365 = vsel %vm294, %v5363, %v5364
        %v5366 = vrot.slane %v5296, 1
        %v5367 = vrot.slane %v5298, 1
        %v5368 = vsel %vm294, %v5366, %v5367
        %v5369 = vrot.slane %v5297, 1
        %v5370 = vrot.slane %v5299, 1
        %v5371 = vsel %vm294, %v5369, %v5370
        %v5372 = vrot.slane %v5300, 1
        %v5373 = vrot.slane %v5302, 1
        %v5374 = vsel %vm294, %v5372, %v5373
        %v5375 = vrot.slane %v5301, 1
        %v5376 = vrot.slane %v5303, 1
        %v5377 = vsel %vm294, %v5375, %v5376
        %v5378 = vrot.slane %v5304, 1
        %v5379 = vrot.slane %v5306, 1
        %v5380 = vsel %vm294, %v5378, %v5379
        %v5381 = vrot.slane %v5305, 1
        %v5382 = vrot.slane %v5307, 1
        %v5383 = vsel %vm294, %v5381, %v5382
        %v5384 = vrot.slane %v5308, 1
        %v5385 = vrot.slane %v5310, 1
        %v5386 = vsel %vm294, %v5384, %v5385
        %v5387 = vrot.slane %v5309, 1
        %v5388 = vrot.slane %v5311, 1
        %v5389 = vsel %vm294, %v5387, %v5388
        %v5390 = vrot.slane %v5312, 1
        %v5391 = vrot.slane %v5314, 1
        %v5392 = vsel %vm294, %v5390, %v5391
        %v5393 = vrot.slane %v5313, 1
        %v5394 = vrot.slane %v5315, 1
        %v5395 = vsel %vm294, %v5393, %v5394
        %s5404 = scalar_lea.vmem [#allocation2], 2856
        %v5405 = vld [vmem:[%s5404] sm:$0xff]
        %v5406 = vld [vmem:[%s5404 + $0x8] sm:$0xff]
        %v5407 = vld [vmem:[%s5404 + $0x10] sm:$0xff]
        %v5408 = vld [vmem:[%s5404 + $0x18] sm:$0xff]
        %v5409 = vld [vmem:[%s5404 + $0x20] sm:$0xff]
        %v5410 = vld [vmem:[%s5404 + $0x28] sm:$0xff]
        %v5411 = vld [vmem:[%s5404 + $0x30] sm:$0xff]
        %v5412 = vld [vmem:[%s5404 + $0x38] sm:$0xff]
        %v5413 = vld [vmem:[%s5404 + $0x40] sm:$0xff]
        %v5414 = vld [vmem:[%s5404 + $0x48] sm:$0xff]
        %v5415 = vld [vmem:[%s5404 + $0x50] sm:$0xff]
        %v5416 = vld [vmem:[%s5404 + $0x58] sm:$0xff]
        %v5417 = vld [vmem:[%s5404 + $0x60] sm:$0xff]
        %v5418 = vld [vmem:[%s5404 + $0x68] sm:$0xff]
        %v5419 = vld [vmem:[%s5404 + $0x70] sm:$0xff]
        %v5420 = vld [vmem:[%s5404 + $0x78] sm:$0xff]
        %v5421 = vld [vmem:[%s5404 + $0x80] sm:$0xf]
        %v5422 = vsel %vm369, %v5353, 0
        %v5424 = vsel %vm369, %v5359, 0
        %v5426 = vsel %vm369, %v5365, 0
        %v5428 = vsel %vm369, %v5371, 0
        %v5430 = vsel %vm369, %v5377, 0
        %v5432 = vsel %vm369, %v5383, 0
        %v5434 = vsel %vm369, %v5389, 0
        %v5436 = vsel %vm369, %v5395, 0
        %v5439 = vsel %vm386, %v5421, 0
        %5441 = vmatprep.subr.mxu0 0.0
        %5442 = vmatpush1.msra.mxu0 %v5405
        %5443 = vmatprep.subr.mxu0 0.0
        %5444 = vmatpush1.msra.mxu0 %v5406
        %5445 = vmatprep.subr.mxu0 0.0
        %5446 = vmatpush1.msra.mxu0 %v5407
        %5447 = vmatprep.subr.mxu0 0.0
        %5448 = vmatpush1.msra.mxu0 %v5408
        %5449 = vmatprep.subr.mxu0 0.0
        %5450 = vmatpush1.msra.mxu0 %v5409
        %5451 = vmatprep.subr.mxu0 0.0
        %5452 = vmatpush1.msra.mxu0 %v5410
        %5453 = vmatprep.subr.mxu0 0.0
        %5454 = vmatpush1.msra.mxu0 %v5411
        %5455 = vmatprep.subr.mxu0 0.0
        %5456 = vmatpush1.msra.mxu0 %v5412
        %5457 = vmatprep.subr.mxu0 0.0
        %5458 = vmatpush1.msra.mxu0 %v5413
        %5459 = vmatprep.subr.mxu0 0.0
        %5460 = vmatpush1.msra.mxu0 %v5414
        %5461 = vmatprep.subr.mxu0 0.0
        %5462 = vmatpush1.msra.mxu0 %v5415
        %5463 = vmatprep.subr.mxu0 0.0
        %5464 = vmatpush1.msra.mxu0 %v5416
        %5465 = vmatprep.subr.mxu0 0.0
        %5466 = vmatpush1.msra.mxu0 %v5417
        %5467 = vmatprep.subr.mxu0 0.0
        %5468 = vmatpush1.msra.mxu0 %v5418
        %5469 = vmatprep.subr.mxu0 0.0
        %5470 = vmatpush1.msra.mxu0 %v5419
        %5471 = vmatprep.subr.mxu0 0.0
        %5472 = vmatpush1.msra.mxu0 %v5420
        %5473 = vmatprep.subr.mxu0 0.0
        %5474 = vmatpush1.msra.mxu0 %v5439
        %5475 = vmatprep.subr.mxu0 0.0
        %5476 = vmatpush1.msra.mxu0 0.0
        %5477 = vmatprep.subr.mxu0 0.0
        %5478 = vmatpush1.msra.mxu0 0.0
        %5479 = vmatprep.subr.mxu0 0.0
        %5480 = vmatpush1.msra.mxu0 0.0
        %5481 = vmatprep.subr.mxu0 0.0
        %5482 = vmatpush1.msra.mxu0 0.0
        %5483 = vmatprep.subr.mxu0 0.0
        %5484 = vmatpush1.msra.mxu0 0.0
        %5485 = vmatprep.subr.mxu0 0.0
        %5486 = vmatpush1.msra.mxu0 0.0
        %5487 = vmatprep.subr.mxu0 0.0
        %5488 = vmatpush1.msra.mxu0 0.0
        %5489 = vmatprep.subr.mxu0 0.0
        %5490 = vmatpush1.msra.mxu0 0.0
        %5491 = vmatprep.subr.mxu0 0.0
        %5492 = vmatpush1.msra.mxu0 0.0
        %5493 = vmatprep.subr.mxu0 0.0
        %5494 = vmatpush1.msra.mxu0 0.0
        %5495 = vmatprep.subr.mxu0 0.0
        %5496 = vmatpush1.msra.mxu0 0.0
        %5497 = vmatprep.subr.mxu0 0.0
        %5498 = vmatpush1.msra.mxu0 0.0
        %5499 = vmatprep.subr.mxu0 0.0
        %5500 = vmatpush1.msra.mxu0 0.0
        %5501 = vmatprep.subr.mxu0 0.0
        %5502 = vmatpush1.msra.mxu0 0.0
        %5503 = vmatprep.subr.mxu0 0.0
        %5504 = vmatpush1.msra.mxu0 0.0
        %5505 = vmatprep.mubr.f32.mxu0 %v5422
        %5506 = vmatmul.mubr.f32.gmra.mrb[0].mxu0 %v5350
        %v5507 = vpop.f32.mrb[0].mxu0
        %v5508 = vadd.f32 0.0, %v5507
        %v5509 = vpop.f32.mrb[0].mxu0
        %5510 = vmatprep.mubr.f32.mxu0 %v5424
        %5511 = vmatmul.mubr.f32.gmra.mrb[0].mxu0 %v5356
        %v5512 = vpop.f32.mrb[0].mxu0
        %v5513 = vadd.f32 0.0, %v5512
        %v5514 = vpop.f32.mrb[0].mxu0
        %5515 = vmatprep.mubr.f32.mxu0 %v5426
        %5516 = vmatmul.mubr.f32.gmra.mrb[0].mxu0 %v5362
        %v5517 = vpop.f32.mrb[0].mxu0
        %v5518 = vadd.f32 0.0, %v5517
        %v5519 = vpop.f32.mrb[0].mxu0
        %5520 = vmatprep.mubr.f32.mxu0 %v5428
        %5521 = vmatmul.mubr.f32.gmra.mrb[0].mxu0 %v5368
        %v5522 = vpop.f32.mrb[0].mxu0
        %v5523 = vadd.f32 0.0, %v5522
        %v5524 = vpop.f32.mrb[0].mxu0
        %5525 = vmatprep.mubr.f32.mxu0 %v5430
        %5526 = vmatmul.mubr.f32.gmra.mrb[0].mxu0 %v5374
        %v5527 = vpop.f32.mrb[0].mxu0
        %v5528 = vadd.f32 0.0, %v5527
        %v5529 = vpop.f32.mrb[0].mxu0
        %5530 = vmatprep.mubr.f32.mxu0 %v5432
        %5531 = vmatmul.mubr.f32.gmra.mrb[0].mxu0 %v5380
        %v5532 = vpop.f32.mrb[0].mxu0
        %v5533 = vadd.f32 0.0, %v5532
        %v5534 = vpop.f32.mrb[0].mxu0
        %5535 = vmatprep.mubr.f32.mxu0 %v5434
        %5536 = vmatmul.mubr.f32.gmra.mrb[0].mxu0 %v5386
        %v5537 = vpop.f32.mrb[0].mxu0
        %v5538 = vadd.f32 0.0, %v5537
        %v5539 = vpop.f32.mrb[0].mxu0
        %5540 = vmatprep.mubr.f32.mxu0 %v5436
        %5541 = vmatmul.mubr.f32.gmra.mrb[0].mxu0 %v5392
        %v5542 = vpop.f32.mrb[0].mxu0
        %v5543 = vadd.f32 0.0, %v5542
        %v5544 = vpop.f32.mrb[0].mxu0
        %5545 = vdwg.mxu0
        %v5546 = vadd.f32 %v5276, %v5508
        %v5547 = vadd.f32 %v5277, %v5513
        %v5548 = vadd.f32 %v5278, %v5518
        %v5549 = vadd.f32 %v5279, %v5523
        %v5550 = vadd.f32 %v5280, %v5528
        %v5551 = vadd.f32 %v5281, %v5533
        %v5552 = vadd.f32 %v5282, %v5538
        %v5553 = vadd.f32 %v5283, %v5543
        %v5554 = vld [vmem:[%s5109] sm:$0xfc]
        %v5555 = vld [vmem:[%s5109 + $0x8] sm:$0xfc]
        %v5556 = vld [vmem:[%s5109 + $0x10] sm:$0x3]
        %v5557 = vld [vmem:[%s5109 + $0x18] sm:$0x3]
        %v5558 = vld [vmem:[%s5109 + $0x20] sm:$0xfc]
        %v5559 = vld [vmem:[%s5109 + $0x28] sm:$0xfc]
        %v5560 = vld [vmem:[%s5109 + $0x30] sm:$0x3]
        %v5561 = vld [vmem:[%s5109 + $0x38] sm:$0x3]
        %v5562 = vld [vmem:[%s5109 + $0x40] sm:$0xfc]
        %v5563 = vld [vmem:[%s5109 + $0x48] sm:$0xfc]
        %v5564 = vld [vmem:[%s5109 + $0x50] sm:$0x3]
        %v5565 = vld [vmem:[%s5109 + $0x58] sm:$0x3]
        %v5566 = vld [vmem:[%s5109 + $0x60] sm:$0xfc]
        %v5567 = vld [vmem:[%s5109 + $0x68] sm:$0xfc]
        %v5568 = vld [vmem:[%s5109 + $0x70] sm:$0x3]
        %v5569 = vld [vmem:[%s5109 + $0x78] sm:$0x3]
        %v5570 = vld [vmem:[%s5109 + $0x80] sm:$0xfc]
        %v5571 = vld [vmem:[%s5109 + $0x88] sm:$0xfc]
        %v5572 = vld [vmem:[%s5109 + $0x90] sm:$0x3]
        %v5573 = vld [vmem:[%s5109 + $0x98] sm:$0x3]
        %v5574 = vld [vmem:[%s5109 + $0xa0] sm:$0xfc]
        %v5575 = vld [vmem:[%s5109 + $0xa8] sm:$0xfc]
        %v5576 = vld [vmem:[%s5109 + $0xb0] sm:$0x3]
        %v5577 = vld [vmem:[%s5109 + $0xb8] sm:$0x3]
        %v5578 = vld [vmem:[%s5109 + $0xc0] sm:$0xfc]
        %v5579 = vld [vmem:[%s5109 + $0xc8] sm:$0xfc]
        %v5580 = vld [vmem:[%s5109 + $0xd0] sm:$0x3]
        %v5581 = vld [vmem:[%s5109 + $0xd8] sm:$0x3]
        %v5582 = vld [vmem:[%s5109 + $0xe0] sm:$0xfc]
        %v5583 = vld [vmem:[%s5109 + $0xe8] sm:$0xfc]
        %v5584 = vld [vmem:[%s5109 + $0xf0] sm:$0x3]
        %v5585 = vld [vmem:[%s5109 + $0xf8] sm:$0x3]
        %v5618 = vrot.slane %v5554, 2
        %v5619 = vrot.slane %v5556, 2
        %v5620 = vsel %vm691, %v5618, %v5619
        %v5621 = vrot.slane %v5555, 2
        %v5622 = vrot.slane %v5557, 2
        %v5623 = vsel %vm691, %v5621, %v5622
        %v5624 = vrot.slane %v5558, 2
        %v5625 = vrot.slane %v5560, 2
        %v5626 = vsel %vm691, %v5624, %v5625
        %v5627 = vrot.slane %v5559, 2
        %v5628 = vrot.slane %v5561, 2
        %v5629 = vsel %vm691, %v5627, %v5628
        %v5630 = vrot.slane %v5562, 2
        %v5631 = vrot.slane %v5564, 2
        %v5632 = vsel %vm691, %v5630, %v5631
        %v5633 = vrot.slane %v5563, 2
        %v5634 = vrot.slane %v5565, 2
        %v5635 = vsel %vm691, %v5633, %v5634
        %v5636 = vrot.slane %v5566, 2
        %v5637 = vrot.slane %v5568, 2
        %v5638 = vsel %vm691, %v5636, %v5637
        %v5639 = vrot.slane %v5567, 2
        %v5640 = vrot.slane %v5569, 2
        %v5641 = vsel %vm691, %v5639, %v5640
        %v5642 = vrot.slane %v5570, 2
        %v5643 = vrot.slane %v5572, 2
        %v5644 = vsel %vm691, %v5642, %v5643
        %v5645 = vrot.slane %v5571, 2
        %v5646 = vrot.slane %v5573, 2
        %v5647 = vsel %vm691, %v5645, %v5646
        %v5648 = vrot.slane %v5574, 2
        %v5649 = vrot.slane %v5576, 2
        %v5650 = vsel %vm691, %v5648, %v5649
        %v5651 = vrot.slane %v5575, 2
        %v5652 = vrot.slane %v5577, 2
        %v5653 = vsel %vm691, %v5651, %v5652
        %v5654 = vrot.slane %v5578, 2
        %v5655 = vrot.slane %v5580, 2
        %v5656 = vsel %vm691, %v5654, %v5655
        %v5657 = vrot.slane %v5579, 2
        %v5658 = vrot.slane %v5581, 2
        %v5659 = vsel %vm691, %v5657, %v5658
        %v5660 = vrot.slane %v5582, 2
        %v5661 = vrot.slane %v5584, 2
        %v5662 = vsel %vm691, %v5660, %v5661
        %v5663 = vrot.slane %v5583, 2
        %v5664 = vrot.slane %v5585, 2
        %v5665 = vsel %vm691, %v5663, %v5664
        %s5674 = scalar_lea.vmem [#allocation2], 2992
        %v5675 = vld [vmem:[%s5674] sm:$0xff]
        %v5676 = vld [vmem:[%s5674 + $0x8] sm:$0xff]
        %v5677 = vld [vmem:[%s5674 + $0x10] sm:$0xff]
        %v5678 = vld [vmem:[%s5674 + $0x18] sm:$0xff]
        %v5679 = vld [vmem:[%s5674 + $0x20] sm:$0xff]
        %v5680 = vld [vmem:[%s5674 + $0x28] sm:$0xff]
        %v5681 = vld [vmem:[%s5674 + $0x30] sm:$0xff]
        %v5682 = vld [vmem:[%s5674 + $0x38] sm:$0xff]
        %v5683 = vld [vmem:[%s5674 + $0x40] sm:$0xff]
        %v5684 = vld [vmem:[%s5674 + $0x48] sm:$0xff]
        %v5685 = vld [vmem:[%s5674 + $0x50] sm:$0xff]
        %v5686 = vld [vmem:[%s5674 + $0x58] sm:$0xff]
        %v5687 = vld [vmem:[%s5674 + $0x60] sm:$0xff]
        %v5688 = vld [vmem:[%s5674 + $0x68] sm:$0xff]
        %v5689 = vld [vmem:[%s5674 + $0x70] sm:$0xff]
        %v5690 = vld [vmem:[%s5674 + $0x78] sm:$0xff]
        %v5691 = vld [vmem:[%s5674 + $0x80] sm:$0xf]
        %v5692 = vsel %vm369, %v5623, 0
        %v5694 = vsel %vm369, %v5629, 0
        %v5696 = vsel %vm369, %v5635, 0
        %v5698 = vsel %vm369, %v5641, 0
        %v5700 = vsel %vm369, %v5647, 0
        %v5702 = vsel %vm369, %v5653, 0
        %v5704 = vsel %vm369, %v5659, 0
        %v5706 = vsel %vm369, %v5665, 0
        %v5709 = vsel %vm386, %v5691, 0
        %5711 = vmatprep.subr.mxu0 0.0
        %5712 = vmatpush1.msra.mxu0 %v5675
        %5713 = vmatprep.subr.mxu0 0.0
        %5714 = vmatpush1.msra.mxu0 %v5676
        %5715 = vmatprep.subr.mxu0 0.0
        %5716 = vmatpush1.msra.mxu0 %v5677
        %5717 = vmatprep.subr.mxu0 0.0
        %5718 = vmatpush1.msra.mxu0 %v5678
        %5719 = vmatprep.subr.mxu0 0.0
        %5720 = vmatpush1.msra.mxu0 %v5679
        %5721 = vmatprep.subr.mxu0 0.0
        %5722 = vmatpush1.msra.mxu0 %v5680
        %5723 = vmatprep.subr.mxu0 0.0
        %5724 = vmatpush1.msra.mxu0 %v5681
        %5725 = vmatprep.subr.mxu0 0.0
        %5726 = vmatpush1.msra.mxu0 %v5682
        %5727 = vmatprep.subr.mxu0 0.0
        %5728 = vmatpush1.msra.mxu0 %v5683
        %5729 = vmatprep.subr.mxu0 0.0
        %5730 = vmatpush1.msra.mxu0 %v5684
        %5731 = vmatprep.subr.mxu0 0.0
        %5732 = vmatpush1.msra.mxu0 %v5685
        %5733 = vmatprep.subr.mxu0 0.0
        %5734 = vmatpush1.msra.mxu0 %v5686
        %5735 = vmatprep.subr.mxu0 0.0
        %5736 = vmatpush1.msra.mxu0 %v5687
        %5737 = vmatprep.subr.mxu0 0.0
        %5738 = vmatpush1.msra.mxu0 %v5688
        %5739 = vmatprep.subr.mxu0 0.0
        %5740 = vmatpush1.msra.mxu0 %v5689
        %5741 = vmatprep.subr.mxu0 0.0
        %5742 = vmatpush1.msra.mxu0 %v5690
        %5743 = vmatprep.subr.mxu0 0.0
        %5744 = vmatpush1.msra.mxu0 %v5709
        %5745 = vmatprep.subr.mxu0 0.0
        %5746 = vmatpush1.msra.mxu0 0.0
        %5747 = vmatprep.subr.mxu0 0.0
        %5748 = vmatpush1.msra.mxu0 0.0
        %5749 = vmatprep.subr.mxu0 0.0
        %5750 = vmatpush1.msra.mxu0 0.0
        %5751 = vmatprep.subr.mxu0 0.0
        %5752 = vmatpush1.msra.mxu0 0.0
        %5753 = vmatprep.subr.mxu0 0.0
        %5754 = vmatpush1.msra.mxu0 0.0
        %5755 = vmatprep.subr.mxu0 0.0
        %5756 = vmatpush1.msra.mxu0 0.0
        %5757 = vmatprep.subr.mxu0 0.0
        %5758 = vmatpush1.msra.mxu0 0.0
        %5759 = vmatprep.subr.mxu0 0.0
        %5760 = vmatpush1.msra.mxu0 0.0
        %5761 = vmatprep.subr.mxu0 0.0
        %5762 = vmatpush1.msra.mxu0 0.0
        %5763 = vmatprep.subr.mxu0 0.0
        %5764 = vmatpush1.msra.mxu0 0.0
        %5765 = vmatprep.subr.mxu0 0.0
        %5766 = vmatpush1.msra.mxu0 0.0
        %5767 = vmatprep.subr.mxu0 0.0
        %5768 = vmatpush1.msra.mxu0 0.0
        %5769 = vmatprep.subr.mxu0 0.0
        %5770 = vmatpush1.msra.mxu0 0.0
        %5771 = vmatprep.subr.mxu0 0.0
        %5772 = vmatpush1.msra.mxu0 0.0
        %5773 = vmatprep.subr.mxu0 0.0
        %5774 = vmatpush1.msra.mxu0 0.0
        %5775 = vmatprep.mubr.f32.mxu0 %v5692
        %5776 = vmatmul.mubr.f32.gmra.mrb[0].mxu0 %v5620
        %v5777 = vpop.f32.mrb[0].mxu0
        %v5778 = vadd.f32 0.0, %v5777
        %v5779 = vpop.f32.mrb[0].mxu0
        %5780 = vmatprep.mubr.f32.mxu0 %v5694
        %5781 = vmatmul.mubr.f32.gmra.mrb[0].mxu0 %v5626
        %v5782 = vpop.f32.mrb[0].mxu0
        %v5783 = vadd.f32 0.0, %v5782
        %v5784 = vpop.f32.mrb[0].mxu0
        %5785 = vmatprep.mubr.f32.mxu0 %v5696
        %5786 = vmatmul.mubr.f32.gmra.mrb[0].mxu0 %v5632
        %v5787 = vpop.f32.mrb[0].mxu0
        %v5788 = vadd.f32 0.0, %v5787
        %v5789 = vpop.f32.mrb[0].mxu0
        %5790 = vmatprep.mubr.f32.mxu0 %v5698
        %5791 = vmatmul.mubr.f32.gmra.mrb[0].mxu0 %v5638
        %v5792 = vpop.f32.mrb[0].mxu0
        %v5793 = vadd.f32 0.0, %v5792
        %v5794 = vpop.f32.mrb[0].mxu0
        %5795 = vmatprep.mubr.f32.mxu0 %v5700
        %5796 = vmatmul.mubr.f32.gmra.mrb[0].mxu0 %v5644
        %v5797 = vpop.f32.mrb[0].mxu0
        %v5798 = vadd.f32 0.0, %v5797
        %v5799 = vpop.f32.mrb[0].mxu0
        %5800 = vmatprep.mubr.f32.mxu0 %v5702
        %5801 = vmatmul.mubr.f32.gmra.mrb[0].mxu0 %v5650
        %v5802 = vpop.f32.mrb[0].mxu0
        %v5803 = vadd.f32 0.0, %v5802
        %v5804 = vpop.f32.mrb[0].mxu0
        %5805 = vmatprep.mubr.f32.mxu0 %v5704
        %5806 = vmatmul.mubr.f32.gmra.mrb[0].mxu0 %v5656
        %v5807 = vpop.f32.mrb[0].mxu0
        %v5808 = vadd.f32 0.0, %v5807
        %v5809 = vpop.f32.mrb[0].mxu0
        %5810 = vmatprep.mubr.f32.mxu0 %v5706
        %5811 = vmatmul.mubr.f32.gmra.mrb[0].mxu0 %v5662
        %v5812 = vpop.f32.mrb[0].mxu0
        %v5813 = vadd.f32 0.0, %v5812
        %v5814 = vpop.f32.mrb[0].mxu0
        %5815 = vdwg.mxu0
        %v5816 = vadd.f32 %v5546, %v5778
        %v5817 = vadd.f32 %v5547, %v5783
        %v5818 = vadd.f32 %v5548, %v5788
        %v5819 = vadd.f32 %v5549, %v5793
        %v5820 = vadd.f32 %v5550, %v5798
        %v5821 = vadd.f32 %v5551, %v5803
        %v5822 = vadd.f32 %v5552, %v5808
        %v5823 = vadd.f32 %v5553, %v5813
        %v5824 = vld [vmem:[%s5109] sm:$0xf8]
        %v5825 = vld [vmem:[%s5109 + $0x8] sm:$0xf8]
        %v5826 = vld [vmem:[%s5109 + $0x10] sm:$0x7]
        %v5827 = vld [vmem:[%s5109 + $0x18] sm:$0x7]
        %v5828 = vld [vmem:[%s5109 + $0x20] sm:$0xf8]
        %v5829 = vld [vmem:[%s5109 + $0x28] sm:$0xf8]
        %v5830 = vld [vmem:[%s5109 + $0x30] sm:$0x7]
        %v5831 = vld [vmem:[%s5109 + $0x38] sm:$0x7]
        %v5832 = vld [vmem:[%s5109 + $0x40] sm:$0xf8]
        %v5833 = vld [vmem:[%s5109 + $0x48] sm:$0xf8]
        %v5834 = vld [vmem:[%s5109 + $0x50] sm:$0x7]
        %v5835 = vld [vmem:[%s5109 + $0x58] sm:$0x7]
        %v5836 = vld [vmem:[%s5109 + $0x60] sm:$0xf8]
        %v5837 = vld [vmem:[%s5109 + $0x68] sm:$0xf8]
        %v5838 = vld [vmem:[%s5109 + $0x70] sm:$0x7]
        %v5839 = vld [vmem:[%s5109 + $0x78] sm:$0x7]
        %v5840 = vld [vmem:[%s5109 + $0x80] sm:$0xf8]
        %v5841 = vld [vmem:[%s5109 + $0x88] sm:$0xf8]
        %v5842 = vld [vmem:[%s5109 + $0x90] sm:$0x7]
        %v5843 = vld [vmem:[%s5109 + $0x98] sm:$0x7]
        %v5844 = vld [vmem:[%s5109 + $0xa0] sm:$0xf8]
        %v5845 = vld [vmem:[%s5109 + $0xa8] sm:$0xf8]
        %v5846 = vld [vmem:[%s5109 + $0xb0] sm:$0x7]
        %v5847 = vld [vmem:[%s5109 + $0xb8] sm:$0x7]
        %v5848 = vld [vmem:[%s5109 + $0xc0] sm:$0xf8]
        %v5849 = vld [vmem:[%s5109 + $0xc8] sm:$0xf8]
        %v5850 = vld [vmem:[%s5109 + $0xd0] sm:$0x7]
        %v5851 = vld [vmem:[%s5109 + $0xd8] sm:$0x7]
        %v5852 = vld [vmem:[%s5109 + $0xe0] sm:$0xf8]
        %v5853 = vld [vmem:[%s5109 + $0xe8] sm:$0xf8]
        %v5854 = vld [vmem:[%s5109 + $0xf0] sm:$0x7]
        %v5855 = vld [vmem:[%s5109 + $0xf8] sm:$0x7]
        %v5888 = vrot.slane %v5824, 3
        %v5889 = vrot.slane %v5826, 3
        %v5890 = vsel %vm962, %v5888, %v5889
        %v5891 = vrot.slane %v5825, 3
        %v5892 = vrot.slane %v5827, 3
        %v5893 = vsel %vm962, %v5891, %v5892
        %v5894 = vrot.slane %v5828, 3
        %v5895 = vrot.slane %v5830, 3
        %v5896 = vsel %vm962, %v5894, %v5895
        %v5897 = vrot.slane %v5829, 3
        %v5898 = vrot.slane %v5831, 3
        %v5899 = vsel %vm962, %v5897, %v5898
        %v5900 = vrot.slane %v5832, 3
        %v5901 = vrot.slane %v5834, 3
        %v5902 = vsel %vm962, %v5900, %v5901
        %v5903 = vrot.slane %v5833, 3
        %v5904 = vrot.slane %v5835, 3
        %v5905 = vsel %vm962, %v5903, %v5904
        %v5906 = vrot.slane %v5836, 3
        %v5907 = vrot.slane %v5838, 3
        %v5908 = vsel %vm962, %v5906, %v5907
        %v5909 = vrot.slane %v5837, 3
        %v5910 = vrot.slane %v5839, 3
        %v5911 = vsel %vm962, %v5909, %v5910
        %v5912 = vrot.slane %v5840, 3
        %v5913 = vrot.slane %v5842, 3
        %v5914 = vsel %vm962, %v5912, %v5913
        %v5915 = vrot.slane %v5841, 3
        %v5916 = vrot.slane %v5843, 3
        %v5917 = vsel %vm962, %v5915, %v5916
        %v5918 = vrot.slane %v5844, 3
        %v5919 = vrot.slane %v5846, 3
        %v5920 = vsel %vm962, %v5918, %v5919
        %v5921 = vrot.slane %v5845, 3
        %v5922 = vrot.slane %v5847, 3
        %v5923 = vsel %vm962, %v5921, %v5922
        %v5924 = vrot.slane %v5848, 3
        %v5925 = vrot.slane %v5850, 3
        %v5926 = vsel %vm962, %v5924, %v5925
        %v5927 = vrot.slane %v5849, 3
        %v5928 = vrot.slane %v5851, 3
        %v5929 = vsel %vm962, %v5927, %v5928
        %v5930 = vrot.slane %v5852, 3
        %v5931 = vrot.slane %v5854, 3
        %v5932 = vsel %vm962, %v5930, %v5931
        %v5933 = vrot.slane %v5853, 3
        %v5934 = vrot.slane %v5855, 3
        %v5935 = vsel %vm962, %v5933, %v5934
        %s5944 = scalar_lea.vmem [#allocation2], 3128
        %v5945 = vld [vmem:[%s5944] sm:$0xff]
        %v5946 = vld [vmem:[%s5944 + $0x8] sm:$0xff]
        %v5947 = vld [vmem:[%s5944 + $0x10] sm:$0xff]
        %v5948 = vld [vmem:[%s5944 + $0x18] sm:$0xff]
        %v5949 = vld [vmem:[%s5944 + $0x20] sm:$0xff]
        %v5950 = vld [vmem:[%s5944 + $0x28] sm:$0xff]
        %v5951 = vld [vmem:[%s5944 + $0x30] sm:$0xff]
        %v5952 = vld [vmem:[%s5944 + $0x38] sm:$0xff]
        %v5953 = vld [vmem:[%s5944 + $0x40] sm:$0xff]
        %v5954 = vld [vmem:[%s5944 + $0x48] sm:$0xff]
        %v5955 = vld [vmem:[%s5944 + $0x50] sm:$0xff]
        %v5956 = vld [vmem:[%s5944 + $0x58] sm:$0xff]
        %v5957 = vld [vmem:[%s5944 + $0x60] sm:$0xff]
        %v5958 = vld [vmem:[%s5944 + $0x68] sm:$0xff]
        %v5959 = vld [vmem:[%s5944 + $0x70] sm:$0xff]
        %v5960 = vld [vmem:[%s5944 + $0x78] sm:$0xff]
        %v5961 = vld [vmem:[%s5944 + $0x80] sm:$0xf]
        %v5962 = vsel %vm369, %v5893, 0
        %v5964 = vsel %vm369, %v5899, 0
        %v5966 = vsel %vm369, %v5905, 0
        %v5968 = vsel %vm369, %v5911, 0
        %v5970 = vsel %vm369, %v5917, 0
        %v5972 = vsel %vm369, %v5923, 0
        %v5974 = vsel %vm369, %v5929, 0
        %v5976 = vsel %vm369, %v5935, 0
        %v5979 = vsel %vm386, %v5961, 0
        %5981 = vmatprep.subr.mxu0 0.0
        %5982 = vmatpush1.msra.mxu0 %v5945
        %5983 = vmatprep.subr.mxu0 0.0
        %5984 = vmatpush1.msra.mxu0 %v5946
        %5985 = vmatprep.subr.mxu0 0.0
        %5986 = vmatpush1.msra.mxu0 %v5947
        %5987 = vmatprep.subr.mxu0 0.0
        %5988 = vmatpush1.msra.mxu0 %v5948
        %5989 = vmatprep.subr.mxu0 0.0
        %5990 = vmatpush1.msra.mxu0 %v5949
        %5991 = vmatprep.subr.mxu0 0.0
        %5992 = vmatpush1.msra.mxu0 %v5950
        %5993 = vmatprep.subr.mxu0 0.0
        %5994 = vmatpush1.msra.mxu0 %v5951
        %5995 = vmatprep.subr.mxu0 0.0
        %5996 = vmatpush1.msra.mxu0 %v5952
        %5997 = vmatprep.subr.mxu0 0.0
        %5998 = vmatpush1.msra.mxu0 %v5953
        %5999 = vmatprep.subr.mxu0 0.0
        %6000 = vmatpush1.msra.mxu0 %v5954
        %6001 = vmatprep.subr.mxu0 0.0
        %6002 = vmatpush1.msra.mxu0 %v5955
        %6003 = vmatprep.subr.mxu0 0.0
        %6004 = vmatpush1.msra.mxu0 %v5956
        %6005 = vmatprep.subr.mxu0 0.0
        %6006 = vmatpush1.msra.mxu0 %v5957
        %6007 = vmatprep.subr.mxu0 0.0
        %6008 = vmatpush1.msra.mxu0 %v5958
        %6009 = vmatprep.subr.mxu0 0.0
        %6010 = vmatpush1.msra.mxu0 %v5959
        %6011 = vmatprep.subr.mxu0 0.0
        %6012 = vmatpush1.msra.mxu0 %v5960
        %6013 = vmatprep.subr.mxu0 0.0
        %6014 = vmatpush1.msra.mxu0 %v5979
        %6015 = vmatprep.subr.mxu0 0.0
        %6016 = vmatpush1.msra.mxu0 0.0
        %6017 = vmatprep.subr.mxu0 0.0
        %6018 = vmatpush1.msra.mxu0 0.0
        %6019 = vmatprep.subr.mxu0 0.0
        %6020 = vmatpush1.msra.mxu0 0.0
        %6021 = vmatprep.subr.mxu0 0.0
        %6022 = vmatpush1.msra.mxu0 0.0
        %6023 = vmatprep.subr.mxu0 0.0
        %6024 = vmatpush1.msra.mxu0 0.0
        %6025 = vmatprep.subr.mxu0 0.0
        %6026 = vmatpush1.msra.mxu0 0.0
        %6027 = vmatprep.subr.mxu0 0.0
        %6028 = vmatpush1.msra.mxu0 0.0
        %6029 = vmatprep.subr.mxu0 0.0
        %6030 = vmatpush1.msra.mxu0 0.0
        %6031 = vmatprep.subr.mxu0 0.0
        %6032 = vmatpush1.msra.mxu0 0.0
        %6033 = vmatprep.subr.mxu0 0.0
        %6034 = vmatpush1.msra.mxu0 0.0
        %6035 = vmatprep.subr.mxu0 0.0
        %6036 = vmatpush1.msra.mxu0 0.0
        %6037 = vmatprep.subr.mxu0 0.0
        %6038 = vmatpush1.msra.mxu0 0.0
        %6039 = vmatprep.subr.mxu0 0.0
        %6040 = vmatpush1.msra.mxu0 0.0
        %6041 = vmatprep.subr.mxu0 0.0
        %6042 = vmatpush1.msra.mxu0 0.0
        %6043 = vmatprep.subr.mxu0 0.0
        %6044 = vmatpush1.msra.mxu0 0.0
        %6045 = vmatprep.mubr.f32.mxu0 %v5962
        %6046 = vmatmul.mubr.f32.gmra.mrb[0].mxu0 %v5890
        %v6047 = vpop.f32.mrb[0].mxu0
        %v6048 = vadd.f32 0.0, %v6047
        %v6049 = vpop.f32.mrb[0].mxu0
        %6050 = vmatprep.mubr.f32.mxu0 %v5964
        %6051 = vmatmul.mubr.f32.gmra.mrb[0].mxu0 %v5896
        %v6052 = vpop.f32.mrb[0].mxu0
        %v6053 = vadd.f32 0.0, %v6052
        %v6054 = vpop.f32.mrb[0].mxu0
        %6055 = vmatprep.mubr.f32.mxu0 %v5966
        %6056 = vmatmul.mubr.f32.gmra.mrb[0].mxu0 %v5902
        %v6057 = vpop.f32.mrb[0].mxu0
        %v6058 = vadd.f32 0.0, %v6057
        %v6059 = vpop.f32.mrb[0].mxu0
        %6060 = vmatprep.mubr.f32.mxu0 %v5968
        %6061 = vmatmul.mubr.f32.gmra.mrb[0].mxu0 %v5908
        %v6062 = vpop.f32.mrb[0].mxu0
        %v6063 = vadd.f32 0.0, %v6062
        %v6064 = vpop.f32.mrb[0].mxu0
        %6065 = vmatprep.mubr.f32.mxu0 %v5970
        %6066 = vmatmul.mubr.f32.gmra.mrb[0].mxu0 %v5914
        %v6067 = vpop.f32.mrb[0].mxu0
        %v6068 = vadd.f32 0.0, %v6067
        %v6069 = vpop.f32.mrb[0].mxu0
        %6070 = vmatprep.mubr.f32.mxu0 %v5972
        %6071 = vmatmul.mubr.f32.gmra.mrb[0].mxu0 %v5920
        %v6072 = vpop.f32.mrb[0].mxu0
        %v6073 = vadd.f32 0.0, %v6072
        %v6074 = vpop.f32.mrb[0].mxu0
        %6075 = vmatprep.mubr.f32.mxu0 %v5974
        %6076 = vmatmul.mubr.f32.gmra.mrb[0].mxu0 %v5926
        %v6077 = vpop.f32.mrb[0].mxu0
        %v6078 = vadd.f32 0.0, %v6077
        %v6079 = vpop.f32.mrb[0].mxu0
        %6080 = vmatprep.mubr.f32.mxu0 %v5976
        %6081 = vmatmul.mubr.f32.gmra.mrb[0].mxu0 %v5932
        %v6082 = vpop.f32.mrb[0].mxu0
        %v6083 = vadd.f32 0.0, %v6082
        %v6084 = vpop.f32.mrb[0].mxu0
        %6085 = vdwg.mxu0
        %v6086 = vadd.f32 %v5816, %v6048
        %v6087 = vadd.f32 %v5817, %v6053
        %v6088 = vadd.f32 %v5818, %v6058
        %v6089 = vadd.f32 %v5819, %v6063
        %v6090 = vadd.f32 %v5820, %v6068
        %v6091 = vadd.f32 %v5821, %v6073
        %v6092 = vadd.f32 %v5822, %v6078
        %v6093 = vadd.f32 %v5823, %v6083
        %s6094 = scalar_lea.vmem %s196, 192
        %v6095 = vld [vmem:[%s6094] sm:$0xff]
        %v6096 = vld [vmem:[%s6094 + $0x8] sm:$0xff]
        %v6097 = vld [vmem:[%s6094 + $0x20] sm:$0xff]
        %v6098 = vld [vmem:[%s6094 + $0x28] sm:$0xff]
        %v6099 = vld [vmem:[%s6094 + $0x40] sm:$0xff]
        %v6100 = vld [vmem:[%s6094 + $0x48] sm:$0xff]
        %v6101 = vld [vmem:[%s6094 + $0x60] sm:$0xff]
        %v6102 = vld [vmem:[%s6094 + $0x68] sm:$0xff]
        %v6103 = vld [vmem:[%s6094 + $0x80] sm:$0xff]
        %v6104 = vld [vmem:[%s6094 + $0x88] sm:$0xff]
        %v6105 = vld [vmem:[%s6094 + $0xa0] sm:$0xff]
        %v6106 = vld [vmem:[%s6094 + $0xa8] sm:$0xff]
        %v6107 = vld [vmem:[%s6094 + $0xc0] sm:$0xff]
        %v6108 = vld [vmem:[%s6094 + $0xc8] sm:$0xff]
        %v6109 = vld [vmem:[%s6094 + $0xe0] sm:$0xff]
        %v6110 = vld [vmem:[%s6094 + $0xe8] sm:$0xff]
        %s6111 = scalar_lea.vmem [#allocation2], 3264
        %v6112 = vld [vmem:[%s6111] sm:$0xff]
        %v6113 = vld [vmem:[%s6111 + $0x8] sm:$0xff]
        %v6114 = vld [vmem:[%s6111 + $0x10] sm:$0xff]
        %v6115 = vld [vmem:[%s6111 + $0x18] sm:$0xff]
        %v6116 = vld [vmem:[%s6111 + $0x20] sm:$0xff]
        %v6117 = vld [vmem:[%s6111 + $0x28] sm:$0xff]
        %v6118 = vld [vmem:[%s6111 + $0x30] sm:$0xff]
        %v6119 = vld [vmem:[%s6111 + $0x38] sm:$0xff]
        %v6120 = vld [vmem:[%s6111 + $0x40] sm:$0xff]
        %v6121 = vld [vmem:[%s6111 + $0x48] sm:$0xff]
        %v6122 = vld [vmem:[%s6111 + $0x50] sm:$0xff]
        %v6123 = vld [vmem:[%s6111 + $0x58] sm:$0xff]
        %v6124 = vld [vmem:[%s6111 + $0x60] sm:$0xff]
        %v6125 = vld [vmem:[%s6111 + $0x68] sm:$0xff]
        %v6126 = vld [vmem:[%s6111 + $0x70] sm:$0xff]
        %v6127 = vld [vmem:[%s6111 + $0x78] sm:$0xff]
        %v6128 = vld [vmem:[%s6111 + $0x80] sm:$0xf]
        %v6130 = vsel %vm369, %v6096, 0
        %v6133 = vsel %vm369, %v6098, 0
        %v6136 = vsel %vm369, %v6100, 0
        %v6139 = vsel %vm369, %v6102, 0
        %v6142 = vsel %vm369, %v6104, 0
        %v6145 = vsel %vm369, %v6106, 0
        %v6148 = vsel %vm369, %v6108, 0
        %v6151 = vsel %vm369, %v6110, 0
        %v6154 = vsel %vm386, %v6128, 0
        %6156 = vmatprep.subr.mxu0 0.0
        %6157 = vmatpush1.msra.mxu0 %v6112
        %6158 = vmatprep.subr.mxu0 0.0
        %6159 = vmatpush1.msra.mxu0 %v6113
        %6160 = vmatprep.subr.mxu0 0.0
        %6161 = vmatpush1.msra.mxu0 %v6114
        %6162 = vmatprep.subr.mxu0 0.0
        %6163 = vmatpush1.msra.mxu0 %v6115
        %6164 = vmatprep.subr.mxu0 0.0
        %6165 = vmatpush1.msra.mxu0 %v6116
        %6166 = vmatprep.subr.mxu0 0.0
        %6167 = vmatpush1.msra.mxu0 %v6117
        %6168 = vmatprep.subr.mxu0 0.0
        %6169 = vmatpush1.msra.mxu0 %v6118
        %6170 = vmatprep.subr.mxu0 0.0
        %6171 = vmatpush1.msra.mxu0 %v6119
        %6172 = vmatprep.subr.mxu0 0.0
        %6173 = vmatpush1.msra.mxu0 %v6120
        %6174 = vmatprep.subr.mxu0 0.0
        %6175 = vmatpush1.msra.mxu0 %v6121
        %6176 = vmatprep.subr.mxu0 0.0
        %6177 = vmatpush1.msra.mxu0 %v6122
        %6178 = vmatprep.subr.mxu0 0.0
        %6179 = vmatpush1.msra.mxu0 %v6123
        %6180 = vmatprep.subr.mxu0 0.0
        %6181 = vmatpush1.msra.mxu0 %v6124
        %6182 = vmatprep.subr.mxu0 0.0
        %6183 = vmatpush1.msra.mxu0 %v6125
        %6184 = vmatprep.subr.mxu0 0.0
        %6185 = vmatpush1.msra.mxu0 %v6126
        %6186 = vmatprep.subr.mxu0 0.0
        %6187 = vmatpush1.msra.mxu0 %v6127
        %6188 = vmatprep.subr.mxu0 0.0
        %6189 = vmatpush1.msra.mxu0 %v6154
        %6190 = vmatprep.subr.mxu0 0.0
        %6191 = vmatpush1.msra.mxu0 0.0
        %6192 = vmatprep.subr.mxu0 0.0
        %6193 = vmatpush1.msra.mxu0 0.0
        %6194 = vmatprep.subr.mxu0 0.0
        %6195 = vmatpush1.msra.mxu0 0.0
        %6196 = vmatprep.subr.mxu0 0.0
        %6197 = vmatpush1.msra.mxu0 0.0
        %6198 = vmatprep.subr.mxu0 0.0
        %6199 = vmatpush1.msra.mxu0 0.0
        %6200 = vmatprep.subr.mxu0 0.0
        %6201 = vmatpush1.msra.mxu0 0.0
        %6202 = vmatprep.subr.mxu0 0.0
        %6203 = vmatpush1.msra.mxu0 0.0
        %6204 = vmatprep.subr.mxu0 0.0
        %6205 = vmatpush1.msra.mxu0 0.0
        %6206 = vmatprep.subr.mxu0 0.0
        %6207 = vmatpush1.msra.mxu0 0.0
        %6208 = vmatprep.subr.mxu0 0.0
        %6209 = vmatpush1.msra.mxu0 0.0
        %6210 = vmatprep.subr.mxu0 0.0
        %6211 = vmatpush1.msra.mxu0 0.0
        %6212 = vmatprep.subr.mxu0 0.0
        %6213 = vmatpush1.msra.mxu0 0.0
        %6214 = vmatprep.subr.mxu0 0.0
        %6215 = vmatpush1.msra.mxu0 0.0
        %6216 = vmatprep.subr.mxu0 0.0
        %6217 = vmatpush1.msra.mxu0 0.0
        %6218 = vmatprep.subr.mxu0 0.0
        %6219 = vmatpush1.msra.mxu0 0.0
        %6220 = vmatprep.mubr.f32.mxu0 %v6130
        %6221 = vmatmul.mubr.f32.gmra.mrb[0].mxu0 %v6095
        %v6222 = vpop.f32.mrb[0].mxu0
        %v6223 = vadd.f32 0.0, %v6222
        %v6224 = vpop.f32.mrb[0].mxu0
        %6225 = vmatprep.mubr.f32.mxu0 %v6133
        %6226 = vmatmul.mubr.f32.gmra.mrb[0].mxu0 %v6097
        %v6227 = vpop.f32.mrb[0].mxu0
        %v6228 = vadd.f32 0.0, %v6227
        %v6229 = vpop.f32.mrb[0].mxu0
        %6230 = vmatprep.mubr.f32.mxu0 %v6136
        %6231 = vmatmul.mubr.f32.gmra.mrb[0].mxu0 %v6099
        %v6232 = vpop.f32.mrb[0].mxu0
        %v6233 = vadd.f32 0.0, %v6232
        %v6234 = vpop.f32.mrb[0].mxu0
        %6235 = vmatprep.mubr.f32.mxu0 %v6139
        %6236 = vmatmul.mubr.f32.gmra.mrb[0].mxu0 %v6101
        %v6237 = vpop.f32.mrb[0].mxu0
        %v6238 = vadd.f32 0.0, %v6237
        %v6239 = vpop.f32.mrb[0].mxu0
        %6240 = vmatprep.mubr.f32.mxu0 %v6142
        %6241 = vmatmul.mubr.f32.gmra.mrb[0].mxu0 %v6103
        %v6242 = vpop.f32.mrb[0].mxu0
        %v6243 = vadd.f32 0.0, %v6242
        %v6244 = vpop.f32.mrb[0].mxu0
        %6245 = vmatprep.mubr.f32.mxu0 %v6145
        %6246 = vmatmul.mubr.f32.gmra.mrb[0].mxu0 %v6105
        %v6247 = vpop.f32.mrb[0].mxu0
        %v6248 = vadd.f32 0.0, %v6247
        %v6249 = vpop.f32.mrb[0].mxu0
        %6250 = vmatprep.mubr.f32.mxu0 %v6148
        %6251 = vmatmul.mubr.f32.gmra.mrb[0].mxu0 %v6107
        %v6252 = vpop.f32.mrb[0].mxu0
        %v6253 = vadd.f32 0.0, %v6252
        %v6254 = vpop.f32.mrb[0].mxu0
        %6255 = vmatprep.mubr.f32.mxu0 %v6151
        %6256 = vmatmul.mubr.f32.gmra.mrb[0].mxu0 %v6109
        %v6257 = vpop.f32.mrb[0].mxu0
        %v6258 = vadd.f32 0.0, %v6257
        %v6259 = vpop.f32.mrb[0].mxu0
        %6260 = vdwg.mxu0
        %v6261 = vadd.f32 %v6086, %v6223
        %v6262 = vadd.f32 %v6087, %v6228
        %v6263 = vadd.f32 %v6088, %v6233
        %v6264 = vadd.f32 %v6089, %v6238
        %v6265 = vadd.f32 %v6090, %v6243
        %v6266 = vadd.f32 %v6091, %v6248
        %v6267 = vadd.f32 %v6092, %v6253
        %v6268 = vadd.f32 %v6093, %v6258
        %v6269 = vld [vmem:[%s6094] sm:$0xfe]
        %v6270 = vld [vmem:[%s6094 + $0x8] sm:$0xfe]
        %v6271 = vld [vmem:[%s6094 + $0x10] sm:$0x1]
        %v6272 = vld [vmem:[%s6094 + $0x18] sm:$0x1]
        %v6273 = vld [vmem:[%s6094 + $0x20] sm:$0xfe]
        %v6274 = vld [vmem:[%s6094 + $0x28] sm:$0xfe]
        %v6275 = vld [vmem:[%s6094 + $0x30] sm:$0x1]
        %v6276 = vld [vmem:[%s6094 + $0x38] sm:$0x1]
        %v6277 = vld [vmem:[%s6094 + $0x40] sm:$0xfe]
        %v6278 = vld [vmem:[%s6094 + $0x48] sm:$0xfe]
        %v6279 = vld [vmem:[%s6094 + $0x50] sm:$0x1]
        %v6280 = vld [vmem:[%s6094 + $0x58] sm:$0x1]
        %v6281 = vld [vmem:[%s6094 + $0x60] sm:$0xfe]
        %v6282 = vld [vmem:[%s6094 + $0x68] sm:$0xfe]
        %v6283 = vld [vmem:[%s6094 + $0x70] sm:$0x1]
        %v6284 = vld [vmem:[%s6094 + $0x78] sm:$0x1]
        %v6285 = vld [vmem:[%s6094 + $0x80] sm:$0xfe]
        %v6286 = vld [vmem:[%s6094 + $0x88] sm:$0xfe]
        %v6287 = vld [vmem:[%s6094 + $0x90] sm:$0x1]
        %v6288 = vld [vmem:[%s6094 + $0x98] sm:$0x1]
        %v6289 = vld [vmem:[%s6094 + $0xa0] sm:$0xfe]
        %v6290 = vld [vmem:[%s6094 + $0xa8] sm:$0xfe]
        %v6291 = vld [vmem:[%s6094 + $0xb0] sm:$0x1]
        %v6292 = vld [vmem:[%s6094 + $0xb8] sm:$0x1]
        %v6293 = vld [vmem:[%s6094 + $0xc0] sm:$0xfe]
        %v6294 = vld [vmem:[%s6094 + $0xc8] sm:$0xfe]
        %v6295 = vld [vmem:[%s6094 + $0xd0] sm:$0x1]
        %v6296 = vld [vmem:[%s6094 + $0xd8] sm:$0x1]
        %v6297 = vld [vmem:[%s6094 + $0xe0] sm:$0xfe]
        %v6298 = vld [vmem:[%s6094 + $0xe8] sm:$0xfe]
        %v6299 = vld [vmem:[%s6094 + $0xf0] sm:$0x1]
        %v6300 = vld [vmem:[%s6094 + $0xf8] sm:$0x1]
        %v6333 = vrot.slane %v6269, 1
        %v6334 = vrot.slane %v6271, 1
        %v6335 = vsel %vm294, %v6333, %v6334
        %v6336 = vrot.slane %v6270, 1
        %v6337 = vrot.slane %v6272, 1
        %v6338 = vsel %vm294, %v6336, %v6337
        %v6339 = vrot.slane %v6273, 1
        %v6340 = vrot.slane %v6275, 1
        %v6341 = vsel %vm294, %v6339, %v6340
        %v6342 = vrot.slane %v6274, 1
        %v6343 = vrot.slane %v6276, 1
        %v6344 = vsel %vm294, %v6342, %v6343
        %v6345 = vrot.slane %v6277, 1
        %v6346 = vrot.slane %v6279, 1
        %v6347 = vsel %vm294, %v6345, %v6346
        %v6348 = vrot.slane %v6278, 1
        %v6349 = vrot.slane %v6280, 1
        %v6350 = vsel %vm294, %v6348, %v6349
        %v6351 = vrot.slane %v6281, 1
        %v6352 = vrot.slane %v6283, 1
        %v6353 = vsel %vm294, %v6351, %v6352
        %v6354 = vrot.slane %v6282, 1
        %v6355 = vrot.slane %v6284, 1
        %v6356 = vsel %vm294, %v6354, %v6355
        %v6357 = vrot.slane %v6285, 1
        %v6358 = vrot.slane %v6287, 1
        %v6359 = vsel %vm294, %v6357, %v6358
        %v6360 = vrot.slane %v6286, 1
        %v6361 = vrot.slane %v6288, 1
        %v6362 = vsel %vm294, %v6360, %v6361
        %v6363 = vrot.slane %v6289, 1
        %v6364 = vrot.slane %v6291, 1
        %v6365 = vsel %vm294, %v6363, %v6364
        %v6366 = vrot.slane %v6290, 1
        %v6367 = vrot.slane %v6292, 1
        %v6368 = vsel %vm294, %v6366, %v6367
        %v6369 = vrot.slane %v6293, 1
        %v6370 = vrot.slane %v6295, 1
        %v6371 = vsel %vm294, %v6369, %v6370
        %v6372 = vrot.slane %v6294, 1
        %v6373 = vrot.slane %v6296, 1
        %v6374 = vsel %vm294, %v6372, %v6373
        %v6375 = vrot.slane %v6297, 1
        %v6376 = vrot.slane %v6299, 1
        %v6377 = vsel %vm294, %v6375, %v6376
        %v6378 = vrot.slane %v6298, 1
        %v6379 = vrot.slane %v6300, 1
        %v6380 = vsel %vm294, %v6378, %v6379
        %s6389 = scalar_lea.vmem [#allocation2], 3400
        %v6390 = vld [vmem:[%s6389] sm:$0xff]
        %v6391 = vld [vmem:[%s6389 + $0x8] sm:$0xff]
        %v6392 = vld [vmem:[%s6389 + $0x10] sm:$0xff]
        %v6393 = vld [vmem:[%s6389 + $0x18] sm:$0xff]
        %v6394 = vld [vmem:[%s6389 + $0x20] sm:$0xff]
        %v6395 = vld [vmem:[%s6389 + $0x28] sm:$0xff]
        %v6396 = vld [vmem:[%s6389 + $0x30] sm:$0xff]
        %v6397 = vld [vmem:[%s6389 + $0x38] sm:$0xff]
        %v6398 = vld [vmem:[%s6389 + $0x40] sm:$0xff]
        %v6399 = vld [vmem:[%s6389 + $0x48] sm:$0xff]
        %v6400 = vld [vmem:[%s6389 + $0x50] sm:$0xff]
        %v6401 = vld [vmem:[%s6389 + $0x58] sm:$0xff]
        %v6402 = vld [vmem:[%s6389 + $0x60] sm:$0xff]
        %v6403 = vld [vmem:[%s6389 + $0x68] sm:$0xff]
        %v6404 = vld [vmem:[%s6389 + $0x70] sm:$0xff]
        %v6405 = vld [vmem:[%s6389 + $0x78] sm:$0xff]
        %v6406 = vld [vmem:[%s6389 + $0x80] sm:$0xf]
        %v6407 = vsel %vm369, %v6338, 0
        %v6409 = vsel %vm369, %v6344, 0
        %v6411 = vsel %vm369, %v6350, 0
        %v6413 = vsel %vm369, %v6356, 0
        %v6415 = vsel %vm369, %v6362, 0
        %v6417 = vsel %vm369, %v6368, 0
        %v6419 = vsel %vm369, %v6374, 0
        %v6421 = vsel %vm369, %v6380, 0
        %v6424 = vsel %vm386, %v6406, 0
        %6426 = vmatprep.subr.mxu0 0.0
        %6427 = vmatpush1.msra.mxu0 %v6390
        %6428 = vmatprep.subr.mxu0 0.0
        %6429 = vmatpush1.msra.mxu0 %v6391
        %6430 = vmatprep.subr.mxu0 0.0
        %6431 = vmatpush1.msra.mxu0 %v6392
        %6432 = vmatprep.subr.mxu0 0.0
        %6433 = vmatpush1.msra.mxu0 %v6393
        %6434 = vmatprep.subr.mxu0 0.0
        %6435 = vmatpush1.msra.mxu0 %v6394
        %6436 = vmatprep.subr.mxu0 0.0
        %6437 = vmatpush1.msra.mxu0 %v6395
        %6438 = vmatprep.subr.mxu0 0.0
        %6439 = vmatpush1.msra.mxu0 %v6396
        %6440 = vmatprep.subr.mxu0 0.0
        %6441 = vmatpush1.msra.mxu0 %v6397
        %6442 = vmatprep.subr.mxu0 0.0
        %6443 = vmatpush1.msra.mxu0 %v6398
        %6444 = vmatprep.subr.mxu0 0.0
        %6445 = vmatpush1.msra.mxu0 %v6399
        %6446 = vmatprep.subr.mxu0 0.0
        %6447 = vmatpush1.msra.mxu0 %v6400
        %6448 = vmatprep.subr.mxu0 0.0
        %6449 = vmatpush1.msra.mxu0 %v6401
        %6450 = vmatprep.subr.mxu0 0.0
        %6451 = vmatpush1.msra.mxu0 %v6402
        %6452 = vmatprep.subr.mxu0 0.0
        %6453 = vmatpush1.msra.mxu0 %v6403
        %6454 = vmatprep.subr.mxu0 0.0
        %6455 = vmatpush1.msra.mxu0 %v6404
        %6456 = vmatprep.subr.mxu0 0.0
        %6457 = vmatpush1.msra.mxu0 %v6405
        %6458 = vmatprep.subr.mxu0 0.0
        %6459 = vmatpush1.msra.mxu0 %v6424
        %6460 = vmatprep.subr.mxu0 0.0
        %6461 = vmatpush1.msra.mxu0 0.0
        %6462 = vmatprep.subr.mxu0 0.0
        %6463 = vmatpush1.msra.mxu0 0.0
        %6464 = vmatprep.subr.mxu0 0.0
        %6465 = vmatpush1.msra.mxu0 0.0
        %6466 = vmatprep.subr.mxu0 0.0
        %6467 = vmatpush1.msra.mxu0 0.0
        %6468 = vmatprep.subr.mxu0 0.0
        %6469 = vmatpush1.msra.mxu0 0.0
        %6470 = vmatprep.subr.mxu0 0.0
        %6471 = vmatpush1.msra.mxu0 0.0
        %6472 = vmatprep.subr.mxu0 0.0
        %6473 = vmatpush1.msra.mxu0 0.0
        %6474 = vmatprep.subr.mxu0 0.0
        %6475 = vmatpush1.msra.mxu0 0.0
        %6476 = vmatprep.subr.mxu0 0.0
        %6477 = vmatpush1.msra.mxu0 0.0
        %6478 = vmatprep.subr.mxu0 0.0
        %6479 = vmatpush1.msra.mxu0 0.0
        %6480 = vmatprep.subr.mxu0 0.0
        %6481 = vmatpush1.msra.mxu0 0.0
        %6482 = vmatprep.subr.mxu0 0.0
        %6483 = vmatpush1.msra.mxu0 0.0
        %6484 = vmatprep.subr.mxu0 0.0
        %6485 = vmatpush1.msra.mxu0 0.0
        %6486 = vmatprep.subr.mxu0 0.0
        %6487 = vmatpush1.msra.mxu0 0.0
        %6488 = vmatprep.subr.mxu0 0.0
        %6489 = vmatpush1.msra.mxu0 0.0
        %6490 = vmatprep.mubr.f32.mxu0 %v6407
        %6491 = vmatmul.mubr.f32.gmra.mrb[0].mxu0 %v6335
        %v6492 = vpop.f32.mrb[0].mxu0
        %v6493 = vadd.f32 0.0, %v6492
        %v6494 = vpop.f32.mrb[0].mxu0
        %6495 = vmatprep.mubr.f32.mxu0 %v6409
        %6496 = vmatmul.mubr.f32.gmra.mrb[0].mxu0 %v6341
        %v6497 = vpop.f32.mrb[0].mxu0
        %v6498 = vadd.f32 0.0, %v6497
        %v6499 = vpop.f32.mrb[0].mxu0
        %6500 = vmatprep.mubr.f32.mxu0 %v6411
        %6501 = vmatmul.mubr.f32.gmra.mrb[0].mxu0 %v6347
        %v6502 = vpop.f32.mrb[0].mxu0
        %v6503 = vadd.f32 0.0, %v6502
        %v6504 = vpop.f32.mrb[0].mxu0
        %6505 = vmatprep.mubr.f32.mxu0 %v6413
        %6506 = vmatmul.mubr.f32.gmra.mrb[0].mxu0 %v6353
        %v6507 = vpop.f32.mrb[0].mxu0
        %v6508 = vadd.f32 0.0, %v6507
        %v6509 = vpop.f32.mrb[0].mxu0
        %6510 = vmatprep.mubr.f32.mxu0 %v6415
        %6511 = vmatmul.mubr.f32.gmra.mrb[0].mxu0 %v6359
        %v6512 = vpop.f32.mrb[0].mxu0
        %v6513 = vadd.f32 0.0, %v6512
        %v6514 = vpop.f32.mrb[0].mxu0
        %6515 = vmatprep.mubr.f32.mxu0 %v6417
        %6516 = vmatmul.mubr.f32.gmra.mrb[0].mxu0 %v6365
        %v6517 = vpop.f32.mrb[0].mxu0
        %v6518 = vadd.f32 0.0, %v6517
        %v6519 = vpop.f32.mrb[0].mxu0
        %6520 = vmatprep.mubr.f32.mxu0 %v6419
        %6521 = vmatmul.mubr.f32.gmra.mrb[0].mxu0 %v6371
        %v6522 = vpop.f32.mrb[0].mxu0
        %v6523 = vadd.f32 0.0, %v6522
        %v6524 = vpop.f32.mrb[0].mxu0
        %6525 = vmatprep.mubr.f32.mxu0 %v6421
        %6526 = vmatmul.mubr.f32.gmra.mrb[0].mxu0 %v6377
        %v6527 = vpop.f32.mrb[0].mxu0
        %v6528 = vadd.f32 0.0, %v6527
        %v6529 = vpop.f32.mrb[0].mxu0
        %6530 = vdwg.mxu0
        %v6531 = vadd.f32 %v6261, %v6493
        %v6532 = vadd.f32 %v6262, %v6498
        %v6533 = vadd.f32 %v6263, %v6503
        %v6534 = vadd.f32 %v6264, %v6508
        %v6535 = vadd.f32 %v6265, %v6513
        %v6536 = vadd.f32 %v6266, %v6518
        %v6537 = vadd.f32 %v6267, %v6523
        %v6538 = vadd.f32 %v6268, %v6528
        %v6539 = vld [vmem:[%s6094] sm:$0xfc]
        %v6540 = vld [vmem:[%s6094 + $0x8] sm:$0xfc]
        %v6541 = vld [vmem:[%s6094 + $0x10] sm:$0x3]
        %v6542 = vld [vmem:[%s6094 + $0x18] sm:$0x3]
        %v6543 = vld [vmem:[%s6094 + $0x20] sm:$0xfc]
        %v6544 = vld [vmem:[%s6094 + $0x28] sm:$0xfc]
        %v6545 = vld [vmem:[%s6094 + $0x30] sm:$0x3]
        %v6546 = vld [vmem:[%s6094 + $0x38] sm:$0x3]
        %v6547 = vld [vmem:[%s6094 + $0x40] sm:$0xfc]
        %v6548 = vld [vmem:[%s6094 + $0x48] sm:$0xfc]
        %v6549 = vld [vmem:[%s6094 + $0x50] sm:$0x3]
        %v6550 = vld [vmem:[%s6094 + $0x58] sm:$0x3]
        %v6551 = vld [vmem:[%s6094 + $0x60] sm:$0xfc]
        %v6552 = vld [vmem:[%s6094 + $0x68] sm:$0xfc]
        %v6553 = vld [vmem:[%s6094 + $0x70] sm:$0x3]
        %v6554 = vld [vmem:[%s6094 + $0x78] sm:$0x3]
        %v6555 = vld [vmem:[%s6094 + $0x80] sm:$0xfc]
        %v6556 = vld [vmem:[%s6094 + $0x88] sm:$0xfc]
        %v6557 = vld [vmem:[%s6094 + $0x90] sm:$0x3]
        %v6558 = vld [vmem:[%s6094 + $0x98] sm:$0x3]
        %v6559 = vld [vmem:[%s6094 + $0xa0] sm:$0xfc]
        %v6560 = vld [vmem:[%s6094 + $0xa8] sm:$0xfc]
        %v6561 = vld [vmem:[%s6094 + $0xb0] sm:$0x3]
        %v6562 = vld [vmem:[%s6094 + $0xb8] sm:$0x3]
        %v6563 = vld [vmem:[%s6094 + $0xc0] sm:$0xfc]
        %v6564 = vld [vmem:[%s6094 + $0xc8] sm:$0xfc]
        %v6565 = vld [vmem:[%s6094 + $0xd0] sm:$0x3]
        %v6566 = vld [vmem:[%s6094 + $0xd8] sm:$0x3]
        %v6567 = vld [vmem:[%s6094 + $0xe0] sm:$0xfc]
        %v6568 = vld [vmem:[%s6094 + $0xe8] sm:$0xfc]
        %v6569 = vld [vmem:[%s6094 + $0xf0] sm:$0x3]
        %v6570 = vld [vmem:[%s6094 + $0xf8] sm:$0x3]
        %v6603 = vrot.slane %v6539, 2
        %v6604 = vrot.slane %v6541, 2
        %v6605 = vsel %vm691, %v6603, %v6604
        %v6606 = vrot.slane %v6540, 2
        %v6607 = vrot.slane %v6542, 2
        %v6608 = vsel %vm691, %v6606, %v6607
        %v6609 = vrot.slane %v6543, 2
        %v6610 = vrot.slane %v6545, 2
        %v6611 = vsel %vm691, %v6609, %v6610
        %v6612 = vrot.slane %v6544, 2
        %v6613 = vrot.slane %v6546, 2
        %v6614 = vsel %vm691, %v6612, %v6613
        %v6615 = vrot.slane %v6547, 2
        %v6616 = vrot.slane %v6549, 2
        %v6617 = vsel %vm691, %v6615, %v6616
        %v6618 = vrot.slane %v6548, 2
        %v6619 = vrot.slane %v6550, 2
        %v6620 = vsel %vm691, %v6618, %v6619
        %v6621 = vrot.slane %v6551, 2
        %v6622 = vrot.slane %v6553, 2
        %v6623 = vsel %vm691, %v6621, %v6622
        %v6624 = vrot.slane %v6552, 2
        %v6625 = vrot.slane %v6554, 2
        %v6626 = vsel %vm691, %v6624, %v6625
        %v6627 = vrot.slane %v6555, 2
        %v6628 = vrot.slane %v6557, 2
        %v6629 = vsel %vm691, %v6627, %v6628
        %v6630 = vrot.slane %v6556, 2
        %v6631 = vrot.slane %v6558, 2
        %v6632 = vsel %vm691, %v6630, %v6631
        %v6633 = vrot.slane %v6559, 2
        %v6634 = vrot.slane %v6561, 2
        %v6635 = vsel %vm691, %v6633, %v6634
        %v6636 = vrot.slane %v6560, 2
        %v6637 = vrot.slane %v6562, 2
        %v6638 = vsel %vm691, %v6636, %v6637
        %v6639 = vrot.slane %v6563, 2
        %v6640 = vrot.slane %v6565, 2
        %v6641 = vsel %vm691, %v6639, %v6640
        %v6642 = vrot.slane %v6564, 2
        %v6643 = vrot.slane %v6566, 2
        %v6644 = vsel %vm691, %v6642, %v6643
        %v6645 = vrot.slane %v6567, 2
        %v6646 = vrot.slane %v6569, 2
        %v6647 = vsel %vm691, %v6645, %v6646
        %v6648 = vrot.slane %v6568, 2
        %v6649 = vrot.slane %v6570, 2
        %v6650 = vsel %vm691, %v6648, %v6649
        %s6659 = scalar_lea.vmem [#allocation2], 3536
        %v6660 = vld [vmem:[%s6659] sm:$0xff]
        %v6661 = vld [vmem:[%s6659 + $0x8] sm:$0xff]
        %v6662 = vld [vmem:[%s6659 + $0x10] sm:$0xff]
        %v6663 = vld [vmem:[%s6659 + $0x18] sm:$0xff]
        %v6664 = vld [vmem:[%s6659 + $0x20] sm:$0xff]
        %v6665 = vld [vmem:[%s6659 + $0x28] sm:$0xff]
        %v6666 = vld [vmem:[%s6659 + $0x30] sm:$0xff]
        %v6667 = vld [vmem:[%s6659 + $0x38] sm:$0xff]
        %v6668 = vld [vmem:[%s6659 + $0x40] sm:$0xff]
        %v6669 = vld [vmem:[%s6659 + $0x48] sm:$0xff]
        %v6670 = vld [vmem:[%s6659 + $0x50] sm:$0xff]
        %v6671 = vld [vmem:[%s6659 + $0x58] sm:$0xff]
        %v6672 = vld [vmem:[%s6659 + $0x60] sm:$0xff]
        %v6673 = vld [vmem:[%s6659 + $0x68] sm:$0xff]
        %v6674 = vld [vmem:[%s6659 + $0x70] sm:$0xff]
        %v6675 = vld [vmem:[%s6659 + $0x78] sm:$0xff]
        %v6676 = vld [vmem:[%s6659 + $0x80] sm:$0xf]
        %v6677 = vsel %vm369, %v6608, 0
        %v6679 = vsel %vm369, %v6614, 0
        %v6681 = vsel %vm369, %v6620, 0
        %v6683 = vsel %vm369, %v6626, 0
        %v6685 = vsel %vm369, %v6632, 0
        %v6687 = vsel %vm369, %v6638, 0
        %v6689 = vsel %vm369, %v6644, 0
        %v6691 = vsel %vm369, %v6650, 0
        %v6694 = vsel %vm386, %v6676, 0
        %6696 = vmatprep.subr.mxu0 0.0
        %6697 = vmatpush1.msra.mxu0 %v6660
        %6698 = vmatprep.subr.mxu0 0.0
        %6699 = vmatpush1.msra.mxu0 %v6661
        %6700 = vmatprep.subr.mxu0 0.0
        %6701 = vmatpush1.msra.mxu0 %v6662
        %6702 = vmatprep.subr.mxu0 0.0
        %6703 = vmatpush1.msra.mxu0 %v6663
        %6704 = vmatprep.subr.mxu0 0.0
        %6705 = vmatpush1.msra.mxu0 %v6664
        %6706 = vmatprep.subr.mxu0 0.0
        %6707 = vmatpush1.msra.mxu0 %v6665
        %6708 = vmatprep.subr.mxu0 0.0
        %6709 = vmatpush1.msra.mxu0 %v6666
        %6710 = vmatprep.subr.mxu0 0.0
        %6711 = vmatpush1.msra.mxu0 %v6667
        %6712 = vmatprep.subr.mxu0 0.0
        %6713 = vmatpush1.msra.mxu0 %v6668
        %6714 = vmatprep.subr.mxu0 0.0
        %6715 = vmatpush1.msra.mxu0 %v6669
        %6716 = vmatprep.subr.mxu0 0.0
        %6717 = vmatpush1.msra.mxu0 %v6670
        %6718 = vmatprep.subr.mxu0 0.0
        %6719 = vmatpush1.msra.mxu0 %v6671
        %6720 = vmatprep.subr.mxu0 0.0
        %6721 = vmatpush1.msra.mxu0 %v6672
        %6722 = vmatprep.subr.mxu0 0.0
        %6723 = vmatpush1.msra.mxu0 %v6673
        %6724 = vmatprep.subr.mxu0 0.0
        %6725 = vmatpush1.msra.mxu0 %v6674
        %6726 = vmatprep.subr.mxu0 0.0
        %6727 = vmatpush1.msra.mxu0 %v6675
        %6728 = vmatprep.subr.mxu0 0.0
        %6729 = vmatpush1.msra.mxu0 %v6694
        %6730 = vmatprep.subr.mxu0 0.0
        %6731 = vmatpush1.msra.mxu0 0.0
        %6732 = vmatprep.subr.mxu0 0.0
        %6733 = vmatpush1.msra.mxu0 0.0
        %6734 = vmatprep.subr.mxu0 0.0
        %6735 = vmatpush1.msra.mxu0 0.0
        %6736 = vmatprep.subr.mxu0 0.0
        %6737 = vmatpush1.msra.mxu0 0.0
        %6738 = vmatprep.subr.mxu0 0.0
        %6739 = vmatpush1.msra.mxu0 0.0
        %6740 = vmatprep.subr.mxu0 0.0
        %6741 = vmatpush1.msra.mxu0 0.0
        %6742 = vmatprep.subr.mxu0 0.0
        %6743 = vmatpush1.msra.mxu0 0.0
        %6744 = vmatprep.subr.mxu0 0.0
        %6745 = vmatpush1.msra.mxu0 0.0
        %6746 = vmatprep.subr.mxu0 0.0
        %6747 = vmatpush1.msra.mxu0 0.0
        %6748 = vmatprep.subr.mxu0 0.0
        %6749 = vmatpush1.msra.mxu0 0.0
        %6750 = vmatprep.subr.mxu0 0.0
        %6751 = vmatpush1.msra.mxu0 0.0
        %6752 = vmatprep.subr.mxu0 0.0
        %6753 = vmatpush1.msra.mxu0 0.0
        %6754 = vmatprep.subr.mxu0 0.0
        %6755 = vmatpush1.msra.mxu0 0.0
        %6756 = vmatprep.subr.mxu0 0.0
        %6757 = vmatpush1.msra.mxu0 0.0
        %6758 = vmatprep.subr.mxu0 0.0
        %6759 = vmatpush1.msra.mxu0 0.0
        %6760 = vmatprep.mubr.f32.mxu0 %v6677
        %6761 = vmatmul.mubr.f32.gmra.mrb[0].mxu0 %v6605
        %v6762 = vpop.f32.mrb[0].mxu0
        %v6763 = vadd.f32 0.0, %v6762
        %v6764 = vpop.f32.mrb[0].mxu0
        %6765 = vmatprep.mubr.f32.mxu0 %v6679
        %6766 = vmatmul.mubr.f32.gmra.mrb[0].mxu0 %v6611
        %v6767 = vpop.f32.mrb[0].mxu0
        %v6768 = vadd.f32 0.0, %v6767
        %v6769 = vpop.f32.mrb[0].mxu0
        %6770 = vmatprep.mubr.f32.mxu0 %v6681
        %6771 = vmatmul.mubr.f32.gmra.mrb[0].mxu0 %v6617
        %v6772 = vpop.f32.mrb[0].mxu0
        %v6773 = vadd.f32 0.0, %v6772
        %v6774 = vpop.f32.mrb[0].mxu0
        %6775 = vmatprep.mubr.f32.mxu0 %v6683
        %6776 = vmatmul.mubr.f32.gmra.mrb[0].mxu0 %v6623
        %v6777 = vpop.f32.mrb[0].mxu0
        %v6778 = vadd.f32 0.0, %v6777
        %v6779 = vpop.f32.mrb[0].mxu0
        %6780 = vmatprep.mubr.f32.mxu0 %v6685
        %6781 = vmatmul.mubr.f32.gmra.mrb[0].mxu0 %v6629
        %v6782 = vpop.f32.mrb[0].mxu0
        %v6783 = vadd.f32 0.0, %v6782
        %v6784 = vpop.f32.mrb[0].mxu0
        %6785 = vmatprep.mubr.f32.mxu0 %v6687
        %6786 = vmatmul.mubr.f32.gmra.mrb[0].mxu0 %v6635
        %v6787 = vpop.f32.mrb[0].mxu0
        %v6788 = vadd.f32 0.0, %v6787
        %v6789 = vpop.f32.mrb[0].mxu0
        %6790 = vmatprep.mubr.f32.mxu0 %v6689
        %6791 = vmatmul.mubr.f32.gmra.mrb[0].mxu0 %v6641
        %v6792 = vpop.f32.mrb[0].mxu0
        %v6793 = vadd.f32 0.0, %v6792
        %v6794 = vpop.f32.mrb[0].mxu0
        %6795 = vmatprep.mubr.f32.mxu0 %v6691
        %6796 = vmatmul.mubr.f32.gmra.mrb[0].mxu0 %v6647
        %v6797 = vpop.f32.mrb[0].mxu0
        %v6798 = vadd.f32 0.0, %v6797
        %v6799 = vpop.f32.mrb[0].mxu0
        %6800 = vdwg.mxu0
        %v6801 = vadd.f32 %v6531, %v6763
        %v6802 = vadd.f32 %v6532, %v6768
        %v6803 = vadd.f32 %v6533, %v6773
        %v6804 = vadd.f32 %v6534, %v6778
        %v6805 = vadd.f32 %v6535, %v6783
        %v6806 = vadd.f32 %v6536, %v6788
        %v6807 = vadd.f32 %v6537, %v6793
        %v6808 = vadd.f32 %v6538, %v6798
        %v6809 = vld [vmem:[%s6094] sm:$0xf8]
        %v6810 = vld [vmem:[%s6094 + $0x8] sm:$0xf8]
        %v6811 = vld [vmem:[%s6094 + $0x10] sm:$0x7]
        %v6812 = vld [vmem:[%s6094 + $0x18] sm:$0x7]
        %v6813 = vld [vmem:[%s6094 + $0x20] sm:$0xf8]
        %v6814 = vld [vmem:[%s6094 + $0x28] sm:$0xf8]
        %v6815 = vld [vmem:[%s6094 + $0x30] sm:$0x7]
        %v6816 = vld [vmem:[%s6094 + $0x38] sm:$0x7]
        %v6817 = vld [vmem:[%s6094 + $0x40] sm:$0xf8]
        %v6818 = vld [vmem:[%s6094 + $0x48] sm:$0xf8]
        %v6819 = vld [vmem:[%s6094 + $0x50] sm:$0x7]
        %v6820 = vld [vmem:[%s6094 + $0x58] sm:$0x7]
        %v6821 = vld [vmem:[%s6094 + $0x60] sm:$0xf8]
        %v6822 = vld [vmem:[%s6094 + $0x68] sm:$0xf8]
        %v6823 = vld [vmem:[%s6094 + $0x70] sm:$0x7]
        %v6824 = vld [vmem:[%s6094 + $0x78] sm:$0x7]
        %v6825 = vld [vmem:[%s6094 + $0x80] sm:$0xf8]
        %v6826 = vld [vmem:[%s6094 + $0x88] sm:$0xf8]
        %v6827 = vld [vmem:[%s6094 + $0x90] sm:$0x7]
        %v6828 = vld [vmem:[%s6094 + $0x98] sm:$0x7]
        %v6829 = vld [vmem:[%s6094 + $0xa0] sm:$0xf8]
        %v6830 = vld [vmem:[%s6094 + $0xa8] sm:$0xf8]
        %v6831 = vld [vmem:[%s6094 + $0xb0] sm:$0x7]
        %v6832 = vld [vmem:[%s6094 + $0xb8] sm:$0x7]
        %v6833 = vld [vmem:[%s6094 + $0xc0] sm:$0xf8]
        %v6834 = vld [vmem:[%s6094 + $0xc8] sm:$0xf8]
        %v6835 = vld [vmem:[%s6094 + $0xd0] sm:$0x7]
        %v6836 = vld [vmem:[%s6094 + $0xd8] sm:$0x7]
        %v6837 = vld [vmem:[%s6094 + $0xe0] sm:$0xf8]
        %v6838 = vld [vmem:[%s6094 + $0xe8] sm:$0xf8]
        %v6839 = vld [vmem:[%s6094 + $0xf0] sm:$0x7]
        %v6840 = vld [vmem:[%s6094 + $0xf8] sm:$0x7]
        %v6873 = vrot.slane %v6809, 3
        %v6874 = vrot.slane %v6811, 3
        %v6875 = vsel %vm962, %v6873, %v6874
        %v6876 = vrot.slane %v6810, 3
        %v6877 = vrot.slane %v6812, 3
        %v6878 = vsel %vm962, %v6876, %v6877
        %v6879 = vrot.slane %v6813, 3
        %v6880 = vrot.slane %v6815, 3
        %v6881 = vsel %vm962, %v6879, %v6880
        %v6882 = vrot.slane %v6814, 3
        %v6883 = vrot.slane %v6816, 3
        %v6884 = vsel %vm962, %v6882, %v6883
        %v6885 = vrot.slane %v6817, 3
        %v6886 = vrot.slane %v6819, 3
        %v6887 = vsel %vm962, %v6885, %v6886
        %v6888 = vrot.slane %v6818, 3
        %v6889 = vrot.slane %v6820, 3
        %v6890 = vsel %vm962, %v6888, %v6889
        %v6891 = vrot.slane %v6821, 3
        %v6892 = vrot.slane %v6823, 3
        %v6893 = vsel %vm962, %v6891, %v6892
        %v6894 = vrot.slane %v6822, 3
        %v6895 = vrot.slane %v6824, 3
        %v6896 = vsel %vm962, %v6894, %v6895
        %v6897 = vrot.slane %v6825, 3
        %v6898 = vrot.slane %v6827, 3
        %v6899 = vsel %vm962, %v6897, %v6898
        %v6900 = vrot.slane %v6826, 3
        %v6901 = vrot.slane %v6828, 3
        %v6902 = vsel %vm962, %v6900, %v6901
        %v6903 = vrot.slane %v6829, 3
        %v6904 = vrot.slane %v6831, 3
        %v6905 = vsel %vm962, %v6903, %v6904
        %v6906 = vrot.slane %v6830, 3
        %v6907 = vrot.slane %v6832, 3
        %v6908 = vsel %vm962, %v6906, %v6907
        %v6909 = vrot.slane %v6833, 3
        %v6910 = vrot.slane %v6835, 3
        %v6911 = vsel %vm962, %v6909, %v6910
        %v6912 = vrot.slane %v6834, 3
        %v6913 = vrot.slane %v6836, 3
        %v6914 = vsel %vm962, %v6912, %v6913
        %v6915 = vrot.slane %v6837, 3
        %v6916 = vrot.slane %v6839, 3
        %v6917 = vsel %vm962, %v6915, %v6916
        %v6918 = vrot.slane %v6838, 3
        %v6919 = vrot.slane %v6840, 3
        %v6920 = vsel %vm962, %v6918, %v6919
        %s6929 = scalar_lea.vmem [#allocation2], 3672
        %v6930 = vld [vmem:[%s6929] sm:$0xff]
        %v6931 = vld [vmem:[%s6929 + $0x8] sm:$0xff]
        %v6932 = vld [vmem:[%s6929 + $0x10] sm:$0xff]
        %v6933 = vld [vmem:[%s6929 + $0x18] sm:$0xff]
        %v6934 = vld [vmem:[%s6929 + $0x20] sm:$0xff]
        %v6935 = vld [vmem:[%s6929 + $0x28] sm:$0xff]
        %v6936 = vld [vmem:[%s6929 + $0x30] sm:$0xff]
        %v6937 = vld [vmem:[%s6929 + $0x38] sm:$0xff]
        %v6938 = vld [vmem:[%s6929 + $0x40] sm:$0xff]
        %v6939 = vld [vmem:[%s6929 + $0x48] sm:$0xff]
        %v6940 = vld [vmem:[%s6929 + $0x50] sm:$0xff]
        %v6941 = vld [vmem:[%s6929 + $0x58] sm:$0xff]
        %v6942 = vld [vmem:[%s6929 + $0x60] sm:$0xff]
        %v6943 = vld [vmem:[%s6929 + $0x68] sm:$0xff]
        %v6944 = vld [vmem:[%s6929 + $0x70] sm:$0xff]
        %v6945 = vld [vmem:[%s6929 + $0x78] sm:$0xff]
        %v6946 = vld [vmem:[%s6929 + $0x80] sm:$0xf]
        %v6947 = vsel %vm369, %v6878, 0
        %v6949 = vsel %vm369, %v6884, 0
        %v6951 = vsel %vm369, %v6890, 0
        %v6953 = vsel %vm369, %v6896, 0
        %v6955 = vsel %vm369, %v6902, 0
        %v6957 = vsel %vm369, %v6908, 0
        %v6959 = vsel %vm369, %v6914, 0
        %v6961 = vsel %vm369, %v6920, 0
        %v6964 = vsel %vm386, %v6946, 0
        %6966 = vmatprep.subr.mxu0 0.0
        %6967 = vmatpush1.msra.mxu0 %v6930
        %6968 = vmatprep.subr.mxu0 0.0
        %6969 = vmatpush1.msra.mxu0 %v6931
        %6970 = vmatprep.subr.mxu0 0.0
        %6971 = vmatpush1.msra.mxu0 %v6932
        %6972 = vmatprep.subr.mxu0 0.0
        %6973 = vmatpush1.msra.mxu0 %v6933
        %6974 = vmatprep.subr.mxu0 0.0
        %6975 = vmatpush1.msra.mxu0 %v6934
        %6976 = vmatprep.subr.mxu0 0.0
        %6977 = vmatpush1.msra.mxu0 %v6935
        %6978 = vmatprep.subr.mxu0 0.0
        %6979 = vmatpush1.msra.mxu0 %v6936
        %6980 = vmatprep.subr.mxu0 0.0
        %6981 = vmatpush1.msra.mxu0 %v6937
        %6982 = vmatprep.subr.mxu0 0.0
        %6983 = vmatpush1.msra.mxu0 %v6938
        %6984 = vmatprep.subr.mxu0 0.0
        %6985 = vmatpush1.msra.mxu0 %v6939
        %6986 = vmatprep.subr.mxu0 0.0
        %6987 = vmatpush1.msra.mxu0 %v6940
        %6988 = vmatprep.subr.mxu0 0.0
        %6989 = vmatpush1.msra.mxu0 %v6941
        %6990 = vmatprep.subr.mxu0 0.0
        %6991 = vmatpush1.msra.mxu0 %v6942
        %6992 = vmatprep.subr.mxu0 0.0
        %6993 = vmatpush1.msra.mxu0 %v6943
        %6994 = vmatprep.subr.mxu0 0.0
        %6995 = vmatpush1.msra.mxu0 %v6944
        %6996 = vmatprep.subr.mxu0 0.0
        %6997 = vmatpush1.msra.mxu0 %v6945
        %6998 = vmatprep.subr.mxu0 0.0
        %6999 = vmatpush1.msra.mxu0 %v6964
        %7000 = vmatprep.subr.mxu0 0.0
        %7001 = vmatpush1.msra.mxu0 0.0
        %7002 = vmatprep.subr.mxu0 0.0
        %7003 = vmatpush1.msra.mxu0 0.0
        %7004 = vmatprep.subr.mxu0 0.0
        %7005 = vmatpush1.msra.mxu0 0.0
        %7006 = vmatprep.subr.mxu0 0.0
        %7007 = vmatpush1.msra.mxu0 0.0
        %7008 = vmatprep.subr.mxu0 0.0
        %7009 = vmatpush1.msra.mxu0 0.0
        %7010 = vmatprep.subr.mxu0 0.0
        %7011 = vmatpush1.msra.mxu0 0.0
        %7012 = vmatprep.subr.mxu0 0.0
        %7013 = vmatpush1.msra.mxu0 0.0
        %7014 = vmatprep.subr.mxu0 0.0
        %7015 = vmatpush1.msra.mxu0 0.0
        %7016 = vmatprep.subr.mxu0 0.0
        %7017 = vmatpush1.msra.mxu0 0.0
        %7018 = vmatprep.subr.mxu0 0.0
        %7019 = vmatpush1.msra.mxu0 0.0
        %7020 = vmatprep.subr.mxu0 0.0
        %7021 = vmatpush1.msra.mxu0 0.0
        %7022 = vmatprep.subr.mxu0 0.0
        %7023 = vmatpush1.msra.mxu0 0.0
        %7024 = vmatprep.subr.mxu0 0.0
        %7025 = vmatpush1.msra.mxu0 0.0
        %7026 = vmatprep.subr.mxu0 0.0
        %7027 = vmatpush1.msra.mxu0 0.0
        %7028 = vmatprep.subr.mxu0 0.0
        %7029 = vmatpush1.msra.mxu0 0.0
        %7030 = vmatprep.mubr.f32.mxu0 %v6947
        %7031 = vmatmul.mubr.f32.gmra.mrb[0].mxu0 %v6875
        %v7032 = vpop.f32.mrb[0].mxu0
        %v7033 = vadd.f32 0.0, %v7032
        %v7034 = vpop.f32.mrb[0].mxu0
        %7035 = vmatprep.mubr.f32.mxu0 %v6949
        %7036 = vmatmul.mubr.f32.gmra.mrb[0].mxu0 %v6881
        %v7037 = vpop.f32.mrb[0].mxu0
        %v7038 = vadd.f32 0.0, %v7037
        %v7039 = vpop.f32.mrb[0].mxu0
        %7040 = vmatprep.mubr.f32.mxu0 %v6951
        %7041 = vmatmul.mubr.f32.gmra.mrb[0].mxu0 %v6887
        %v7042 = vpop.f32.mrb[0].mxu0
        %v7043 = vadd.f32 0.0, %v7042
        %v7044 = vpop.f32.mrb[0].mxu0
        %7045 = vmatprep.mubr.f32.mxu0 %v6953
        %7046 = vmatmul.mubr.f32.gmra.mrb[0].mxu0 %v6893
        %v7047 = vpop.f32.mrb[0].mxu0
        %v7048 = vadd.f32 0.0, %v7047
        %v7049 = vpop.f32.mrb[0].mxu0
        %7050 = vmatprep.mubr.f32.mxu0 %v6955
        %7051 = vmatmul.mubr.f32.gmra.mrb[0].mxu0 %v6899
        %v7052 = vpop.f32.mrb[0].mxu0
        %v7053 = vadd.f32 0.0, %v7052
        %v7054 = vpop.f32.mrb[0].mxu0
        %7055 = vmatprep.mubr.f32.mxu0 %v6957
        %7056 = vmatmul.mubr.f32.gmra.mrb[0].mxu0 %v6905
        %v7057 = vpop.f32.mrb[0].mxu0
        %v7058 = vadd.f32 0.0, %v7057
        %v7059 = vpop.f32.mrb[0].mxu0
        %7060 = vmatprep.mubr.f32.mxu0 %v6959
        %7061 = vmatmul.mubr.f32.gmra.mrb[0].mxu0 %v6911
        %v7062 = vpop.f32.mrb[0].mxu0
        %v7063 = vadd.f32 0.0, %v7062
        %v7064 = vpop.f32.mrb[0].mxu0
        %7065 = vmatprep.mubr.f32.mxu0 %v6961
        %7066 = vmatmul.mubr.f32.gmra.mrb[0].mxu0 %v6917
        %v7067 = vpop.f32.mrb[0].mxu0
        %v7068 = vadd.f32 0.0, %v7067
        %v7069 = vpop.f32.mrb[0].mxu0
        %7070 = vdwg.mxu0
        %v7071 = vadd.f32 %v6801, %v7033
        %v7072 = vadd.f32 %v6802, %v7038
        %v7073 = vadd.f32 %v6803, %v7043
        %v7074 = vadd.f32 %v6804, %v7048
        %v7075 = vadd.f32 %v6805, %v7053
        %v7076 = vadd.f32 %v6806, %v7058
        %v7077 = vadd.f32 %v6807, %v7063
        %v7078 = vadd.f32 %v6808, %v7068
        %v7079 = vld [vmem:[#allocation5] sm:$0x1]
        %v7081 = vlaneseq
        %v7082 = vshrl.u32 %v7081, 7
        %v7083 = vsub.s32 0, %v7082
        %v7084 = vrot.slane %v7079, %v7083
        %v7086 = vadd.f32 %v7071, %v7084
        %v7087 = vadd.f32 %v7072, %v7084
        %v7088 = vadd.f32 %v7073, %v7084
        %v7089 = vadd.f32 %v7074, %v7084
        %v7090 = vadd.f32 %v7075, %v7084
        %v7091 = vadd.f32 %v7076, %v7084
        %v7092 = vadd.f32 %v7077, %v7084
        %v7093 = vadd.f32 %v7078, %v7084
        %v7094 = vmax.f32 %v7086, 0.0
        %v7095 = vmax.f32 %v7087, 0.0
        %v7096 = vmax.f32 %v7088, 0.0
        %v7097 = vmax.f32 %v7089, 0.0
        %v7098 = vmax.f32 %v7090, 0.0
        %v7099 = vmax.f32 %v7091, 0.0
        %v7100 = vmax.f32 %v7092, 0.0
        %v7101 = vmax.f32 %v7093, 0.0
        %7102 = vst [vmem:[%s191] sm:$0xff] %v7094
        %7103 = vst [vmem:[%s191 + $0x8] sm:$0xff] %v7095
        %7104 = vst [vmem:[%s191 + $0x10] sm:$0xff] %v7096
        %7105 = vst [vmem:[%s191 + $0x18] sm:$0xff] %v7097
        %7106 = vst [vmem:[%s191 + $0x20] sm:$0xff] %v7098
        %7107 = vst [vmem:[%s191 + $0x28] sm:$0xff] %v7099
        %7108 = vst [vmem:[%s191 + $0x30] sm:$0xff] %v7100
        %7109 = vst [vmem:[%s191 + $0x38] sm:$0xff] %v7101
        %s7110 = sand.u32 %s95, 1
        %s7111 = scalar_lea.sflag [#allocation4], %s7110
        %s7112 = sand.u32 %s95, 1
        %s7113 = smul.addr %s7112, 64
        %s7114 = scalar_lea.vmem [#allocation7], %s7113
        // Predicated region
        $region41: #{tpu_custom_call.1} parent=31 // pred_check
          %p7115 = pneg %p105
        $region42: #{tpu_custom_call.1} parent=31 // pred_check_branch
          %7117 = sbr.rel (%p7115) target = $region44
        $region43: #{tpu_custom_call.1} parent=31 // pred_region
          %s7119 = ssub.s32 1024, 1024
          %7120 = vsyncadd %s7111, %s7119
          %s7121 = smul.addr %s19, 8
          %s7122 = smul.addr %s7121, 128
          %s7123 = scalar_lea.hbm %s3, %s7122
          %s7124 = sshll.u32 %s7114, 4
          %s7125 = int_to_ptr.vmem [resolvable:$true] %s7124
          %7130 = dma.vmem_to_hbm [thread:$0]  %s7125, 1024, %s7123, %s7111, 128, 128, 8
        $region44: #{tpu_custom_call.1} parent=31 // pred_fallthru
          _
      $region32: #{tpu_custom_call.1} parent=5 // pred_fallthru
        _
      %p7131 = scmp.le.s32.totalorder 2, %s14
      // Predicated region
      $region45: #{tpu_custom_call.1} parent=5 // pred_check
        %p7132 = pneg %p7131
      $region46: #{tpu_custom_call.1} parent=5 // pred_check_branch
        %7134 = sbr.rel (%p7132) target = $region48
      $region47: #{tpu_custom_call.1} parent=5 // pred_region
        %s7135 = ssub.s32 %s14, 2
        // Predicated region
        $region49: #{tpu_custom_call.1} parent=47 // pred_check
          %p7136 = pneg %p111
        $region50: #{tpu_custom_call.1} parent=47 // pred_check_branch
          %7138 = sbr.rel (%p7136) target = $region52
        $region51: #{tpu_custom_call.1} parent=47 // pred_region
          %s7139 = sand.u32 %s96, 1
          %s7140 = scalar_lea.sflag [#allocation4], %s7139
          %s7141 = sand.u32 %s96, 1
          %s7142 = smul.addr %s7141, 64
          %s7143 = scalar_lea.vmem [#allocation7], %s7142
          %7144 = dma.done %s7140, 1024
        $region52: #{tpu_custom_call.1} parent=47 // pred_fallthru
          _
      $region48: #{tpu_custom_call.1} parent=5 // pred_fallthru
        _
    $region6: #{tpu_custom_call.1} parent=1 // loop_footer
      %s18 = sadd.s32 1, %s14
    $region7: #{tpu_custom_call.1} parent=1 // loop_footer_branch
      %13 = sbr.rel target = $region3
    $region8: #{tpu_custom_call.1} parent=1 // loop_exit
      _
    %7145 = vsyncpa [#allocation3], 1
    %s7146 = scalar_lea.sflag [#allocation3], 1
    %7147 = vsyncpa %s7146, 1
    %7148 = vsyncpa [#allocation6], 1
    %7149 = vsyncpa [#allocation4], 1
    %s7150 = scalar_lea.sflag [#allocation4], 1
    %7151 = vsyncpa %s7150, 1

</llo_original>
